<compile_context>
chip_gen: v7x
topology: tpu7x:2x2x1
jax: 0.10.0
libtpu: 0.0.40
codegen_flags: <defaults>
</compile_context>

<pallas_src>
import functools

import jax
import jax.numpy as jnp
from jax.experimental import pallas as pl
from jax.experimental.pallas import tpu as pltpu


C_FEAT = 1024 // 3 * 6        # 2046: true global-feature width (fc1 input)
C_FEAT_PAD = 2048             # padded to a lane multiple (padding is exact)
NC_PAD = 128                  # classes padded to a full lane group
NEG_INF_BIAS = -1e30          # padded-class bias -> exp() == 0 in log_softmax


# ---------------------------------------------------------------------------
# Pallas kernel: one grid step processes a (Bt, N, C) batch block.
# ---------------------------------------------------------------------------
def _vnn_pointnet_cls_kernel(x_ref,
                             w1_ref, b1_ref, w2_ref, b2_ref, w3_ref, b3_ref,
                             f1_hbm, c1_ref, f2_hbm, c2_ref, f3_hbm, c3_ref,
                             o_ref,
                             f1_vmem, f2_vmem, f3_vmem, sem):
    # Kick off the head-weight DMAs (HBM -> VMEM scratch) so they overlap the
    # encoder compute; wait only right before each head dot.
    cp1 = pltpu.make_async_copy(f1_hbm, f1_vmem, sem.at[0])
    cp2 = pltpu.make_async_copy(f2_hbm, f2_vmem, sem.at[1])
    cp3 = pltpu.make_async_copy(f3_hbm, f3_vmem, sem.at[2])
    cp1.start(); cp2.start(); cp3.start()

    bt, n, c = x_ref.shape
    x = x_ref[...].reshape(bt * n, c)                       # (Bt*N, C) f32

    # ---- conv1 (K=3): VPU broadcast-FMAs, f32 (avoids a degenerate MXU dot).
    w1 = w1_ref[...]                                        # (C, 64) f32
    acc = x[:, 0:1] * w1[0:1, :]
    for i in range(1, c):
        acc = acc + x[:, i:i + 1] * w1[i:i + 1, :]
    h = jnp.maximum(acc + b1_ref[...], 0.0)                 # (Bt*N, 64)

    # ---- conv2 / conv3: bf16 operands, f32 accumulation (BN folded).
    h = jnp.dot(h.astype(jnp.bfloat16), w2_ref[...],
                preferred_element_type=jnp.float32) + b2_ref[...]
    h = jnp.maximum(h, 0.0)                                 # (Bt*N, 128)
    h = jnp.dot(h.astype(jnp.bfloat16), w3_ref[...],
                preferred_element_type=jnp.float32) + b3_ref[...]   # (Bt*N, 2048)

    # ---- global max-pool over points, per batch element.
    g = jnp.max(h.reshape(bt, n, -1), axis=1)               # (Bt, 2048)

    # ---- head: fc1+bn1+relu, dropout(=id in eval), fc2+bn2+relu, fc3.
    cp1.wait()
    f = jnp.dot(g.astype(jnp.bfloat16), f1_vmem[...],
                preferred_element_type=jnp.float32) + c1_ref[...]
    f = jnp.maximum(f, 0.0)                                 # (Bt, 512)
    cp2.wait()
    f = jnp.dot(f.astype(jnp.bfloat16), f2_vmem[...],
                preferred_element_type=jnp.float32) + c2_ref[...]
    f = jnp.maximum(f, 0.0)                                 # (Bt, 256)
    cp3.wait()
    logits = jnp.dot(f.astype(jnp.bfloat16), f3_vmem[...],
                     preferred_element_type=jnp.float32) + c3_ref[...]  # (Bt, 128)

    # ---- log_softmax over classes (padded classes have -1e30 bias -> exp=0).
    m = jnp.max(logits, axis=-1, keepdims=True)
    z = logits - m
    lse = jnp.log(jnp.sum(jnp.exp(z), axis=-1, keepdims=True))
    o_ref[...] = z - lse                                    # (Bt, NC_PAD)


# ---------------------------------------------------------------------------
# Wrapper
# ---------------------------------------------------------------------------
def vnn_pointnet_cls_forward(x, params, *, num_class=2, batch_tile=None):
    """x: (B, channel, N) torch NCL layout -> (log_probs (B, num_class), trans_feat)."""
    B, C, N = x.shape
    bt = B if batch_tile is None else batch_tile
    assert B % bt == 0, (B, bt)
    x_pts = jnp.transpose(x, (0, 2, 1))                     # (B, N, C)

    p = params
    flat = (p["conv1"][0], p["conv1"][1], p["conv2"][0], p["conv2"][1],
            p["conv3"][0], p["conv3"][1],
            p["fc1"][0], p["fc1"][1], p["fc2"][0], p["fc2"][1],
            p["fc3"][0], p["fc3"][1])
    f1, f2, f3 = flat[6], flat[8], flat[10]
    nc_pad = f3.shape[-1]
    assert num_class <= nc_pad

    def rep(a):   # small resident array, same block every grid step
        return pl.BlockSpec(a.shape, lambda s: (0, 0))

    in_specs = ([pl.BlockSpec((bt, N, C), lambda s: (s, 0, 0))]
                + [rep(a) for a in flat[:6]]
                + [pl.BlockSpec(memory_space=pl.ANY), rep(flat[7]),
                   pl.BlockSpec(memory_space=pl.ANY), rep(flat[9]),
                   pl.BlockSpec(memory_space=pl.ANY), rep(flat[11])])

    out = pl.pallas_call(
        _vnn_pointnet_cls_kernel,
        out_shape=jax.ShapeDtypeStruct((B, nc_pad), jnp.float32),
        grid=(B // bt,),
        in_specs=in_specs,
        out_specs=pl.BlockSpec((bt, nc_pad), lambda s: (s, 0)),
        scratch_shapes=[pltpu.VMEM(f1.shape, f1.dtype),
                        pltpu.VMEM(f2.shape, f2.dtype),
                        pltpu.VMEM(f3.shape, f3.dtype),
                        pltpu.SemaphoreType.DMA((3,))],
        compiler_params=pltpu.CompilerParams(
            dimension_semantics=("parallel",),
            vmem_limit_bytes=32 * 1024 * 1024),
    )(x_pts, *flat)

    log_probs = out[:, :num_class]                          # drop padded classes
    trans_feat = None          # VNN PointNetEncoder returns trans_feat = None
    return log_probs, trans_feat


# ---------------------------------------------------------------------------
# Parameter init (deterministic, synthetic) + eval-mode BN folding + padding
# ---------------------------------------------------------------------------
def _fold_bn(w, b, gamma, beta, mean, var, eps=1e-5):
    # y = gamma*(x@w + b - mean)/sqrt(var+eps) + beta  ==  x@w' + b'
    s = gamma / jnp.sqrt(var + eps)
    return w * s[None, :], (b - mean) * s + beta


def _bn_stats(k, c):
    k1, k2, k3, k4 = jax.random.split(k, 4)
    return (0.5 + jax.random.uniform(k1, (c,), jnp.float32),
            0.1 * jax.random.normal(k2, (c,), jnp.float32),
            0.1 * jax.random.normal(k3, (c,), jnp.float32),
            0.5 + jax.random.uniform(k4, (c,), jnp.float32))


def _layer(key, i, o, *, bn=True, wdtype=jnp.bfloat16):
    kw, kb, kbn = jax.random.split(key, 3)
    w = 0.1 * jax.random.normal(kw, (i, o), jnp.float32)
    b = 0.05 * jax.random.normal(kb, (o,), jnp.float32)
    if bn:
        w, b = _fold_bn(w, b, *_bn_stats(kbn, o))
    # weights stored MXU-native (bf16) after folding; bias as an f32 (1, o) row.
    return w.astype(wdtype), b.reshape(1, -1).astype(jnp.float32)


def init_params(key, channel=3, num_class=2):
    ks = jax.random.split(key, 6)
    pad_c = C_FEAT_PAD - C_FEAT

    conv1 = _layer(ks[0], channel, 64, wdtype=jnp.float32)   # K=3, f32 VPU path
    conv2 = _layer(ks[1], 64, 128)

    # conv3: pad output columns 2046 -> 2048 with zeros (exact: pooled max of a
    # zero column is 0, and the matching fc1 input rows are zero).
    w3, b3 = _layer(ks[2], 128, C_FEAT)
    w3 = jnp.pad(w3, ((0, 0), (0, pad_c)))
    b3 = jnp.pad(b3, ((0, 0), (0, pad_c)))

    # fc1: pad input rows 2046 -> 2048 with zeros.
    w4, b4 = _layer(ks[3], C_FEAT, 512)
    w4 = jnp.pad(w4, ((0, pad_c), (0, 0)))

    fc2 = _layer(ks[4], 512, 256)

    # fc3: pad classes to 128 lanes; padded-class bias = -1e30 so the padded
    # columns contribute exp()==0 to the in-kernel log_softmax (exact).
    w6, b6 = _layer(ks[5], 256, num_class, bn=False)
    nc_pad = max(NC_PAD, -(-num_class // 128) * 128)
    w6 = jnp.pad(w6, ((0, 0), (0, nc_pad - num_class)))
    b6 = jnp.pad(b6, ((0, 0), (0, nc_pad - num_class)),
                 constant_values=NEG_INF_BIAS)

    return {
        "conv1": conv1,            # encoder placeholder (see TODO at top)
        "conv2": conv2,
        "conv3": (w3, b3),
        "fc1": (w4, b4),           # + bn1 folded
        "fc2": fc2,                # + bn2 folded (dropout = id in eval)
        "fc3": (w6, b6),
    }


# ---------------------------------------------------------------------------
# Plain-XLA reference (same bf16-weight / f32-accumulate recipe)
# ---------------------------------------------------------------------------
def _ref_forward(x, p, num_class):
    def dot(a, w):
        return jnp.dot(a.astype(jnp.bfloat16), w,
                       preferred_element_type=jnp.float32)
    x_pts = jnp.transpose(x, (0, 2, 1))
    h = jnp.maximum(jnp.dot(x_pts, p["conv1"][0],
                            preferred_element_type=jnp.float32)
                    + p["conv1"][1], 0.0)
    h = jnp.maximum(dot(h, p["conv2"][0]) + p["conv2"][1], 0.0)
    h = dot(h, p["conv3"][0]) + p["conv3"][1]
    g = jnp.max(h, axis=1)                                  # (B, 2048)
    f = jnp.maximum(dot(g, p["fc1"][0]) + p["fc1"][1], 0.0)
    f = jnp.maximum(dot(f, p["fc2"][0]) + p["fc2"][1], 0.0)
    logits = (dot(f, p["fc3"][0]) + p["fc3"][1])[:, :num_class]
    return jax.nn.log_softmax(logits, axis=-1)


# ---------------------------------------------------------------------------
if __name__ == "__main__":
    B, channel, N, num_class = 2, 3, 256, 2    # normal_channel=False -> channel=3
    key = jax.random.PRNGKey(0)
    kx, kp = jax.random.split(key)
    x = jax.random.normal(kx, (B, channel, N), jnp.float32)
    params = init_params(kp, channel=channel, num_class=num_class)

    fwd = jax.jit(functools.partial(vnn_pointnet_cls_forward,
                                    num_class=num_class))
    log_probs, trans_feat = fwd(x, params)
    log_probs = jax.block_until_ready(log_probs)

    assert log_probs.shape == (B, num_class), log_probs.shape
    assert trans_feat is None
    assert bool(jnp.all(jnp.isfinite(log_probs)))
    # log_softmax rows must normalize.
    assert bool(jnp.allclose(jnp.sum(jnp.exp(log_probs), axis=1), 1.0, atol=1e-3))
    # must agree with the plain-XLA reference (same bf16/f32 recipe).
    ref = _ref_forward(x, params, num_class)
    assert bool(jnp.allclose(log_probs, ref, atol=2e-2, rtol=2e-2)), (log_probs, ref)

    print("KERNEL_OK")
</pallas_src>

<mosaic_0001>
module attributes {stable_mosaic.version = 11 : i64} {
  func.func @_vnn_pointnet_cls_kernel(%arg0: i32, %arg1: memref<2x256x3xf32, #tpu.memory_space<vmem>>, %arg2: memref<3x64xf32, #tpu.memory_space<vmem>>, %arg3: memref<1x64xf32, #tpu.memory_space<vmem>>, %arg4: memref<64x128xbf16, #tpu.memory_space<vmem>>, %arg5: memref<1x128xf32, #tpu.memory_space<vmem>>, %arg6: memref<128x2048xbf16, #tpu.memory_space<vmem>>, %arg7: memref<1x2048xf32, #tpu.memory_space<vmem>>, %arg8: memref<2048x512xbf16, #tpu.memory_space<any>>, %arg9: memref<1x512xf32, #tpu.memory_space<vmem>>, %arg10: memref<512x256xbf16, #tpu.memory_space<any>>, %arg11: memref<1x256xf32, #tpu.memory_space<vmem>>, %arg12: memref<256x128xbf16, #tpu.memory_space<any>>, %arg13: memref<1x128xf32, #tpu.memory_space<vmem>>, %arg14: memref<2x128xf32, #tpu.memory_space<vmem>>, %arg15: memref<2048x512xbf16, #tpu.memory_space<vmem>>, %arg16: memref<512x256xbf16, #tpu.memory_space<vmem>>, %arg17: memref<256x128xbf16, #tpu.memory_space<vmem>>, %arg18: memref<3x!tpu.dma_semaphore, #tpu.memory_space<semaphore_mem>>) attributes {dimension_semantics = [#tpu.dimension_semantics<parallel>], iteration_bounds = array<i64: 1>, scalar_prefetch = 0 : i64, scratch_operands = 4 : i64, tpu.core_type = #tpu.core_type<tc>, window_params = [{transform_indices = @transform_0, window_bounds = array<i64: 2, 256, 3>}, {pipeline_mode = #tpu.pipeline_mode<synchronous>, transform_indices = @transform_1, window_bounds = array<i64: 3, 64>}, {pipeline_mode = #tpu.pipeline_mode<synchronous>, transform_indices = @transform_2, window_bounds = array<i64: 1, 64>}, {pipeline_mode = #tpu.pipeline_mode<synchronous>, transform_indices = @transform_3, window_bounds = array<i64: 64, 128>}, {pipeline_mode = #tpu.pipeline_mode<synchronous>, transform_indices = @transform_4, window_bounds = array<i64: 1, 128>}, {pipeline_mode = #tpu.pipeline_mode<synchronous>, transform_indices = @transform_5, window_bounds = array<i64: 128, 2048>}, {pipeline_mode = #tpu.pipeline_mode<synchronous>, transform_indices = @transform_6, window_bounds = array<i64: 1, 2048>}, {}, {pipeline_mode = #tpu.pipeline_mode<synchronous>, transform_indices = @transform_8, window_bounds = array<i64: 1, 512>}, {}, {pipeline_mode = #tpu.pipeline_mode<synchronous>, transform_indices = @transform_10, window_bounds = array<i64: 1, 256>}, {}, {pipeline_mode = #tpu.pipeline_mode<synchronous>, transform_indices = @transform_12, window_bounds = array<i64: 1, 128>}, {transform_indices = @transform_13, window_bounds = array<i64: 2, 128>}]} {
    %c0_i32 = arith.constant 0 : i32
    %0 = tpu.memref_slice %arg18[%c0_i32] : memref<3x!tpu.dma_semaphore, #tpu.memory_space<semaphore_mem>> -> memref<1x!tpu.dma_semaphore, #tpu.memory_space<semaphore_mem>>
    %1 = tpu.memref_squeeze %0 : memref<1x!tpu.dma_semaphore, #tpu.memory_space<semaphore_mem>> -> memref<!tpu.dma_semaphore, #tpu.memory_space<semaphore_mem>>
    tpu.enqueue_dma source(%arg8 : memref<2048x512xbf16, #tpu.memory_space<any>>) target(%arg15 : memref<2048x512xbf16, #tpu.memory_space<vmem>>) target_semaphore(%1 : memref<!tpu.dma_semaphore, #tpu.memory_space<semaphore_mem>>)
    %c1_i32 = arith.constant 1 : i32
    %2 = tpu.memref_slice %arg18[%c1_i32] : memref<3x!tpu.dma_semaphore, #tpu.memory_space<semaphore_mem>> -> memref<1x!tpu.dma_semaphore, #tpu.memory_space<semaphore_mem>>
    %3 = tpu.memref_squeeze %2 : memref<1x!tpu.dma_semaphore, #tpu.memory_space<semaphore_mem>> -> memref<!tpu.dma_semaphore, #tpu.memory_space<semaphore_mem>>
    tpu.enqueue_dma source(%arg10 : memref<512x256xbf16, #tpu.memory_space<any>>) target(%arg16 : memref<512x256xbf16, #tpu.memory_space<vmem>>) target_semaphore(%3 : memref<!tpu.dma_semaphore, #tpu.memory_space<semaphore_mem>>)
    %c2_i32 = arith.constant 2 : i32
    %4 = tpu.memref_slice %arg18[%c2_i32] : memref<3x!tpu.dma_semaphore, #tpu.memory_space<semaphore_mem>> -> memref<1x!tpu.dma_semaphore, #tpu.memory_space<semaphore_mem>>
    %5 = tpu.memref_squeeze %4 : memref<1x!tpu.dma_semaphore, #tpu.memory_space<semaphore_mem>> -> memref<!tpu.dma_semaphore, #tpu.memory_space<semaphore_mem>>
    tpu.enqueue_dma source(%arg12 : memref<256x128xbf16, #tpu.memory_space<any>>) target(%arg17 : memref<256x128xbf16, #tpu.memory_space<vmem>>) target_semaphore(%5 : memref<!tpu.dma_semaphore, #tpu.memory_space<semaphore_mem>>)
    %c0 = arith.constant 0 : index
    %c0_0 = arith.constant 0 : index
    %c0_1 = arith.constant 0 : index
    %6 = vector.load %arg1[%c0, %c0_0, %c0_1] : memref<2x256x3xf32, #tpu.memory_space<vmem>>, vector<2x256x3xf32>
    %7 = vector.shape_cast %6 : vector<2x256x3xf32> to vector<512x3xf32>
    %c0_2 = arith.constant 0 : index
    %c0_3 = arith.constant 0 : index
    %8 = vector.load %arg2[%c0_2, %c0_3] : memref<3x64xf32, #tpu.memory_space<vmem>>, vector<3x64xf32>
    %9 = vector.extract_strided_slice %7 {offsets = [0, 0], sizes = [512, 1], strides = [1, 1]} : vector<512x3xf32> to vector<512x1xf32>
    %10 = vector.extract_strided_slice %8 {offsets = [0, 0], sizes = [1, 64], strides = [1, 1]} : vector<3x64xf32> to vector<1x64xf32>
    %11 = vector.broadcast %9 : vector<512x1xf32> to vector<512x64xf32>
    %12 = vector.broadcast %10 : vector<1x64xf32> to vector<512x64xf32>
    %13 = arith.mulf %11, %12 : vector<512x64xf32>
    %14 = vector.extract_strided_slice %7 {offsets = [0, 1], sizes = [512, 1], strides = [1, 1]} : vector<512x3xf32> to vector<512x1xf32>
    %15 = vector.extract_strided_slice %8 {offsets = [1, 0], sizes = [1, 64], strides = [1, 1]} : vector<3x64xf32> to vector<1x64xf32>
    %16 = vector.broadcast %14 : vector<512x1xf32> to vector<512x64xf32>
    %17 = vector.broadcast %15 : vector<1x64xf32> to vector<512x64xf32>
    %18 = arith.mulf %16, %17 : vector<512x64xf32>
    %19 = arith.addf %13, %18 : vector<512x64xf32>
    %20 = vector.extract_strided_slice %7 {offsets = [0, 2], sizes = [512, 1], strides = [1, 1]} : vector<512x3xf32> to vector<512x1xf32>
    %21 = vector.extract_strided_slice %8 {offsets = [2, 0], sizes = [1, 64], strides = [1, 1]} : vector<3x64xf32> to vector<1x64xf32>
    %22 = vector.broadcast %20 : vector<512x1xf32> to vector<512x64xf32>
    %23 = vector.broadcast %21 : vector<1x64xf32> to vector<512x64xf32>
    %24 = arith.mulf %22, %23 : vector<512x64xf32>
    %25 = arith.addf %19, %24 : vector<512x64xf32>
    %c0_4 = arith.constant 0 : index
    %c0_5 = arith.constant 0 : index
    %26 = vector.load %arg3[%c0_4, %c0_5] : memref<1x64xf32, #tpu.memory_space<vmem>>, vector<1x64xf32>
    %27 = vector.broadcast %26 : vector<1x64xf32> to vector<512x64xf32>
    %28 = arith.addf %25, %27 : vector<512x64xf32>
    %cst = arith.constant 0.000000e+00 : f32
    %29 = vector.broadcast %cst : f32 to vector<512x64xf32>
    %30 = arith.maximumf %28, %29 : vector<512x64xf32>
    %31 = arith.truncf %30 : vector<512x64xf32> to vector<512x64xbf16>
    %c0_6 = arith.constant 0 : index
    %c0_7 = arith.constant 0 : index
    %32 = vector.load %arg4[%c0_6, %c0_7] : memref<64x128xbf16, #tpu.memory_space<vmem>>, vector<64x128xbf16>
    %cst_8 = arith.constant dense<0.000000e+00> : vector<512x128xf32>
    %33 = tpu.matmul %31, %32, %cst_8 {dimension_numbers = #tpu.dot_dimension_numbers<[1], [0], [0], [1], [0, 0, 1, 1], [], []>} : vector<512x64xbf16>, vector<64x128xbf16>, vector<512x128xf32> -> vector<512x128xf32>
    %c0_9 = arith.constant 0 : index
    %c0_10 = arith.constant 0 : index
    %34 = vector.load %arg5[%c0_9, %c0_10] : memref<1x128xf32, #tpu.memory_space<vmem>>, vector<1x128xf32>
    %35 = vector.broadcast %34 : vector<1x128xf32> to vector<512x128xf32>
    %36 = arith.addf %33, %35 : vector<512x128xf32>
    %cst_11 = arith.constant 0.000000e+00 : f32
    %37 = vector.broadcast %cst_11 : f32 to vector<512x128xf32>
    %38 = arith.maximumf %36, %37 : vector<512x128xf32>
    %39 = arith.truncf %38 : vector<512x128xf32> to vector<512x128xbf16>
    %c0_12 = arith.constant 0 : index
    %c0_13 = arith.constant 0 : index
    %40 = vector.load %arg6[%c0_12, %c0_13] : memref<128x2048xbf16, #tpu.memory_space<vmem>>, vector<128x2048xbf16>
    %cst_14 = arith.constant dense<0.000000e+00> : vector<512x2048xf32>
    %41 = tpu.matmul %39, %40, %cst_14 {dimension_numbers = #tpu.dot_dimension_numbers<[1], [0], [0], [1], [0, 0, 1, 1], [], []>} : vector<512x128xbf16>, vector<128x2048xbf16>, vector<512x2048xf32> -> vector<512x2048xf32>
    %c0_15 = arith.constant 0 : index
    %c0_16 = arith.constant 0 : index
    %42 = vector.load %arg7[%c0_15, %c0_16] : memref<1x2048xf32, #tpu.memory_space<vmem>>, vector<1x2048xf32>
    %43 = vector.broadcast %42 : vector<1x2048xf32> to vector<512x2048xf32>
    %44 = arith.addf %41, %43 : vector<512x2048xf32>
    %45 = vector.shape_cast %44 : vector<512x2048xf32> to vector<2x256x2048xf32>
    %cst_17 = arith.constant dense<0xFF800000> : vector<2x2048xf32>
    %46 = vector.multi_reduction <maximumf>, %45, %cst_17 [1] : vector<2x256x2048xf32> to vector<2x2048xf32>
    %c0_i32_18 = arith.constant 0 : i32
    %47 = tpu.memref_slice %arg18[%c0_i32_18] : memref<3x!tpu.dma_semaphore, #tpu.memory_space<semaphore_mem>> -> memref<1x!tpu.dma_semaphore, #tpu.memory_space<semaphore_mem>>
    %48 = tpu.memref_squeeze %47 : memref<1x!tpu.dma_semaphore, #tpu.memory_space<semaphore_mem>> -> memref<!tpu.dma_semaphore, #tpu.memory_space<semaphore_mem>>
    tpu.wait_dma2 semaphore(%48 : memref<!tpu.dma_semaphore, #tpu.memory_space<semaphore_mem>>) src(%arg8 : memref<2048x512xbf16, #tpu.memory_space<any>>) dst(%arg15 : memref<2048x512xbf16, #tpu.memory_space<vmem>>)
    %49 = arith.truncf %46 : vector<2x2048xf32> to vector<2x2048xbf16>
    %c0_19 = arith.constant 0 : index
    %c0_20 = arith.constant 0 : index
    %50 = vector.load %arg15[%c0_19, %c0_20] : memref<2048x512xbf16, #tpu.memory_space<vmem>>, vector<2048x512xbf16>
    %cst_21 = arith.constant dense<0.000000e+00> : vector<2x512xf32>
    %51 = tpu.matmul %49, %50, %cst_21 {dimension_numbers = #tpu.dot_dimension_numbers<[1], [0], [0], [1], [0, 0, 1, 1], [], []>} : vector<2x2048xbf16>, vector<2048x512xbf16>, vector<2x512xf32> -> vector<2x512xf32>
    %c0_22 = arith.constant 0 : index
    %c0_23 = arith.constant 0 : index
    %52 = vector.load %arg9[%c0_22, %c0_23] : memref<1x512xf32, #tpu.memory_space<vmem>>, vector<1x512xf32>
    %53 = vector.broadcast %52 : vector<1x512xf32> to vector<2x512xf32>
    %54 = arith.addf %51, %53 : vector<2x512xf32>
    %cst_24 = arith.constant 0.000000e+00 : f32
    %55 = vector.broadcast %cst_24 : f32 to vector<2x512xf32>
    %56 = arith.maximumf %54, %55 : vector<2x512xf32>
    %c1_i32_25 = arith.constant 1 : i32
    %57 = tpu.memref_slice %arg18[%c1_i32_25] : memref<3x!tpu.dma_semaphore, #tpu.memory_space<semaphore_mem>> -> memref<1x!tpu.dma_semaphore, #tpu.memory_space<semaphore_mem>>
    %58 = tpu.memref_squeeze %57 : memref<1x!tpu.dma_semaphore, #tpu.memory_space<semaphore_mem>> -> memref<!tpu.dma_semaphore, #tpu.memory_space<semaphore_mem>>
    tpu.wait_dma2 semaphore(%58 : memref<!tpu.dma_semaphore, #tpu.memory_space<semaphore_mem>>) src(%arg10 : memref<512x256xbf16, #tpu.memory_space<any>>) dst(%arg16 : memref<512x256xbf16, #tpu.memory_space<vmem>>)
    %59 = arith.truncf %56 : vector<2x512xf32> to vector<2x512xbf16>
    %c0_26 = arith.constant 0 : index
    %c0_27 = arith.constant 0 : index
    %60 = vector.load %arg16[%c0_26, %c0_27] : memref<512x256xbf16, #tpu.memory_space<vmem>>, vector<512x256xbf16>
    %cst_28 = arith.constant dense<0.000000e+00> : vector<2x256xf32>
    %61 = tpu.matmul %59, %60, %cst_28 {dimension_numbers = #tpu.dot_dimension_numbers<[1], [0], [0], [1], [0, 0, 1, 1], [], []>} : vector<2x512xbf16>, vector<512x256xbf16>, vector<2x256xf32> -> vector<2x256xf32>
    %c0_29 = arith.constant 0 : index
    %c0_30 = arith.constant 0 : index
    %62 = vector.load %arg11[%c0_29, %c0_30] : memref<1x256xf32, #tpu.memory_space<vmem>>, vector<1x256xf32>
    %63 = vector.broadcast %62 : vector<1x256xf32> to vector<2x256xf32>
    %64 = arith.addf %61, %63 : vector<2x256xf32>
    %cst_31 = arith.constant 0.000000e+00 : f32
    %65 = vector.broadcast %cst_31 : f32 to vector<2x256xf32>
    %66 = arith.maximumf %64, %65 : vector<2x256xf32>
    %c2_i32_32 = arith.constant 2 : i32
    %67 = tpu.memref_slice %arg18[%c2_i32_32] : memref<3x!tpu.dma_semaphore, #tpu.memory_space<semaphore_mem>> -> memref<1x!tpu.dma_semaphore, #tpu.memory_space<semaphore_mem>>
    %68 = tpu.memref_squeeze %67 : memref<1x!tpu.dma_semaphore, #tpu.memory_space<semaphore_mem>> -> memref<!tpu.dma_semaphore, #tpu.memory_space<semaphore_mem>>
    tpu.wait_dma2 semaphore(%68 : memref<!tpu.dma_semaphore, #tpu.memory_space<semaphore_mem>>) src(%arg12 : memref<256x128xbf16, #tpu.memory_space<any>>) dst(%arg17 : memref<256x128xbf16, #tpu.memory_space<vmem>>)
    %69 = arith.truncf %66 : vector<2x256xf32> to vector<2x256xbf16>
    %c0_33 = arith.constant 0 : index
    %c0_34 = arith.constant 0 : index
    %70 = vector.load %arg17[%c0_33, %c0_34] : memref<256x128xbf16, #tpu.memory_space<vmem>>, vector<256x128xbf16>
    %cst_35 = arith.constant dense<0.000000e+00> : vector<2x128xf32>
    %71 = tpu.matmul %69, %70, %cst_35 {dimension_numbers = #tpu.dot_dimension_numbers<[1], [0], [0], [1], [0, 0, 1, 1], [], []>} : vector<2x256xbf16>, vector<256x128xbf16>, vector<2x128xf32> -> vector<2x128xf32>
    %c0_36 = arith.constant 0 : index
    %c0_37 = arith.constant 0 : index
    %72 = vector.load %arg13[%c0_36, %c0_37] : memref<1x128xf32, #tpu.memory_space<vmem>>, vector<1x128xf32>
    %73 = vector.broadcast %72 : vector<1x128xf32> to vector<2x128xf32>
    %74 = arith.addf %71, %73 : vector<2x128xf32>
    %cst_38 = arith.constant dense<0xFF800000> : vector<2xf32>
    %75 = vector.multi_reduction <maximumf>, %74, %cst_38 [1] : vector<2x128xf32> to vector<2xf32>
    %76 = vector.shape_cast %75 : vector<2xf32> to vector<2x1xf32>
    %77 = vector.broadcast %76 : vector<2x1xf32> to vector<2x128xf32>
    %78 = arith.subf %74, %77 : vector<2x128xf32>
    %79 = math.exp %78 : vector<2x128xf32>
    %cst_39 = arith.constant dense<0.000000e+00> : vector<2xf32>
    %80 = vector.multi_reduction <add>, %79, %cst_39 [1] : vector<2x128xf32> to vector<2xf32>
    %81 = vector.shape_cast %80 : vector<2xf32> to vector<2x1xf32>
    %82 = math.log %81 : vector<2x1xf32>
    %83 = vector.broadcast %82 : vector<2x1xf32> to vector<2x128xf32>
    %84 = arith.subf %78, %83 : vector<2x128xf32>
    %c0_40 = arith.constant 0 : index
    %c0_41 = arith.constant 0 : index
    %85 = vector.load %arg14[%c0_40, %c0_41] : memref<2x128xf32, #tpu.memory_space<vmem>>, vector<2x128xf32>
    tpu.vector_store %arg14[%c0_40, %c0_41], %84 {strides = array<i32>} : memref<2x128xf32, #tpu.memory_space<vmem>>, vector<2x128xf32>,
    return
  }
  func.func @transform_0(%arg0: i32) -> (i32, i32, i32) {
    %c0_i32 = arith.constant 0 : i32
    %c0_i32_0 = arith.constant 0 : i32
    %c0_i32_1 = arith.constant 0 : i32
    return %arg0, %c0_i32, %c0_i32_0 : i32, i32, i32
  }
  func.func @transform_1(%arg0: i32) -> (i32, i32) {
    %c0_i32 = arith.constant 0 : i32
    %c0_i32_0 = arith.constant 0 : i32
    %c0_i32_1 = arith.constant 0 : i32
    return %c0_i32, %c0_i32_0 : i32, i32
  }
  func.func @transform_2(%arg0: i32) -> (i32, i32) {
    %c0_i32 = arith.constant 0 : i32
    %c0_i32_0 = arith.constant 0 : i32
    %c0_i32_1 = arith.constant 0 : i32
    return %c0_i32, %c0_i32_0 : i32, i32
  }
  func.func @transform_3(%arg0: i32) -> (i32, i32) {
    %c0_i32 = arith.constant 0 : i32
    %c0_i32_0 = arith.constant 0 : i32
    %c0_i32_1 = arith.constant 0 : i32
    return %c0_i32, %c0_i32_0 : i32, i32
  }
  func.func @transform_4(%arg0: i32) -> (i32, i32) {
    %c0_i32 = arith.constant 0 : i32
    %c0_i32_0 = arith.constant 0 : i32
    %c0_i32_1 = arith.constant 0 : i32
    return %c0_i32, %c0_i32_0 : i32, i32
  }
  func.func @transform_5(%arg0: i32) -> (i32, i32) {
    %c0_i32 = arith.constant 0 : i32
    %c0_i32_0 = arith.constant 0 : i32
    %c0_i32_1 = arith.constant 0 : i32
    return %c0_i32, %c0_i32_0 : i32, i32
  }
  func.func @transform_6(%arg0: i32) -> (i32, i32) {
    %c0_i32 = arith.constant 0 : i32
    %c0_i32_0 = arith.constant 0 : i32
    %c0_i32_1 = arith.constant 0 : i32
    return %c0_i32, %c0_i32_0 : i32, i32
  }
  func.func @transform_8(%arg0: i32) -> (i32, i32) {
    %c0_i32 = arith.constant 0 : i32
    %c0_i32_0 = arith.constant 0 : i32
    %c0_i32_1 = arith.constant 0 : i32
    return %c0_i32, %c0_i32_0 : i32, i32
  }
  func.func @transform_10(%arg0: i32) -> (i32, i32) {
    %c0_i32 = arith.constant 0 : i32
    %c0_i32_0 = arith.constant 0 : i32
    %c0_i32_1 = arith.constant 0 : i32
    return %c0_i32, %c0_i32_0 : i32, i32
  }
  func.func @transform_12(%arg0: i32) -> (i32, i32) {
    %c0_i32 = arith.constant 0 : i32
    %c0_i32_0 = arith.constant 0 : i32
    %c0_i32_1 = arith.constant 0 : i32
    return %c0_i32, %c0_i32_0 : i32, i32
  }
  func.func @transform_13(%arg0: i32) -> (i32, i32) {
    %c0_i32 = arith.constant 0 : i32
    %c0_i32_0 = arith.constant 0 : i32
    return %arg0, %c0_i32 : i32, i32
  }
}

</mosaic_0001>

<llo_original>
// kernel: vnn_pointnet_cls_forward.1
$region0: #{vnn_pointnet_cls_forward.1}
  #allocation0 [shape = 'u32[]', space=smem, size = 0x4, offset = 0x4, fixed_abs, tag = 'smem constant byte address 0x4 - core index']
  #allocation1 [shape = 'u32[144,128]{1,0:T(1,128)}', space=vmem, size = 0x12000, scoped, tag = 'internal scratch']
  #allocation2 [shape = 'bf16[2048,512]{1,0:T(16,128)(2,1)}', space=vmem, size = 0x200000, scoped, tag = 'scratch operand']
  #allocation3 [shape = 'bf16[512,256]{1,0:T(16,128)(2,1)}', space=vmem, size = 0x40000, scoped, tag = 'scratch operand']
  #allocation4 [shape = 'bf16[256,128]{1,0:T(16,128)(2,1)}', space=vmem, size = 0x10000, scoped, tag = 'scratch operand']
  #allocation5 [shape = 's32[3]{0}', space=sflag, size = 0xc, scoped, tag = 'scratch operand']
  #allocation22 [shape = 's32[]', space=sflag, size = 0x4, offset = 0, fixed_abs, tag = 'sflag constant byte address 0x0 - dummy sync flag']
  #allocation24 [shape = 's32[]', space=sflag, size = 0x4, offset = 0, fixed_abs, tag = 'sflag constant byte address 0x0 - dummy sync flag']
  #allocation26 [shape = 's32[]', space=sflag, size = 0x4, offset = 0, fixed_abs, tag = 'sflag constant byte address 0x0 - dummy sync flag']
  #allocation27 [shape = 's32[]', space=sflag, size = 0x4, offset = 0, fixed_abs, tag = 'sflag constant byte address 0x0 - dummy sync flag']
  #allocation28 [shape = 'u32[]', space=smem, size = 0x4, offset = 0x44, fixed_abs, tag = 'smem constant byte address 0x44 - assertion arg 0']
  #allocation29 [shape = 'u32[]', space=smem, size = 0x4, offset = 0x48, fixed_abs, tag = 'smem constant byte address 0x48 - assertion arg 1']
  %s0 = inlined_call_operand.vmem [shape: f32[2,256,3], index: 0, kind: input, shape index: {}]
  %s1 = inlined_call_operand.hbm [shape: f32[3,64], index: 1, kind: input, shape index: {}]
  %s2 = inlined_call_operand.hbm [shape: f32[1,64], index: 2, kind: input, shape index: {}]
  %s3 = inlined_call_operand.hbm [shape: bf16[64,128], index: 3, kind: input, shape index: {}]
  %s4 = inlined_call_operand.hbm [shape: f32[1,128], index: 4, kind: input, shape index: {}]
  %s5 = inlined_call_operand.hbm [shape: bf16[128,2048], index: 5, kind: input, shape index: {}]
  %s6 = inlined_call_operand.hbm [shape: f32[1,2048], index: 6, kind: input, shape index: {}]
  %s7 = inlined_call_operand.hbm [shape: bf16[2048,512], index: 7, kind: input, shape index: {}]
  %s8 = inlined_call_operand.hbm [shape: f32[1,512], index: 8, kind: input, shape index: {}]
  %s9 = inlined_call_operand.hbm [shape: bf16[512,256], index: 9, kind: input, shape index: {}]
  %s10 = inlined_call_operand.hbm [shape: f32[1,256], index: 10, kind: input, shape index: {}]
  %s11 = inlined_call_operand.hbm [shape: bf16[256,128], index: 11, kind: input, shape index: {}]
  %s12 = inlined_call_operand.hbm [shape: f32[1,128], index: 12, kind: input, shape index: {}]
  %s13 = inlined_call_operand.hbm [shape: f32[2,128], index: 13, kind: output, shape index: {}]
  %s14 = sld [smem:[#allocation0]]
  $region90: #{vnn_pointnet_cls_forward.1} parent=0
    _
  %s16 = ssub.s32 1, %s14
  %s17 = scalar_select 0, %s16, %s14
  $region1: #{vnn_pointnet_cls_forward.1} parent=0
    #allocation6 [shape = 'u8[2048]{0}', space=vmem, size = 0x800, scoped, tag = 'input window, operand 1, single buffered']
    #allocation7 [shape = 's32[1]{0}', space=sflag, size = 0x4, scoped, tag = 'scoped memory for vnn_pointnet_cls_forward.1']
    #allocation8 [shape = 's32[1]{0}', space=sflag, size = 0x4, scoped, tag = 'scoped memory for vnn_pointnet_cls_forward.1']
    #allocation9 [shape = 'u8[512]{0}', space=vmem, size = 0x400, scoped, tag = 'input window, operand 2, single buffered']
    #allocation10 [shape = 's32[1]{0}', space=sflag, size = 0x4, scoped, tag = 'scoped memory for vnn_pointnet_cls_forward.1']
    #allocation11 [shape = 'u8[16384]{0}', space=vmem, size = 0x4000, scoped, tag = 'input window, operand 3, single buffered']
    #allocation12 [shape = 'u8[512]{0}', space=vmem, size = 0x400, scoped, tag = 'input window, operand 4, single buffered']
    #allocation13 [shape = 's32[1]{0}', space=sflag, size = 0x4, scoped, tag = 'scoped memory for vnn_pointnet_cls_forward.1']
    #allocation14 [shape = 'u8[524288]{0}', space=vmem, size = 0x80000, scoped, tag = 'input window, operand 5, single buffered']
    #allocation15 [shape = 'u8[8192]{0}', space=vmem, size = 0x2000, scoped, tag = 'input window, operand 6, single buffered']
    #allocation16 [shape = 's32[1]{0}', space=sflag, size = 0x4, scoped, tag = 'scoped memory for vnn_pointnet_cls_forward.1']
    #allocation17 [shape = 'u8[2048]{0}', space=vmem, size = 0x800, scoped, tag = 'input window, operand 8, single buffered']
    #allocation18 [shape = 'u8[1024]{0}', space=vmem, size = 0x400, scoped, tag = 'input window, operand 10, single buffered']
    #allocation19 [shape = 's32[1]{0}', space=sflag, size = 0x4, scoped, tag = 'scoped memory for vnn_pointnet_cls_forward.1']
    #allocation20 [shape = 'u8[512]{0}', space=vmem, size = 0x400, scoped, tag = 'input window, operand 12, single buffered']
    #allocation21 [shape = 'u8[1024]{0}', space=vmem, size = 0x400, scoped, tag = 'output window, operand 0, single buffered']
    #allocation23 [shape = 'u32[9]{0}', space=smem, size = 0x24, scoped, tag = 'DMA stride descriptor']
    #allocation25 [shape = 'u32[9]{0}', space=smem, size = 0x24, scoped, tag = 'DMA stride descriptor']
    %18 = vsyncpa [#allocation7], 0
    %19 = vsyncpa [#allocation10], 0
    %20 = vsyncpa [#allocation13], 0
    %21 = vsyncpa [#allocation16], 0
    %22 = vsyncpa [#allocation19], 0
    %23 = vsyncpa [#allocation8], 0
    // Predicated region
    $region2: #{vnn_pointnet_cls_forward.1} parent=1 // pred_check
      _
    $region3: #{vnn_pointnet_cls_forward.1} parent=1 // pred_check_branch
      %25 = sbr.rel (0) target = $region5
    $region4: #{vnn_pointnet_cls_forward.1} parent=1 // pred_region
      _
    $region5: #{vnn_pointnet_cls_forward.1} parent=1 // pred_fallthru
      _
    // Predicated region
    $region6: #{vnn_pointnet_cls_forward.1} parent=1 // pred_check
      _
    $region7: #{vnn_pointnet_cls_forward.1} parent=1 // pred_check_branch
      %27 = sbr.rel (0) target = $region9
    $region8: #{vnn_pointnet_cls_forward.1} parent=1 // pred_region
      %s29 = ssub.s32 64, 64
      %30 = vsyncadd [#allocation7], %s29
      %s32 = sshll.u32 [#allocation6], 4
      %s33 = int_to_ptr.vmem [resolvable:$true] %s32
      %35 = dma.hbm_to_vmem [thread:$0]  %s1, 64, %s33, [#allocation7]
    $region9: #{vnn_pointnet_cls_forward.1} parent=1 // pred_fallthru
      _
    // Predicated region
    $region10: #{vnn_pointnet_cls_forward.1} parent=1 // pred_check
      _
    $region11: #{vnn_pointnet_cls_forward.1} parent=1 // pred_check_branch
      %37 = sbr.rel (0) target = $region13
    $region12: #{vnn_pointnet_cls_forward.1} parent=1 // pred_region
      %s39 = ssub.s32 16, 16
      %40 = vsyncadd [#allocation10], %s39
      %s42 = sshll.u32 [#allocation9], 4
      %s43 = int_to_ptr.vmem [resolvable:$true] %s42
      %45 = dma.hbm_to_vmem [thread:$0]  %s2, 16, %s43, [#allocation10]
    $region13: #{vnn_pointnet_cls_forward.1} parent=1 // pred_fallthru
      _
    // Predicated region
    $region14: #{vnn_pointnet_cls_forward.1} parent=1 // pred_check
      _
    $region15: #{vnn_pointnet_cls_forward.1} parent=1 // pred_check_branch
      %47 = sbr.rel (0) target = $region17
    $region16: #{vnn_pointnet_cls_forward.1} parent=1 // pred_region
      %s49 = ssub.s32 512, 512
      %50 = vsyncadd [#allocation10], %s49
      %s51 = sshll.u32 [#allocation11], 4
      %s52 = int_to_ptr.vmem [resolvable:$true] %s51
      %57 = dma.hbm_to_vmem [thread:$0]  %s3, 512, %s52, [#allocation10], 64, 64, 4
    $region17: #{vnn_pointnet_cls_forward.1} parent=1 // pred_fallthru
      _
    // Predicated region
    $region18: #{vnn_pointnet_cls_forward.1} parent=1 // pred_check
      _
    $region19: #{vnn_pointnet_cls_forward.1} parent=1 // pred_check_branch
      %59 = sbr.rel (0) target = $region21
    $region20: #{vnn_pointnet_cls_forward.1} parent=1 // pred_region
      %s61 = ssub.s32 16, 16
      %62 = vsyncadd [#allocation13], %s61
      %s64 = sshll.u32 [#allocation12], 4
      %s65 = int_to_ptr.vmem [resolvable:$true] %s64
      %67 = dma.hbm_to_vmem [thread:$0]  %s4, 16, %s65, [#allocation13]
    $region21: #{vnn_pointnet_cls_forward.1} parent=1 // pred_fallthru
      _
    // Predicated region
    $region22: #{vnn_pointnet_cls_forward.1} parent=1 // pred_check
      _
    $region23: #{vnn_pointnet_cls_forward.1} parent=1 // pred_check_branch
      %69 = sbr.rel (0) target = $region25
    $region24: #{vnn_pointnet_cls_forward.1} parent=1 // pred_region
      %s71 = ssub.s32 16384, 16384
      %72 = vsyncadd [#allocation13], %s71
      %s73 = sshll.u32 [#allocation14], 4
      %s74 = int_to_ptr.vmem [resolvable:$true] %s73
      %79 = dma.hbm_to_vmem [thread:$0]  %s5, 16384, %s74, [#allocation13], 1024, 1024, 64
    $region25: #{vnn_pointnet_cls_forward.1} parent=1 // pred_fallthru
      _
    // Predicated region
    $region26: #{vnn_pointnet_cls_forward.1} parent=1 // pred_check
      _
    $region27: #{vnn_pointnet_cls_forward.1} parent=1 // pred_check_branch
      %81 = sbr.rel (0) target = $region29
    $region28: #{vnn_pointnet_cls_forward.1} parent=1 // pred_region
      %s83 = ssub.s32 256, 256
      %84 = vsyncadd [#allocation16], %s83
      %s86 = sshll.u32 [#allocation15], 4
      %s87 = int_to_ptr.vmem [resolvable:$true] %s86
      %89 = dma.hbm_to_vmem [thread:$0]  %s6, 256, %s87, [#allocation16]
    $region29: #{vnn_pointnet_cls_forward.1} parent=1 // pred_fallthru
      _
    // Predicated region
    $region30: #{vnn_pointnet_cls_forward.1} parent=1 // pred_check
      _
    $region31: #{vnn_pointnet_cls_forward.1} parent=1 // pred_check_branch
      %91 = sbr.rel (0) target = $region33
    $region32: #{vnn_pointnet_cls_forward.1} parent=1 // pred_region
      %s93 = ssub.s32 64, 64
      %94 = vsyncadd [#allocation16], %s93
      %s96 = sshll.u32 [#allocation17], 4
      %s97 = int_to_ptr.vmem [resolvable:$true] %s96
      %99 = dma.hbm_to_vmem [thread:$0]  %s8, 64, %s97, [#allocation16]
    $region33: #{vnn_pointnet_cls_forward.1} parent=1 // pred_fallthru
      _
    // Predicated region
    $region34: #{vnn_pointnet_cls_forward.1} parent=1 // pred_check
      _
    $region35: #{vnn_pointnet_cls_forward.1} parent=1 // pred_check_branch
      %101 = sbr.rel (0) target = $region37
    $region36: #{vnn_pointnet_cls_forward.1} parent=1 // pred_region
      %s103 = ssub.s32 32, 32
      %104 = vsyncadd [#allocation19], %s103
      %s106 = sshll.u32 [#allocation18], 4
      %s107 = int_to_ptr.vmem [resolvable:$true] %s106
      %109 = dma.hbm_to_vmem [thread:$0]  %s10, 32, %s107, [#allocation19]
    $region37: #{vnn_pointnet_cls_forward.1} parent=1 // pred_fallthru
      _
    // Predicated region
    $region38: #{vnn_pointnet_cls_forward.1} parent=1 // pred_check
      _
    $region39: #{vnn_pointnet_cls_forward.1} parent=1 // pred_check_branch
      %111 = sbr.rel (0) target = $region41
    $region40: #{vnn_pointnet_cls_forward.1} parent=1 // pred_region
      %s113 = ssub.s32 16, 16
      %114 = vsyncadd [#allocation19], %s113
      %s116 = sshll.u32 [#allocation20], 4
      %s117 = int_to_ptr.vmem [resolvable:$true] %s116
      %119 = dma.hbm_to_vmem [thread:$0]  %s12, 16, %s117, [#allocation19]
    $region41: #{vnn_pointnet_cls_forward.1} parent=1 // pred_fallthru
      _
    // Predicated region
    $region42: #{vnn_pointnet_cls_forward.1} parent=1 // pred_check
      _
    $region43: #{vnn_pointnet_cls_forward.1} parent=1 // pred_check_branch
      %121 = sbr.rel (0) target = $region45
    $region44: #{vnn_pointnet_cls_forward.1} parent=1 // pred_region
      %122 = dma.done [#allocation7], 64
    $region45: #{vnn_pointnet_cls_forward.1} parent=1 // pred_fallthru
      _
    // Predicated region
    $region46: #{vnn_pointnet_cls_forward.1} parent=1 // pred_check
      _
    $region47: #{vnn_pointnet_cls_forward.1} parent=1 // pred_check_branch
      %124 = sbr.rel (0) target = $region49
    $region48: #{vnn_pointnet_cls_forward.1} parent=1 // pred_region
      %125 = dma.done [#allocation10], 16
    $region49: #{vnn_pointnet_cls_forward.1} parent=1 // pred_fallthru
      _
    // Predicated region
    $region50: #{vnn_pointnet_cls_forward.1} parent=1 // pred_check
      _
    $region51: #{vnn_pointnet_cls_forward.1} parent=1 // pred_check_branch
      %127 = sbr.rel (0) target = $region53
    $region52: #{vnn_pointnet_cls_forward.1} parent=1 // pred_region
      %128 = dma.done [#allocation10], 512
    $region53: #{vnn_pointnet_cls_forward.1} parent=1 // pred_fallthru
      _
    // Predicated region
    $region54: #{vnn_pointnet_cls_forward.1} parent=1 // pred_check
      _
    $region55: #{vnn_pointnet_cls_forward.1} parent=1 // pred_check_branch
      %130 = sbr.rel (0) target = $region57
    $region56: #{vnn_pointnet_cls_forward.1} parent=1 // pred_region
      %131 = dma.done [#allocation13], 16
    $region57: #{vnn_pointnet_cls_forward.1} parent=1 // pred_fallthru
      _
    // Predicated region
    $region58: #{vnn_pointnet_cls_forward.1} parent=1 // pred_check
      _
    $region59: #{vnn_pointnet_cls_forward.1} parent=1 // pred_check_branch
      %133 = sbr.rel (0) target = $region61
    $region60: #{vnn_pointnet_cls_forward.1} parent=1 // pred_region
      %134 = dma.done [#allocation13], 16384
    $region61: #{vnn_pointnet_cls_forward.1} parent=1 // pred_fallthru
      _
    // Predicated region
    $region62: #{vnn_pointnet_cls_forward.1} parent=1 // pred_check
      _
    $region63: #{vnn_pointnet_cls_forward.1} parent=1 // pred_check_branch
      %136 = sbr.rel (0) target = $region65
    $region64: #{vnn_pointnet_cls_forward.1} parent=1 // pred_region
      %137 = dma.done [#allocation16], 256
    $region65: #{vnn_pointnet_cls_forward.1} parent=1 // pred_fallthru
      _
    // Predicated region
    $region66: #{vnn_pointnet_cls_forward.1} parent=1 // pred_check
      _
    $region67: #{vnn_pointnet_cls_forward.1} parent=1 // pred_check_branch
      %139 = sbr.rel (0) target = $region69
    $region68: #{vnn_pointnet_cls_forward.1} parent=1 // pred_region
      %140 = dma.done [#allocation16], 64
    $region69: #{vnn_pointnet_cls_forward.1} parent=1 // pred_fallthru
      _
    // Predicated region
    $region70: #{vnn_pointnet_cls_forward.1} parent=1 // pred_check
      _
    $region71: #{vnn_pointnet_cls_forward.1} parent=1 // pred_check_branch
      %142 = sbr.rel (0) target = $region73
    $region72: #{vnn_pointnet_cls_forward.1} parent=1 // pred_region
      %143 = dma.done [#allocation19], 32
    $region73: #{vnn_pointnet_cls_forward.1} parent=1 // pred_fallthru
      _
    // Predicated region
    $region74: #{vnn_pointnet_cls_forward.1} parent=1 // pred_check
      _
    $region75: #{vnn_pointnet_cls_forward.1} parent=1 // pred_check_branch
      %145 = sbr.rel (0) target = $region77
    $region76: #{vnn_pointnet_cls_forward.1} parent=1 // pred_region
      %146 = dma.done [#allocation19], 16
    $region77: #{vnn_pointnet_cls_forward.1} parent=1 // pred_fallthru
      _
    %s149 = sshll.u32 1, 14
    %s150 = sxor.u32 4294967295, %s149
    %s152 = sld [smem:[#allocation0]]
    %s153 = sadd.s32 2, %s152
    %s155 = sshll.u32 7, 26
    %s156 = sxor.u32 4294967295, %s155
    %s157 = sand.u32 0, %s156
    %s158 = sshll.u32 %s153, 26
    %s159 = sor.u32 %s157, %s158
    %s160 = sshll.u32 [#allocation2], 4
    %s161 = int_to_ptr.vmem [resolvable:$true] %s160
    %164 = sst [smem:[#allocation23]] 512
    %s165 = scalar_lea.smem [#allocation23], 1
    %166 = sst [smem:[%s165]] 512
    %s167 = scalar_lea.smem [#allocation23], 2
    %168 = sst [smem:[%s167]] 4
    %s169 = scalar_lea.smem [#allocation23], 3
    %170 = sst [smem:[%s169]] 64
    %s171 = scalar_lea.smem [#allocation23], 4
    %172 = sst [smem:[%s171]] 128
    %s173 = scalar_lea.smem [#allocation23], 5
    %174 = sst [smem:[%s173]] 2
    %s175 = scalar_lea.smem [#allocation23], 6
    %176 = sst [smem:[%s175]] 256
    %s177 = scalar_lea.smem [#allocation23], 7
    %178 = sst [smem:[%s177]] 64
    %s179 = scalar_lea.smem [#allocation23], 8
    %180 = sst [smem:[%s179]] 4
    %182 = dma.general %s7, 65536, %s161, [#allocation5], [#allocation22], [#allocation23], %s159, 0
    %s183 = scalar_lea.sflag [#allocation5], 1
    %s185 = sshll.u32 1, 14
    %s186 = sxor.u32 4294967295, %s185
    %s188 = sadd.s32 2, %s152
    %s190 = sshll.u32 7, 26
    %s191 = sxor.u32 4294967295, %s190
    %s192 = sand.u32 0, %s191
    %s193 = sshll.u32 %s188, 26
    %s194 = sor.u32 %s192, %s193
    %s195 = sshll.u32 [#allocation3], 4
    %s196 = int_to_ptr.vmem [resolvable:$true] %s195
    %199 = sst [smem:[#allocation25]] 256
    %s200 = scalar_lea.smem [#allocation25], 1
    %201 = sst [smem:[%s200]] 256
    %s202 = scalar_lea.smem [#allocation25], 2
    %203 = sst [smem:[%s202]] 2
    %s204 = scalar_lea.smem [#allocation25], 3
    %205 = sst [smem:[%s204]] 64
    %s206 = scalar_lea.smem [#allocation25], 4
    %207 = sst [smem:[%s206]] 128
    %s208 = scalar_lea.smem [#allocation25], 5
    %209 = sst [smem:[%s208]] 2
    %s210 = scalar_lea.smem [#allocation25], 6
    %211 = sst [smem:[%s210]] 128
    %s212 = scalar_lea.smem [#allocation25], 7
    %213 = sst [smem:[%s212]] 64
    %s214 = scalar_lea.smem [#allocation25], 8
    %215 = sst [smem:[%s214]] 4
    %217 = dma.general %s9, 8192, %s196, %s183, [#allocation24], [#allocation25], %s194, 0
    %s218 = scalar_lea.sflag [#allocation5], 2
    // Predicated region
    $region78: #{vnn_pointnet_cls_forward.1} parent=1 // pred_check
      _
    $region79: #{vnn_pointnet_cls_forward.1} parent=1 // pred_check_branch
      %220 = sbr.rel target = $region81
    $region80: #{vnn_pointnet_cls_forward.1} parent=1 // pred_region
      %221 = sst [smem:[#allocation28]] [#allocation27]
      %222 = sst [smem:[#allocation29]] [#allocation26]
    $region81: #{vnn_pointnet_cls_forward.1} parent=1 // pred_fallthru
      _
    %224 = shalt.err (0)
    %s226 = sshll.u32 [#allocation4], 4
    %s227 = int_to_ptr.vmem [resolvable:$true] %s226
    %229 = dma.hbm_to_vmem [thread:$0]  %s11, 2048, %s227, %s218
    %v230 = vld [vmem:[%s0] sm:$0xff]
    %v231 = vld [vmem:[%s0 + $0x8] sm:$0xff]
    %v232 = vld [vmem:[%s0 + $0x10] sm:$0xff]
    %v233 = vld [vmem:[%s0 + $0x18] sm:$0xff]
    %v234 = vld [vmem:[%s0 + $0x20] sm:$0xff]
    %v235 = vld [vmem:[%s0 + $0x28] sm:$0xff]
    %v236 = vld [vmem:[%s0 + $0x30] sm:$0xff]
    %v237 = vld [vmem:[%s0 + $0x38] sm:$0xff]
    %v238 = vld [vmem:[%s0 + $0x40] sm:$0xff]
    %v239 = vld [vmem:[%s0 + $0x48] sm:$0xff]
    %v240 = vld [vmem:[%s0 + $0x50] sm:$0xff]
    %v241 = vld [vmem:[%s0 + $0x58] sm:$0xff]
    %v242 = vld [vmem:[%s0 + $0x60] sm:$0xff]
    %v243 = vld [vmem:[%s0 + $0x68] sm:$0xff]
    %v244 = vld [vmem:[%s0 + $0x70] sm:$0xff]
    %v245 = vld [vmem:[%s0 + $0x78] sm:$0xff]
    %v246 = vld [vmem:[%s0 + $0x80] sm:$0xff]
    %v247 = vld [vmem:[%s0 + $0x88] sm:$0xff]
    %v248 = vld [vmem:[%s0 + $0x90] sm:$0xff]
    %v249 = vld [vmem:[%s0 + $0x98] sm:$0xff]
    %v250 = vld [vmem:[%s0 + $0xa0] sm:$0xff]
    %v251 = vld [vmem:[%s0 + $0xa8] sm:$0xff]
    %v252 = vld [vmem:[%s0 + $0xb0] sm:$0xff]
    %v253 = vld [vmem:[%s0 + $0xb8] sm:$0xff]
    %v254 = vld [vmem:[%s0 + $0xc0] sm:$0xff]
    %v255 = vld [vmem:[%s0 + $0xc8] sm:$0xff]
    %v256 = vld [vmem:[%s0 + $0xd0] sm:$0xff]
    %v257 = vld [vmem:[%s0 + $0xd8] sm:$0xff]
    %v258 = vld [vmem:[%s0 + $0xe0] sm:$0xff]
    %v259 = vld [vmem:[%s0 + $0xe8] sm:$0xff]
    %v260 = vld [vmem:[%s0 + $0xf0] sm:$0xff]
    %v261 = vld [vmem:[%s0 + $0xf8] sm:$0xff]
    %v262 = vld [vmem:[%s0 + $0x100] sm:$0xff]
    %v263 = vld [vmem:[%s0 + $0x108] sm:$0xff]
    %v264 = vld [vmem:[%s0 + $0x110] sm:$0xff]
    %v265 = vld [vmem:[%s0 + $0x118] sm:$0xff]
    %v266 = vld [vmem:[%s0 + $0x120] sm:$0xff]
    %v267 = vld [vmem:[%s0 + $0x128] sm:$0xff]
    %v268 = vld [vmem:[%s0 + $0x130] sm:$0xff]
    %v269 = vld [vmem:[%s0 + $0x138] sm:$0xff]
    %v270 = vld [vmem:[%s0 + $0x140] sm:$0xff]
    %v271 = vld [vmem:[%s0 + $0x148] sm:$0xff]
    %v272 = vld [vmem:[%s0 + $0x150] sm:$0xff]
    %v273 = vld [vmem:[%s0 + $0x158] sm:$0xff]
    %v274 = vld [vmem:[%s0 + $0x160] sm:$0xff]
    %v275 = vld [vmem:[%s0 + $0x168] sm:$0xff]
    %v276 = vld [vmem:[%s0 + $0x170] sm:$0xff]
    %v277 = vld [vmem:[%s0 + $0x178] sm:$0xff]
    %v278 = vld [vmem:[%s0 + $0x180] sm:$0xff]
    %v279 = vld [vmem:[%s0 + $0x188] sm:$0xff]
    %v280 = vld [vmem:[%s0 + $0x190] sm:$0xff]
    %v281 = vld [vmem:[%s0 + $0x198] sm:$0xff]
    %v282 = vld [vmem:[%s0 + $0x1a0] sm:$0xff]
    %v283 = vld [vmem:[%s0 + $0x1a8] sm:$0xff]
    %v284 = vld [vmem:[%s0 + $0x1b0] sm:$0xff]
    %v285 = vld [vmem:[%s0 + $0x1b8] sm:$0xff]
    %v286 = vld [vmem:[%s0 + $0x1c0] sm:$0xff]
    %v287 = vld [vmem:[%s0 + $0x1c8] sm:$0xff]
    %v288 = vld [vmem:[%s0 + $0x1d0] sm:$0xff]
    %v289 = vld [vmem:[%s0 + $0x1d8] sm:$0xff]
    %v290 = vld [vmem:[%s0 + $0x1e0] sm:$0xff]
    %v291 = vld [vmem:[%s0 + $0x1e8] sm:$0xff]
    %v292 = vld [vmem:[%s0 + $0x1f0] sm:$0xff]
    %v293 = vld [vmem:[%s0 + $0x1f8] sm:$0xff]
    %v294 = vld [vmem:[#allocation6] sm:$0x7]
    %296 = vset.pattern.permute.xlu0 0
    %297 = vperm.xlu0 %296, %v230
    %v298 = vpop.permute.xlu0 %297
    %301 = vset.pattern.permute.xlu0 0
    %302 = vperm.xlu0 %301, %v231
    %v303 = vpop.permute.xlu0 %302
    %306 = vset.pattern.permute.xlu0 0
    %307 = vperm.xlu0 %306, %v232
    %v308 = vpop.permute.xlu0 %307
    %311 = vset.pattern.permute.xlu0 0
    %312 = vperm.xlu0 %311, %v233
    %v313 = vpop.permute.xlu0 %312
    %316 = vset.pattern.permute.xlu0 0
    %317 = vperm.xlu0 %316, %v234
    %v318 = vpop.permute.xlu0 %317
    %321 = vset.pattern.permute.xlu0 0
    %322 = vperm.xlu0 %321, %v235
    %v323 = vpop.permute.xlu0 %322
    %326 = vset.pattern.permute.xlu0 0
    %327 = vperm.xlu0 %326, %v236
    %v328 = vpop.permute.xlu0 %327
    %331 = vset.pattern.permute.xlu0 0
    %332 = vperm.xlu0 %331, %v237
    %v333 = vpop.permute.xlu0 %332
    %336 = vset.pattern.permute.xlu0 0
    %337 = vperm.xlu0 %336, %v238
    %v338 = vpop.permute.xlu0 %337
    %341 = vset.pattern.permute.xlu0 0
    %342 = vperm.xlu0 %341, %v239
    %v343 = vpop.permute.xlu0 %342
    %346 = vset.pattern.permute.xlu0 0
    %347 = vperm.xlu0 %346, %v240
    %v348 = vpop.permute.xlu0 %347
    %351 = vset.pattern.permute.xlu0 0
    %352 = vperm.xlu0 %351, %v241
    %v353 = vpop.permute.xlu0 %352
    %356 = vset.pattern.permute.xlu0 0
    %357 = vperm.xlu0 %356, %v242
    %v358 = vpop.permute.xlu0 %357
    %361 = vset.pattern.permute.xlu0 0
    %362 = vperm.xlu0 %361, %v243
    %v363 = vpop.permute.xlu0 %362
    %366 = vset.pattern.permute.xlu0 0
    %367 = vperm.xlu0 %366, %v244
    %v368 = vpop.permute.xlu0 %367
    %371 = vset.pattern.permute.xlu0 0
    %372 = vperm.xlu0 %371, %v245
    %v373 = vpop.permute.xlu0 %372
    %376 = vset.pattern.permute.xlu0 0
    %377 = vperm.xlu0 %376, %v246
    %v378 = vpop.permute.xlu0 %377
    %381 = vset.pattern.permute.xlu0 0
    %382 = vperm.xlu0 %381, %v247
    %v383 = vpop.permute.xlu0 %382
    %386 = vset.pattern.permute.xlu0 0
    %387 = vperm.xlu0 %386, %v248
    %v388 = vpop.permute.xlu0 %387
    %391 = vset.pattern.permute.xlu0 0
    %392 = vperm.xlu0 %391, %v249
    %v393 = vpop.permute.xlu0 %392
    %396 = vset.pattern.permute.xlu0 0
    %397 = vperm.xlu0 %396, %v250
    %v398 = vpop.permute.xlu0 %397
    %401 = vset.pattern.permute.xlu0 0
    %402 = vperm.xlu0 %401, %v251
    %v403 = vpop.permute.xlu0 %402
    %406 = vset.pattern.permute.xlu0 0
    %407 = vperm.xlu0 %406, %v252
    %v408 = vpop.permute.xlu0 %407
    %411 = vset.pattern.permute.xlu0 0
    %412 = vperm.xlu0 %411, %v253
    %v413 = vpop.permute.xlu0 %412
    %416 = vset.pattern.permute.xlu0 0
    %417 = vperm.xlu0 %416, %v254
    %v418 = vpop.permute.xlu0 %417
    %421 = vset.pattern.permute.xlu0 0
    %422 = vperm.xlu0 %421, %v255
    %v423 = vpop.permute.xlu0 %422
    %426 = vset.pattern.permute.xlu0 0
    %427 = vperm.xlu0 %426, %v256
    %v428 = vpop.permute.xlu0 %427
    %431 = vset.pattern.permute.xlu0 0
    %432 = vperm.xlu0 %431, %v257
    %v433 = vpop.permute.xlu0 %432
    %436 = vset.pattern.permute.xlu0 0
    %437 = vperm.xlu0 %436, %v258
    %v438 = vpop.permute.xlu0 %437
    %441 = vset.pattern.permute.xlu0 0
    %442 = vperm.xlu0 %441, %v259
    %v443 = vpop.permute.xlu0 %442
    %446 = vset.pattern.permute.xlu0 0
    %447 = vperm.xlu0 %446, %v260
    %v448 = vpop.permute.xlu0 %447
    %451 = vset.pattern.permute.xlu0 0
    %452 = vperm.xlu0 %451, %v261
    %v453 = vpop.permute.xlu0 %452
    %456 = vset.pattern.permute.xlu0 0
    %457 = vperm.xlu0 %456, %v262
    %v458 = vpop.permute.xlu0 %457
    %461 = vset.pattern.permute.xlu0 0
    %462 = vperm.xlu0 %461, %v263
    %v463 = vpop.permute.xlu0 %462
    %466 = vset.pattern.permute.xlu0 0
    %467 = vperm.xlu0 %466, %v264
    %v468 = vpop.permute.xlu0 %467
    %471 = vset.pattern.permute.xlu0 0
    %472 = vperm.xlu0 %471, %v265
    %v473 = vpop.permute.xlu0 %472
    %476 = vset.pattern.permute.xlu0 0
    %477 = vperm.xlu0 %476, %v266
    %v478 = vpop.permute.xlu0 %477
    %481 = vset.pattern.permute.xlu0 0
    %482 = vperm.xlu0 %481, %v267
    %v483 = vpop.permute.xlu0 %482
    %486 = vset.pattern.permute.xlu0 0
    %487 = vperm.xlu0 %486, %v268
    %v488 = vpop.permute.xlu0 %487
    %491 = vset.pattern.permute.xlu0 0
    %492 = vperm.xlu0 %491, %v269
    %v493 = vpop.permute.xlu0 %492
    %496 = vset.pattern.permute.xlu0 0
    %497 = vperm.xlu0 %496, %v270
    %v498 = vpop.permute.xlu0 %497
    %501 = vset.pattern.permute.xlu0 0
    %502 = vperm.xlu0 %501, %v271
    %v503 = vpop.permute.xlu0 %502
    %506 = vset.pattern.permute.xlu0 0
    %507 = vperm.xlu0 %506, %v272
    %v508 = vpop.permute.xlu0 %507
    %511 = vset.pattern.permute.xlu0 0
    %512 = vperm.xlu0 %511, %v273
    %v513 = vpop.permute.xlu0 %512
    %516 = vset.pattern.permute.xlu0 0
    %517 = vperm.xlu0 %516, %v274
    %v518 = vpop.permute.xlu0 %517
    %521 = vset.pattern.permute.xlu0 0
    %522 = vperm.xlu0 %521, %v275
    %v523 = vpop.permute.xlu0 %522
    %526 = vset.pattern.permute.xlu0 0
    %527 = vperm.xlu0 %526, %v276
    %v528 = vpop.permute.xlu0 %527
    %531 = vset.pattern.permute.xlu0 0
    %532 = vperm.xlu0 %531, %v277
    %v533 = vpop.permute.xlu0 %532
    %536 = vset.pattern.permute.xlu0 0
    %537 = vperm.xlu0 %536, %v278
    %v538 = vpop.permute.xlu0 %537
    %541 = vset.pattern.permute.xlu0 0
    %542 = vperm.xlu0 %541, %v279
    %v543 = vpop.permute.xlu0 %542
    %546 = vset.pattern.permute.xlu0 0
    %547 = vperm.xlu0 %546, %v280
    %v548 = vpop.permute.xlu0 %547
    %551 = vset.pattern.permute.xlu0 0
    %552 = vperm.xlu0 %551, %v281
    %v553 = vpop.permute.xlu0 %552
    %556 = vset.pattern.permute.xlu0 0
    %557 = vperm.xlu0 %556, %v282
    %v558 = vpop.permute.xlu0 %557
    %561 = vset.pattern.permute.xlu0 0
    %562 = vperm.xlu0 %561, %v283
    %v563 = vpop.permute.xlu0 %562
    %566 = vset.pattern.permute.xlu0 0
    %567 = vperm.xlu0 %566, %v284
    %v568 = vpop.permute.xlu0 %567
    %571 = vset.pattern.permute.xlu0 0
    %572 = vperm.xlu0 %571, %v285
    %v573 = vpop.permute.xlu0 %572
    %576 = vset.pattern.permute.xlu0 0
    %577 = vperm.xlu0 %576, %v286
    %v578 = vpop.permute.xlu0 %577
    %581 = vset.pattern.permute.xlu0 0
    %582 = vperm.xlu0 %581, %v287
    %v583 = vpop.permute.xlu0 %582
    %586 = vset.pattern.permute.xlu0 0
    %587 = vperm.xlu0 %586, %v288
    %v588 = vpop.permute.xlu0 %587
    %591 = vset.pattern.permute.xlu0 0
    %592 = vperm.xlu0 %591, %v289
    %v593 = vpop.permute.xlu0 %592
    %596 = vset.pattern.permute.xlu0 0
    %597 = vperm.xlu0 %596, %v290
    %v598 = vpop.permute.xlu0 %597
    %601 = vset.pattern.permute.xlu0 0
    %602 = vperm.xlu0 %601, %v291
    %v603 = vpop.permute.xlu0 %602
    %606 = vset.pattern.permute.xlu0 0
    %607 = vperm.xlu0 %606, %v292
    %v608 = vpop.permute.xlu0 %607
    %611 = vset.pattern.permute.xlu0 0
    %612 = vperm.xlu0 %611, %v293
    %v613 = vpop.permute.xlu0 %612
    %v615 = vlaneseq
    %v616 = vshrl.u32 %v615, 7
    %v617 = vsub.s32 0, %v616
    %v618 = vrot.slane %v294, %v617
    %v619 = vmul.f32 %v298, %v618
    %v620 = vmul.f32 %v303, %v618
    %v621 = vmul.f32 %v308, %v618
    %v622 = vmul.f32 %v313, %v618
    %v623 = vmul.f32 %v318, %v618
    %v624 = vmul.f32 %v323, %v618
    %v625 = vmul.f32 %v328, %v618
    %v626 = vmul.f32 %v333, %v618
    %v627 = vmul.f32 %v338, %v618
    %v628 = vmul.f32 %v343, %v618
    %v629 = vmul.f32 %v348, %v618
    %v630 = vmul.f32 %v353, %v618
    %v631 = vmul.f32 %v358, %v618
    %v632 = vmul.f32 %v363, %v618
    %v633 = vmul.f32 %v368, %v618
    %v634 = vmul.f32 %v373, %v618
    %v635 = vmul.f32 %v378, %v618
    %v636 = vmul.f32 %v383, %v618
    %v637 = vmul.f32 %v388, %v618
    %v638 = vmul.f32 %v393, %v618
    %v639 = vmul.f32 %v398, %v618
    %v640 = vmul.f32 %v403, %v618
    %v641 = vmul.f32 %v408, %v618
    %v642 = vmul.f32 %v413, %v618
    %v643 = vmul.f32 %v418, %v618
    %v644 = vmul.f32 %v423, %v618
    %v645 = vmul.f32 %v428, %v618
    %v646 = vmul.f32 %v433, %v618
    %v647 = vmul.f32 %v438, %v618
    %v648 = vmul.f32 %v443, %v618
    %v649 = vmul.f32 %v448, %v618
    %v650 = vmul.f32 %v453, %v618
    %v651 = vmul.f32 %v458, %v618
    %v652 = vmul.f32 %v463, %v618
    %v653 = vmul.f32 %v468, %v618
    %v654 = vmul.f32 %v473, %v618
    %v655 = vmul.f32 %v478, %v618
    %v656 = vmul.f32 %v483, %v618
    %v657 = vmul.f32 %v488, %v618
    %v658 = vmul.f32 %v493, %v618
    %v659 = vmul.f32 %v498, %v618
    %v660 = vmul.f32 %v503, %v618
    %v661 = vmul.f32 %v508, %v618
    %v662 = vmul.f32 %v513, %v618
    %v663 = vmul.f32 %v518, %v618
    %v664 = vmul.f32 %v523, %v618
    %v665 = vmul.f32 %v528, %v618
    %v666 = vmul.f32 %v533, %v618
    %v667 = vmul.f32 %v538, %v618
    %v668 = vmul.f32 %v543, %v618
    %v669 = vmul.f32 %v548, %v618
    %v670 = vmul.f32 %v553, %v618
    %v671 = vmul.f32 %v558, %v618
    %v672 = vmul.f32 %v563, %v618
    %v673 = vmul.f32 %v568, %v618
    %v674 = vmul.f32 %v573, %v618
    %v675 = vmul.f32 %v578, %v618
    %v676 = vmul.f32 %v583, %v618
    %v677 = vmul.f32 %v588, %v618
    %v678 = vmul.f32 %v593, %v618
    %v679 = vmul.f32 %v598, %v618
    %v680 = vmul.f32 %v603, %v618
    %v681 = vmul.f32 %v608, %v618
    %v682 = vmul.f32 %v613, %v618
    %683 = vset.pattern.permute.xlu0 1
    %684 = vperm.xlu0 %683, %v230
    %v685 = vpop.permute.xlu0 %684
    %687 = vset.pattern.permute.xlu0 1
    %688 = vperm.xlu0 %687, %v231
    %v689 = vpop.permute.xlu0 %688
    %691 = vset.pattern.permute.xlu0 1
    %692 = vperm.xlu0 %691, %v232
    %v693 = vpop.permute.xlu0 %692
    %695 = vset.pattern.permute.xlu0 1
    %696 = vperm.xlu0 %695, %v233
    %v697 = vpop.permute.xlu0 %696
    %699 = vset.pattern.permute.xlu0 1
    %700 = vperm.xlu0 %699, %v234
    %v701 = vpop.permute.xlu0 %700
    %703 = vset.pattern.permute.xlu0 1
    %704 = vperm.xlu0 %703, %v235
    %v705 = vpop.permute.xlu0 %704
    %707 = vset.pattern.permute.xlu0 1
    %708 = vperm.xlu0 %707, %v236
    %v709 = vpop.permute.xlu0 %708
    %711 = vset.pattern.permute.xlu0 1
    %712 = vperm.xlu0 %711, %v237
    %v713 = vpop.permute.xlu0 %712
    %715 = vset.pattern.permute.xlu0 1
    %716 = vperm.xlu0 %715, %v238
    %v717 = vpop.permute.xlu0 %716
    %719 = vset.pattern.permute.xlu0 1
    %720 = vperm.xlu0 %719, %v239
    %v721 = vpop.permute.xlu0 %720
    %723 = vset.pattern.permute.xlu0 1
    %724 = vperm.xlu0 %723, %v240
    %v725 = vpop.permute.xlu0 %724
    %727 = vset.pattern.permute.xlu0 1
    %728 = vperm.xlu0 %727, %v241
    %v729 = vpop.permute.xlu0 %728
    %731 = vset.pattern.permute.xlu0 1
    %732 = vperm.xlu0 %731, %v242
    %v733 = vpop.permute.xlu0 %732
    %735 = vset.pattern.permute.xlu0 1
    %736 = vperm.xlu0 %735, %v243
    %v737 = vpop.permute.xlu0 %736
    %739 = vset.pattern.permute.xlu0 1
    %740 = vperm.xlu0 %739, %v244
    %v741 = vpop.permute.xlu0 %740
    %743 = vset.pattern.permute.xlu0 1
    %744 = vperm.xlu0 %743, %v245
    %v745 = vpop.permute.xlu0 %744
    %747 = vset.pattern.permute.xlu0 1
    %748 = vperm.xlu0 %747, %v246
    %v749 = vpop.permute.xlu0 %748
    %751 = vset.pattern.permute.xlu0 1
    %752 = vperm.xlu0 %751, %v247
    %v753 = vpop.permute.xlu0 %752
    %755 = vset.pattern.permute.xlu0 1
    %756 = vperm.xlu0 %755, %v248
    %v757 = vpop.permute.xlu0 %756
    %759 = vset.pattern.permute.xlu0 1
    %760 = vperm.xlu0 %759, %v249
    %v761 = vpop.permute.xlu0 %760
    %763 = vset.pattern.permute.xlu0 1
    %764 = vperm.xlu0 %763, %v250
    %v765 = vpop.permute.xlu0 %764
    %767 = vset.pattern.permute.xlu0 1
    %768 = vperm.xlu0 %767, %v251
    %v769 = vpop.permute.xlu0 %768
    %771 = vset.pattern.permute.xlu0 1
    %772 = vperm.xlu0 %771, %v252
    %v773 = vpop.permute.xlu0 %772
    %775 = vset.pattern.permute.xlu0 1
    %776 = vperm.xlu0 %775, %v253
    %v777 = vpop.permute.xlu0 %776
    %779 = vset.pattern.permute.xlu0 1
    %780 = vperm.xlu0 %779, %v254
    %v781 = vpop.permute.xlu0 %780
    %783 = vset.pattern.permute.xlu0 1
    %784 = vperm.xlu0 %783, %v255
    %v785 = vpop.permute.xlu0 %784
    %787 = vset.pattern.permute.xlu0 1
    %788 = vperm.xlu0 %787, %v256
    %v789 = vpop.permute.xlu0 %788
    %791 = vset.pattern.permute.xlu0 1
    %792 = vperm.xlu0 %791, %v257
    %v793 = vpop.permute.xlu0 %792
    %795 = vset.pattern.permute.xlu0 1
    %796 = vperm.xlu0 %795, %v258
    %v797 = vpop.permute.xlu0 %796
    %799 = vset.pattern.permute.xlu0 1
    %800 = vperm.xlu0 %799, %v259
    %v801 = vpop.permute.xlu0 %800
    %803 = vset.pattern.permute.xlu0 1
    %804 = vperm.xlu0 %803, %v260
    %v805 = vpop.permute.xlu0 %804
    %807 = vset.pattern.permute.xlu0 1
    %808 = vperm.xlu0 %807, %v261
    %v809 = vpop.permute.xlu0 %808
    %811 = vset.pattern.permute.xlu0 1
    %812 = vperm.xlu0 %811, %v262
    %v813 = vpop.permute.xlu0 %812
    %815 = vset.pattern.permute.xlu0 1
    %816 = vperm.xlu0 %815, %v263
    %v817 = vpop.permute.xlu0 %816
    %819 = vset.pattern.permute.xlu0 1
    %820 = vperm.xlu0 %819, %v264
    %v821 = vpop.permute.xlu0 %820
    %823 = vset.pattern.permute.xlu0 1
    %824 = vperm.xlu0 %823, %v265
    %v825 = vpop.permute.xlu0 %824
    %827 = vset.pattern.permute.xlu0 1
    %828 = vperm.xlu0 %827, %v266
    %v829 = vpop.permute.xlu0 %828
    %831 = vset.pattern.permute.xlu0 1
    %832 = vperm.xlu0 %831, %v267
    %v833 = vpop.permute.xlu0 %832
    %835 = vset.pattern.permute.xlu0 1
    %836 = vperm.xlu0 %835, %v268
    %v837 = vpop.permute.xlu0 %836
    %839 = vset.pattern.permute.xlu0 1
    %840 = vperm.xlu0 %839, %v269
    %v841 = vpop.permute.xlu0 %840
    %843 = vset.pattern.permute.xlu0 1
    %844 = vperm.xlu0 %843, %v270
    %v845 = vpop.permute.xlu0 %844
    %847 = vset.pattern.permute.xlu0 1
    %848 = vperm.xlu0 %847, %v271
    %v849 = vpop.permute.xlu0 %848
    %851 = vset.pattern.permute.xlu0 1
    %852 = vperm.xlu0 %851, %v272
    %v853 = vpop.permute.xlu0 %852
    %855 = vset.pattern.permute.xlu0 1
    %856 = vperm.xlu0 %855, %v273
    %v857 = vpop.permute.xlu0 %856
    %859 = vset.pattern.permute.xlu0 1
    %860 = vperm.xlu0 %859, %v274
    %v861 = vpop.permute.xlu0 %860
    %863 = vset.pattern.permute.xlu0 1
    %864 = vperm.xlu0 %863, %v275
    %v865 = vpop.permute.xlu0 %864
    %867 = vset.pattern.permute.xlu0 1
    %868 = vperm.xlu0 %867, %v276
    %v869 = vpop.permute.xlu0 %868
    %871 = vset.pattern.permute.xlu0 1
    %872 = vperm.xlu0 %871, %v277
    %v873 = vpop.permute.xlu0 %872
    %875 = vset.pattern.permute.xlu0 1
    %876 = vperm.xlu0 %875, %v278
    %v877 = vpop.permute.xlu0 %876
    %879 = vset.pattern.permute.xlu0 1
    %880 = vperm.xlu0 %879, %v279
    %v881 = vpop.permute.xlu0 %880
    %883 = vset.pattern.permute.xlu0 1
    %884 = vperm.xlu0 %883, %v280
    %v885 = vpop.permute.xlu0 %884
    %887 = vset.pattern.permute.xlu0 1
    %888 = vperm.xlu0 %887, %v281
    %v889 = vpop.permute.xlu0 %888
    %891 = vset.pattern.permute.xlu0 1
    %892 = vperm.xlu0 %891, %v282
    %v893 = vpop.permute.xlu0 %892
    %895 = vset.pattern.permute.xlu0 1
    %896 = vperm.xlu0 %895, %v283
    %v897 = vpop.permute.xlu0 %896
    %899 = vset.pattern.permute.xlu0 1
    %900 = vperm.xlu0 %899, %v284
    %v901 = vpop.permute.xlu0 %900
    %903 = vset.pattern.permute.xlu0 1
    %904 = vperm.xlu0 %903, %v285
    %v905 = vpop.permute.xlu0 %904
    %907 = vset.pattern.permute.xlu0 1
    %908 = vperm.xlu0 %907, %v286
    %v909 = vpop.permute.xlu0 %908
    %911 = vset.pattern.permute.xlu0 1
    %912 = vperm.xlu0 %911, %v287
    %v913 = vpop.permute.xlu0 %912
    %915 = vset.pattern.permute.xlu0 1
    %916 = vperm.xlu0 %915, %v288
    %v917 = vpop.permute.xlu0 %916
    %919 = vset.pattern.permute.xlu0 1
    %920 = vperm.xlu0 %919, %v289
    %v921 = vpop.permute.xlu0 %920
    %923 = vset.pattern.permute.xlu0 1
    %924 = vperm.xlu0 %923, %v290
    %v925 = vpop.permute.xlu0 %924
    %927 = vset.pattern.permute.xlu0 1
    %928 = vperm.xlu0 %927, %v291
    %v929 = vpop.permute.xlu0 %928
    %931 = vset.pattern.permute.xlu0 1
    %932 = vperm.xlu0 %931, %v292
    %v933 = vpop.permute.xlu0 %932
    %935 = vset.pattern.permute.xlu0 1
    %936 = vperm.xlu0 %935, %v293
    %v937 = vpop.permute.xlu0 %936
    %v939 = vlaneseq
    %v940 = vshrl.u32 %v939, 7
    %v941 = vsub.s32 1, %v940
    %v942 = vrot.slane %v294, %v941
    %v943 = vmul.f32 %v685, %v942
    %v944 = vmul.f32 %v689, %v942
    %v945 = vmul.f32 %v693, %v942
    %v946 = vmul.f32 %v697, %v942
    %v947 = vmul.f32 %v701, %v942
    %v948 = vmul.f32 %v705, %v942
    %v949 = vmul.f32 %v709, %v942
    %v950 = vmul.f32 %v713, %v942
    %v951 = vmul.f32 %v717, %v942
    %v952 = vmul.f32 %v721, %v942
    %v953 = vmul.f32 %v725, %v942
    %v954 = vmul.f32 %v729, %v942
    %v955 = vmul.f32 %v733, %v942
    %v956 = vmul.f32 %v737, %v942
    %v957 = vmul.f32 %v741, %v942
    %v958 = vmul.f32 %v745, %v942
    %v959 = vmul.f32 %v749, %v942
    %v960 = vmul.f32 %v753, %v942
    %v961 = vmul.f32 %v757, %v942
    %v962 = vmul.f32 %v761, %v942
    %v963 = vmul.f32 %v765, %v942
    %v964 = vmul.f32 %v769, %v942
    %v965 = vmul.f32 %v773, %v942
    %v966 = vmul.f32 %v777, %v942
    %v967 = vmul.f32 %v781, %v942
    %v968 = vmul.f32 %v785, %v942
    %v969 = vmul.f32 %v789, %v942
    %v970 = vmul.f32 %v793, %v942
    %v971 = vmul.f32 %v797, %v942
    %v972 = vmul.f32 %v801, %v942
    %v973 = vmul.f32 %v805, %v942
    %v974 = vmul.f32 %v809, %v942
    %v975 = vmul.f32 %v813, %v942
    %v976 = vmul.f32 %v817, %v942
    %v977 = vmul.f32 %v821, %v942
    %v978 = vmul.f32 %v825, %v942
    %v979 = vmul.f32 %v829, %v942
    %v980 = vmul.f32 %v833, %v942
    %v981 = vmul.f32 %v837, %v942
    %v982 = vmul.f32 %v841, %v942
    %v983 = vmul.f32 %v845, %v942
    %v984 = vmul.f32 %v849, %v942
    %v985 = vmul.f32 %v853, %v942
    %v986 = vmul.f32 %v857, %v942
    %v987 = vmul.f32 %v861, %v942
    %v988 = vmul.f32 %v865, %v942
    %v989 = vmul.f32 %v869, %v942
    %v990 = vmul.f32 %v873, %v942
    %v991 = vmul.f32 %v877, %v942
    %v992 = vmul.f32 %v881, %v942
    %v993 = vmul.f32 %v885, %v942
    %v994 = vmul.f32 %v889, %v942
    %v995 = vmul.f32 %v893, %v942
    %v996 = vmul.f32 %v897, %v942
    %v997 = vmul.f32 %v901, %v942
    %v998 = vmul.f32 %v905, %v942
    %v999 = vmul.f32 %v909, %v942
    %v1000 = vmul.f32 %v913, %v942
    %v1001 = vmul.f32 %v917, %v942
    %v1002 = vmul.f32 %v921, %v942
    %v1003 = vmul.f32 %v925, %v942
    %v1004 = vmul.f32 %v929, %v942
    %v1005 = vmul.f32 %v933, %v942
    %v1006 = vmul.f32 %v937, %v942
    %v1007 = vadd.f32 %v619, %v943
    %v1008 = vadd.f32 %v620, %v944
    %v1009 = vadd.f32 %v621, %v945
    %v1010 = vadd.f32 %v622, %v946
    %v1011 = vadd.f32 %v623, %v947
    %v1012 = vadd.f32 %v624, %v948
    %v1013 = vadd.f32 %v625, %v949
    %v1014 = vadd.f32 %v626, %v950
    %v1015 = vadd.f32 %v627, %v951
    %v1016 = vadd.f32 %v628, %v952
    %v1017 = vadd.f32 %v629, %v953
    %v1018 = vadd.f32 %v630, %v954
    %v1019 = vadd.f32 %v631, %v955
    %v1020 = vadd.f32 %v632, %v956
    %v1021 = vadd.f32 %v633, %v957
    %v1022 = vadd.f32 %v634, %v958
    %v1023 = vadd.f32 %v635, %v959
    %v1024 = vadd.f32 %v636, %v960
    %v1025 = vadd.f32 %v637, %v961
    %v1026 = vadd.f32 %v638, %v962
    %v1027 = vadd.f32 %v639, %v963
    %v1028 = vadd.f32 %v640, %v964
    %v1029 = vadd.f32 %v641, %v965
    %v1030 = vadd.f32 %v642, %v966
    %v1031 = vadd.f32 %v643, %v967
    %v1032 = vadd.f32 %v644, %v968
    %v1033 = vadd.f32 %v645, %v969
    %v1034 = vadd.f32 %v646, %v970
    %v1035 = vadd.f32 %v647, %v971
    %v1036 = vadd.f32 %v648, %v972
    %v1037 = vadd.f32 %v649, %v973
    %v1038 = vadd.f32 %v650, %v974
    %v1039 = vadd.f32 %v651, %v975
    %v1040 = vadd.f32 %v652, %v976
    %v1041 = vadd.f32 %v653, %v977
    %v1042 = vadd.f32 %v654, %v978
    %v1043 = vadd.f32 %v655, %v979
    %v1044 = vadd.f32 %v656, %v980
    %v1045 = vadd.f32 %v657, %v981
    %v1046 = vadd.f32 %v658, %v982
    %v1047 = vadd.f32 %v659, %v983
    %v1048 = vadd.f32 %v660, %v984
    %v1049 = vadd.f32 %v661, %v985
    %v1050 = vadd.f32 %v662, %v986
    %v1051 = vadd.f32 %v663, %v987
    %v1052 = vadd.f32 %v664, %v988
    %v1053 = vadd.f32 %v665, %v989
    %v1054 = vadd.f32 %v666, %v990
    %v1055 = vadd.f32 %v667, %v991
    %v1056 = vadd.f32 %v668, %v992
    %v1057 = vadd.f32 %v669, %v993
    %v1058 = vadd.f32 %v670, %v994
    %v1059 = vadd.f32 %v671, %v995
    %v1060 = vadd.f32 %v672, %v996
    %v1061 = vadd.f32 %v673, %v997
    %v1062 = vadd.f32 %v674, %v998
    %v1063 = vadd.f32 %v675, %v999
    %v1064 = vadd.f32 %v676, %v1000
    %v1065 = vadd.f32 %v677, %v1001
    %v1066 = vadd.f32 %v678, %v1002
    %v1067 = vadd.f32 %v679, %v1003
    %v1068 = vadd.f32 %v680, %v1004
    %v1069 = vadd.f32 %v681, %v1005
    %v1070 = vadd.f32 %v682, %v1006
    %1071 = vset.pattern.permute.xlu0 2
    %1072 = vperm.xlu0 %1071, %v230
    %v1073 = vpop.permute.xlu0 %1072
    %1075 = vset.pattern.permute.xlu0 2
    %1076 = vperm.xlu0 %1075, %v231
    %v1077 = vpop.permute.xlu0 %1076
    %1079 = vset.pattern.permute.xlu0 2
    %1080 = vperm.xlu0 %1079, %v232
    %v1081 = vpop.permute.xlu0 %1080
    %1083 = vset.pattern.permute.xlu0 2
    %1084 = vperm.xlu0 %1083, %v233
    %v1085 = vpop.permute.xlu0 %1084
    %1087 = vset.pattern.permute.xlu0 2
    %1088 = vperm.xlu0 %1087, %v234
    %v1089 = vpop.permute.xlu0 %1088
    %1091 = vset.pattern.permute.xlu0 2
    %1092 = vperm.xlu0 %1091, %v235
    %v1093 = vpop.permute.xlu0 %1092
    %1095 = vset.pattern.permute.xlu0 2
    %1096 = vperm.xlu0 %1095, %v236
    %v1097 = vpop.permute.xlu0 %1096
    %1099 = vset.pattern.permute.xlu0 2
    %1100 = vperm.xlu0 %1099, %v237
    %v1101 = vpop.permute.xlu0 %1100
    %1103 = vset.pattern.permute.xlu0 2
    %1104 = vperm.xlu0 %1103, %v238
    %v1105 = vpop.permute.xlu0 %1104
    %1107 = vset.pattern.permute.xlu0 2
    %1108 = vperm.xlu0 %1107, %v239
    %v1109 = vpop.permute.xlu0 %1108
    %1111 = vset.pattern.permute.xlu0 2
    %1112 = vperm.xlu0 %1111, %v240
    %v1113 = vpop.permute.xlu0 %1112
    %1115 = vset.pattern.permute.xlu0 2
    %1116 = vperm.xlu0 %1115, %v241
    %v1117 = vpop.permute.xlu0 %1116
    %1119 = vset.pattern.permute.xlu0 2
    %1120 = vperm.xlu0 %1119, %v242
    %v1121 = vpop.permute.xlu0 %1120
    %1123 = vset.pattern.permute.xlu0 2
    %1124 = vperm.xlu0 %1123, %v243
    %v1125 = vpop.permute.xlu0 %1124
    %1127 = vset.pattern.permute.xlu0 2
    %1128 = vperm.xlu0 %1127, %v244
    %v1129 = vpop.permute.xlu0 %1128
    %1131 = vset.pattern.permute.xlu0 2
    %1132 = vperm.xlu0 %1131, %v245
    %v1133 = vpop.permute.xlu0 %1132
    %1135 = vset.pattern.permute.xlu0 2
    %1136 = vperm.xlu0 %1135, %v246
    %v1137 = vpop.permute.xlu0 %1136
    %1139 = vset.pattern.permute.xlu0 2
    %1140 = vperm.xlu0 %1139, %v247
    %v1141 = vpop.permute.xlu0 %1140
    %1143 = vset.pattern.permute.xlu0 2
    %1144 = vperm.xlu0 %1143, %v248
    %v1145 = vpop.permute.xlu0 %1144
    %1147 = vset.pattern.permute.xlu0 2
    %1148 = vperm.xlu0 %1147, %v249
    %v1149 = vpop.permute.xlu0 %1148
    %1151 = vset.pattern.permute.xlu0 2
    %1152 = vperm.xlu0 %1151, %v250
    %v1153 = vpop.permute.xlu0 %1152
    %1155 = vset.pattern.permute.xlu0 2
    %1156 = vperm.xlu0 %1155, %v251
    %v1157 = vpop.permute.xlu0 %1156
    %1159 = vset.pattern.permute.xlu0 2
    %1160 = vperm.xlu0 %1159, %v252
    %v1161 = vpop.permute.xlu0 %1160
    %1163 = vset.pattern.permute.xlu0 2
    %1164 = vperm.xlu0 %1163, %v253
    %v1165 = vpop.permute.xlu0 %1164
    %1167 = vset.pattern.permute.xlu0 2
    %1168 = vperm.xlu0 %1167, %v254
    %v1169 = vpop.permute.xlu0 %1168
    %1171 = vset.pattern.permute.xlu0 2
    %1172 = vperm.xlu0 %1171, %v255
    %v1173 = vpop.permute.xlu0 %1172
    %1175 = vset.pattern.permute.xlu0 2
    %1176 = vperm.xlu0 %1175, %v256
    %v1177 = vpop.permute.xlu0 %1176
    %1179 = vset.pattern.permute.xlu0 2
    %1180 = vperm.xlu0 %1179, %v257
    %v1181 = vpop.permute.xlu0 %1180
    %1183 = vset.pattern.permute.xlu0 2
    %1184 = vperm.xlu0 %1183, %v258
    %v1185 = vpop.permute.xlu0 %1184
    %1187 = vset.pattern.permute.xlu0 2
    %1188 = vperm.xlu0 %1187, %v259
    %v1189 = vpop.permute.xlu0 %1188
    %1191 = vset.pattern.permute.xlu0 2
    %1192 = vperm.xlu0 %1191, %v260
    %v1193 = vpop.permute.xlu0 %1192
    %1195 = vset.pattern.permute.xlu0 2
    %1196 = vperm.xlu0 %1195, %v261
    %v1197 = vpop.permute.xlu0 %1196
    %1199 = vset.pattern.permute.xlu0 2
    %1200 = vperm.xlu0 %1199, %v262
    %v1201 = vpop.permute.xlu0 %1200
    %1203 = vset.pattern.permute.xlu0 2
    %1204 = vperm.xlu0 %1203, %v263
    %v1205 = vpop.permute.xlu0 %1204
    %1207 = vset.pattern.permute.xlu0 2
    %1208 = vperm.xlu0 %1207, %v264
    %v1209 = vpop.permute.xlu0 %1208
    %1211 = vset.pattern.permute.xlu0 2
    %1212 = vperm.xlu0 %1211, %v265
    %v1213 = vpop.permute.xlu0 %1212
    %1215 = vset.pattern.permute.xlu0 2
    %1216 = vperm.xlu0 %1215, %v266
    %v1217 = vpop.permute.xlu0 %1216
    %1219 = vset.pattern.permute.xlu0 2
    %1220 = vperm.xlu0 %1219, %v267
    %v1221 = vpop.permute.xlu0 %1220
    %1223 = vset.pattern.permute.xlu0 2
    %1224 = vperm.xlu0 %1223, %v268
    %v1225 = vpop.permute.xlu0 %1224
    %1227 = vset.pattern.permute.xlu0 2
    %1228 = vperm.xlu0 %1227, %v269
    %v1229 = vpop.permute.xlu0 %1228
    %1231 = vset.pattern.permute.xlu0 2
    %1232 = vperm.xlu0 %1231, %v270
    %v1233 = vpop.permute.xlu0 %1232
    %1235 = vset.pattern.permute.xlu0 2
    %1236 = vperm.xlu0 %1235, %v271
    %v1237 = vpop.permute.xlu0 %1236
    %1239 = vset.pattern.permute.xlu0 2
    %1240 = vperm.xlu0 %1239, %v272
    %v1241 = vpop.permute.xlu0 %1240
    %1243 = vset.pattern.permute.xlu0 2
    %1244 = vperm.xlu0 %1243, %v273
    %v1245 = vpop.permute.xlu0 %1244
    %1247 = vset.pattern.permute.xlu0 2
    %1248 = vperm.xlu0 %1247, %v274
    %v1249 = vpop.permute.xlu0 %1248
    %1251 = vset.pattern.permute.xlu0 2
    %1252 = vperm.xlu0 %1251, %v275
    %v1253 = vpop.permute.xlu0 %1252
    %1255 = vset.pattern.permute.xlu0 2
    %1256 = vperm.xlu0 %1255, %v276
    %v1257 = vpop.permute.xlu0 %1256
    %1259 = vset.pattern.permute.xlu0 2
    %1260 = vperm.xlu0 %1259, %v277
    %v1261 = vpop.permute.xlu0 %1260
    %1263 = vset.pattern.permute.xlu0 2
    %1264 = vperm.xlu0 %1263, %v278
    %v1265 = vpop.permute.xlu0 %1264
    %1267 = vset.pattern.permute.xlu0 2
    %1268 = vperm.xlu0 %1267, %v279
    %v1269 = vpop.permute.xlu0 %1268
    %1271 = vset.pattern.permute.xlu0 2
    %1272 = vperm.xlu0 %1271, %v280
    %v1273 = vpop.permute.xlu0 %1272
    %1275 = vset.pattern.permute.xlu0 2
    %1276 = vperm.xlu0 %1275, %v281
    %v1277 = vpop.permute.xlu0 %1276
    %1279 = vset.pattern.permute.xlu0 2
    %1280 = vperm.xlu0 %1279, %v282
    %v1281 = vpop.permute.xlu0 %1280
    %1283 = vset.pattern.permute.xlu0 2
    %1284 = vperm.xlu0 %1283, %v283
    %v1285 = vpop.permute.xlu0 %1284
    %1287 = vset.pattern.permute.xlu0 2
    %1288 = vperm.xlu0 %1287, %v284
    %v1289 = vpop.permute.xlu0 %1288
    %1291 = vset.pattern.permute.xlu0 2
    %1292 = vperm.xlu0 %1291, %v285
    %v1293 = vpop.permute.xlu0 %1292
    %1295 = vset.pattern.permute.xlu0 2
    %1296 = vperm.xlu0 %1295, %v286
    %v1297 = vpop.permute.xlu0 %1296
    %1299 = vset.pattern.permute.xlu0 2
    %1300 = vperm.xlu0 %1299, %v287
    %v1301 = vpop.permute.xlu0 %1300
    %1303 = vset.pattern.permute.xlu0 2
    %1304 = vperm.xlu0 %1303, %v288
    %v1305 = vpop.permute.xlu0 %1304
    %1307 = vset.pattern.permute.xlu0 2
    %1308 = vperm.xlu0 %1307, %v289
    %v1309 = vpop.permute.xlu0 %1308
    %1311 = vset.pattern.permute.xlu0 2
    %1312 = vperm.xlu0 %1311, %v290
    %v1313 = vpop.permute.xlu0 %1312
    %1315 = vset.pattern.permute.xlu0 2
    %1316 = vperm.xlu0 %1315, %v291
    %v1317 = vpop.permute.xlu0 %1316
    %1319 = vset.pattern.permute.xlu0 2
    %1320 = vperm.xlu0 %1319, %v292
    %v1321 = vpop.permute.xlu0 %1320
    %1323 = vset.pattern.permute.xlu0 2
    %1324 = vperm.xlu0 %1323, %v293
    %v1325 = vpop.permute.xlu0 %1324
    %v1327 = vlaneseq
    %v1328 = vshrl.u32 %v1327, 7
    %v1329 = vsub.s32 2, %v1328
    %v1330 = vrot.slane %v294, %v1329
    %v1331 = vmul.f32 %v1073, %v1330
    %v1332 = vmul.f32 %v1077, %v1330
    %v1333 = vmul.f32 %v1081, %v1330
    %v1334 = vmul.f32 %v1085, %v1330
    %v1335 = vmul.f32 %v1089, %v1330
    %v1336 = vmul.f32 %v1093, %v1330
    %v1337 = vmul.f32 %v1097, %v1330
    %v1338 = vmul.f32 %v1101, %v1330
    %v1339 = vmul.f32 %v1105, %v1330
    %v1340 = vmul.f32 %v1109, %v1330
    %v1341 = vmul.f32 %v1113, %v1330
    %v1342 = vmul.f32 %v1117, %v1330
    %v1343 = vmul.f32 %v1121, %v1330
    %v1344 = vmul.f32 %v1125, %v1330
    %v1345 = vmul.f32 %v1129, %v1330
    %v1346 = vmul.f32 %v1133, %v1330
    %v1347 = vmul.f32 %v1137, %v1330
    %v1348 = vmul.f32 %v1141, %v1330
    %v1349 = vmul.f32 %v1145, %v1330
    %v1350 = vmul.f32 %v1149, %v1330
    %v1351 = vmul.f32 %v1153, %v1330
    %v1352 = vmul.f32 %v1157, %v1330
    %v1353 = vmul.f32 %v1161, %v1330
    %v1354 = vmul.f32 %v1165, %v1330
    %v1355 = vmul.f32 %v1169, %v1330
    %v1356 = vmul.f32 %v1173, %v1330
    %v1357 = vmul.f32 %v1177, %v1330
    %v1358 = vmul.f32 %v1181, %v1330
    %v1359 = vmul.f32 %v1185, %v1330
    %v1360 = vmul.f32 %v1189, %v1330
    %v1361 = vmul.f32 %v1193, %v1330
    %v1362 = vmul.f32 %v1197, %v1330
    %v1363 = vmul.f32 %v1201, %v1330
    %v1364 = vmul.f32 %v1205, %v1330
    %v1365 = vmul.f32 %v1209, %v1330
    %v1366 = vmul.f32 %v1213, %v1330
    %v1367 = vmul.f32 %v1217, %v1330
    %v1368 = vmul.f32 %v1221, %v1330
    %v1369 = vmul.f32 %v1225, %v1330
    %v1370 = vmul.f32 %v1229, %v1330
    %v1371 = vmul.f32 %v1233, %v1330
    %v1372 = vmul.f32 %v1237, %v1330
    %v1373 = vmul.f32 %v1241, %v1330
    %v1374 = vmul.f32 %v1245, %v1330
    %v1375 = vmul.f32 %v1249, %v1330
    %v1376 = vmul.f32 %v1253, %v1330
    %v1377 = vmul.f32 %v1257, %v1330
    %v1378 = vmul.f32 %v1261, %v1330
    %v1379 = vmul.f32 %v1265, %v1330
    %v1380 = vmul.f32 %v1269, %v1330
    %v1381 = vmul.f32 %v1273, %v1330
    %v1382 = vmul.f32 %v1277, %v1330
    %v1383 = vmul.f32 %v1281, %v1330
    %v1384 = vmul.f32 %v1285, %v1330
    %v1385 = vmul.f32 %v1289, %v1330
    %v1386 = vmul.f32 %v1293, %v1330
    %v1387 = vmul.f32 %v1297, %v1330
    %v1388 = vmul.f32 %v1301, %v1330
    %v1389 = vmul.f32 %v1305, %v1330
    %v1390 = vmul.f32 %v1309, %v1330
    %v1391 = vmul.f32 %v1313, %v1330
    %v1392 = vmul.f32 %v1317, %v1330
    %v1393 = vmul.f32 %v1321, %v1330
    %v1394 = vmul.f32 %v1325, %v1330
    %v1395 = vadd.f32 %v1007, %v1331
    %v1396 = vadd.f32 %v1008, %v1332
    %v1397 = vadd.f32 %v1009, %v1333
    %v1398 = vadd.f32 %v1010, %v1334
    %v1399 = vadd.f32 %v1011, %v1335
    %v1400 = vadd.f32 %v1012, %v1336
    %v1401 = vadd.f32 %v1013, %v1337
    %v1402 = vadd.f32 %v1014, %v1338
    %v1403 = vadd.f32 %v1015, %v1339
    %v1404 = vadd.f32 %v1016, %v1340
    %v1405 = vadd.f32 %v1017, %v1341
    %v1406 = vadd.f32 %v1018, %v1342
    %v1407 = vadd.f32 %v1019, %v1343
    %v1408 = vadd.f32 %v1020, %v1344
    %v1409 = vadd.f32 %v1021, %v1345
    %v1410 = vadd.f32 %v1022, %v1346
    %v1411 = vadd.f32 %v1023, %v1347
    %v1412 = vadd.f32 %v1024, %v1348
    %v1413 = vadd.f32 %v1025, %v1349
    %v1414 = vadd.f32 %v1026, %v1350
    %v1415 = vadd.f32 %v1027, %v1351
    %v1416 = vadd.f32 %v1028, %v1352
    %v1417 = vadd.f32 %v1029, %v1353
    %v1418 = vadd.f32 %v1030, %v1354
    %v1419 = vadd.f32 %v1031, %v1355
    %v1420 = vadd.f32 %v1032, %v1356
    %v1421 = vadd.f32 %v1033, %v1357
    %v1422 = vadd.f32 %v1034, %v1358
    %v1423 = vadd.f32 %v1035, %v1359
    %v1424 = vadd.f32 %v1036, %v1360
    %v1425 = vadd.f32 %v1037, %v1361
    %v1426 = vadd.f32 %v1038, %v1362
    %v1427 = vadd.f32 %v1039, %v1363
    %v1428 = vadd.f32 %v1040, %v1364
    %v1429 = vadd.f32 %v1041, %v1365
    %v1430 = vadd.f32 %v1042, %v1366
    %v1431 = vadd.f32 %v1043, %v1367
    %v1432 = vadd.f32 %v1044, %v1368
    %v1433 = vadd.f32 %v1045, %v1369
    %v1434 = vadd.f32 %v1046, %v1370
    %v1435 = vadd.f32 %v1047, %v1371
    %v1436 = vadd.f32 %v1048, %v1372
    %v1437 = vadd.f32 %v1049, %v1373
    %v1438 = vadd.f32 %v1050, %v1374
    %v1439 = vadd.f32 %v1051, %v1375
    %v1440 = vadd.f32 %v1052, %v1376
    %v1441 = vadd.f32 %v1053, %v1377
    %v1442 = vadd.f32 %v1054, %v1378
    %v1443 = vadd.f32 %v1055, %v1379
    %v1444 = vadd.f32 %v1056, %v1380
    %v1445 = vadd.f32 %v1057, %v1381
    %v1446 = vadd.f32 %v1058, %v1382
    %v1447 = vadd.f32 %v1059, %v1383
    %v1448 = vadd.f32 %v1060, %v1384
    %v1449 = vadd.f32 %v1061, %v1385
    %v1450 = vadd.f32 %v1062, %v1386
    %v1451 = vadd.f32 %v1063, %v1387
    %v1452 = vadd.f32 %v1064, %v1388
    %v1453 = vadd.f32 %v1065, %v1389
    %v1454 = vadd.f32 %v1066, %v1390
    %v1455 = vadd.f32 %v1067, %v1391
    %v1456 = vadd.f32 %v1068, %v1392
    %v1457 = vadd.f32 %v1069, %v1393
    %v1458 = vadd.f32 %v1070, %v1394
    %v1459 = vld [vmem:[#allocation9] sm:$0x1]
    %v1461 = vlaneseq
    %v1462 = vshrl.u32 %v1461, 7
    %v1463 = vsub.s32 0, %v1462
    %v1464 = vrot.slane %v1459, %v1463
    %v1466 = vadd.f32 %v1395, %v1464
    %v1467 = vadd.f32 %v1396, %v1464
    %v1468 = vadd.f32 %v1397, %v1464
    %v1469 = vadd.f32 %v1398, %v1464
    %v1470 = vadd.f32 %v1399, %v1464
    %v1471 = vadd.f32 %v1400, %v1464
    %v1472 = vadd.f32 %v1401, %v1464
    %v1473 = vadd.f32 %v1402, %v1464
    %v1474 = vadd.f32 %v1403, %v1464
    %v1475 = vadd.f32 %v1404, %v1464
    %v1476 = vadd.f32 %v1405, %v1464
    %v1477 = vadd.f32 %v1406, %v1464
    %v1478 = vadd.f32 %v1407, %v1464
    %v1479 = vadd.f32 %v1408, %v1464
    %v1480 = vadd.f32 %v1409, %v1464
    %v1481 = vadd.f32 %v1410, %v1464
    %v1482 = vadd.f32 %v1411, %v1464
    %v1483 = vadd.f32 %v1412, %v1464
    %v1484 = vadd.f32 %v1413, %v1464
    %v1485 = vadd.f32 %v1414, %v1464
    %v1486 = vadd.f32 %v1415, %v1464
    %v1487 = vadd.f32 %v1416, %v1464
    %v1488 = vadd.f32 %v1417, %v1464
    %v1489 = vadd.f32 %v1418, %v1464
    %v1490 = vadd.f32 %v1419, %v1464
    %v1491 = vadd.f32 %v1420, %v1464
    %v1492 = vadd.f32 %v1421, %v1464
    %v1493 = vadd.f32 %v1422, %v1464
    %v1494 = vadd.f32 %v1423, %v1464
    %v1495 = vadd.f32 %v1424, %v1464
    %v1496 = vadd.f32 %v1425, %v1464
    %v1497 = vadd.f32 %v1426, %v1464
    %v1498 = vadd.f32 %v1427, %v1464
    %v1499 = vadd.f32 %v1428, %v1464
    %v1500 = vadd.f32 %v1429, %v1464
    %v1501 = vadd.f32 %v1430, %v1464
    %v1502 = vadd.f32 %v1431, %v1464
    %v1503 = vadd.f32 %v1432, %v1464
    %v1504 = vadd.f32 %v1433, %v1464
    %v1505 = vadd.f32 %v1434, %v1464
    %v1506 = vadd.f32 %v1435, %v1464
    %v1507 = vadd.f32 %v1436, %v1464
    %v1508 = vadd.f32 %v1437, %v1464
    %v1509 = vadd.f32 %v1438, %v1464
    %v1510 = vadd.f32 %v1439, %v1464
    %v1511 = vadd.f32 %v1440, %v1464
    %v1512 = vadd.f32 %v1441, %v1464
    %v1513 = vadd.f32 %v1442, %v1464
    %v1514 = vadd.f32 %v1443, %v1464
    %v1515 = vadd.f32 %v1444, %v1464
    %v1516 = vadd.f32 %v1445, %v1464
    %v1517 = vadd.f32 %v1446, %v1464
    %v1518 = vadd.f32 %v1447, %v1464
    %v1519 = vadd.f32 %v1448, %v1464
    %v1520 = vadd.f32 %v1449, %v1464
    %v1521 = vadd.f32 %v1450, %v1464
    %v1522 = vadd.f32 %v1451, %v1464
    %v1523 = vadd.f32 %v1452, %v1464
    %v1524 = vadd.f32 %v1453, %v1464
    %v1525 = vadd.f32 %v1454, %v1464
    %v1526 = vadd.f32 %v1455, %v1464
    %v1527 = vadd.f32 %v1456, %v1464
    %v1528 = vadd.f32 %v1457, %v1464
    %v1529 = vadd.f32 %v1458, %v1464
    %v1530 = vmax.f32 %v1466, 0.0
    %v1531 = vmax.f32 %v1467, 0.0
    %v1532 = vmax.f32 %v1468, 0.0
    %v1533 = vmax.f32 %v1469, 0.0
    %v1534 = vmax.f32 %v1470, 0.0
    %v1535 = vmax.f32 %v1471, 0.0
    %v1536 = vmax.f32 %v1472, 0.0
    %v1537 = vmax.f32 %v1473, 0.0
    %v1538 = vmax.f32 %v1474, 0.0
    %v1539 = vmax.f32 %v1475, 0.0
    %v1540 = vmax.f32 %v1476, 0.0
    %v1541 = vmax.f32 %v1477, 0.0
    %v1542 = vmax.f32 %v1478, 0.0
    %v1543 = vmax.f32 %v1479, 0.0
    %v1544 = vmax.f32 %v1480, 0.0
    %v1545 = vmax.f32 %v1481, 0.0
    %v1546 = vmax.f32 %v1482, 0.0
    %v1547 = vmax.f32 %v1483, 0.0
    %v1548 = vmax.f32 %v1484, 0.0
    %v1549 = vmax.f32 %v1485, 0.0
    %v1550 = vmax.f32 %v1486, 0.0
    %v1551 = vmax.f32 %v1487, 0.0
    %v1552 = vmax.f32 %v1488, 0.0
    %v1553 = vmax.f32 %v1489, 0.0
    %v1554 = vmax.f32 %v1490, 0.0
    %v1555 = vmax.f32 %v1491, 0.0
    %v1556 = vmax.f32 %v1492, 0.0
    %v1557 = vmax.f32 %v1493, 0.0
    %v1558 = vmax.f32 %v1494, 0.0
    %v1559 = vmax.f32 %v1495, 0.0
    %v1560 = vmax.f32 %v1496, 0.0
    %v1561 = vmax.f32 %v1497, 0.0
    %v1562 = vmax.f32 %v1498, 0.0
    %v1563 = vmax.f32 %v1499, 0.0
    %v1564 = vmax.f32 %v1500, 0.0
    %v1565 = vmax.f32 %v1501, 0.0
    %v1566 = vmax.f32 %v1502, 0.0
    %v1567 = vmax.f32 %v1503, 0.0
    %v1568 = vmax.f32 %v1504, 0.0
    %v1569 = vmax.f32 %v1505, 0.0
    %v1570 = vmax.f32 %v1506, 0.0
    %v1571 = vmax.f32 %v1507, 0.0
    %v1572 = vmax.f32 %v1508, 0.0
    %v1573 = vmax.f32 %v1509, 0.0
    %v1574 = vmax.f32 %v1510, 0.0
    %v1575 = vmax.f32 %v1511, 0.0
    %v1576 = vmax.f32 %v1512, 0.0
    %v1577 = vmax.f32 %v1513, 0.0
    %v1578 = vmax.f32 %v1514, 0.0
    %v1579 = vmax.f32 %v1515, 0.0
    %v1580 = vmax.f32 %v1516, 0.0
    %v1581 = vmax.f32 %v1517, 0.0
    %v1582 = vmax.f32 %v1518, 0.0
    %v1583 = vmax.f32 %v1519, 0.0
    %v1584 = vmax.f32 %v1520, 0.0
    %v1585 = vmax.f32 %v1521, 0.0
    %v1586 = vmax.f32 %v1522, 0.0
    %v1587 = vmax.f32 %v1523, 0.0
    %v1588 = vmax.f32 %v1524, 0.0
    %v1589 = vmax.f32 %v1525, 0.0
    %v1590 = vmax.f32 %v1526, 0.0
    %v1591 = vmax.f32 %v1527, 0.0
    %v1592 = vmax.f32 %v1528, 0.0
    %v1593 = vmax.f32 %v1529, 0.0
    %v1594 = vpack.c.bf16 %v1531, %v1530
    %v1595 = vpack.c.bf16 %v1533, %v1532
    %v1596 = vpack.c.bf16 %v1535, %v1534
    %v1597 = vpack.c.bf16 %v1537, %v1536
    %v1598 = vpack.c.bf16 %v1539, %v1538
    %v1599 = vpack.c.bf16 %v1541, %v1540
    %v1600 = vpack.c.bf16 %v1543, %v1542
    %v1601 = vpack.c.bf16 %v1545, %v1544
    %v1602 = vpack.c.bf16 %v1547, %v1546
    %v1603 = vpack.c.bf16 %v1549, %v1548
    %v1604 = vpack.c.bf16 %v1551, %v1550
    %v1605 = vpack.c.bf16 %v1553, %v1552
    %v1606 = vpack.c.bf16 %v1555, %v1554
    %v1607 = vpack.c.bf16 %v1557, %v1556
    %v1608 = vpack.c.bf16 %v1559, %v1558
    %v1609 = vpack.c.bf16 %v1561, %v1560
    %v1610 = vpack.c.bf16 %v1563, %v1562
    %v1611 = vpack.c.bf16 %v1565, %v1564
    %v1612 = vpack.c.bf16 %v1567, %v1566
    %v1613 = vpack.c.bf16 %v1569, %v1568
    %v1614 = vpack.c.bf16 %v1571, %v1570
    %v1615 = vpack.c.bf16 %v1573, %v1572
    %v1616 = vpack.c.bf16 %v1575, %v1574
    %v1617 = vpack.c.bf16 %v1577, %v1576
    %v1618 = vpack.c.bf16 %v1579, %v1578
    %v1619 = vpack.c.bf16 %v1581, %v1580
    %v1620 = vpack.c.bf16 %v1583, %v1582
    %v1621 = vpack.c.bf16 %v1585, %v1584
    %v1622 = vpack.c.bf16 %v1587, %v1586
    %v1623 = vpack.c.bf16 %v1589, %v1588
    %v1624 = vpack.c.bf16 %v1591, %v1590
    %v1625 = vpack.c.bf16 %v1593, %v1592
    %v1626 = vld [vmem:[#allocation11] sm:$0xf]
    %v1627 = vld [vmem:[#allocation11 + $0x4] sm:$0xf]
    %v1628 = vld [vmem:[#allocation11 + $0x8] sm:$0xf]
    %v1629 = vld [vmem:[#allocation11 + $0xc] sm:$0xf]
    %v1630 = vld [vmem:[#allocation11 + $0x10] sm:$0xf]
    %v1631 = vld [vmem:[#allocation11 + $0x14] sm:$0xf]
    %v1632 = vld [vmem:[#allocation11 + $0x18] sm:$0xf]
    %v1633 = vld [vmem:[#allocation11 + $0x1c] sm:$0xf]
    %v1634 = vld [vmem:[#allocation12] sm:$0x1]
    %v1636 = vlaneseq
    %v1637 = vshrl.u32 %v1636, 7
    %v1638 = vsub.s32 0, %v1637
    %v1639 = vrot.slane %v1634, %v1638
    %v1649 = vunpack.c.l.b16 %v1626
    %v1650 = vunpack.c.l.b16 %v1627
    %v1651 = vunpack.c.l.b16 %v1628
    %v1652 = vunpack.c.l.b16 %v1629
    %v1653 = vunpack.c.l.b16 %v1630
    %v1654 = vunpack.c.l.b16 %v1631
    %v1655 = vunpack.c.l.b16 %v1632
    %v1656 = vunpack.c.l.b16 %v1633
    %v1657 = vpack.c.b16 %v1650, %v1649
    %v1658 = vpack.c.b16 %v1652, %v1651
    %v1659 = vpack.c.b16 %v1654, %v1653
    %v1660 = vpack.c.b16 %v1656, %v1655
    %vm1665 = vcmask 523264
    %v1667 = vsel %vm1665, %v1594, 0
    %v1670 = vsel %vm1665, %v1595, 0
    %v1673 = vsel %vm1665, %v1596, 0
    %v1676 = vsel %vm1665, %v1597, 0
    %v1679 = vsel %vm1665, %v1598, 0
    %v1682 = vsel %vm1665, %v1599, 0
    %v1685 = vsel %vm1665, %v1600, 0
    %v1688 = vsel %vm1665, %v1601, 0
    %v1691 = vsel %vm1665, %v1602, 0
    %v1694 = vsel %vm1665, %v1603, 0
    %v1697 = vsel %vm1665, %v1604, 0
    %v1700 = vsel %vm1665, %v1605, 0
    %v1703 = vsel %vm1665, %v1606, 0
    %v1706 = vsel %vm1665, %v1607, 0
    %v1709 = vsel %vm1665, %v1608, 0
    %v1712 = vsel %vm1665, %v1609, 0
    %v1715 = vsel %vm1665, %v1610, 0
    %v1718 = vsel %vm1665, %v1611, 0
    %v1721 = vsel %vm1665, %v1612, 0
    %v1724 = vsel %vm1665, %v1613, 0
    %v1727 = vsel %vm1665, %v1614, 0
    %v1730 = vsel %vm1665, %v1615, 0
    %v1733 = vsel %vm1665, %v1616, 0
    %v1736 = vsel %vm1665, %v1617, 0
    %v1739 = vsel %vm1665, %v1618, 0
    %v1742 = vsel %vm1665, %v1619, 0
    %v1745 = vsel %vm1665, %v1620, 0
    %v1748 = vsel %vm1665, %v1621, 0
    %v1751 = vsel %vm1665, %v1622, 0
    %v1754 = vsel %vm1665, %v1623, 0
    %v1757 = vsel %vm1665, %v1624, 0
    %v1760 = vsel %vm1665, %v1625, 0
    %1762 = vmatprep.subr.bf16.mxu0 0
    %1763 = vmatpush1.bf16.msra.mxu0 %v1657
    %1764 = vmatprep.subr.bf16.mxu0 0
    %1765 = vmatpush1.bf16.msra.mxu0 %v1658
    %1766 = vmatprep.subr.bf16.mxu0 0
    %1767 = vmatpush1.bf16.msra.mxu0 %v1659
    %1768 = vmatprep.subr.bf16.mxu0 0
    %1769 = vmatpush1.bf16.msra.mxu0 %v1660
    %1770 = vmatprep.subr.bf16.mxu0 0
    %1771 = vmatpush1.bf16.msra.mxu0 0
    %1772 = vmatprep.subr.bf16.mxu0 0
    %1773 = vmatpush1.bf16.msra.mxu0 0
    %1774 = vmatprep.subr.bf16.mxu0 0
    %1775 = vmatpush1.bf16.msra.mxu0 0
    %1776 = vmatprep.subr.bf16.mxu0 0
    %1777 = vmatpush1.bf16.msra.mxu0 0
    %1778 = vmatprep.subr.bf16.mxu0 0
    %1779 = vmatpush1.bf16.msra.mxu0 0
    %1780 = vmatprep.subr.bf16.mxu0 0
    %1781 = vmatpush1.bf16.msra.mxu0 0
    %1782 = vmatprep.subr.bf16.mxu0 0
    %1783 = vmatpush1.bf16.msra.mxu0 0
    %1784 = vmatprep.subr.bf16.mxu0 0
    %1785 = vmatpush1.bf16.msra.mxu0 0
    %1786 = vmatprep.subr.bf16.mxu0 0
    %1787 = vmatpush1.bf16.msra.mxu0 0
    %1788 = vmatprep.subr.bf16.mxu0 0
    %1789 = vmatpush1.bf16.msra.mxu0 0
    %1790 = vmatprep.subr.bf16.mxu0 0
    %1791 = vmatpush1.bf16.msra.mxu0 0
    %1792 = vmatprep.subr.bf16.mxu0 0
    %1793 = vmatpush1.bf16.msra.mxu0 0
    %1794 = vmatprep.mubr.bf16.mxu0 0
    %1795 = vmatmul.mubr.bf16.gmra.mrb[0].mxu0 %v1667
    %v1796 = vpop.f32.mrb[0].mxu0
    %v1797 = vadd.f32 %v1639, %v1796
    %v1798 = vpop.f32.mrb[0].mxu0
    %v1799 = vpop.f32.mrb[0].mxu0
    %v1800 = vadd.f32 %v1639, %v1799
    %v1801 = vpop.f32.mrb[0].mxu0
    %1802 = vmatprep.mubr.bf16.mxu0 0
    %1803 = vmatmul.mubr.bf16.gmra.mrb[0].mxu0 %v1670
    %v1804 = vpop.f32.mrb[0].mxu0
    %v1805 = vadd.f32 %v1639, %v1804
    %v1806 = vpop.f32.mrb[0].mxu0
    %v1807 = vpop.f32.mrb[0].mxu0
    %v1808 = vadd.f32 %v1639, %v1807
    %v1809 = vpop.f32.mrb[0].mxu0
    %1810 = vmatprep.mubr.bf16.mxu0 0
    %1811 = vmatmul.mubr.bf16.gmra.mrb[0].mxu0 %v1673
    %v1812 = vpop.f32.mrb[0].mxu0
    %v1813 = vadd.f32 %v1639, %v1812
    %v1814 = vpop.f32.mrb[0].mxu0
    %v1815 = vpop.f32.mrb[0].mxu0
    %v1816 = vadd.f32 %v1639, %v1815
    %v1817 = vpop.f32.mrb[0].mxu0
    %1818 = vmatprep.mubr.bf16.mxu0 0
    %1819 = vmatmul.mubr.bf16.gmra.mrb[0].mxu0 %v1676
    %v1820 = vpop.f32.mrb[0].mxu0
    %v1821 = vadd.f32 %v1639, %v1820
    %v1822 = vpop.f32.mrb[0].mxu0
    %v1823 = vpop.f32.mrb[0].mxu0
    %v1824 = vadd.f32 %v1639, %v1823
    %v1825 = vpop.f32.mrb[0].mxu0
    %1826 = vmatprep.mubr.bf16.mxu0 0
    %1827 = vmatmul.mubr.bf16.gmra.mrb[0].mxu0 %v1679
    %v1828 = vpop.f32.mrb[0].mxu0
    %v1829 = vadd.f32 %v1639, %v1828
    %v1830 = vpop.f32.mrb[0].mxu0
    %v1831 = vpop.f32.mrb[0].mxu0
    %v1832 = vadd.f32 %v1639, %v1831
    %v1833 = vpop.f32.mrb[0].mxu0
    %1834 = vmatprep.mubr.bf16.mxu0 0
    %1835 = vmatmul.mubr.bf16.gmra.mrb[0].mxu0 %v1682
    %v1836 = vpop.f32.mrb[0].mxu0
    %v1837 = vadd.f32 %v1639, %v1836
    %v1838 = vpop.f32.mrb[0].mxu0
    %v1839 = vpop.f32.mrb[0].mxu0
    %v1840 = vadd.f32 %v1639, %v1839
    %v1841 = vpop.f32.mrb[0].mxu0
    %1842 = vmatprep.mubr.bf16.mxu0 0
    %1843 = vmatmul.mubr.bf16.gmra.mrb[0].mxu0 %v1685
    %v1844 = vpop.f32.mrb[0].mxu0
    %v1845 = vadd.f32 %v1639, %v1844
    %v1846 = vpop.f32.mrb[0].mxu0
    %v1847 = vpop.f32.mrb[0].mxu0
    %v1848 = vadd.f32 %v1639, %v1847
    %v1849 = vpop.f32.mrb[0].mxu0
    %1850 = vmatprep.mubr.bf16.mxu0 0
    %1851 = vmatmul.mubr.bf16.gmra.mrb[0].mxu0 %v1688
    %v1852 = vpop.f32.mrb[0].mxu0
    %v1853 = vadd.f32 %v1639, %v1852
    %v1854 = vpop.f32.mrb[0].mxu0
    %v1855 = vpop.f32.mrb[0].mxu0
    %v1856 = vadd.f32 %v1639, %v1855
    %v1857 = vpop.f32.mrb[0].mxu0
    %1858 = vmatprep.mubr.bf16.mxu0 0
    %1859 = vmatmul.mubr.bf16.gmra.mrb[0].mxu0 %v1691
    %v1860 = vpop.f32.mrb[0].mxu0
    %v1861 = vadd.f32 %v1639, %v1860
    %v1862 = vpop.f32.mrb[0].mxu0
    %v1863 = vpop.f32.mrb[0].mxu0
    %v1864 = vadd.f32 %v1639, %v1863
    %v1865 = vpop.f32.mrb[0].mxu0
    %1866 = vmatprep.mubr.bf16.mxu0 0
    %1867 = vmatmul.mubr.bf16.gmra.mrb[0].mxu0 %v1694
    %v1868 = vpop.f32.mrb[0].mxu0
    %v1869 = vadd.f32 %v1639, %v1868
    %v1870 = vpop.f32.mrb[0].mxu0
    %v1871 = vpop.f32.mrb[0].mxu0
    %v1872 = vadd.f32 %v1639, %v1871
    %v1873 = vpop.f32.mrb[0].mxu0
    %1874 = vmatprep.mubr.bf16.mxu0 0
    %1875 = vmatmul.mubr.bf16.gmra.mrb[0].mxu0 %v1697
    %v1876 = vpop.f32.mrb[0].mxu0
    %v1877 = vadd.f32 %v1639, %v1876
    %v1878 = vpop.f32.mrb[0].mxu0
    %v1879 = vpop.f32.mrb[0].mxu0
    %v1880 = vadd.f32 %v1639, %v1879
    %v1881 = vpop.f32.mrb[0].mxu0
    %1882 = vmatprep.mubr.bf16.mxu0 0
    %1883 = vmatmul.mubr.bf16.gmra.mrb[0].mxu0 %v1700
    %v1884 = vpop.f32.mrb[0].mxu0
    %v1885 = vadd.f32 %v1639, %v1884
    %v1886 = vpop.f32.mrb[0].mxu0
    %v1887 = vpop.f32.mrb[0].mxu0
    %v1888 = vadd.f32 %v1639, %v1887
    %v1889 = vpop.f32.mrb[0].mxu0
    %1890 = vmatprep.mubr.bf16.mxu0 0
    %1891 = vmatmul.mubr.bf16.gmra.mrb[0].mxu0 %v1703
    %v1892 = vpop.f32.mrb[0].mxu0
    %v1893 = vadd.f32 %v1639, %v1892
    %v1894 = vpop.f32.mrb[0].mxu0
    %v1895 = vpop.f32.mrb[0].mxu0
    %v1896 = vadd.f32 %v1639, %v1895
    %v1897 = vpop.f32.mrb[0].mxu0
    %1898 = vmatprep.mubr.bf16.mxu0 0
    %1899 = vmatmul.mubr.bf16.gmra.mrb[0].mxu0 %v1706
    %v1900 = vpop.f32.mrb[0].mxu0
    %v1901 = vadd.f32 %v1639, %v1900
    %v1902 = vpop.f32.mrb[0].mxu0
    %v1903 = vpop.f32.mrb[0].mxu0
    %v1904 = vadd.f32 %v1639, %v1903
    %v1905 = vpop.f32.mrb[0].mxu0
    %1906 = vmatprep.mubr.bf16.mxu0 0
    %1907 = vmatmul.mubr.bf16.gmra.mrb[0].mxu0 %v1709
    %v1908 = vpop.f32.mrb[0].mxu0
    %v1909 = vadd.f32 %v1639, %v1908
    %v1910 = vpop.f32.mrb[0].mxu0
    %v1911 = vpop.f32.mrb[0].mxu0
    %v1912 = vadd.f32 %v1639, %v1911
    %v1913 = vpop.f32.mrb[0].mxu0
    %1914 = vmatprep.mubr.bf16.mxu0 0
    %1915 = vmatmul.mubr.bf16.gmra.mrb[0].mxu0 %v1712
    %v1916 = vpop.f32.mrb[0].mxu0
    %v1917 = vadd.f32 %v1639, %v1916
    %v1918 = vpop.f32.mrb[0].mxu0
    %v1919 = vpop.f32.mrb[0].mxu0
    %v1920 = vadd.f32 %v1639, %v1919
    %v1921 = vpop.f32.mrb[0].mxu0
    %1922 = vmatprep.mubr.bf16.mxu0 0
    %1923 = vmatmul.mubr.bf16.gmra.mrb[0].mxu0 %v1715
    %v1924 = vpop.f32.mrb[0].mxu0
    %v1925 = vadd.f32 %v1639, %v1924
    %v1926 = vpop.f32.mrb[0].mxu0
    %v1927 = vpop.f32.mrb[0].mxu0
    %v1928 = vadd.f32 %v1639, %v1927
    %v1929 = vpop.f32.mrb[0].mxu0
    %1930 = vmatprep.mubr.bf16.mxu0 0
    %1931 = vmatmul.mubr.bf16.gmra.mrb[0].mxu0 %v1718
    %v1932 = vpop.f32.mrb[0].mxu0
    %v1933 = vadd.f32 %v1639, %v1932
    %v1934 = vpop.f32.mrb[0].mxu0
    %v1935 = vpop.f32.mrb[0].mxu0
    %v1936 = vadd.f32 %v1639, %v1935
    %v1937 = vpop.f32.mrb[0].mxu0
    %1938 = vmatprep.mubr.bf16.mxu0 0
    %1939 = vmatmul.mubr.bf16.gmra.mrb[0].mxu0 %v1721
    %v1940 = vpop.f32.mrb[0].mxu0
    %v1941 = vadd.f32 %v1639, %v1940
    %v1942 = vpop.f32.mrb[0].mxu0
    %v1943 = vpop.f32.mrb[0].mxu0
    %v1944 = vadd.f32 %v1639, %v1943
    %v1945 = vpop.f32.mrb[0].mxu0
    %1946 = vmatprep.mubr.bf16.mxu0 0
    %1947 = vmatmul.mubr.bf16.gmra.mrb[0].mxu0 %v1724
    %v1948 = vpop.f32.mrb[0].mxu0
    %v1949 = vadd.f32 %v1639, %v1948
    %v1950 = vpop.f32.mrb[0].mxu0
    %v1951 = vpop.f32.mrb[0].mxu0
    %v1952 = vadd.f32 %v1639, %v1951
    %v1953 = vpop.f32.mrb[0].mxu0
    %1954 = vmatprep.mubr.bf16.mxu0 0
    %1955 = vmatmul.mubr.bf16.gmra.mrb[0].mxu0 %v1727
    %v1956 = vpop.f32.mrb[0].mxu0
    %v1957 = vadd.f32 %v1639, %v1956
    %v1958 = vpop.f32.mrb[0].mxu0
    %v1959 = vpop.f32.mrb[0].mxu0
    %v1960 = vadd.f32 %v1639, %v1959
    %v1961 = vpop.f32.mrb[0].mxu0
    %1962 = vmatprep.mubr.bf16.mxu0 0
    %1963 = vmatmul.mubr.bf16.gmra.mrb[0].mxu0 %v1730
    %v1964 = vpop.f32.mrb[0].mxu0
    %v1965 = vadd.f32 %v1639, %v1964
    %v1966 = vpop.f32.mrb[0].mxu0
    %v1967 = vpop.f32.mrb[0].mxu0
    %v1968 = vadd.f32 %v1639, %v1967
    %v1969 = vpop.f32.mrb[0].mxu0
    %1970 = vmatprep.mubr.bf16.mxu0 0
    %1971 = vmatmul.mubr.bf16.gmra.mrb[0].mxu0 %v1733
    %v1972 = vpop.f32.mrb[0].mxu0
    %v1973 = vadd.f32 %v1639, %v1972
    %v1974 = vpop.f32.mrb[0].mxu0
    %v1975 = vpop.f32.mrb[0].mxu0
    %v1976 = vadd.f32 %v1639, %v1975
    %v1977 = vpop.f32.mrb[0].mxu0
    %1978 = vmatprep.mubr.bf16.mxu0 0
    %1979 = vmatmul.mubr.bf16.gmra.mrb[0].mxu0 %v1736
    %v1980 = vpop.f32.mrb[0].mxu0
    %v1981 = vadd.f32 %v1639, %v1980
    %v1982 = vpop.f32.mrb[0].mxu0
    %v1983 = vpop.f32.mrb[0].mxu0
    %v1984 = vadd.f32 %v1639, %v1983
    %v1985 = vpop.f32.mrb[0].mxu0
    %1986 = vmatprep.mubr.bf16.mxu0 0
    %1987 = vmatmul.mubr.bf16.gmra.mrb[0].mxu0 %v1739
    %v1988 = vpop.f32.mrb[0].mxu0
    %v1989 = vadd.f32 %v1639, %v1988
    %v1990 = vpop.f32.mrb[0].mxu0
    %v1991 = vpop.f32.mrb[0].mxu0
    %v1992 = vadd.f32 %v1639, %v1991
    %v1993 = vpop.f32.mrb[0].mxu0
    %1994 = vmatprep.mubr.bf16.mxu0 0
    %1995 = vmatmul.mubr.bf16.gmra.mrb[0].mxu0 %v1742
    %v1996 = vpop.f32.mrb[0].mxu0
    %v1997 = vadd.f32 %v1639, %v1996
    %v1998 = vpop.f32.mrb[0].mxu0
    %v1999 = vpop.f32.mrb[0].mxu0
    %v2000 = vadd.f32 %v1639, %v1999
    %v2001 = vpop.f32.mrb[0].mxu0
    %2002 = vmatprep.mubr.bf16.mxu0 0
    %2003 = vmatmul.mubr.bf16.gmra.mrb[0].mxu0 %v1745
    %v2004 = vpop.f32.mrb[0].mxu0
    %v2005 = vadd.f32 %v1639, %v2004
    %v2006 = vpop.f32.mrb[0].mxu0
    %v2007 = vpop.f32.mrb[0].mxu0
    %v2008 = vadd.f32 %v1639, %v2007
    %v2009 = vpop.f32.mrb[0].mxu0
    %2010 = vmatprep.mubr.bf16.mxu0 0
    %2011 = vmatmul.mubr.bf16.gmra.mrb[0].mxu0 %v1748
    %v2012 = vpop.f32.mrb[0].mxu0
    %v2013 = vadd.f32 %v1639, %v2012
    %v2014 = vpop.f32.mrb[0].mxu0
    %v2015 = vpop.f32.mrb[0].mxu0
    %v2016 = vadd.f32 %v1639, %v2015
    %v2017 = vpop.f32.mrb[0].mxu0
    %2018 = vmatprep.mubr.bf16.mxu0 0
    %2019 = vmatmul.mubr.bf16.gmra.mrb[0].mxu0 %v1751
    %v2020 = vpop.f32.mrb[0].mxu0
    %v2021 = vadd.f32 %v1639, %v2020
    %v2022 = vpop.f32.mrb[0].mxu0
    %v2023 = vpop.f32.mrb[0].mxu0
    %v2024 = vadd.f32 %v1639, %v2023
    %v2025 = vpop.f32.mrb[0].mxu0
    %2026 = vmatprep.mubr.bf16.mxu0 0
    %2027 = vmatmul.mubr.bf16.gmra.mrb[0].mxu0 %v1754
    %v2028 = vpop.f32.mrb[0].mxu0
    %v2029 = vadd.f32 %v1639, %v2028
    %v2030 = vpop.f32.mrb[0].mxu0
    %v2031 = vpop.f32.mrb[0].mxu0
    %v2032 = vadd.f32 %v1639, %v2031
    %v2033 = vpop.f32.mrb[0].mxu0
    %2034 = vmatprep.mubr.bf16.mxu0 0
    %2035 = vmatmul.mubr.bf16.gmra.mrb[0].mxu0 %v1757
    %v2036 = vpop.f32.mrb[0].mxu0
    %v2037 = vadd.f32 %v1639, %v2036
    %v2038 = vpop.f32.mrb[0].mxu0
    %v2039 = vpop.f32.mrb[0].mxu0
    %v2040 = vadd.f32 %v1639, %v2039
    %v2041 = vpop.f32.mrb[0].mxu0
    %2042 = vmatprep.mubr.bf16.mxu0 0
    %2043 = vmatmul.mubr.bf16.gmra.mrb[0].mxu0 %v1760
    %v2044 = vpop.f32.mrb[0].mxu0
    %v2045 = vadd.f32 %v1639, %v2044
    %v2046 = vpop.f32.mrb[0].mxu0
    %v2047 = vpop.f32.mrb[0].mxu0
    %v2048 = vadd.f32 %v1639, %v2047
    %v2049 = vpop.f32.mrb[0].mxu0
    %2050 = vdwg.mxu0
    %v2051 = vmax.f32 %v1797, 0.0
    %v2052 = vmax.f32 %v1800, 0.0
    %v2053 = vmax.f32 %v1805, 0.0
    %v2054 = vmax.f32 %v1808, 0.0
    %v2055 = vmax.f32 %v1813, 0.0
    %v2056 = vmax.f32 %v1816, 0.0
    %v2057 = vmax.f32 %v1821, 0.0
    %v2058 = vmax.f32 %v1824, 0.0
    %v2059 = vmax.f32 %v1829, 0.0
    %v2060 = vmax.f32 %v1832, 0.0
    %v2061 = vmax.f32 %v1837, 0.0
    %v2062 = vmax.f32 %v1840, 0.0
    %v2063 = vmax.f32 %v1845, 0.0
    %v2064 = vmax.f32 %v1848, 0.0
    %v2065 = vmax.f32 %v1853, 0.0
    %v2066 = vmax.f32 %v1856, 0.0
    %v2067 = vmax.f32 %v1861, 0.0
    %v2068 = vmax.f32 %v1864, 0.0
    %v2069 = vmax.f32 %v1869, 0.0
    %v2070 = vmax.f32 %v1872, 0.0
    %v2071 = vmax.f32 %v1877, 0.0
    %v2072 = vmax.f32 %v1880, 0.0
    %v2073 = vmax.f32 %v1885, 0.0
    %v2074 = vmax.f32 %v1888, 0.0
    %v2075 = vmax.f32 %v1893, 0.0
    %v2076 = vmax.f32 %v1896, 0.0
    %v2077 = vmax.f32 %v1901, 0.0
    %v2078 = vmax.f32 %v1904, 0.0
    %v2079 = vmax.f32 %v1909, 0.0
    %v2080 = vmax.f32 %v1912, 0.0
    %v2081 = vmax.f32 %v1917, 0.0
    %v2082 = vmax.f32 %v1920, 0.0
    %v2083 = vmax.f32 %v1925, 0.0
    %v2084 = vmax.f32 %v1928, 0.0
    %v2085 = vmax.f32 %v1933, 0.0
    %v2086 = vmax.f32 %v1936, 0.0
    %v2087 = vmax.f32 %v1941, 0.0
    %v2088 = vmax.f32 %v1944, 0.0
    %v2089 = vmax.f32 %v1949, 0.0
    %v2090 = vmax.f32 %v1952, 0.0
    %v2091 = vmax.f32 %v1957, 0.0
    %v2092 = vmax.f32 %v1960, 0.0
    %v2093 = vmax.f32 %v1965, 0.0
    %v2094 = vmax.f32 %v1968, 0.0
    %v2095 = vmax.f32 %v1973, 0.0
    %v2096 = vmax.f32 %v1976, 0.0
    %v2097 = vmax.f32 %v1981, 0.0
    %v2098 = vmax.f32 %v1984, 0.0
    %v2099 = vmax.f32 %v1989, 0.0
    %v2100 = vmax.f32 %v1992, 0.0
    %v2101 = vmax.f32 %v1997, 0.0
    %v2102 = vmax.f32 %v2000, 0.0
    %v2103 = vmax.f32 %v2005, 0.0
    %v2104 = vmax.f32 %v2008, 0.0
    %v2105 = vmax.f32 %v2013, 0.0
    %v2106 = vmax.f32 %v2016, 0.0
    %v2107 = vmax.f32 %v2021, 0.0
    %v2108 = vmax.f32 %v2024, 0.0
    %v2109 = vmax.f32 %v2029, 0.0
    %v2110 = vmax.f32 %v2032, 0.0
    %v2111 = vmax.f32 %v2037, 0.0
    %v2112 = vmax.f32 %v2040, 0.0
    %v2113 = vmax.f32 %v2045, 0.0
    %v2114 = vmax.f32 %v2048, 0.0
    %v2115 = vpack.c.bf16 %v2052, %v2051
    %v2116 = vpack.c.bf16 %v2054, %v2053
    %v2117 = vpack.c.bf16 %v2056, %v2055
    %v2118 = vpack.c.bf16 %v2058, %v2057
    %v2119 = vpack.c.bf16 %v2060, %v2059
    %v2120 = vpack.c.bf16 %v2062, %v2061
    %v2121 = vpack.c.bf16 %v2064, %v2063
    %v2122 = vpack.c.bf16 %v2066, %v2065
    %v2123 = vpack.c.bf16 %v2068, %v2067
    %v2124 = vpack.c.bf16 %v2070, %v2069
    %v2125 = vpack.c.bf16 %v2072, %v2071
    %v2126 = vpack.c.bf16 %v2074, %v2073
    %v2127 = vpack.c.bf16 %v2076, %v2075
    %v2128 = vpack.c.bf16 %v2078, %v2077
    %v2129 = vpack.c.bf16 %v2080, %v2079
    %v2130 = vpack.c.bf16 %v2082, %v2081
    %v2131 = vpack.c.bf16 %v2084, %v2083
    %v2132 = vpack.c.bf16 %v2086, %v2085
    %v2133 = vpack.c.bf16 %v2088, %v2087
    %v2134 = vpack.c.bf16 %v2090, %v2089
    %v2135 = vpack.c.bf16 %v2092, %v2091
    %v2136 = vpack.c.bf16 %v2094, %v2093
    %v2137 = vpack.c.bf16 %v2096, %v2095
    %v2138 = vpack.c.bf16 %v2098, %v2097
    %v2139 = vpack.c.bf16 %v2100, %v2099
    %v2140 = vpack.c.bf16 %v2102, %v2101
    %v2141 = vpack.c.bf16 %v2104, %v2103
    %v2142 = vpack.c.bf16 %v2106, %v2105
    %v2143 = vpack.c.bf16 %v2108, %v2107
    %v2144 = vpack.c.bf16 %v2110, %v2109
    %v2145 = vpack.c.bf16 %v2112, %v2111
    %v2146 = vpack.c.bf16 %v2114, %v2113
    %v2147 = vld [vmem:[#allocation14] sm:$0xff]
    %v2148 = vld [vmem:[#allocation14 + $0x8] sm:$0xff]
    %v2149 = vld [vmem:[#allocation14 + $0x10] sm:$0xff]
    %v2150 = vld [vmem:[#allocation14 + $0x18] sm:$0xff]
    %v2151 = vld [vmem:[#allocation14 + $0x20] sm:$0xff]
    %v2152 = vld [vmem:[#allocation14 + $0x28] sm:$0xff]
    %v2153 = vld [vmem:[#allocation14 + $0x30] sm:$0xff]
    %v2154 = vld [vmem:[#allocation14 + $0x38] sm:$0xff]
    %v2155 = vld [vmem:[#allocation14 + $0x40] sm:$0xff]
    %v2156 = vld [vmem:[#allocation14 + $0x48] sm:$0xff]
    %v2157 = vld [vmem:[#allocation14 + $0x50] sm:$0xff]
    %v2158 = vld [vmem:[#allocation14 + $0x58] sm:$0xff]
    %v2159 = vld [vmem:[#allocation14 + $0x60] sm:$0xff]
    %v2160 = vld [vmem:[#allocation14 + $0x68] sm:$0xff]
    %v2161 = vld [vmem:[#allocation14 + $0x70] sm:$0xff]
    %v2162 = vld [vmem:[#allocation14 + $0x78] sm:$0xff]
    %v2163 = vld [vmem:[#allocation14 + $0x80] sm:$0xff]
    %v2164 = vld [vmem:[#allocation14 + $0x88] sm:$0xff]
    %v2165 = vld [vmem:[#allocation14 + $0x90] sm:$0xff]
    %v2166 = vld [vmem:[#allocation14 + $0x98] sm:$0xff]
    %v2167 = vld [vmem:[#allocation14 + $0xa0] sm:$0xff]
    %v2168 = vld [vmem:[#allocation14 + $0xa8] sm:$0xff]
    %v2169 = vld [vmem:[#allocation14 + $0xb0] sm:$0xff]
    %v2170 = vld [vmem:[#allocation14 + $0xb8] sm:$0xff]
    %v2171 = vld [vmem:[#allocation14 + $0xc0] sm:$0xff]
    %v2172 = vld [vmem:[#allocation14 + $0xc8] sm:$0xff]
    %v2173 = vld [vmem:[#allocation14 + $0xd0] sm:$0xff]
    %v2174 = vld [vmem:[#allocation14 + $0xd8] sm:$0xff]
    %v2175 = vld [vmem:[#allocation14 + $0xe0] sm:$0xff]
    %v2176 = vld [vmem:[#allocation14 + $0xe8] sm:$0xff]
    %v2177 = vld [vmem:[#allocation14 + $0xf0] sm:$0xff]
    %v2178 = vld [vmem:[#allocation14 + $0xf8] sm:$0xff]
    %v2179 = vld [vmem:[#allocation14 + $0x100] sm:$0xff]
    %v2180 = vld [vmem:[#allocation14 + $0x108] sm:$0xff]
    %v2181 = vld [vmem:[#allocation14 + $0x110] sm:$0xff]
    %v2182 = vld [vmem:[#allocation14 + $0x118] sm:$0xff]
    %v2183 = vld [vmem:[#allocation14 + $0x120] sm:$0xff]
    %v2184 = vld [vmem:[#allocation14 + $0x128] sm:$0xff]
    %v2185 = vld [vmem:[#allocation14 + $0x130] sm:$0xff]
    %v2186 = vld [vmem:[#allocation14 + $0x138] sm:$0xff]
    %v2187 = vld [vmem:[#allocation14 + $0x140] sm:$0xff]
    %v2188 = vld [vmem:[#allocation14 + $0x148] sm:$0xff]
    %v2189 = vld [vmem:[#allocation14 + $0x150] sm:$0xff]
    %v2190 = vld [vmem:[#allocation14 + $0x158] sm:$0xff]
    %v2191 = vld [vmem:[#allocation14 + $0x160] sm:$0xff]
    %v2192 = vld [vmem:[#allocation14 + $0x168] sm:$0xff]
    %v2193 = vld [vmem:[#allocation14 + $0x170] sm:$0xff]
    %v2194 = vld [vmem:[#allocation14 + $0x178] sm:$0xff]
    %v2195 = vld [vmem:[#allocation14 + $0x180] sm:$0xff]
    %v2196 = vld [vmem:[#allocation14 + $0x188] sm:$0xff]
    %v2197 = vld [vmem:[#allocation14 + $0x190] sm:$0xff]
    %v2198 = vld [vmem:[#allocation14 + $0x198] sm:$0xff]
    %v2199 = vld [vmem:[#allocation14 + $0x1a0] sm:$0xff]
    %v2200 = vld [vmem:[#allocation14 + $0x1a8] sm:$0xff]
    %v2201 = vld [vmem:[#allocation14 + $0x1b0] sm:$0xff]
    %v2202 = vld [vmem:[#allocation14 + $0x1b8] sm:$0xff]
    %v2203 = vld [vmem:[#allocation14 + $0x1c0] sm:$0xff]
    %v2204 = vld [vmem:[#allocation14 + $0x1c8] sm:$0xff]
    %v2205 = vld [vmem:[#allocation14 + $0x1d0] sm:$0xff]
    %v2206 = vld [vmem:[#allocation14 + $0x1d8] sm:$0xff]
    %v2207 = vld [vmem:[#allocation14 + $0x1e0] sm:$0xff]
    %v2208 = vld [vmem:[#allocation14 + $0x1e8] sm:$0xff]
    %v2209 = vld [vmem:[#allocation14 + $0x1f0] sm:$0xff]
    %v2210 = vld [vmem:[#allocation14 + $0x1f8] sm:$0xff]
    %v2211 = vld [vmem:[#allocation14 + $0x200] sm:$0xff]
    %v2212 = vld [vmem:[#allocation14 + $0x208] sm:$0xff]
    %v2213 = vld [vmem:[#allocation14 + $0x210] sm:$0xff]
    %v2214 = vld [vmem:[#allocation14 + $0x218] sm:$0xff]
    %v2215 = vld [vmem:[#allocation14 + $0x220] sm:$0xff]
    %v2216 = vld [vmem:[#allocation14 + $0x228] sm:$0xff]
    %v2217 = vld [vmem:[#allocation14 + $0x230] sm:$0xff]
    %v2218 = vld [vmem:[#allocation14 + $0x238] sm:$0xff]
    %v2219 = vld [vmem:[#allocation14 + $0x240] sm:$0xff]
    %v2220 = vld [vmem:[#allocation14 + $0x248] sm:$0xff]
    %v2221 = vld [vmem:[#allocation14 + $0x250] sm:$0xff]
    %v2222 = vld [vmem:[#allocation14 + $0x258] sm:$0xff]
    %v2223 = vld [vmem:[#allocation14 + $0x260] sm:$0xff]
    %v2224 = vld [vmem:[#allocation14 + $0x268] sm:$0xff]
    %v2225 = vld [vmem:[#allocation14 + $0x270] sm:$0xff]
    %v2226 = vld [vmem:[#allocation14 + $0x278] sm:$0xff]
    %v2227 = vld [vmem:[#allocation14 + $0x280] sm:$0xff]
    %v2228 = vld [vmem:[#allocation14 + $0x288] sm:$0xff]
    %v2229 = vld [vmem:[#allocation14 + $0x290] sm:$0xff]
    %v2230 = vld [vmem:[#allocation14 + $0x298] sm:$0xff]
    %v2231 = vld [vmem:[#allocation14 + $0x2a0] sm:$0xff]
    %v2232 = vld [vmem:[#allocation14 + $0x2a8] sm:$0xff]
    %v2233 = vld [vmem:[#allocation14 + $0x2b0] sm:$0xff]
    %v2234 = vld [vmem:[#allocation14 + $0x2b8] sm:$0xff]
    %v2235 = vld [vmem:[#allocation14 + $0x2c0] sm:$0xff]
    %v2236 = vld [vmem:[#allocation14 + $0x2c8] sm:$0xff]
    %v2237 = vld [vmem:[#allocation14 + $0x2d0] sm:$0xff]
    %v2238 = vld [vmem:[#allocation14 + $0x2d8] sm:$0xff]
    %v2239 = vld [vmem:[#allocation14 + $0x2e0] sm:$0xff]
    %v2240 = vld [vmem:[#allocation14 + $0x2e8] sm:$0xff]
    %v2241 = vld [vmem:[#allocation14 + $0x2f0] sm:$0xff]
    %v2242 = vld [vmem:[#allocation14 + $0x2f8] sm:$0xff]
    %v2243 = vld [vmem:[#allocation14 + $0x300] sm:$0xff]
    %v2244 = vld [vmem:[#allocation14 + $0x308] sm:$0xff]
    %v2245 = vld [vmem:[#allocation14 + $0x310] sm:$0xff]
    %v2246 = vld [vmem:[#allocation14 + $0x318] sm:$0xff]
    %v2247 = vld [vmem:[#allocation14 + $0x320] sm:$0xff]
    %v2248 = vld [vmem:[#allocation14 + $0x328] sm:$0xff]
    %v2249 = vld [vmem:[#allocation14 + $0x330] sm:$0xff]
    %v2250 = vld [vmem:[#allocation14 + $0x338] sm:$0xff]
    %v2251 = vld [vmem:[#allocation14 + $0x340] sm:$0xff]
    %v2252 = vld [vmem:[#allocation14 + $0x348] sm:$0xff]
    %v2253 = vld [vmem:[#allocation14 + $0x350] sm:$0xff]
    %v2254 = vld [vmem:[#allocation14 + $0x358] sm:$0xff]
    %v2255 = vld [vmem:[#allocation14 + $0x360] sm:$0xff]
    %v2256 = vld [vmem:[#allocation14 + $0x368] sm:$0xff]
    %v2257 = vld [vmem:[#allocation14 + $0x370] sm:$0xff]
    %v2258 = vld [vmem:[#allocation14 + $0x378] sm:$0xff]
    %v2259 = vld [vmem:[#allocation14 + $0x380] sm:$0xff]
    %v2260 = vld [vmem:[#allocation14 + $0x388] sm:$0xff]
    %v2261 = vld [vmem:[#allocation14 + $0x390] sm:$0xff]
    %v2262 = vld [vmem:[#allocation14 + $0x398] sm:$0xff]
    %v2263 = vld [vmem:[#allocation14 + $0x3a0] sm:$0xff]
    %v2264 = vld [vmem:[#allocation14 + $0x3a8] sm:$0xff]
    %v2265 = vld [vmem:[#allocation14 + $0x3b0] sm:$0xff]
    %v2266 = vld [vmem:[#allocation14 + $0x3b8] sm:$0xff]
    %v2267 = vld [vmem:[#allocation14 + $0x3c0] sm:$0xff]
    %v2268 = vld [vmem:[#allocation14 + $0x3c8] sm:$0xff]
    %v2269 = vld [vmem:[#allocation14 + $0x3d0] sm:$0xff]
    %v2270 = vld [vmem:[#allocation14 + $0x3d8] sm:$0xff]
    %v2271 = vld [vmem:[#allocation14 + $0x3e0] sm:$0xff]
    %v2272 = vld [vmem:[#allocation14 + $0x3e8] sm:$0xff]
    %v2273 = vld [vmem:[#allocation14 + $0x3f0] sm:$0xff]
    %v2274 = vld [vmem:[#allocation14 + $0x3f8] sm:$0xff]
    %v2275 = vld [vmem:[#allocation15] sm:$0xff]
    %v2276 = vld [vmem:[#allocation15 + $0x8] sm:$0xff]
    %v2279 = vlaneseq
    %v2280 = vshrl.u32 %v2279, 7
    %v2281 = vsub.s32 0, %v2280
    %v2282 = vrot.slane %v2275, %v2281
    %v2283 = vlaneseq
    %v2284 = vshrl.u32 %v2283, 7
    %v2285 = vsub.s32 1, %v2284
    %v2286 = vrot.slane %v2275, %v2285
    %v2287 = vlaneseq
    %v2288 = vshrl.u32 %v2287, 7
    %v2289 = vsub.s32 2, %v2288
    %v2290 = vrot.slane %v2275, %v2289
    %v2291 = vlaneseq
    %v2292 = vshrl.u32 %v2291, 7
    %v2293 = vsub.s32 3, %v2292
    %v2294 = vrot.slane %v2275, %v2293
    %v2295 = vlaneseq
    %v2296 = vshrl.u32 %v2295, 7
    %v2297 = vsub.s32 4, %v2296
    %v2298 = vrot.slane %v2275, %v2297
    %v2299 = vlaneseq
    %v2300 = vshrl.u32 %v2299, 7
    %v2301 = vsub.s32 5, %v2300
    %v2302 = vrot.slane %v2275, %v2301
    %v2303 = vlaneseq
    %v2304 = vshrl.u32 %v2303, 7
    %v2305 = vsub.s32 6, %v2304
    %v2306 = vrot.slane %v2275, %v2305
    %v2307 = vlaneseq
    %v2308 = vshrl.u32 %v2307, 7
    %v2309 = vsub.s32 7, %v2308
    %v2310 = vrot.slane %v2275, %v2309
    %v2311 = vlaneseq
    %v2312 = vshrl.u32 %v2311, 7
    %v2313 = vsub.s32 0, %v2312
    %v2314 = vrot.slane %v2276, %v2313
    %v2315 = vlaneseq
    %v2316 = vshrl.u32 %v2315, 7
    %v2317 = vsub.s32 1, %v2316
    %v2318 = vrot.slane %v2276, %v2317
    %v2319 = vlaneseq
    %v2320 = vshrl.u32 %v2319, 7
    %v2321 = vsub.s32 2, %v2320
    %v2322 = vrot.slane %v2276, %v2321
    %v2323 = vlaneseq
    %v2324 = vshrl.u32 %v2323, 7
    %v2325 = vsub.s32 3, %v2324
    %v2326 = vrot.slane %v2276, %v2325
    %v2327 = vlaneseq
    %v2328 = vshrl.u32 %v2327, 7
    %v2329 = vsub.s32 4, %v2328
    %v2330 = vrot.slane %v2276, %v2329
    %v2331 = vlaneseq
    %v2332 = vshrl.u32 %v2331, 7
    %v2333 = vsub.s32 5, %v2332
    %v2334 = vrot.slane %v2276, %v2333
    %v2335 = vlaneseq
    %v2336 = vshrl.u32 %v2335, 7
    %v2337 = vsub.s32 6, %v2336
    %v2338 = vrot.slane %v2276, %v2337
    %v2339 = vlaneseq
    %v2340 = vshrl.u32 %v2339, 7
    %v2341 = vsub.s32 7, %v2340
    %v2342 = vrot.slane %v2276, %v2341
    %v2487 = vunpack.c.l.b16 %v2147
    %v2488 = vunpack.c.h.b16 %v2147
    %v2489 = vunpack.c.l.b16 %v2148
    %v2490 = vunpack.c.h.b16 %v2148
    %v2491 = vunpack.c.l.b16 %v2149
    %v2492 = vunpack.c.h.b16 %v2149
    %v2493 = vunpack.c.l.b16 %v2150
    %v2494 = vunpack.c.h.b16 %v2150
    %v2495 = vunpack.c.l.b16 %v2151
    %v2496 = vunpack.c.h.b16 %v2151
    %v2497 = vunpack.c.l.b16 %v2152
    %v2498 = vunpack.c.h.b16 %v2152
    %v2499 = vunpack.c.l.b16 %v2153
    %v2500 = vunpack.c.h.b16 %v2153
    %v2501 = vunpack.c.l.b16 %v2154
    %v2502 = vunpack.c.h.b16 %v2154
    %v2503 = vunpack.c.l.b16 %v2155
    %v2504 = vunpack.c.h.b16 %v2155
    %v2505 = vunpack.c.l.b16 %v2156
    %v2506 = vunpack.c.h.b16 %v2156
    %v2507 = vunpack.c.l.b16 %v2157
    %v2508 = vunpack.c.h.b16 %v2157
    %v2509 = vunpack.c.l.b16 %v2158
    %v2510 = vunpack.c.h.b16 %v2158
    %v2511 = vunpack.c.l.b16 %v2159
    %v2512 = vunpack.c.h.b16 %v2159
    %v2513 = vunpack.c.l.b16 %v2160
    %v2514 = vunpack.c.h.b16 %v2160
    %v2515 = vunpack.c.l.b16 %v2161
    %v2516 = vunpack.c.h.b16 %v2161
    %v2517 = vunpack.c.l.b16 %v2162
    %v2518 = vunpack.c.h.b16 %v2162
    %v2519 = vunpack.c.l.b16 %v2163
    %v2520 = vunpack.c.h.b16 %v2163
    %v2521 = vunpack.c.l.b16 %v2164
    %v2522 = vunpack.c.h.b16 %v2164
    %v2523 = vunpack.c.l.b16 %v2165
    %v2524 = vunpack.c.h.b16 %v2165
    %v2525 = vunpack.c.l.b16 %v2166
    %v2526 = vunpack.c.h.b16 %v2166
    %v2527 = vunpack.c.l.b16 %v2167
    %v2528 = vunpack.c.h.b16 %v2167
    %v2529 = vunpack.c.l.b16 %v2168
    %v2530 = vunpack.c.h.b16 %v2168
    %v2531 = vunpack.c.l.b16 %v2169
    %v2532 = vunpack.c.h.b16 %v2169
    %v2533 = vunpack.c.l.b16 %v2170
    %v2534 = vunpack.c.h.b16 %v2170
    %v2535 = vunpack.c.l.b16 %v2171
    %v2536 = vunpack.c.h.b16 %v2171
    %v2537 = vunpack.c.l.b16 %v2172
    %v2538 = vunpack.c.h.b16 %v2172
    %v2539 = vunpack.c.l.b16 %v2173
    %v2540 = vunpack.c.h.b16 %v2173
    %v2541 = vunpack.c.l.b16 %v2174
    %v2542 = vunpack.c.h.b16 %v2174
    %v2543 = vunpack.c.l.b16 %v2175
    %v2544 = vunpack.c.h.b16 %v2175
    %v2545 = vunpack.c.l.b16 %v2176
    %v2546 = vunpack.c.h.b16 %v2176
    %v2547 = vunpack.c.l.b16 %v2177
    %v2548 = vunpack.c.h.b16 %v2177
    %v2549 = vunpack.c.l.b16 %v2178
    %v2550 = vunpack.c.h.b16 %v2178
    %v2551 = vunpack.c.l.b16 %v2179
    %v2552 = vunpack.c.h.b16 %v2179
    %v2553 = vunpack.c.l.b16 %v2180
    %v2554 = vunpack.c.h.b16 %v2180
    %v2555 = vunpack.c.l.b16 %v2181
    %v2556 = vunpack.c.h.b16 %v2181
    %v2557 = vunpack.c.l.b16 %v2182
    %v2558 = vunpack.c.h.b16 %v2182
    %v2559 = vunpack.c.l.b16 %v2183
    %v2560 = vunpack.c.h.b16 %v2183
    %v2561 = vunpack.c.l.b16 %v2184
    %v2562 = vunpack.c.h.b16 %v2184
    %v2563 = vunpack.c.l.b16 %v2185
    %v2564 = vunpack.c.h.b16 %v2185
    %v2565 = vunpack.c.l.b16 %v2186
    %v2566 = vunpack.c.h.b16 %v2186
    %v2567 = vunpack.c.l.b16 %v2187
    %v2568 = vunpack.c.h.b16 %v2187
    %v2569 = vunpack.c.l.b16 %v2188
    %v2570 = vunpack.c.h.b16 %v2188
    %v2571 = vunpack.c.l.b16 %v2189
    %v2572 = vunpack.c.h.b16 %v2189
    %v2573 = vunpack.c.l.b16 %v2190
    %v2574 = vunpack.c.h.b16 %v2190
    %v2575 = vunpack.c.l.b16 %v2191
    %v2576 = vunpack.c.h.b16 %v2191
    %v2577 = vunpack.c.l.b16 %v2192
    %v2578 = vunpack.c.h.b16 %v2192
    %v2579 = vunpack.c.l.b16 %v2193
    %v2580 = vunpack.c.h.b16 %v2193
    %v2581 = vunpack.c.l.b16 %v2194
    %v2582 = vunpack.c.h.b16 %v2194
    %v2583 = vunpack.c.l.b16 %v2195
    %v2584 = vunpack.c.h.b16 %v2195
    %v2585 = vunpack.c.l.b16 %v2196
    %v2586 = vunpack.c.h.b16 %v2196
    %v2587 = vunpack.c.l.b16 %v2197
    %v2588 = vunpack.c.h.b16 %v2197
    %v2589 = vunpack.c.l.b16 %v2198
    %v2590 = vunpack.c.h.b16 %v2198
    %v2591 = vunpack.c.l.b16 %v2199
    %v2592 = vunpack.c.h.b16 %v2199
    %v2593 = vunpack.c.l.b16 %v2200
    %v2594 = vunpack.c.h.b16 %v2200
    %v2595 = vunpack.c.l.b16 %v2201
    %v2596 = vunpack.c.h.b16 %v2201
    %v2597 = vunpack.c.l.b16 %v2202
    %v2598 = vunpack.c.h.b16 %v2202
    %v2599 = vunpack.c.l.b16 %v2203
    %v2600 = vunpack.c.h.b16 %v2203
    %v2601 = vunpack.c.l.b16 %v2204
    %v2602 = vunpack.c.h.b16 %v2204
    %v2603 = vunpack.c.l.b16 %v2205
    %v2604 = vunpack.c.h.b16 %v2205
    %v2605 = vunpack.c.l.b16 %v2206
    %v2606 = vunpack.c.h.b16 %v2206
    %v2607 = vunpack.c.l.b16 %v2207
    %v2608 = vunpack.c.h.b16 %v2207
    %v2609 = vunpack.c.l.b16 %v2208
    %v2610 = vunpack.c.h.b16 %v2208
    %v2611 = vunpack.c.l.b16 %v2209
    %v2612 = vunpack.c.h.b16 %v2209
    %v2613 = vunpack.c.l.b16 %v2210
    %v2614 = vunpack.c.h.b16 %v2210
    %v2615 = vunpack.c.l.b16 %v2211
    %v2616 = vunpack.c.h.b16 %v2211
    %v2617 = vunpack.c.l.b16 %v2212
    %v2618 = vunpack.c.h.b16 %v2212
    %v2619 = vunpack.c.l.b16 %v2213
    %v2620 = vunpack.c.h.b16 %v2213
    %v2621 = vunpack.c.l.b16 %v2214
    %v2622 = vunpack.c.h.b16 %v2214
    %v2623 = vunpack.c.l.b16 %v2215
    %v2624 = vunpack.c.h.b16 %v2215
    %v2625 = vunpack.c.l.b16 %v2216
    %v2626 = vunpack.c.h.b16 %v2216
    %v2627 = vunpack.c.l.b16 %v2217
    %v2628 = vunpack.c.h.b16 %v2217
    %v2629 = vunpack.c.l.b16 %v2218
    %v2630 = vunpack.c.h.b16 %v2218
    %v2631 = vunpack.c.l.b16 %v2219
    %v2632 = vunpack.c.h.b16 %v2219
    %v2633 = vunpack.c.l.b16 %v2220
    %v2634 = vunpack.c.h.b16 %v2220
    %v2635 = vunpack.c.l.b16 %v2221
    %v2636 = vunpack.c.h.b16 %v2221
    %v2637 = vunpack.c.l.b16 %v2222
    %v2638 = vunpack.c.h.b16 %v2222
    %v2639 = vunpack.c.l.b16 %v2223
    %v2640 = vunpack.c.h.b16 %v2223
    %v2641 = vunpack.c.l.b16 %v2224
    %v2642 = vunpack.c.h.b16 %v2224
    %v2643 = vunpack.c.l.b16 %v2225
    %v2644 = vunpack.c.h.b16 %v2225
    %v2645 = vunpack.c.l.b16 %v2226
    %v2646 = vunpack.c.h.b16 %v2226
    %v2647 = vunpack.c.l.b16 %v2227
    %v2648 = vunpack.c.h.b16 %v2227
    %v2649 = vunpack.c.l.b16 %v2228
    %v2650 = vunpack.c.h.b16 %v2228
    %v2651 = vunpack.c.l.b16 %v2229
    %v2652 = vunpack.c.h.b16 %v2229
    %v2653 = vunpack.c.l.b16 %v2230
    %v2654 = vunpack.c.h.b16 %v2230
    %v2655 = vunpack.c.l.b16 %v2231
    %v2656 = vunpack.c.h.b16 %v2231
    %v2657 = vunpack.c.l.b16 %v2232
    %v2658 = vunpack.c.h.b16 %v2232
    %v2659 = vunpack.c.l.b16 %v2233
    %v2660 = vunpack.c.h.b16 %v2233
    %v2661 = vunpack.c.l.b16 %v2234
    %v2662 = vunpack.c.h.b16 %v2234
    %v2663 = vunpack.c.l.b16 %v2235
    %v2664 = vunpack.c.h.b16 %v2235
    %v2665 = vunpack.c.l.b16 %v2236
    %v2666 = vunpack.c.h.b16 %v2236
    %v2667 = vunpack.c.l.b16 %v2237
    %v2668 = vunpack.c.h.b16 %v2237
    %v2669 = vunpack.c.l.b16 %v2238
    %v2670 = vunpack.c.h.b16 %v2238
    %v2671 = vunpack.c.l.b16 %v2239
    %v2672 = vunpack.c.h.b16 %v2239
    %v2673 = vunpack.c.l.b16 %v2240
    %v2674 = vunpack.c.h.b16 %v2240
    %v2675 = vunpack.c.l.b16 %v2241
    %v2676 = vunpack.c.h.b16 %v2241
    %v2677 = vunpack.c.l.b16 %v2242
    %v2678 = vunpack.c.h.b16 %v2242
    %v2679 = vunpack.c.l.b16 %v2243
    %v2680 = vunpack.c.h.b16 %v2243
    %v2681 = vunpack.c.l.b16 %v2244
    %v2682 = vunpack.c.h.b16 %v2244
    %v2683 = vunpack.c.l.b16 %v2245
    %v2684 = vunpack.c.h.b16 %v2245
    %v2685 = vunpack.c.l.b16 %v2246
    %v2686 = vunpack.c.h.b16 %v2246
    %v2687 = vunpack.c.l.b16 %v2247
    %v2688 = vunpack.c.h.b16 %v2247
    %v2689 = vunpack.c.l.b16 %v2248
    %v2690 = vunpack.c.h.b16 %v2248
    %v2691 = vunpack.c.l.b16 %v2249
    %v2692 = vunpack.c.h.b16 %v2249
    %v2693 = vunpack.c.l.b16 %v2250
    %v2694 = vunpack.c.h.b16 %v2250
    %v2695 = vunpack.c.l.b16 %v2251
    %v2696 = vunpack.c.h.b16 %v2251
    %v2697 = vunpack.c.l.b16 %v2252
    %v2698 = vunpack.c.h.b16 %v2252
    %v2699 = vunpack.c.l.b16 %v2253
    %v2700 = vunpack.c.h.b16 %v2253
    %v2701 = vunpack.c.l.b16 %v2254
    %v2702 = vunpack.c.h.b16 %v2254
    %v2703 = vunpack.c.l.b16 %v2255
    %v2704 = vunpack.c.h.b16 %v2255
    %v2705 = vunpack.c.l.b16 %v2256
    %v2706 = vunpack.c.h.b16 %v2256
    %v2707 = vunpack.c.l.b16 %v2257
    %v2708 = vunpack.c.h.b16 %v2257
    %v2709 = vunpack.c.l.b16 %v2258
    %v2710 = vunpack.c.h.b16 %v2258
    %v2711 = vunpack.c.l.b16 %v2259
    %v2712 = vunpack.c.h.b16 %v2259
    %v2713 = vunpack.c.l.b16 %v2260
    %v2714 = vunpack.c.h.b16 %v2260
    %v2715 = vunpack.c.l.b16 %v2261
    %v2716 = vunpack.c.h.b16 %v2261
    %v2717 = vunpack.c.l.b16 %v2262
    %v2718 = vunpack.c.h.b16 %v2262
    %v2719 = vunpack.c.l.b16 %v2263
    %v2720 = vunpack.c.h.b16 %v2263
    %v2721 = vunpack.c.l.b16 %v2264
    %v2722 = vunpack.c.h.b16 %v2264
    %v2723 = vunpack.c.l.b16 %v2265
    %v2724 = vunpack.c.h.b16 %v2265
    %v2725 = vunpack.c.l.b16 %v2266
    %v2726 = vunpack.c.h.b16 %v2266
    %v2727 = vunpack.c.l.b16 %v2267
    %v2728 = vunpack.c.h.b16 %v2267
    %v2729 = vunpack.c.l.b16 %v2268
    %v2730 = vunpack.c.h.b16 %v2268
    %v2731 = vunpack.c.l.b16 %v2269
    %v2732 = vunpack.c.h.b16 %v2269
    %v2733 = vunpack.c.l.b16 %v2270
    %v2734 = vunpack.c.h.b16 %v2270
    %v2735 = vunpack.c.l.b16 %v2271
    %v2736 = vunpack.c.h.b16 %v2271
    %v2737 = vunpack.c.l.b16 %v2272
    %v2738 = vunpack.c.h.b16 %v2272
    %v2739 = vunpack.c.l.b16 %v2273
    %v2740 = vunpack.c.h.b16 %v2273
    %v2741 = vunpack.c.l.b16 %v2274
    %v2742 = vunpack.c.h.b16 %v2274
    %v2743 = vpack.c.b16 %v2503, %v2487
    %v2744 = vpack.c.b16 %v2504, %v2488
    %v2745 = vpack.c.b16 %v2505, %v2489
    %v2746 = vpack.c.b16 %v2506, %v2490
    %v2747 = vpack.c.b16 %v2507, %v2491
    %v2748 = vpack.c.b16 %v2508, %v2492
    %v2749 = vpack.c.b16 %v2509, %v2493
    %v2750 = vpack.c.b16 %v2510, %v2494
    %v2751 = vpack.c.b16 %v2511, %v2495
    %v2752 = vpack.c.b16 %v2512, %v2496
    %v2753 = vpack.c.b16 %v2513, %v2497
    %v2754 = vpack.c.b16 %v2514, %v2498
    %v2755 = vpack.c.b16 %v2515, %v2499
    %v2756 = vpack.c.b16 %v2516, %v2500
    %v2757 = vpack.c.b16 %v2517, %v2501
    %v2758 = vpack.c.b16 %v2518, %v2502
    %v2759 = vpack.c.b16 %v2535, %v2519
    %v2760 = vpack.c.b16 %v2536, %v2520
    %v2761 = vpack.c.b16 %v2537, %v2521
    %v2762 = vpack.c.b16 %v2538, %v2522
    %v2763 = vpack.c.b16 %v2539, %v2523
    %v2764 = vpack.c.b16 %v2540, %v2524
    %v2765 = vpack.c.b16 %v2541, %v2525
    %v2766 = vpack.c.b16 %v2542, %v2526
    %v2767 = vpack.c.b16 %v2543, %v2527
    %v2768 = vpack.c.b16 %v2544, %v2528
    %v2769 = vpack.c.b16 %v2545, %v2529
    %v2770 = vpack.c.b16 %v2546, %v2530
    %v2771 = vpack.c.b16 %v2547, %v2531
    %v2772 = vpack.c.b16 %v2548, %v2532
    %v2773 = vpack.c.b16 %v2549, %v2533
    %v2774 = vpack.c.b16 %v2550, %v2534
    %v2775 = vpack.c.b16 %v2567, %v2551
    %v2776 = vpack.c.b16 %v2568, %v2552
    %v2777 = vpack.c.b16 %v2569, %v2553
    %v2778 = vpack.c.b16 %v2570, %v2554
    %v2779 = vpack.c.b16 %v2571, %v2555
    %v2780 = vpack.c.b16 %v2572, %v2556
    %v2781 = vpack.c.b16 %v2573, %v2557
    %v2782 = vpack.c.b16 %v2574, %v2558
    %v2783 = vpack.c.b16 %v2575, %v2559
    %v2784 = vpack.c.b16 %v2576, %v2560
    %v2785 = vpack.c.b16 %v2577, %v2561
    %v2786 = vpack.c.b16 %v2578, %v2562
    %v2787 = vpack.c.b16 %v2579, %v2563
    %v2788 = vpack.c.b16 %v2580, %v2564
    %v2789 = vpack.c.b16 %v2581, %v2565
    %v2790 = vpack.c.b16 %v2582, %v2566
    %v2791 = vpack.c.b16 %v2599, %v2583
    %v2792 = vpack.c.b16 %v2600, %v2584
    %v2793 = vpack.c.b16 %v2601, %v2585
    %v2794 = vpack.c.b16 %v2602, %v2586
    %v2795 = vpack.c.b16 %v2603, %v2587
    %v2796 = vpack.c.b16 %v2604, %v2588
    %v2797 = vpack.c.b16 %v2605, %v2589
    %v2798 = vpack.c.b16 %v2606, %v2590
    %v2799 = vpack.c.b16 %v2607, %v2591
    %v2800 = vpack.c.b16 %v2608, %v2592
    %v2801 = vpack.c.b16 %v2609, %v2593
    %v2802 = vpack.c.b16 %v2610, %v2594
    %v2803 = vpack.c.b16 %v2611, %v2595
    %v2804 = vpack.c.b16 %v2612, %v2596
    %v2805 = vpack.c.b16 %v2613, %v2597
    %v2806 = vpack.c.b16 %v2614, %v2598
    %v2807 = vpack.c.b16 %v2631, %v2615
    %v2808 = vpack.c.b16 %v2632, %v2616
    %v2809 = vpack.c.b16 %v2633, %v2617
    %v2810 = vpack.c.b16 %v2634, %v2618
    %v2811 = vpack.c.b16 %v2635, %v2619
    %v2812 = vpack.c.b16 %v2636, %v2620
    %v2813 = vpack.c.b16 %v2637, %v2621
    %v2814 = vpack.c.b16 %v2638, %v2622
    %v2815 = vpack.c.b16 %v2639, %v2623
    %v2816 = vpack.c.b16 %v2640, %v2624
    %v2817 = vpack.c.b16 %v2641, %v2625
    %v2818 = vpack.c.b16 %v2642, %v2626
    %v2819 = vpack.c.b16 %v2643, %v2627
    %v2820 = vpack.c.b16 %v2644, %v2628
    %v2821 = vpack.c.b16 %v2645, %v2629
    %v2822 = vpack.c.b16 %v2646, %v2630
    %v2823 = vpack.c.b16 %v2663, %v2647
    %v2824 = vpack.c.b16 %v2664, %v2648
    %v2825 = vpack.c.b16 %v2665, %v2649
    %v2826 = vpack.c.b16 %v2666, %v2650
    %v2827 = vpack.c.b16 %v2667, %v2651
    %v2828 = vpack.c.b16 %v2668, %v2652
    %v2829 = vpack.c.b16 %v2669, %v2653
    %v2830 = vpack.c.b16 %v2670, %v2654
    %v2831 = vpack.c.b16 %v2671, %v2655
    %v2832 = vpack.c.b16 %v2672, %v2656
    %v2833 = vpack.c.b16 %v2673, %v2657
    %v2834 = vpack.c.b16 %v2674, %v2658
    %v2835 = vpack.c.b16 %v2675, %v2659
    %v2836 = vpack.c.b16 %v2676, %v2660
    %v2837 = vpack.c.b16 %v2677, %v2661
    %v2838 = vpack.c.b16 %v2678, %v2662
    %v2839 = vpack.c.b16 %v2695, %v2679
    %v2840 = vpack.c.b16 %v2696, %v2680
    %v2841 = vpack.c.b16 %v2697, %v2681
    %v2842 = vpack.c.b16 %v2698, %v2682
    %v2843 = vpack.c.b16 %v2699, %v2683
    %v2844 = vpack.c.b16 %v2700, %v2684
    %v2845 = vpack.c.b16 %v2701, %v2685
    %v2846 = vpack.c.b16 %v2702, %v2686
    %v2847 = vpack.c.b16 %v2703, %v2687
    %v2848 = vpack.c.b16 %v2704, %v2688
    %v2849 = vpack.c.b16 %v2705, %v2689
    %v2850 = vpack.c.b16 %v2706, %v2690
    %v2851 = vpack.c.b16 %v2707, %v2691
    %v2852 = vpack.c.b16 %v2708, %v2692
    %v2853 = vpack.c.b16 %v2709, %v2693
    %v2854 = vpack.c.b16 %v2710, %v2694
    %v2855 = vpack.c.b16 %v2727, %v2711
    %v2856 = vpack.c.b16 %v2728, %v2712
    %v2857 = vpack.c.b16 %v2729, %v2713
    %v2858 = vpack.c.b16 %v2730, %v2714
    %v2859 = vpack.c.b16 %v2731, %v2715
    %v2860 = vpack.c.b16 %v2732, %v2716
    %v2861 = vpack.c.b16 %v2733, %v2717
    %v2862 = vpack.c.b16 %v2734, %v2718
    %v2863 = vpack.c.b16 %v2735, %v2719
    %v2864 = vpack.c.b16 %v2736, %v2720
    %v2865 = vpack.c.b16 %v2737, %v2721
    %v2866 = vpack.c.b16 %v2738, %v2722
    %v2867 = vpack.c.b16 %v2739, %v2723
    %v2868 = vpack.c.b16 %v2740, %v2724
    %v2869 = vpack.c.b16 %v2741, %v2725
    %v2870 = vpack.c.b16 %v2742, %v2726
    %2999 = vmatprep.subr.bf16.mxu0 %v2744
    %3000 = vmatpush1.bf16.msra.mxu0 %v2743
    %3001 = vmatprep.subr.bf16.mxu0 %v2760
    %3002 = vmatpush1.bf16.msra.mxu0 %v2759
    %3003 = vmatprep.subr.bf16.mxu0 %v2776
    %3004 = vmatpush1.bf16.msra.mxu0 %v2775
    %3005 = vmatprep.subr.bf16.mxu0 %v2792
    %3006 = vmatpush1.bf16.msra.mxu0 %v2791
    %3007 = vmatprep.subr.bf16.mxu0 %v2808
    %3008 = vmatpush1.bf16.msra.mxu0 %v2807
    %3009 = vmatprep.subr.bf16.mxu0 %v2824
    %3010 = vmatpush1.bf16.msra.mxu0 %v2823
    %3011 = vmatprep.subr.bf16.mxu0 %v2840
    %3012 = vmatpush1.bf16.msra.mxu0 %v2839
    %3013 = vmatprep.subr.bf16.mxu0 %v2856
    %3014 = vmatpush1.bf16.msra.mxu0 %v2855
    %3015 = vmatprep.subr.bf16.mxu0 0
    %3016 = vmatpush1.bf16.msra.mxu0 0
    %3017 = vmatprep.subr.bf16.mxu0 0
    %3018 = vmatpush1.bf16.msra.mxu0 0
    %3019 = vmatprep.subr.bf16.mxu0 0
    %3020 = vmatpush1.bf16.msra.mxu0 0
    %3021 = vmatprep.subr.bf16.mxu0 0
    %3022 = vmatpush1.bf16.msra.mxu0 0
    %3023 = vmatprep.subr.bf16.mxu0 0
    %3024 = vmatpush1.bf16.msra.mxu0 0
    %3025 = vmatprep.subr.bf16.mxu0 0
    %3026 = vmatpush1.bf16.msra.mxu0 0
    %3027 = vmatprep.subr.bf16.mxu0 0
    %3028 = vmatpush1.bf16.msra.mxu0 0
    %3029 = vmatprep.subr.bf16.mxu0 0
    %3030 = vmatpush1.bf16.msra.mxu0 0
    %3031 = vmatprep.mubr.bf16.mxu0 0
    %3032 = vmatmul.mubr.bf16.gmra.mrb[0].mxu0 %v2115
    %v3033 = vpop.f32.mrb[0].mxu0
    %v3034 = vadd.f32 %v2282, %v3033
    %v3035 = vpop.f32.mrb[0].mxu0
    %v3036 = vadd.f32 %v2286, %v3035
    %v3037 = vpop.f32.mrb[0].mxu0
    %v3038 = vadd.f32 %v2282, %v3037
    %v3039 = vpop.f32.mrb[0].mxu0
    %v3040 = vadd.f32 %v2286, %v3039
    %3041 = vmatprep.mubr.bf16.mxu0 0
    %3042 = vmatmul.mubr.bf16.gmra.mrb[0].mxu0 %v2116
    %v3043 = vpop.f32.mrb[0].mxu0
    %v3044 = vadd.f32 %v2282, %v3043
    %v3045 = vpop.f32.mrb[0].mxu0
    %v3046 = vadd.f32 %v2286, %v3045
    %v3047 = vpop.f32.mrb[0].mxu0
    %v3048 = vadd.f32 %v2282, %v3047
    %v3049 = vpop.f32.mrb[0].mxu0
    %v3050 = vadd.f32 %v2286, %v3049
    %3051 = vmatprep.mubr.bf16.mxu0 0
    %3052 = vmatmul.mubr.bf16.gmra.mrb[0].mxu0 %v2117
    %v3053 = vpop.f32.mrb[0].mxu0
    %v3054 = vadd.f32 %v2282, %v3053
    %v3055 = vpop.f32.mrb[0].mxu0
    %v3056 = vadd.f32 %v2286, %v3055
    %v3057 = vpop.f32.mrb[0].mxu0
    %v3058 = vadd.f32 %v2282, %v3057
    %v3059 = vpop.f32.mrb[0].mxu0
    %v3060 = vadd.f32 %v2286, %v3059
    %3061 = vmatprep.mubr.bf16.mxu0 0
    %3062 = vmatmul.mubr.bf16.gmra.mrb[0].mxu0 %v2118
    %v3063 = vpop.f32.mrb[0].mxu0
    %v3064 = vadd.f32 %v2282, %v3063
    %v3065 = vpop.f32.mrb[0].mxu0
    %v3066 = vadd.f32 %v2286, %v3065
    %v3067 = vpop.f32.mrb[0].mxu0
    %v3068 = vadd.f32 %v2282, %v3067
    %v3069 = vpop.f32.mrb[0].mxu0
    %v3070 = vadd.f32 %v2286, %v3069
    %3071 = vmatprep.mubr.bf16.mxu0 0
    %3072 = vmatmul.mubr.bf16.gmra.mrb[0].mxu0 %v2119
    %v3073 = vpop.f32.mrb[0].mxu0
    %v3074 = vadd.f32 %v2282, %v3073
    %v3075 = vpop.f32.mrb[0].mxu0
    %v3076 = vadd.f32 %v2286, %v3075
    %v3077 = vpop.f32.mrb[0].mxu0
    %v3078 = vadd.f32 %v2282, %v3077
    %v3079 = vpop.f32.mrb[0].mxu0
    %v3080 = vadd.f32 %v2286, %v3079
    %3081 = vmatprep.mubr.bf16.mxu0 0
    %3082 = vmatmul.mubr.bf16.gmra.mrb[0].mxu0 %v2120
    %v3083 = vpop.f32.mrb[0].mxu0
    %v3084 = vadd.f32 %v2282, %v3083
    %v3085 = vpop.f32.mrb[0].mxu0
    %v3086 = vadd.f32 %v2286, %v3085
    %v3087 = vpop.f32.mrb[0].mxu0
    %v3088 = vadd.f32 %v2282, %v3087
    %v3089 = vpop.f32.mrb[0].mxu0
    %v3090 = vadd.f32 %v2286, %v3089
    %3091 = vmatprep.mubr.bf16.mxu0 0
    %3092 = vmatmul.mubr.bf16.gmra.mrb[0].mxu0 %v2121
    %v3093 = vpop.f32.mrb[0].mxu0
    %v3094 = vadd.f32 %v2282, %v3093
    %v3095 = vpop.f32.mrb[0].mxu0
    %v3096 = vadd.f32 %v2286, %v3095
    %v3097 = vpop.f32.mrb[0].mxu0
    %v3098 = vadd.f32 %v2282, %v3097
    %v3099 = vpop.f32.mrb[0].mxu0
    %v3100 = vadd.f32 %v2286, %v3099
    %3101 = vmatprep.mubr.bf16.mxu0 0
    %3102 = vmatmul.mubr.bf16.gmra.mrb[0].mxu0 %v2122
    %v3103 = vpop.f32.mrb[0].mxu0
    %v3104 = vadd.f32 %v2282, %v3103
    %v3105 = vpop.f32.mrb[0].mxu0
    %v3106 = vadd.f32 %v2286, %v3105
    %v3107 = vpop.f32.mrb[0].mxu0
    %v3108 = vadd.f32 %v2282, %v3107
    %v3109 = vpop.f32.mrb[0].mxu0
    %v3110 = vadd.f32 %v2286, %v3109
    %3111 = vmatprep.mubr.bf16.mxu0 0
    %3112 = vmatmul.mubr.bf16.gmra.mrb[0].mxu0 %v2123
    %v3113 = vpop.f32.mrb[0].mxu0
    %v3114 = vadd.f32 %v2282, %v3113
    %v3115 = vpop.f32.mrb[0].mxu0
    %v3116 = vadd.f32 %v2286, %v3115
    %v3117 = vpop.f32.mrb[0].mxu0
    %v3118 = vadd.f32 %v2282, %v3117
    %v3119 = vpop.f32.mrb[0].mxu0
    %v3120 = vadd.f32 %v2286, %v3119
    %3121 = vmatprep.mubr.bf16.mxu0 0
    %3122 = vmatmul.mubr.bf16.gmra.mrb[0].mxu0 %v2124
    %v3123 = vpop.f32.mrb[0].mxu0
    %v3124 = vadd.f32 %v2282, %v3123
    %v3125 = vpop.f32.mrb[0].mxu0
    %v3126 = vadd.f32 %v2286, %v3125
    %v3127 = vpop.f32.mrb[0].mxu0
    %v3128 = vadd.f32 %v2282, %v3127
    %v3129 = vpop.f32.mrb[0].mxu0
    %v3130 = vadd.f32 %v2286, %v3129
    %3131 = vmatprep.mubr.bf16.mxu0 0
    %3132 = vmatmul.mubr.bf16.gmra.mrb[0].mxu0 %v2125
    %v3133 = vpop.f32.mrb[0].mxu0
    %v3134 = vadd.f32 %v2282, %v3133
    %v3135 = vpop.f32.mrb[0].mxu0
    %v3136 = vadd.f32 %v2286, %v3135
    %v3137 = vpop.f32.mrb[0].mxu0
    %v3138 = vadd.f32 %v2282, %v3137
    %v3139 = vpop.f32.mrb[0].mxu0
    %v3140 = vadd.f32 %v2286, %v3139
    %3141 = vmatprep.mubr.bf16.mxu0 0
    %3142 = vmatmul.mubr.bf16.gmra.mrb[0].mxu0 %v2126
    %v3143 = vpop.f32.mrb[0].mxu0
    %v3144 = vadd.f32 %v2282, %v3143
    %v3145 = vpop.f32.mrb[0].mxu0
    %v3146 = vadd.f32 %v2286, %v3145
    %v3147 = vpop.f32.mrb[0].mxu0
    %v3148 = vadd.f32 %v2282, %v3147
    %v3149 = vpop.f32.mrb[0].mxu0
    %v3150 = vadd.f32 %v2286, %v3149
    %3151 = vmatprep.mubr.bf16.mxu0 0
    %3152 = vmatmul.mubr.bf16.gmra.mrb[0].mxu0 %v2127
    %v3153 = vpop.f32.mrb[0].mxu0
    %v3154 = vadd.f32 %v2282, %v3153
    %v3155 = vpop.f32.mrb[0].mxu0
    %v3156 = vadd.f32 %v2286, %v3155
    %v3157 = vpop.f32.mrb[0].mxu0
    %v3158 = vadd.f32 %v2282, %v3157
    %v3159 = vpop.f32.mrb[0].mxu0
    %v3160 = vadd.f32 %v2286, %v3159
    %3161 = vmatprep.mubr.bf16.mxu0 0
    %3162 = vmatmul.mubr.bf16.gmra.mrb[0].mxu0 %v2128
    %v3163 = vpop.f32.mrb[0].mxu0
    %v3164 = vadd.f32 %v2282, %v3163
    %v3165 = vpop.f32.mrb[0].mxu0
    %v3166 = vadd.f32 %v2286, %v3165
    %v3167 = vpop.f32.mrb[0].mxu0
    %v3168 = vadd.f32 %v2282, %v3167
    %v3169 = vpop.f32.mrb[0].mxu0
    %v3170 = vadd.f32 %v2286, %v3169
    %3171 = vmatprep.mubr.bf16.mxu0 0
    %3172 = vmatmul.mubr.bf16.gmra.mrb[0].mxu0 %v2129
    %v3173 = vpop.f32.mrb[0].mxu0
    %v3174 = vadd.f32 %v2282, %v3173
    %v3175 = vpop.f32.mrb[0].mxu0
    %v3176 = vadd.f32 %v2286, %v3175
    %v3177 = vpop.f32.mrb[0].mxu0
    %v3178 = vadd.f32 %v2282, %v3177
    %v3179 = vpop.f32.mrb[0].mxu0
    %v3180 = vadd.f32 %v2286, %v3179
    %3181 = vmatprep.mubr.bf16.mxu0 0
    %3182 = vmatmul.mubr.bf16.gmra.mrb[0].mxu0 %v2130
    %v3183 = vpop.f32.mrb[0].mxu0
    %v3184 = vadd.f32 %v2282, %v3183
    %v3185 = vpop.f32.mrb[0].mxu0
    %v3186 = vadd.f32 %v2286, %v3185
    %v3187 = vpop.f32.mrb[0].mxu0
    %v3188 = vadd.f32 %v2282, %v3187
    %v3189 = vpop.f32.mrb[0].mxu0
    %v3190 = vadd.f32 %v2286, %v3189
    %3191 = vmatprep.mubr.bf16.mxu0 0
    %3192 = vmatmul.mubr.bf16.gmra.mrb[0].mxu0 %v2131
    %v3193 = vpop.f32.mrb[0].mxu0
    %v3194 = vadd.f32 %v2282, %v3193
    %v3195 = vpop.f32.mrb[0].mxu0
    %v3196 = vadd.f32 %v2286, %v3195
    %v3197 = vpop.f32.mrb[0].mxu0
    %v3198 = vadd.f32 %v2282, %v3197
    %v3199 = vpop.f32.mrb[0].mxu0
    %v3200 = vadd.f32 %v2286, %v3199
    %3201 = vmatprep.mubr.bf16.mxu0 0
    %3202 = vmatmul.mubr.bf16.gmra.mrb[0].mxu0 %v2132
    %v3203 = vpop.f32.mrb[0].mxu0
    %v3204 = vadd.f32 %v2282, %v3203
    %v3205 = vpop.f32.mrb[0].mxu0
    %v3206 = vadd.f32 %v2286, %v3205
    %v3207 = vpop.f32.mrb[0].mxu0
    %v3208 = vadd.f32 %v2282, %v3207
    %v3209 = vpop.f32.mrb[0].mxu0
    %v3210 = vadd.f32 %v2286, %v3209
    %3211 = vmatprep.mubr.bf16.mxu0 0
    %3212 = vmatmul.mubr.bf16.gmra.mrb[0].mxu0 %v2133
    %v3213 = vpop.f32.mrb[0].mxu0
    %v3214 = vadd.f32 %v2282, %v3213
    %v3215 = vpop.f32.mrb[0].mxu0
    %v3216 = vadd.f32 %v2286, %v3215
    %v3217 = vpop.f32.mrb[0].mxu0
    %v3218 = vadd.f32 %v2282, %v3217
    %v3219 = vpop.f32.mrb[0].mxu0
    %v3220 = vadd.f32 %v2286, %v3219
    %3221 = vmatprep.mubr.bf16.mxu0 0
    %3222 = vmatmul.mubr.bf16.gmra.mrb[0].mxu0 %v2134
    %v3223 = vpop.f32.mrb[0].mxu0
    %v3224 = vadd.f32 %v2282, %v3223
    %v3225 = vpop.f32.mrb[0].mxu0
    %v3226 = vadd.f32 %v2286, %v3225
    %v3227 = vpop.f32.mrb[0].mxu0
    %v3228 = vadd.f32 %v2282, %v3227
    %v3229 = vpop.f32.mrb[0].mxu0
    %v3230 = vadd.f32 %v2286, %v3229
    %3231 = vmatprep.mubr.bf16.mxu0 0
    %3232 = vmatmul.mubr.bf16.gmra.mrb[0].mxu0 %v2135
    %v3233 = vpop.f32.mrb[0].mxu0
    %v3234 = vadd.f32 %v2282, %v3233
    %v3235 = vpop.f32.mrb[0].mxu0
    %v3236 = vadd.f32 %v2286, %v3235
    %v3237 = vpop.f32.mrb[0].mxu0
    %v3238 = vadd.f32 %v2282, %v3237
    %v3239 = vpop.f32.mrb[0].mxu0
    %v3240 = vadd.f32 %v2286, %v3239
    %3241 = vmatprep.mubr.bf16.mxu0 0
    %3242 = vmatmul.mubr.bf16.gmra.mrb[0].mxu0 %v2136
    %v3243 = vpop.f32.mrb[0].mxu0
    %v3244 = vadd.f32 %v2282, %v3243
    %v3245 = vpop.f32.mrb[0].mxu0
    %v3246 = vadd.f32 %v2286, %v3245
    %v3247 = vpop.f32.mrb[0].mxu0
    %v3248 = vadd.f32 %v2282, %v3247
    %v3249 = vpop.f32.mrb[0].mxu0
    %v3250 = vadd.f32 %v2286, %v3249
    %3251 = vmatprep.mubr.bf16.mxu0 0
    %3252 = vmatmul.mubr.bf16.gmra.mrb[0].mxu0 %v2137
    %v3253 = vpop.f32.mrb[0].mxu0
    %v3254 = vadd.f32 %v2282, %v3253
    %v3255 = vpop.f32.mrb[0].mxu0
    %v3256 = vadd.f32 %v2286, %v3255
    %v3257 = vpop.f32.mrb[0].mxu0
    %v3258 = vadd.f32 %v2282, %v3257
    %v3259 = vpop.f32.mrb[0].mxu0
    %v3260 = vadd.f32 %v2286, %v3259
    %3261 = vmatprep.mubr.bf16.mxu0 0
    %3262 = vmatmul.mubr.bf16.gmra.mrb[0].mxu0 %v2138
    %v3263 = vpop.f32.mrb[0].mxu0
    %v3264 = vadd.f32 %v2282, %v3263
    %v3265 = vpop.f32.mrb[0].mxu0
    %v3266 = vadd.f32 %v2286, %v3265
    %v3267 = vpop.f32.mrb[0].mxu0
    %v3268 = vadd.f32 %v2282, %v3267
    %v3269 = vpop.f32.mrb[0].mxu0
    %v3270 = vadd.f32 %v2286, %v3269
    %3271 = vmatprep.mubr.bf16.mxu0 0
    %3272 = vmatmul.mubr.bf16.gmra.mrb[0].mxu0 %v2139
    %v3273 = vpop.f32.mrb[0].mxu0
    %v3274 = vadd.f32 %v2282, %v3273
    %v3275 = vpop.f32.mrb[0].mxu0
    %v3276 = vadd.f32 %v2286, %v3275
    %v3277 = vpop.f32.mrb[0].mxu0
    %v3278 = vadd.f32 %v2282, %v3277
    %v3279 = vpop.f32.mrb[0].mxu0
    %v3280 = vadd.f32 %v2286, %v3279
    %3281 = vmatprep.mubr.bf16.mxu0 0
    %3282 = vmatmul.mubr.bf16.gmra.mrb[0].mxu0 %v2140
    %v3283 = vpop.f32.mrb[0].mxu0
    %v3284 = vadd.f32 %v2282, %v3283
    %v3285 = vpop.f32.mrb[0].mxu0
    %v3286 = vadd.f32 %v2286, %v3285
    %v3287 = vpop.f32.mrb[0].mxu0
    %v3288 = vadd.f32 %v2282, %v3287
    %v3289 = vpop.f32.mrb[0].mxu0
    %v3290 = vadd.f32 %v2286, %v3289
    %3291 = vmatprep.mubr.bf16.mxu0 0
    %3292 = vmatmul.mubr.bf16.gmra.mrb[0].mxu0 %v2141
    %v3293 = vpop.f32.mrb[0].mxu0
    %v3294 = vadd.f32 %v2282, %v3293
    %v3295 = vpop.f32.mrb[0].mxu0
    %v3296 = vadd.f32 %v2286, %v3295
    %v3297 = vpop.f32.mrb[0].mxu0
    %v3298 = vadd.f32 %v2282, %v3297
    %v3299 = vpop.f32.mrb[0].mxu0
    %v3300 = vadd.f32 %v2286, %v3299
    %3301 = vmatprep.mubr.bf16.mxu0 0
    %3302 = vmatmul.mubr.bf16.gmra.mrb[0].mxu0 %v2142
    %v3303 = vpop.f32.mrb[0].mxu0
    %v3304 = vadd.f32 %v2282, %v3303
    %v3305 = vpop.f32.mrb[0].mxu0
    %v3306 = vadd.f32 %v2286, %v3305
    %v3307 = vpop.f32.mrb[0].mxu0
    %v3308 = vadd.f32 %v2282, %v3307
    %v3309 = vpop.f32.mrb[0].mxu0
    %v3310 = vadd.f32 %v2286, %v3309
    %3311 = vmatprep.mubr.bf16.mxu0 0
    %3312 = vmatmul.mubr.bf16.gmra.mrb[0].mxu0 %v2143
    %v3313 = vpop.f32.mrb[0].mxu0
    %v3314 = vadd.f32 %v2282, %v3313
    %v3315 = vpop.f32.mrb[0].mxu0
    %v3316 = vadd.f32 %v2286, %v3315
    %v3317 = vpop.f32.mrb[0].mxu0
    %v3318 = vadd.f32 %v2282, %v3317
    %v3319 = vpop.f32.mrb[0].mxu0
    %v3320 = vadd.f32 %v2286, %v3319
    %3321 = vmatprep.mubr.bf16.mxu0 0
    %3322 = vmatmul.mubr.bf16.gmra.mrb[0].mxu0 %v2144
    %v3323 = vpop.f32.mrb[0].mxu0
    %v3324 = vadd.f32 %v2282, %v3323
    %v3325 = vpop.f32.mrb[0].mxu0
    %v3326 = vadd.f32 %v2286, %v3325
    %v3327 = vpop.f32.mrb[0].mxu0
    %v3328 = vadd.f32 %v2282, %v3327
    %v3329 = vpop.f32.mrb[0].mxu0
    %v3330 = vadd.f32 %v2286, %v3329
    %3331 = vmatprep.mubr.bf16.mxu0 0
    %3332 = vmatmul.mubr.bf16.gmra.mrb[0].mxu0 %v2145
    %v3333 = vpop.f32.mrb[0].mxu0
    %v3334 = vadd.f32 %v2282, %v3333
    %v3335 = vpop.f32.mrb[0].mxu0
    %v3336 = vadd.f32 %v2286, %v3335
    %v3337 = vpop.f32.mrb[0].mxu0
    %v3338 = vadd.f32 %v2282, %v3337
    %v3339 = vpop.f32.mrb[0].mxu0
    %v3340 = vadd.f32 %v2286, %v3339
    %3341 = vmatprep.mubr.bf16.mxu0 0
    %3342 = vmatmul.mubr.bf16.gmra.mrb[0].mxu0 %v2146
    %v3343 = vpop.f32.mrb[0].mxu0
    %v3344 = vadd.f32 %v2282, %v3343
    %v3345 = vpop.f32.mrb[0].mxu0
    %v3346 = vadd.f32 %v2286, %v3345
    %v3347 = vpop.f32.mrb[0].mxu0
    %v3348 = vadd.f32 %v2282, %v3347
    %v3349 = vpop.f32.mrb[0].mxu0
    %v3350 = vadd.f32 %v2286, %v3349
    %3351 = vdwg.mxu0
    %3352 = vmatprep.subr.bf16.mxu0 %v2746
    %3353 = vmatpush1.bf16.msra.mxu0 %v2745
    %3354 = vmatprep.subr.bf16.mxu0 %v2762
    %3355 = vmatpush1.bf16.msra.mxu0 %v2761
    %3356 = vmatprep.subr.bf16.mxu0 %v2778
    %3357 = vmatpush1.bf16.msra.mxu0 %v2777
    %3358 = vmatprep.subr.bf16.mxu0 %v2794
    %3359 = vmatpush1.bf16.msra.mxu0 %v2793
    %3360 = vmatprep.subr.bf16.mxu0 %v2810
    %3361 = vmatpush1.bf16.msra.mxu0 %v2809
    %3362 = vmatprep.subr.bf16.mxu0 %v2826
    %3363 = vmatpush1.bf16.msra.mxu0 %v2825
    %3364 = vmatprep.subr.bf16.mxu0 %v2842
    %3365 = vmatpush1.bf16.msra.mxu0 %v2841
    %3366 = vmatprep.subr.bf16.mxu0 %v2858
    %3367 = vmatpush1.bf16.msra.mxu0 %v2857
    %3368 = vmatprep.subr.bf16.mxu0 0
    %3369 = vmatpush1.bf16.msra.mxu0 0
    %3370 = vmatprep.subr.bf16.mxu0 0
    %3371 = vmatpush1.bf16.msra.mxu0 0
    %3372 = vmatprep.subr.bf16.mxu0 0
    %3373 = vmatpush1.bf16.msra.mxu0 0
    %3374 = vmatprep.subr.bf16.mxu0 0
    %3375 = vmatpush1.bf16.msra.mxu0 0
    %3376 = vmatprep.subr.bf16.mxu0 0
    %3377 = vmatpush1.bf16.msra.mxu0 0
    %3378 = vmatprep.subr.bf16.mxu0 0
    %3379 = vmatpush1.bf16.msra.mxu0 0
    %3380 = vmatprep.subr.bf16.mxu0 0
    %3381 = vmatpush1.bf16.msra.mxu0 0
    %3382 = vmatprep.subr.bf16.mxu0 0
    %3383 = vmatpush1.bf16.msra.mxu0 0
    %3384 = vmatprep.mubr.bf16.mxu0 0
    %3385 = vmatmul.mubr.bf16.gmra.mrb[0].mxu0 %v2115
    %v3386 = vpop.f32.mrb[0].mxu0
    %v3387 = vadd.f32 %v2290, %v3386
    %v3388 = vpop.f32.mrb[0].mxu0
    %v3389 = vadd.f32 %v2294, %v3388
    %v3390 = vpop.f32.mrb[0].mxu0
    %v3391 = vadd.f32 %v2290, %v3390
    %v3392 = vpop.f32.mrb[0].mxu0
    %v3393 = vadd.f32 %v2294, %v3392
    %3394 = vmatprep.mubr.bf16.mxu0 0
    %3395 = vmatmul.mubr.bf16.gmra.mrb[0].mxu0 %v2116
    %v3396 = vpop.f32.mrb[0].mxu0
    %v3397 = vadd.f32 %v2290, %v3396
    %v3398 = vpop.f32.mrb[0].mxu0
    %v3399 = vadd.f32 %v2294, %v3398
    %v3400 = vpop.f32.mrb[0].mxu0
    %v3401 = vadd.f32 %v2290, %v3400
    %v3402 = vpop.f32.mrb[0].mxu0
    %v3403 = vadd.f32 %v2294, %v3402
    %3404 = vmatprep.mubr.bf16.mxu0 0
    %3405 = vmatmul.mubr.bf16.gmra.mrb[0].mxu0 %v2117
    %v3406 = vpop.f32.mrb[0].mxu0
    %v3407 = vadd.f32 %v2290, %v3406
    %v3408 = vpop.f32.mrb[0].mxu0
    %v3409 = vadd.f32 %v2294, %v3408
    %v3410 = vpop.f32.mrb[0].mxu0
    %v3411 = vadd.f32 %v2290, %v3410
    %v3412 = vpop.f32.mrb[0].mxu0
    %v3413 = vadd.f32 %v2294, %v3412
    %3414 = vmatprep.mubr.bf16.mxu0 0
    %3415 = vmatmul.mubr.bf16.gmra.mrb[0].mxu0 %v2118
    %v3416 = vpop.f32.mrb[0].mxu0
    %v3417 = vadd.f32 %v2290, %v3416
    %v3418 = vpop.f32.mrb[0].mxu0
    %v3419 = vadd.f32 %v2294, %v3418
    %v3420 = vpop.f32.mrb[0].mxu0
    %v3421 = vadd.f32 %v2290, %v3420
    %v3422 = vpop.f32.mrb[0].mxu0
    %v3423 = vadd.f32 %v2294, %v3422
    %3424 = vmatprep.mubr.bf16.mxu0 0
    %3425 = vmatmul.mubr.bf16.gmra.mrb[0].mxu0 %v2119
    %v3426 = vpop.f32.mrb[0].mxu0
    %v3427 = vadd.f32 %v2290, %v3426
    %v3428 = vpop.f32.mrb[0].mxu0
    %v3429 = vadd.f32 %v2294, %v3428
    %v3430 = vpop.f32.mrb[0].mxu0
    %v3431 = vadd.f32 %v2290, %v3430
    %v3432 = vpop.f32.mrb[0].mxu0
    %v3433 = vadd.f32 %v2294, %v3432
    %3434 = vmatprep.mubr.bf16.mxu0 0
    %3435 = vmatmul.mubr.bf16.gmra.mrb[0].mxu0 %v2120
    %v3436 = vpop.f32.mrb[0].mxu0
    %v3437 = vadd.f32 %v2290, %v3436
    %v3438 = vpop.f32.mrb[0].mxu0
    %v3439 = vadd.f32 %v2294, %v3438
    %v3440 = vpop.f32.mrb[0].mxu0
    %v3441 = vadd.f32 %v2290, %v3440
    %v3442 = vpop.f32.mrb[0].mxu0
    %v3443 = vadd.f32 %v2294, %v3442
    %3444 = vmatprep.mubr.bf16.mxu0 0
    %3445 = vmatmul.mubr.bf16.gmra.mrb[0].mxu0 %v2121
    %v3446 = vpop.f32.mrb[0].mxu0
    %v3447 = vadd.f32 %v2290, %v3446
    %v3448 = vpop.f32.mrb[0].mxu0
    %v3449 = vadd.f32 %v2294, %v3448
    %v3450 = vpop.f32.mrb[0].mxu0
    %v3451 = vadd.f32 %v2290, %v3450
    %v3452 = vpop.f32.mrb[0].mxu0
    %v3453 = vadd.f32 %v2294, %v3452
    %3454 = vmatprep.mubr.bf16.mxu0 0
    %3455 = vmatmul.mubr.bf16.gmra.mrb[0].mxu0 %v2122
    %v3456 = vpop.f32.mrb[0].mxu0
    %v3457 = vadd.f32 %v2290, %v3456
    %v3458 = vpop.f32.mrb[0].mxu0
    %v3459 = vadd.f32 %v2294, %v3458
    %v3460 = vpop.f32.mrb[0].mxu0
    %v3461 = vadd.f32 %v2290, %v3460
    %v3462 = vpop.f32.mrb[0].mxu0
    %v3463 = vadd.f32 %v2294, %v3462
    %3464 = vmatprep.mubr.bf16.mxu0 0
    %3465 = vmatmul.mubr.bf16.gmra.mrb[0].mxu0 %v2123
    %v3466 = vpop.f32.mrb[0].mxu0
    %v3467 = vadd.f32 %v2290, %v3466
    %v3468 = vpop.f32.mrb[0].mxu0
    %v3469 = vadd.f32 %v2294, %v3468
    %v3470 = vpop.f32.mrb[0].mxu0
    %v3471 = vadd.f32 %v2290, %v3470
    %v3472 = vpop.f32.mrb[0].mxu0
    %v3473 = vadd.f32 %v2294, %v3472
    %3474 = vmatprep.mubr.bf16.mxu0 0
    %3475 = vmatmul.mubr.bf16.gmra.mrb[0].mxu0 %v2124
    %v3476 = vpop.f32.mrb[0].mxu0
    %v3477 = vadd.f32 %v2290, %v3476
    %v3478 = vpop.f32.mrb[0].mxu0
    %v3479 = vadd.f32 %v2294, %v3478
    %v3480 = vpop.f32.mrb[0].mxu0
    %v3481 = vadd.f32 %v2290, %v3480
    %v3482 = vpop.f32.mrb[0].mxu0
    %v3483 = vadd.f32 %v2294, %v3482
    %3484 = vmatprep.mubr.bf16.mxu0 0
    %3485 = vmatmul.mubr.bf16.gmra.mrb[0].mxu0 %v2125
    %v3486 = vpop.f32.mrb[0].mxu0
    %v3487 = vadd.f32 %v2290, %v3486
    %v3488 = vpop.f32.mrb[0].mxu0
    %v3489 = vadd.f32 %v2294, %v3488
    %v3490 = vpop.f32.mrb[0].mxu0
    %v3491 = vadd.f32 %v2290, %v3490
    %v3492 = vpop.f32.mrb[0].mxu0
    %v3493 = vadd.f32 %v2294, %v3492
    %3494 = vmatprep.mubr.bf16.mxu0 0
    %3495 = vmatmul.mubr.bf16.gmra.mrb[0].mxu0 %v2126
    %v3496 = vpop.f32.mrb[0].mxu0
    %v3497 = vadd.f32 %v2290, %v3496
    %v3498 = vpop.f32.mrb[0].mxu0
    %v3499 = vadd.f32 %v2294, %v3498
    %v3500 = vpop.f32.mrb[0].mxu0
    %v3501 = vadd.f32 %v2290, %v3500
    %v3502 = vpop.f32.mrb[0].mxu0
    %v3503 = vadd.f32 %v2294, %v3502
    %3504 = vmatprep.mubr.bf16.mxu0 0
    %3505 = vmatmul.mubr.bf16.gmra.mrb[0].mxu0 %v2127
    %v3506 = vpop.f32.mrb[0].mxu0
    %v3507 = vadd.f32 %v2290, %v3506
    %v3508 = vpop.f32.mrb[0].mxu0
    %v3509 = vadd.f32 %v2294, %v3508
    %v3510 = vpop.f32.mrb[0].mxu0
    %v3511 = vadd.f32 %v2290, %v3510
    %v3512 = vpop.f32.mrb[0].mxu0
    %v3513 = vadd.f32 %v2294, %v3512
    %3514 = vmatprep.mubr.bf16.mxu0 0
    %3515 = vmatmul.mubr.bf16.gmra.mrb[0].mxu0 %v2128
    %v3516 = vpop.f32.mrb[0].mxu0
    %v3517 = vadd.f32 %v2290, %v3516
    %v3518 = vpop.f32.mrb[0].mxu0
    %v3519 = vadd.f32 %v2294, %v3518
    %v3520 = vpop.f32.mrb[0].mxu0
    %v3521 = vadd.f32 %v2290, %v3520
    %v3522 = vpop.f32.mrb[0].mxu0
    %v3523 = vadd.f32 %v2294, %v3522
    %3524 = vmatprep.mubr.bf16.mxu0 0
    %3525 = vmatmul.mubr.bf16.gmra.mrb[0].mxu0 %v2129
    %v3526 = vpop.f32.mrb[0].mxu0
    %v3527 = vadd.f32 %v2290, %v3526
    %v3528 = vpop.f32.mrb[0].mxu0
    %v3529 = vadd.f32 %v2294, %v3528
    %v3530 = vpop.f32.mrb[0].mxu0
    %v3531 = vadd.f32 %v2290, %v3530
    %v3532 = vpop.f32.mrb[0].mxu0
    %v3533 = vadd.f32 %v2294, %v3532
    %3534 = vmatprep.mubr.bf16.mxu0 0
    %3535 = vmatmul.mubr.bf16.gmra.mrb[0].mxu0 %v2130
    %v3536 = vpop.f32.mrb[0].mxu0
    %v3537 = vadd.f32 %v2290, %v3536
    %v3538 = vpop.f32.mrb[0].mxu0
    %v3539 = vadd.f32 %v2294, %v3538
    %v3540 = vpop.f32.mrb[0].mxu0
    %v3541 = vadd.f32 %v2290, %v3540
    %v3542 = vpop.f32.mrb[0].mxu0
    %v3543 = vadd.f32 %v2294, %v3542
    %3544 = vmatprep.mubr.bf16.mxu0 0
    %3545 = vmatmul.mubr.bf16.gmra.mrb[0].mxu0 %v2131
    %v3546 = vpop.f32.mrb[0].mxu0
    %v3547 = vadd.f32 %v2290, %v3546
    %v3548 = vpop.f32.mrb[0].mxu0
    %v3549 = vadd.f32 %v2294, %v3548
    %v3550 = vpop.f32.mrb[0].mxu0
    %v3551 = vadd.f32 %v2290, %v3550
    %v3552 = vpop.f32.mrb[0].mxu0
    %v3553 = vadd.f32 %v2294, %v3552
    %3554 = vmatprep.mubr.bf16.mxu0 0
    %3555 = vmatmul.mubr.bf16.gmra.mrb[0].mxu0 %v2132
    %v3556 = vpop.f32.mrb[0].mxu0
    %v3557 = vadd.f32 %v2290, %v3556
    %v3558 = vpop.f32.mrb[0].mxu0
    %v3559 = vadd.f32 %v2294, %v3558
    %v3560 = vpop.f32.mrb[0].mxu0
    %v3561 = vadd.f32 %v2290, %v3560
    %v3562 = vpop.f32.mrb[0].mxu0
    %v3563 = vadd.f32 %v2294, %v3562
    %3564 = vmatprep.mubr.bf16.mxu0 0
    %3565 = vmatmul.mubr.bf16.gmra.mrb[0].mxu0 %v2133
    %v3566 = vpop.f32.mrb[0].mxu0
    %v3567 = vadd.f32 %v2290, %v3566
    %v3568 = vpop.f32.mrb[0].mxu0
    %v3569 = vadd.f32 %v2294, %v3568
    %v3570 = vpop.f32.mrb[0].mxu0
    %v3571 = vadd.f32 %v2290, %v3570
    %v3572 = vpop.f32.mrb[0].mxu0
    %v3573 = vadd.f32 %v2294, %v3572
    %3574 = vmatprep.mubr.bf16.mxu0 0
    %3575 = vmatmul.mubr.bf16.gmra.mrb[0].mxu0 %v2134
    %v3576 = vpop.f32.mrb[0].mxu0
    %v3577 = vadd.f32 %v2290, %v3576
    %v3578 = vpop.f32.mrb[0].mxu0
    %v3579 = vadd.f32 %v2294, %v3578
    %v3580 = vpop.f32.mrb[0].mxu0
    %v3581 = vadd.f32 %v2290, %v3580
    %v3582 = vpop.f32.mrb[0].mxu0
    %v3583 = vadd.f32 %v2294, %v3582
    %3584 = vmatprep.mubr.bf16.mxu0 0
    %3585 = vmatmul.mubr.bf16.gmra.mrb[0].mxu0 %v2135
    %v3586 = vpop.f32.mrb[0].mxu0
    %v3587 = vadd.f32 %v2290, %v3586
    %v3588 = vpop.f32.mrb[0].mxu0
    %v3589 = vadd.f32 %v2294, %v3588
    %v3590 = vpop.f32.mrb[0].mxu0
    %v3591 = vadd.f32 %v2290, %v3590
    %v3592 = vpop.f32.mrb[0].mxu0
    %v3593 = vadd.f32 %v2294, %v3592
    %3594 = vmatprep.mubr.bf16.mxu0 0
    %3595 = vmatmul.mubr.bf16.gmra.mrb[0].mxu0 %v2136
    %v3596 = vpop.f32.mrb[0].mxu0
    %v3597 = vadd.f32 %v2290, %v3596
    %v3598 = vpop.f32.mrb[0].mxu0
    %v3599 = vadd.f32 %v2294, %v3598
    %v3600 = vpop.f32.mrb[0].mxu0
    %v3601 = vadd.f32 %v2290, %v3600
    %v3602 = vpop.f32.mrb[0].mxu0
    %v3603 = vadd.f32 %v2294, %v3602
    %3604 = vmatprep.mubr.bf16.mxu0 0
    %3605 = vmatmul.mubr.bf16.gmra.mrb[0].mxu0 %v2137
    %v3606 = vpop.f32.mrb[0].mxu0
    %v3607 = vadd.f32 %v2290, %v3606
    %v3608 = vpop.f32.mrb[0].mxu0
    %v3609 = vadd.f32 %v2294, %v3608
    %v3610 = vpop.f32.mrb[0].mxu0
    %v3611 = vadd.f32 %v2290, %v3610
    %v3612 = vpop.f32.mrb[0].mxu0
    %v3613 = vadd.f32 %v2294, %v3612
    %3614 = vmatprep.mubr.bf16.mxu0 0
    %3615 = vmatmul.mubr.bf16.gmra.mrb[0].mxu0 %v2138
    %v3616 = vpop.f32.mrb[0].mxu0
    %v3617 = vadd.f32 %v2290, %v3616
    %v3618 = vpop.f32.mrb[0].mxu0
    %v3619 = vadd.f32 %v2294, %v3618
    %v3620 = vpop.f32.mrb[0].mxu0
    %v3621 = vadd.f32 %v2290, %v3620
    %v3622 = vpop.f32.mrb[0].mxu0
    %v3623 = vadd.f32 %v2294, %v3622
    %3624 = vmatprep.mubr.bf16.mxu0 0
    %3625 = vmatmul.mubr.bf16.gmra.mrb[0].mxu0 %v2139
    %v3626 = vpop.f32.mrb[0].mxu0
    %v3627 = vadd.f32 %v2290, %v3626
    %v3628 = vpop.f32.mrb[0].mxu0
    %v3629 = vadd.f32 %v2294, %v3628
    %v3630 = vpop.f32.mrb[0].mxu0
    %v3631 = vadd.f32 %v2290, %v3630
    %v3632 = vpop.f32.mrb[0].mxu0
    %v3633 = vadd.f32 %v2294, %v3632
    %3634 = vmatprep.mubr.bf16.mxu0 0
    %3635 = vmatmul.mubr.bf16.gmra.mrb[0].mxu0 %v2140
    %v3636 = vpop.f32.mrb[0].mxu0
    %v3637 = vadd.f32 %v2290, %v3636
    %v3638 = vpop.f32.mrb[0].mxu0
    %v3639 = vadd.f32 %v2294, %v3638
    %v3640 = vpop.f32.mrb[0].mxu0
    %v3641 = vadd.f32 %v2290, %v3640
    %v3642 = vpop.f32.mrb[0].mxu0
    %v3643 = vadd.f32 %v2294, %v3642
    %3644 = vmatprep.mubr.bf16.mxu0 0
    %3645 = vmatmul.mubr.bf16.gmra.mrb[0].mxu0 %v2141
    %v3646 = vpop.f32.mrb[0].mxu0
    %v3647 = vadd.f32 %v2290, %v3646
    %v3648 = vpop.f32.mrb[0].mxu0
    %v3649 = vadd.f32 %v2294, %v3648
    %v3650 = vpop.f32.mrb[0].mxu0
    %v3651 = vadd.f32 %v2290, %v3650
    %v3652 = vpop.f32.mrb[0].mxu0
    %v3653 = vadd.f32 %v2294, %v3652
    %3654 = vmatprep.mubr.bf16.mxu0 0
    %3655 = vmatmul.mubr.bf16.gmra.mrb[0].mxu0 %v2142
    %v3656 = vpop.f32.mrb[0].mxu0
    %v3657 = vadd.f32 %v2290, %v3656
    %v3658 = vpop.f32.mrb[0].mxu0
    %v3659 = vadd.f32 %v2294, %v3658
    %v3660 = vpop.f32.mrb[0].mxu0
    %v3661 = vadd.f32 %v2290, %v3660
    %v3662 = vpop.f32.mrb[0].mxu0
    %v3663 = vadd.f32 %v2294, %v3662
    %3664 = vmatprep.mubr.bf16.mxu0 0
    %3665 = vmatmul.mubr.bf16.gmra.mrb[0].mxu0 %v2143
    %v3666 = vpop.f32.mrb[0].mxu0
    %v3667 = vadd.f32 %v2290, %v3666
    %v3668 = vpop.f32.mrb[0].mxu0
    %v3669 = vadd.f32 %v2294, %v3668
    %v3670 = vpop.f32.mrb[0].mxu0
    %v3671 = vadd.f32 %v2290, %v3670
    %v3672 = vpop.f32.mrb[0].mxu0
    %v3673 = vadd.f32 %v2294, %v3672
    %3674 = vmatprep.mubr.bf16.mxu0 0
    %3675 = vmatmul.mubr.bf16.gmra.mrb[0].mxu0 %v2144
    %v3676 = vpop.f32.mrb[0].mxu0
    %v3677 = vadd.f32 %v2290, %v3676
    %v3678 = vpop.f32.mrb[0].mxu0
    %v3679 = vadd.f32 %v2294, %v3678
    %v3680 = vpop.f32.mrb[0].mxu0
    %v3681 = vadd.f32 %v2290, %v3680
    %v3682 = vpop.f32.mrb[0].mxu0
    %v3683 = vadd.f32 %v2294, %v3682
    %3684 = vmatprep.mubr.bf16.mxu0 0
    %3685 = vmatmul.mubr.bf16.gmra.mrb[0].mxu0 %v2145
    %v3686 = vpop.f32.mrb[0].mxu0
    %v3687 = vadd.f32 %v2290, %v3686
    %v3688 = vpop.f32.mrb[0].mxu0
    %v3689 = vadd.f32 %v2294, %v3688
    %v3690 = vpop.f32.mrb[0].mxu0
    %v3691 = vadd.f32 %v2290, %v3690
    %v3692 = vpop.f32.mrb[0].mxu0
    %v3693 = vadd.f32 %v2294, %v3692
    %3694 = vmatprep.mubr.bf16.mxu0 0
    %3695 = vmatmul.mubr.bf16.gmra.mrb[0].mxu0 %v2146
    %v3696 = vpop.f32.mrb[0].mxu0
    %v3697 = vadd.f32 %v2290, %v3696
    %v3698 = vpop.f32.mrb[0].mxu0
    %v3699 = vadd.f32 %v2294, %v3698
    %v3700 = vpop.f32.mrb[0].mxu0
    %v3701 = vadd.f32 %v2290, %v3700
    %v3702 = vpop.f32.mrb[0].mxu0
    %v3703 = vadd.f32 %v2294, %v3702
    %3704 = vdwg.mxu0
    %3705 = vmatprep.subr.bf16.mxu0 %v2748
    %3706 = vmatpush1.bf16.msra.mxu0 %v2747
    %3707 = vmatprep.subr.bf16.mxu0 %v2764
    %3708 = vmatpush1.bf16.msra.mxu0 %v2763
    %3709 = vmatprep.subr.bf16.mxu0 %v2780
    %3710 = vmatpush1.bf16.msra.mxu0 %v2779
    %3711 = vmatprep.subr.bf16.mxu0 %v2796
    %3712 = vmatpush1.bf16.msra.mxu0 %v2795
    %3713 = vmatprep.subr.bf16.mxu0 %v2812
    %3714 = vmatpush1.bf16.msra.mxu0 %v2811
    %3715 = vmatprep.subr.bf16.mxu0 %v2828
    %3716 = vmatpush1.bf16.msra.mxu0 %v2827
    %3717 = vmatprep.subr.bf16.mxu0 %v2844
    %3718 = vmatpush1.bf16.msra.mxu0 %v2843
    %3719 = vmatprep.subr.bf16.mxu0 %v2860
    %3720 = vmatpush1.bf16.msra.mxu0 %v2859
    %3721 = vmatprep.subr.bf16.mxu0 0
    %3722 = vmatpush1.bf16.msra.mxu0 0
    %3723 = vmatprep.subr.bf16.mxu0 0
    %3724 = vmatpush1.bf16.msra.mxu0 0
    %3725 = vmatprep.subr.bf16.mxu0 0
    %3726 = vmatpush1.bf16.msra.mxu0 0
    %3727 = vmatprep.subr.bf16.mxu0 0
    %3728 = vmatpush1.bf16.msra.mxu0 0
    %3729 = vmatprep.subr.bf16.mxu0 0
    %3730 = vmatpush1.bf16.msra.mxu0 0
    %3731 = vmatprep.subr.bf16.mxu0 0
    %3732 = vmatpush1.bf16.msra.mxu0 0
    %3733 = vmatprep.subr.bf16.mxu0 0
    %3734 = vmatpush1.bf16.msra.mxu0 0
    %3735 = vmatprep.subr.bf16.mxu0 0
    %3736 = vmatpush1.bf16.msra.mxu0 0
    %3737 = vmatprep.mubr.bf16.mxu0 0
    %3738 = vmatmul.mubr.bf16.gmra.mrb[0].mxu0 %v2115
    %v3739 = vpop.f32.mrb[0].mxu0
    %v3740 = vadd.f32 %v2298, %v3739
    %v3741 = vpop.f32.mrb[0].mxu0
    %v3742 = vadd.f32 %v2302, %v3741
    %v3743 = vpop.f32.mrb[0].mxu0
    %v3744 = vadd.f32 %v2298, %v3743
    %v3745 = vpop.f32.mrb[0].mxu0
    %v3746 = vadd.f32 %v2302, %v3745
    %3747 = vmatprep.mubr.bf16.mxu0 0
    %3748 = vmatmul.mubr.bf16.gmra.mrb[0].mxu0 %v2116
    %v3749 = vpop.f32.mrb[0].mxu0
    %v3750 = vadd.f32 %v2298, %v3749
    %v3751 = vpop.f32.mrb[0].mxu0
    %v3752 = vadd.f32 %v2302, %v3751
    %v3753 = vpop.f32.mrb[0].mxu0
    %v3754 = vadd.f32 %v2298, %v3753
    %v3755 = vpop.f32.mrb[0].mxu0
    %v3756 = vadd.f32 %v2302, %v3755
    %3757 = vmatprep.mubr.bf16.mxu0 0
    %3758 = vmatmul.mubr.bf16.gmra.mrb[0].mxu0 %v2117
    %v3759 = vpop.f32.mrb[0].mxu0
    %v3760 = vadd.f32 %v2298, %v3759
    %v3761 = vpop.f32.mrb[0].mxu0
    %v3762 = vadd.f32 %v2302, %v3761
    %v3763 = vpop.f32.mrb[0].mxu0
    %v3764 = vadd.f32 %v2298, %v3763
    %v3765 = vpop.f32.mrb[0].mxu0
    %v3766 = vadd.f32 %v2302, %v3765
    %3767 = vmatprep.mubr.bf16.mxu0 0
    %3768 = vmatmul.mubr.bf16.gmra.mrb[0].mxu0 %v2118
    %v3769 = vpop.f32.mrb[0].mxu0
    %v3770 = vadd.f32 %v2298, %v3769
    %v3771 = vpop.f32.mrb[0].mxu0
    %v3772 = vadd.f32 %v2302, %v3771
    %v3773 = vpop.f32.mrb[0].mxu0
    %v3774 = vadd.f32 %v2298, %v3773
    %v3775 = vpop.f32.mrb[0].mxu0
    %v3776 = vadd.f32 %v2302, %v3775
    %3777 = vmatprep.mubr.bf16.mxu0 0
    %3778 = vmatmul.mubr.bf16.gmra.mrb[0].mxu0 %v2119
    %v3779 = vpop.f32.mrb[0].mxu0
    %v3780 = vadd.f32 %v2298, %v3779
    %v3781 = vpop.f32.mrb[0].mxu0
    %v3782 = vadd.f32 %v2302, %v3781
    %v3783 = vpop.f32.mrb[0].mxu0
    %v3784 = vadd.f32 %v2298, %v3783
    %v3785 = vpop.f32.mrb[0].mxu0
    %v3786 = vadd.f32 %v2302, %v3785
    %3787 = vmatprep.mubr.bf16.mxu0 0
    %3788 = vmatmul.mubr.bf16.gmra.mrb[0].mxu0 %v2120
    %v3789 = vpop.f32.mrb[0].mxu0
    %v3790 = vadd.f32 %v2298, %v3789
    %v3791 = vpop.f32.mrb[0].mxu0
    %v3792 = vadd.f32 %v2302, %v3791
    %v3793 = vpop.f32.mrb[0].mxu0
    %v3794 = vadd.f32 %v2298, %v3793
    %v3795 = vpop.f32.mrb[0].mxu0
    %v3796 = vadd.f32 %v2302, %v3795
    %3797 = vmatprep.mubr.bf16.mxu0 0
    %3798 = vmatmul.mubr.bf16.gmra.mrb[0].mxu0 %v2121
    %v3799 = vpop.f32.mrb[0].mxu0
    %v3800 = vadd.f32 %v2298, %v3799
    %v3801 = vpop.f32.mrb[0].mxu0
    %v3802 = vadd.f32 %v2302, %v3801
    %v3803 = vpop.f32.mrb[0].mxu0
    %v3804 = vadd.f32 %v2298, %v3803
    %v3805 = vpop.f32.mrb[0].mxu0
    %v3806 = vadd.f32 %v2302, %v3805
    %3807 = vmatprep.mubr.bf16.mxu0 0
    %3808 = vmatmul.mubr.bf16.gmra.mrb[0].mxu0 %v2122
    %v3809 = vpop.f32.mrb[0].mxu0
    %v3810 = vadd.f32 %v2298, %v3809
    %v3811 = vpop.f32.mrb[0].mxu0
    %v3812 = vadd.f32 %v2302, %v3811
    %v3813 = vpop.f32.mrb[0].mxu0
    %v3814 = vadd.f32 %v2298, %v3813
    %v3815 = vpop.f32.mrb[0].mxu0
    %v3816 = vadd.f32 %v2302, %v3815
    %3817 = vmatprep.mubr.bf16.mxu0 0
    %3818 = vmatmul.mubr.bf16.gmra.mrb[0].mxu0 %v2123
    %v3819 = vpop.f32.mrb[0].mxu0
    %v3820 = vadd.f32 %v2298, %v3819
    %v3821 = vpop.f32.mrb[0].mxu0
    %v3822 = vadd.f32 %v2302, %v3821
    %v3823 = vpop.f32.mrb[0].mxu0
    %v3824 = vadd.f32 %v2298, %v3823
    %v3825 = vpop.f32.mrb[0].mxu0
    %v3826 = vadd.f32 %v2302, %v3825
    %3827 = vmatprep.mubr.bf16.mxu0 0
    %3828 = vmatmul.mubr.bf16.gmra.mrb[0].mxu0 %v2124
    %v3829 = vpop.f32.mrb[0].mxu0
    %v3830 = vadd.f32 %v2298, %v3829
    %v3831 = vpop.f32.mrb[0].mxu0
    %v3832 = vadd.f32 %v2302, %v3831
    %v3833 = vpop.f32.mrb[0].mxu0
    %v3834 = vadd.f32 %v2298, %v3833
    %v3835 = vpop.f32.mrb[0].mxu0
    %v3836 = vadd.f32 %v2302, %v3835
    %3837 = vmatprep.mubr.bf16.mxu0 0
    %3838 = vmatmul.mubr.bf16.gmra.mrb[0].mxu0 %v2125
    %v3839 = vpop.f32.mrb[0].mxu0
    %v3840 = vadd.f32 %v2298, %v3839
    %v3841 = vpop.f32.mrb[0].mxu0
    %v3842 = vadd.f32 %v2302, %v3841
    %v3843 = vpop.f32.mrb[0].mxu0
    %v3844 = vadd.f32 %v2298, %v3843
    %v3845 = vpop.f32.mrb[0].mxu0
    %v3846 = vadd.f32 %v2302, %v3845
    %3847 = vmatprep.mubr.bf16.mxu0 0
    %3848 = vmatmul.mubr.bf16.gmra.mrb[0].mxu0 %v2126
    %v3849 = vpop.f32.mrb[0].mxu0
    %v3850 = vadd.f32 %v2298, %v3849
    %v3851 = vpop.f32.mrb[0].mxu0
    %v3852 = vadd.f32 %v2302, %v3851
    %v3853 = vpop.f32.mrb[0].mxu0
    %v3854 = vadd.f32 %v2298, %v3853
    %v3855 = vpop.f32.mrb[0].mxu0
    %v3856 = vadd.f32 %v2302, %v3855
    %3857 = vmatprep.mubr.bf16.mxu0 0
    %3858 = vmatmul.mubr.bf16.gmra.mrb[0].mxu0 %v2127
    %v3859 = vpop.f32.mrb[0].mxu0
    %v3860 = vadd.f32 %v2298, %v3859
    %v3861 = vpop.f32.mrb[0].mxu0
    %v3862 = vadd.f32 %v2302, %v3861
    %v3863 = vpop.f32.mrb[0].mxu0
    %v3864 = vadd.f32 %v2298, %v3863
    %v3865 = vpop.f32.mrb[0].mxu0
    %v3866 = vadd.f32 %v2302, %v3865
    %3867 = vmatprep.mubr.bf16.mxu0 0
    %3868 = vmatmul.mubr.bf16.gmra.mrb[0].mxu0 %v2128
    %v3869 = vpop.f32.mrb[0].mxu0
    %v3870 = vadd.f32 %v2298, %v3869
    %v3871 = vpop.f32.mrb[0].mxu0
    %v3872 = vadd.f32 %v2302, %v3871
    %v3873 = vpop.f32.mrb[0].mxu0
    %v3874 = vadd.f32 %v2298, %v3873
    %v3875 = vpop.f32.mrb[0].mxu0
    %v3876 = vadd.f32 %v2302, %v3875
    %3877 = vmatprep.mubr.bf16.mxu0 0
    %3878 = vmatmul.mubr.bf16.gmra.mrb[0].mxu0 %v2129
    %v3879 = vpop.f32.mrb[0].mxu0
    %v3880 = vadd.f32 %v2298, %v3879
    %v3881 = vpop.f32.mrb[0].mxu0
    %v3882 = vadd.f32 %v2302, %v3881
    %v3883 = vpop.f32.mrb[0].mxu0
    %v3884 = vadd.f32 %v2298, %v3883
    %v3885 = vpop.f32.mrb[0].mxu0
    %v3886 = vadd.f32 %v2302, %v3885
    %3887 = vmatprep.mubr.bf16.mxu0 0
    %3888 = vmatmul.mubr.bf16.gmra.mrb[0].mxu0 %v2130
    %v3889 = vpop.f32.mrb[0].mxu0
    %v3890 = vadd.f32 %v2298, %v3889
    %v3891 = vpop.f32.mrb[0].mxu0
    %v3892 = vadd.f32 %v2302, %v3891
    %v3893 = vpop.f32.mrb[0].mxu0
    %v3894 = vadd.f32 %v2298, %v3893
    %v3895 = vpop.f32.mrb[0].mxu0
    %v3896 = vadd.f32 %v2302, %v3895
    %3897 = vmatprep.mubr.bf16.mxu0 0
    %3898 = vmatmul.mubr.bf16.gmra.mrb[0].mxu0 %v2131
    %v3899 = vpop.f32.mrb[0].mxu0
    %v3900 = vadd.f32 %v2298, %v3899
    %v3901 = vpop.f32.mrb[0].mxu0
    %v3902 = vadd.f32 %v2302, %v3901
    %v3903 = vpop.f32.mrb[0].mxu0
    %v3904 = vadd.f32 %v2298, %v3903
    %v3905 = vpop.f32.mrb[0].mxu0
    %v3906 = vadd.f32 %v2302, %v3905
    %3907 = vmatprep.mubr.bf16.mxu0 0
    %3908 = vmatmul.mubr.bf16.gmra.mrb[0].mxu0 %v2132
    %v3909 = vpop.f32.mrb[0].mxu0
    %v3910 = vadd.f32 %v2298, %v3909
    %v3911 = vpop.f32.mrb[0].mxu0
    %v3912 = vadd.f32 %v2302, %v3911
    %v3913 = vpop.f32.mrb[0].mxu0
    %v3914 = vadd.f32 %v2298, %v3913
    %v3915 = vpop.f32.mrb[0].mxu0
    %v3916 = vadd.f32 %v2302, %v3915
    %3917 = vmatprep.mubr.bf16.mxu0 0
    %3918 = vmatmul.mubr.bf16.gmra.mrb[0].mxu0 %v2133
    %v3919 = vpop.f32.mrb[0].mxu0
    %v3920 = vadd.f32 %v2298, %v3919
    %v3921 = vpop.f32.mrb[0].mxu0
    %v3922 = vadd.f32 %v2302, %v3921
    %v3923 = vpop.f32.mrb[0].mxu0
    %v3924 = vadd.f32 %v2298, %v3923
    %v3925 = vpop.f32.mrb[0].mxu0
    %v3926 = vadd.f32 %v2302, %v3925
    %3927 = vmatprep.mubr.bf16.mxu0 0
    %3928 = vmatmul.mubr.bf16.gmra.mrb[0].mxu0 %v2134
    %v3929 = vpop.f32.mrb[0].mxu0
    %v3930 = vadd.f32 %v2298, %v3929
    %v3931 = vpop.f32.mrb[0].mxu0
    %v3932 = vadd.f32 %v2302, %v3931
    %v3933 = vpop.f32.mrb[0].mxu0
    %v3934 = vadd.f32 %v2298, %v3933
    %v3935 = vpop.f32.mrb[0].mxu0
    %v3936 = vadd.f32 %v2302, %v3935
    %3937 = vmatprep.mubr.bf16.mxu0 0
    %3938 = vmatmul.mubr.bf16.gmra.mrb[0].mxu0 %v2135
    %v3939 = vpop.f32.mrb[0].mxu0
    %v3940 = vadd.f32 %v2298, %v3939
    %v3941 = vpop.f32.mrb[0].mxu0
    %v3942 = vadd.f32 %v2302, %v3941
    %v3943 = vpop.f32.mrb[0].mxu0
    %v3944 = vadd.f32 %v2298, %v3943
    %v3945 = vpop.f32.mrb[0].mxu0
    %v3946 = vadd.f32 %v2302, %v3945
    %3947 = vmatprep.mubr.bf16.mxu0 0
    %3948 = vmatmul.mubr.bf16.gmra.mrb[0].mxu0 %v2136
    %v3949 = vpop.f32.mrb[0].mxu0
    %v3950 = vadd.f32 %v2298, %v3949
    %v3951 = vpop.f32.mrb[0].mxu0
    %v3952 = vadd.f32 %v2302, %v3951
    %v3953 = vpop.f32.mrb[0].mxu0
    %v3954 = vadd.f32 %v2298, %v3953
    %v3955 = vpop.f32.mrb[0].mxu0
    %v3956 = vadd.f32 %v2302, %v3955
    %3957 = vmatprep.mubr.bf16.mxu0 0
    %3958 = vmatmul.mubr.bf16.gmra.mrb[0].mxu0 %v2137
    %v3959 = vpop.f32.mrb[0].mxu0
    %v3960 = vadd.f32 %v2298, %v3959
    %v3961 = vpop.f32.mrb[0].mxu0
    %v3962 = vadd.f32 %v2302, %v3961
    %v3963 = vpop.f32.mrb[0].mxu0
    %v3964 = vadd.f32 %v2298, %v3963
    %v3965 = vpop.f32.mrb[0].mxu0
    %v3966 = vadd.f32 %v2302, %v3965
    %3967 = vmatprep.mubr.bf16.mxu0 0
    %3968 = vmatmul.mubr.bf16.gmra.mrb[0].mxu0 %v2138
    %v3969 = vpop.f32.mrb[0].mxu0
    %v3970 = vadd.f32 %v2298, %v3969
    %v3971 = vpop.f32.mrb[0].mxu0
    %v3972 = vadd.f32 %v2302, %v3971
    %v3973 = vpop.f32.mrb[0].mxu0
    %v3974 = vadd.f32 %v2298, %v3973
    %v3975 = vpop.f32.mrb[0].mxu0
    %v3976 = vadd.f32 %v2302, %v3975
    %3977 = vmatprep.mubr.bf16.mxu0 0
    %3978 = vmatmul.mubr.bf16.gmra.mrb[0].mxu0 %v2139
    %v3979 = vpop.f32.mrb[0].mxu0
    %v3980 = vadd.f32 %v2298, %v3979
    %v3981 = vpop.f32.mrb[0].mxu0
    %v3982 = vadd.f32 %v2302, %v3981
    %v3983 = vpop.f32.mrb[0].mxu0
    %v3984 = vadd.f32 %v2298, %v3983
    %v3985 = vpop.f32.mrb[0].mxu0
    %v3986 = vadd.f32 %v2302, %v3985
    %3987 = vmatprep.mubr.bf16.mxu0 0
    %3988 = vmatmul.mubr.bf16.gmra.mrb[0].mxu0 %v2140
    %v3989 = vpop.f32.mrb[0].mxu0
    %v3990 = vadd.f32 %v2298, %v3989
    %v3991 = vpop.f32.mrb[0].mxu0
    %v3992 = vadd.f32 %v2302, %v3991
    %v3993 = vpop.f32.mrb[0].mxu0
    %v3994 = vadd.f32 %v2298, %v3993
    %v3995 = vpop.f32.mrb[0].mxu0
    %v3996 = vadd.f32 %v2302, %v3995
    %3997 = vmatprep.mubr.bf16.mxu0 0
    %3998 = vmatmul.mubr.bf16.gmra.mrb[0].mxu0 %v2141
    %v3999 = vpop.f32.mrb[0].mxu0
    %v4000 = vadd.f32 %v2298, %v3999
    %v4001 = vpop.f32.mrb[0].mxu0
    %v4002 = vadd.f32 %v2302, %v4001
    %v4003 = vpop.f32.mrb[0].mxu0
    %v4004 = vadd.f32 %v2298, %v4003
    %v4005 = vpop.f32.mrb[0].mxu0
    %v4006 = vadd.f32 %v2302, %v4005
    %4007 = vmatprep.mubr.bf16.mxu0 0
    %4008 = vmatmul.mubr.bf16.gmra.mrb[0].mxu0 %v2142
    %v4009 = vpop.f32.mrb[0].mxu0
    %v4010 = vadd.f32 %v2298, %v4009
    %v4011 = vpop.f32.mrb[0].mxu0
    %v4012 = vadd.f32 %v2302, %v4011
    %v4013 = vpop.f32.mrb[0].mxu0
    %v4014 = vadd.f32 %v2298, %v4013
    %v4015 = vpop.f32.mrb[0].mxu0
    %v4016 = vadd.f32 %v2302, %v4015
    %4017 = vmatprep.mubr.bf16.mxu0 0
    %4018 = vmatmul.mubr.bf16.gmra.mrb[0].mxu0 %v2143
    %v4019 = vpop.f32.mrb[0].mxu0
    %v4020 = vadd.f32 %v2298, %v4019
    %v4021 = vpop.f32.mrb[0].mxu0
    %v4022 = vadd.f32 %v2302, %v4021
    %v4023 = vpop.f32.mrb[0].mxu0
    %v4024 = vadd.f32 %v2298, %v4023
    %v4025 = vpop.f32.mrb[0].mxu0
    %v4026 = vadd.f32 %v2302, %v4025
    %4027 = vmatprep.mubr.bf16.mxu0 0
    %4028 = vmatmul.mubr.bf16.gmra.mrb[0].mxu0 %v2144
    %v4029 = vpop.f32.mrb[0].mxu0
    %v4030 = vadd.f32 %v2298, %v4029
    %v4031 = vpop.f32.mrb[0].mxu0
    %v4032 = vadd.f32 %v2302, %v4031
    %v4033 = vpop.f32.mrb[0].mxu0
    %v4034 = vadd.f32 %v2298, %v4033
    %v4035 = vpop.f32.mrb[0].mxu0
    %v4036 = vadd.f32 %v2302, %v4035
    %4037 = vmatprep.mubr.bf16.mxu0 0
    %4038 = vmatmul.mubr.bf16.gmra.mrb[0].mxu0 %v2145
    %v4039 = vpop.f32.mrb[0].mxu0
    %v4040 = vadd.f32 %v2298, %v4039
    %v4041 = vpop.f32.mrb[0].mxu0
    %v4042 = vadd.f32 %v2302, %v4041
    %v4043 = vpop.f32.mrb[0].mxu0
    %v4044 = vadd.f32 %v2298, %v4043
    %v4045 = vpop.f32.mrb[0].mxu0
    %v4046 = vadd.f32 %v2302, %v4045
    %4047 = vmatprep.mubr.bf16.mxu0 0
    %4048 = vmatmul.mubr.bf16.gmra.mrb[0].mxu0 %v2146
    %v4049 = vpop.f32.mrb[0].mxu0
    %v4050 = vadd.f32 %v2298, %v4049
    %v4051 = vpop.f32.mrb[0].mxu0
    %v4052 = vadd.f32 %v2302, %v4051
    %v4053 = vpop.f32.mrb[0].mxu0
    %v4054 = vadd.f32 %v2298, %v4053
    %v4055 = vpop.f32.mrb[0].mxu0
    %v4056 = vadd.f32 %v2302, %v4055
    %4057 = vdwg.mxu0
    %4058 = vmatprep.subr.bf16.mxu0 %v2750
    %4059 = vmatpush1.bf16.msra.mxu0 %v2749
    %4060 = vmatprep.subr.bf16.mxu0 %v2766
    %4061 = vmatpush1.bf16.msra.mxu0 %v2765
    %4062 = vmatprep.subr.bf16.mxu0 %v2782
    %4063 = vmatpush1.bf16.msra.mxu0 %v2781
    %4064 = vmatprep.subr.bf16.mxu0 %v2798
    %4065 = vmatpush1.bf16.msra.mxu0 %v2797
    %4066 = vmatprep.subr.bf16.mxu0 %v2814
    %4067 = vmatpush1.bf16.msra.mxu0 %v2813
    %4068 = vmatprep.subr.bf16.mxu0 %v2830
    %4069 = vmatpush1.bf16.msra.mxu0 %v2829
    %4070 = vmatprep.subr.bf16.mxu0 %v2846
    %4071 = vmatpush1.bf16.msra.mxu0 %v2845
    %4072 = vmatprep.subr.bf16.mxu0 %v2862
    %4073 = vmatpush1.bf16.msra.mxu0 %v2861
    %4074 = vmatprep.subr.bf16.mxu0 0
    %4075 = vmatpush1.bf16.msra.mxu0 0
    %4076 = vmatprep.subr.bf16.mxu0 0
    %4077 = vmatpush1.bf16.msra.mxu0 0
    %4078 = vmatprep.subr.bf16.mxu0 0
    %4079 = vmatpush1.bf16.msra.mxu0 0
    %4080 = vmatprep.subr.bf16.mxu0 0
    %4081 = vmatpush1.bf16.msra.mxu0 0
    %4082 = vmatprep.subr.bf16.mxu0 0
    %4083 = vmatpush1.bf16.msra.mxu0 0
    %4084 = vmatprep.subr.bf16.mxu0 0
    %4085 = vmatpush1.bf16.msra.mxu0 0
    %4086 = vmatprep.subr.bf16.mxu0 0
    %4087 = vmatpush1.bf16.msra.mxu0 0
    %4088 = vmatprep.subr.bf16.mxu0 0
    %4089 = vmatpush1.bf16.msra.mxu0 0
    %4090 = vmatprep.mubr.bf16.mxu0 0
    %4091 = vmatmul.mubr.bf16.gmra.mrb[0].mxu0 %v2115
    %v4092 = vpop.f32.mrb[0].mxu0
    %v4093 = vadd.f32 %v2306, %v4092
    %v4094 = vpop.f32.mrb[0].mxu0
    %v4095 = vadd.f32 %v2310, %v4094
    %v4096 = vpop.f32.mrb[0].mxu0
    %v4097 = vadd.f32 %v2306, %v4096
    %v4098 = vpop.f32.mrb[0].mxu0
    %v4099 = vadd.f32 %v2310, %v4098
    %4100 = vmatprep.mubr.bf16.mxu0 0
    %4101 = vmatmul.mubr.bf16.gmra.mrb[0].mxu0 %v2116
    %v4102 = vpop.f32.mrb[0].mxu0
    %v4103 = vadd.f32 %v2306, %v4102
    %v4104 = vpop.f32.mrb[0].mxu0
    %v4105 = vadd.f32 %v2310, %v4104
    %v4106 = vpop.f32.mrb[0].mxu0
    %v4107 = vadd.f32 %v2306, %v4106
    %v4108 = vpop.f32.mrb[0].mxu0
    %v4109 = vadd.f32 %v2310, %v4108
    %4110 = vmatprep.mubr.bf16.mxu0 0
    %4111 = vmatmul.mubr.bf16.gmra.mrb[0].mxu0 %v2117
    %v4112 = vpop.f32.mrb[0].mxu0
    %v4113 = vadd.f32 %v2306, %v4112
    %v4114 = vpop.f32.mrb[0].mxu0
    %v4115 = vadd.f32 %v2310, %v4114
    %v4116 = vpop.f32.mrb[0].mxu0
    %v4117 = vadd.f32 %v2306, %v4116
    %v4118 = vpop.f32.mrb[0].mxu0
    %v4119 = vadd.f32 %v2310, %v4118
    %4120 = vmatprep.mubr.bf16.mxu0 0
    %4121 = vmatmul.mubr.bf16.gmra.mrb[0].mxu0 %v2118
    %v4122 = vpop.f32.mrb[0].mxu0
    %v4123 = vadd.f32 %v2306, %v4122
    %v4124 = vpop.f32.mrb[0].mxu0
    %v4125 = vadd.f32 %v2310, %v4124
    %v4126 = vpop.f32.mrb[0].mxu0
    %v4127 = vadd.f32 %v2306, %v4126
    %v4128 = vpop.f32.mrb[0].mxu0
    %v4129 = vadd.f32 %v2310, %v4128
    %4130 = vmatprep.mubr.bf16.mxu0 0
    %4131 = vmatmul.mubr.bf16.gmra.mrb[0].mxu0 %v2119
    %v4132 = vpop.f32.mrb[0].mxu0
    %v4133 = vadd.f32 %v2306, %v4132
    %v4134 = vpop.f32.mrb[0].mxu0
    %v4135 = vadd.f32 %v2310, %v4134
    %v4136 = vpop.f32.mrb[0].mxu0
    %v4137 = vadd.f32 %v2306, %v4136
    %v4138 = vpop.f32.mrb[0].mxu0
    %v4139 = vadd.f32 %v2310, %v4138
    %4140 = vmatprep.mubr.bf16.mxu0 0
    %4141 = vmatmul.mubr.bf16.gmra.mrb[0].mxu0 %v2120
    %v4142 = vpop.f32.mrb[0].mxu0
    %v4143 = vadd.f32 %v2306, %v4142
    %v4144 = vpop.f32.mrb[0].mxu0
    %v4145 = vadd.f32 %v2310, %v4144
    %v4146 = vpop.f32.mrb[0].mxu0
    %v4147 = vadd.f32 %v2306, %v4146
    %v4148 = vpop.f32.mrb[0].mxu0
    %v4149 = vadd.f32 %v2310, %v4148
    %4150 = vmatprep.mubr.bf16.mxu0 0
    %4151 = vmatmul.mubr.bf16.gmra.mrb[0].mxu0 %v2121
    %v4152 = vpop.f32.mrb[0].mxu0
    %v4153 = vadd.f32 %v2306, %v4152
    %v4154 = vpop.f32.mrb[0].mxu0
    %v4155 = vadd.f32 %v2310, %v4154
    %v4156 = vpop.f32.mrb[0].mxu0
    %v4157 = vadd.f32 %v2306, %v4156
    %v4158 = vpop.f32.mrb[0].mxu0
    %v4159 = vadd.f32 %v2310, %v4158
    %4160 = vmatprep.mubr.bf16.mxu0 0
    %4161 = vmatmul.mubr.bf16.gmra.mrb[0].mxu0 %v2122
    %v4162 = vpop.f32.mrb[0].mxu0
    %v4163 = vadd.f32 %v2306, %v4162
    %v4164 = vpop.f32.mrb[0].mxu0
    %v4165 = vadd.f32 %v2310, %v4164
    %v4166 = vpop.f32.mrb[0].mxu0
    %v4167 = vadd.f32 %v2306, %v4166
    %v4168 = vpop.f32.mrb[0].mxu0
    %v4169 = vadd.f32 %v2310, %v4168
    %4170 = vmatprep.mubr.bf16.mxu0 0
    %4171 = vmatmul.mubr.bf16.gmra.mrb[0].mxu0 %v2123
    %v4172 = vpop.f32.mrb[0].mxu0
    %v4173 = vadd.f32 %v2306, %v4172
    %v4174 = vpop.f32.mrb[0].mxu0
    %v4175 = vadd.f32 %v2310, %v4174
    %v4176 = vpop.f32.mrb[0].mxu0
    %v4177 = vadd.f32 %v2306, %v4176
    %v4178 = vpop.f32.mrb[0].mxu0
    %v4179 = vadd.f32 %v2310, %v4178
    %4180 = vmatprep.mubr.bf16.mxu0 0
    %4181 = vmatmul.mubr.bf16.gmra.mrb[0].mxu0 %v2124
    %v4182 = vpop.f32.mrb[0].mxu0
    %v4183 = vadd.f32 %v2306, %v4182
    %v4184 = vpop.f32.mrb[0].mxu0
    %v4185 = vadd.f32 %v2310, %v4184
    %v4186 = vpop.f32.mrb[0].mxu0
    %v4187 = vadd.f32 %v2306, %v4186
    %v4188 = vpop.f32.mrb[0].mxu0
    %v4189 = vadd.f32 %v2310, %v4188
    %4190 = vmatprep.mubr.bf16.mxu0 0
    %4191 = vmatmul.mubr.bf16.gmra.mrb[0].mxu0 %v2125
    %v4192 = vpop.f32.mrb[0].mxu0
    %v4193 = vadd.f32 %v2306, %v4192
    %v4194 = vpop.f32.mrb[0].mxu0
    %v4195 = vadd.f32 %v2310, %v4194
    %v4196 = vpop.f32.mrb[0].mxu0
    %v4197 = vadd.f32 %v2306, %v4196
    %v4198 = vpop.f32.mrb[0].mxu0
    %v4199 = vadd.f32 %v2310, %v4198
    %4200 = vmatprep.mubr.bf16.mxu0 0
    %4201 = vmatmul.mubr.bf16.gmra.mrb[0].mxu0 %v2126
    %v4202 = vpop.f32.mrb[0].mxu0
    %v4203 = vadd.f32 %v2306, %v4202
    %v4204 = vpop.f32.mrb[0].mxu0
    %v4205 = vadd.f32 %v2310, %v4204
    %v4206 = vpop.f32.mrb[0].mxu0
    %v4207 = vadd.f32 %v2306, %v4206
    %v4208 = vpop.f32.mrb[0].mxu0
    %v4209 = vadd.f32 %v2310, %v4208
    %4210 = vmatprep.mubr.bf16.mxu0 0
    %4211 = vmatmul.mubr.bf16.gmra.mrb[0].mxu0 %v2127
    %v4212 = vpop.f32.mrb[0].mxu0
    %v4213 = vadd.f32 %v2306, %v4212
    %v4214 = vpop.f32.mrb[0].mxu0
    %v4215 = vadd.f32 %v2310, %v4214
    %v4216 = vpop.f32.mrb[0].mxu0
    %v4217 = vadd.f32 %v2306, %v4216
    %v4218 = vpop.f32.mrb[0].mxu0
    %v4219 = vadd.f32 %v2310, %v4218
    %4220 = vmatprep.mubr.bf16.mxu0 0
    %4221 = vmatmul.mubr.bf16.gmra.mrb[0].mxu0 %v2128
    %v4222 = vpop.f32.mrb[0].mxu0
    %v4223 = vadd.f32 %v2306, %v4222
    %v4224 = vpop.f32.mrb[0].mxu0
    %v4225 = vadd.f32 %v2310, %v4224
    %v4226 = vpop.f32.mrb[0].mxu0
    %v4227 = vadd.f32 %v2306, %v4226
    %v4228 = vpop.f32.mrb[0].mxu0
    %v4229 = vadd.f32 %v2310, %v4228
    %4230 = vmatprep.mubr.bf16.mxu0 0
    %4231 = vmatmul.mubr.bf16.gmra.mrb[0].mxu0 %v2129
    %v4232 = vpop.f32.mrb[0].mxu0
    %v4233 = vadd.f32 %v2306, %v4232
    %v4234 = vpop.f32.mrb[0].mxu0
    %v4235 = vadd.f32 %v2310, %v4234
    %v4236 = vpop.f32.mrb[0].mxu0
    %v4237 = vadd.f32 %v2306, %v4236
    %v4238 = vpop.f32.mrb[0].mxu0
    %v4239 = vadd.f32 %v2310, %v4238
    %4240 = vmatprep.mubr.bf16.mxu0 0
    %4241 = vmatmul.mubr.bf16.gmra.mrb[0].mxu0 %v2130
    %v4242 = vpop.f32.mrb[0].mxu0
    %v4243 = vadd.f32 %v2306, %v4242
    %v4244 = vpop.f32.mrb[0].mxu0
    %v4245 = vadd.f32 %v2310, %v4244
    %v4246 = vpop.f32.mrb[0].mxu0
    %v4247 = vadd.f32 %v2306, %v4246
    %v4248 = vpop.f32.mrb[0].mxu0
    %v4249 = vadd.f32 %v2310, %v4248
    %4250 = vmatprep.mubr.bf16.mxu0 0
    %4251 = vmatmul.mubr.bf16.gmra.mrb[0].mxu0 %v2131
    %v4252 = vpop.f32.mrb[0].mxu0
    %v4253 = vadd.f32 %v2306, %v4252
    %v4254 = vpop.f32.mrb[0].mxu0
    %v4255 = vadd.f32 %v2310, %v4254
    %v4256 = vpop.f32.mrb[0].mxu0
    %v4257 = vadd.f32 %v2306, %v4256
    %v4258 = vpop.f32.mrb[0].mxu0
    %v4259 = vadd.f32 %v2310, %v4258
    %4260 = vmatprep.mubr.bf16.mxu0 0
    %4261 = vmatmul.mubr.bf16.gmra.mrb[0].mxu0 %v2132
    %v4262 = vpop.f32.mrb[0].mxu0
    %v4263 = vadd.f32 %v2306, %v4262
    %v4264 = vpop.f32.mrb[0].mxu0
    %v4265 = vadd.f32 %v2310, %v4264
    %v4266 = vpop.f32.mrb[0].mxu0
    %v4267 = vadd.f32 %v2306, %v4266
    %v4268 = vpop.f32.mrb[0].mxu0
    %v4269 = vadd.f32 %v2310, %v4268
    %4270 = vmatprep.mubr.bf16.mxu0 0
    %4271 = vmatmul.mubr.bf16.gmra.mrb[0].mxu0 %v2133
    %v4272 = vpop.f32.mrb[0].mxu0
    %v4273 = vadd.f32 %v2306, %v4272
    %v4274 = vpop.f32.mrb[0].mxu0
    %v4275 = vadd.f32 %v2310, %v4274
    %v4276 = vpop.f32.mrb[0].mxu0
    %v4277 = vadd.f32 %v2306, %v4276
    %v4278 = vpop.f32.mrb[0].mxu0
    %v4279 = vadd.f32 %v2310, %v4278
    %4280 = vmatprep.mubr.bf16.mxu0 0
    %4281 = vmatmul.mubr.bf16.gmra.mrb[0].mxu0 %v2134
    %v4282 = vpop.f32.mrb[0].mxu0
    %v4283 = vadd.f32 %v2306, %v4282
    %v4284 = vpop.f32.mrb[0].mxu0
    %v4285 = vadd.f32 %v2310, %v4284
    %v4286 = vpop.f32.mrb[0].mxu0
    %v4287 = vadd.f32 %v2306, %v4286
    %v4288 = vpop.f32.mrb[0].mxu0
    %v4289 = vadd.f32 %v2310, %v4288
    %4290 = vmatprep.mubr.bf16.mxu0 0
    %4291 = vmatmul.mubr.bf16.gmra.mrb[0].mxu0 %v2135
    %v4292 = vpop.f32.mrb[0].mxu0
    %v4293 = vadd.f32 %v2306, %v4292
    %v4294 = vpop.f32.mrb[0].mxu0
    %v4295 = vadd.f32 %v2310, %v4294
    %v4296 = vpop.f32.mrb[0].mxu0
    %v4297 = vadd.f32 %v2306, %v4296
    %v4298 = vpop.f32.mrb[0].mxu0
    %v4299 = vadd.f32 %v2310, %v4298
    %4300 = vmatprep.mubr.bf16.mxu0 0
    %4301 = vmatmul.mubr.bf16.gmra.mrb[0].mxu0 %v2136
    %v4302 = vpop.f32.mrb[0].mxu0
    %v4303 = vadd.f32 %v2306, %v4302
    %v4304 = vpop.f32.mrb[0].mxu0
    %v4305 = vadd.f32 %v2310, %v4304
    %v4306 = vpop.f32.mrb[0].mxu0
    %v4307 = vadd.f32 %v2306, %v4306
    %v4308 = vpop.f32.mrb[0].mxu0
    %v4309 = vadd.f32 %v2310, %v4308
    %4310 = vmatprep.mubr.bf16.mxu0 0
    %4311 = vmatmul.mubr.bf16.gmra.mrb[0].mxu0 %v2137
    %v4312 = vpop.f32.mrb[0].mxu0
    %v4313 = vadd.f32 %v2306, %v4312
    %v4314 = vpop.f32.mrb[0].mxu0
    %v4315 = vadd.f32 %v2310, %v4314
    %v4316 = vpop.f32.mrb[0].mxu0
    %v4317 = vadd.f32 %v2306, %v4316
    %v4318 = vpop.f32.mrb[0].mxu0
    %v4319 = vadd.f32 %v2310, %v4318
    %4320 = vmatprep.mubr.bf16.mxu0 0
    %4321 = vmatmul.mubr.bf16.gmra.mrb[0].mxu0 %v2138
    %v4322 = vpop.f32.mrb[0].mxu0
    %v4323 = vadd.f32 %v2306, %v4322
    %v4324 = vpop.f32.mrb[0].mxu0
    %v4325 = vadd.f32 %v2310, %v4324
    %v4326 = vpop.f32.mrb[0].mxu0
    %v4327 = vadd.f32 %v2306, %v4326
    %v4328 = vpop.f32.mrb[0].mxu0
    %v4329 = vadd.f32 %v2310, %v4328
    %4330 = vmatprep.mubr.bf16.mxu0 0
    %4331 = vmatmul.mubr.bf16.gmra.mrb[0].mxu0 %v2139
    %v4332 = vpop.f32.mrb[0].mxu0
    %v4333 = vadd.f32 %v2306, %v4332
    %v4334 = vpop.f32.mrb[0].mxu0
    %v4335 = vadd.f32 %v2310, %v4334
    %v4336 = vpop.f32.mrb[0].mxu0
    %v4337 = vadd.f32 %v2306, %v4336
    %v4338 = vpop.f32.mrb[0].mxu0
    %v4339 = vadd.f32 %v2310, %v4338
    %4340 = vmatprep.mubr.bf16.mxu0 0
    %4341 = vmatmul.mubr.bf16.gmra.mrb[0].mxu0 %v2140
    %v4342 = vpop.f32.mrb[0].mxu0
    %v4343 = vadd.f32 %v2306, %v4342
    %v4344 = vpop.f32.mrb[0].mxu0
    %v4345 = vadd.f32 %v2310, %v4344
    %v4346 = vpop.f32.mrb[0].mxu0
    %v4347 = vadd.f32 %v2306, %v4346
    %v4348 = vpop.f32.mrb[0].mxu0
    %v4349 = vadd.f32 %v2310, %v4348
    %4350 = vmatprep.mubr.bf16.mxu0 0
    %4351 = vmatmul.mubr.bf16.gmra.mrb[0].mxu0 %v2141
    %v4352 = vpop.f32.mrb[0].mxu0
    %v4353 = vadd.f32 %v2306, %v4352
    %v4354 = vpop.f32.mrb[0].mxu0
    %v4355 = vadd.f32 %v2310, %v4354
    %v4356 = vpop.f32.mrb[0].mxu0
    %v4357 = vadd.f32 %v2306, %v4356
    %v4358 = vpop.f32.mrb[0].mxu0
    %v4359 = vadd.f32 %v2310, %v4358
    %4360 = vmatprep.mubr.bf16.mxu0 0
    %4361 = vmatmul.mubr.bf16.gmra.mrb[0].mxu0 %v2142
    %v4362 = vpop.f32.mrb[0].mxu0
    %v4363 = vadd.f32 %v2306, %v4362
    %v4364 = vpop.f32.mrb[0].mxu0
    %v4365 = vadd.f32 %v2310, %v4364
    %v4366 = vpop.f32.mrb[0].mxu0
    %v4367 = vadd.f32 %v2306, %v4366
    %v4368 = vpop.f32.mrb[0].mxu0
    %v4369 = vadd.f32 %v2310, %v4368
    %4370 = vmatprep.mubr.bf16.mxu0 0
    %4371 = vmatmul.mubr.bf16.gmra.mrb[0].mxu0 %v2143
    %v4372 = vpop.f32.mrb[0].mxu0
    %v4373 = vadd.f32 %v2306, %v4372
    %v4374 = vpop.f32.mrb[0].mxu0
    %v4375 = vadd.f32 %v2310, %v4374
    %v4376 = vpop.f32.mrb[0].mxu0
    %v4377 = vadd.f32 %v2306, %v4376
    %v4378 = vpop.f32.mrb[0].mxu0
    %v4379 = vadd.f32 %v2310, %v4378
    %4380 = vmatprep.mubr.bf16.mxu0 0
    %4381 = vmatmul.mubr.bf16.gmra.mrb[0].mxu0 %v2144
    %v4382 = vpop.f32.mrb[0].mxu0
    %v4383 = vadd.f32 %v2306, %v4382
    %v4384 = vpop.f32.mrb[0].mxu0
    %v4385 = vadd.f32 %v2310, %v4384
    %v4386 = vpop.f32.mrb[0].mxu0
    %v4387 = vadd.f32 %v2306, %v4386
    %v4388 = vpop.f32.mrb[0].mxu0
    %v4389 = vadd.f32 %v2310, %v4388
    %4390 = vmatprep.mubr.bf16.mxu0 0
    %4391 = vmatmul.mubr.bf16.gmra.mrb[0].mxu0 %v2145
    %v4392 = vpop.f32.mrb[0].mxu0
    %v4393 = vadd.f32 %v2306, %v4392
    %v4394 = vpop.f32.mrb[0].mxu0
    %v4395 = vadd.f32 %v2310, %v4394
    %v4396 = vpop.f32.mrb[0].mxu0
    %v4397 = vadd.f32 %v2306, %v4396
    %v4398 = vpop.f32.mrb[0].mxu0
    %v4399 = vadd.f32 %v2310, %v4398
    %4400 = vmatprep.mubr.bf16.mxu0 0
    %4401 = vmatmul.mubr.bf16.gmra.mrb[0].mxu0 %v2146
    %v4402 = vpop.f32.mrb[0].mxu0
    %v4403 = vadd.f32 %v2306, %v4402
    %v4404 = vpop.f32.mrb[0].mxu0
    %v4405 = vadd.f32 %v2310, %v4404
    %v4406 = vpop.f32.mrb[0].mxu0
    %v4407 = vadd.f32 %v2306, %v4406
    %v4408 = vpop.f32.mrb[0].mxu0
    %v4409 = vadd.f32 %v2310, %v4408
    %4410 = vdwg.mxu0
    %4411 = vmatprep.subr.bf16.mxu0 %v2752
    %4412 = vmatpush1.bf16.msra.mxu0 %v2751
    %4413 = vmatprep.subr.bf16.mxu0 %v2768
    %4414 = vmatpush1.bf16.msra.mxu0 %v2767
    %4415 = vmatprep.subr.bf16.mxu0 %v2784
    %4416 = vmatpush1.bf16.msra.mxu0 %v2783
    %4417 = vmatprep.subr.bf16.mxu0 %v2800
    %4418 = vmatpush1.bf16.msra.mxu0 %v2799
    %4419 = vmatprep.subr.bf16.mxu0 %v2816
    %4420 = vmatpush1.bf16.msra.mxu0 %v2815
    %4421 = vmatprep.subr.bf16.mxu0 %v2832
    %4422 = vmatpush1.bf16.msra.mxu0 %v2831
    %4423 = vmatprep.subr.bf16.mxu0 %v2848
    %4424 = vmatpush1.bf16.msra.mxu0 %v2847
    %4425 = vmatprep.subr.bf16.mxu0 %v2864
    %4426 = vmatpush1.bf16.msra.mxu0 %v2863
    %4427 = vmatprep.subr.bf16.mxu0 0
    %4428 = vmatpush1.bf16.msra.mxu0 0
    %4429 = vmatprep.subr.bf16.mxu0 0
    %4430 = vmatpush1.bf16.msra.mxu0 0
    %4431 = vmatprep.subr.bf16.mxu0 0
    %4432 = vmatpush1.bf16.msra.mxu0 0
    %4433 = vmatprep.subr.bf16.mxu0 0
    %4434 = vmatpush1.bf16.msra.mxu0 0
    %4435 = vmatprep.subr.bf16.mxu0 0
    %4436 = vmatpush1.bf16.msra.mxu0 0
    %4437 = vmatprep.subr.bf16.mxu0 0
    %4438 = vmatpush1.bf16.msra.mxu0 0
    %4439 = vmatprep.subr.bf16.mxu0 0
    %4440 = vmatpush1.bf16.msra.mxu0 0
    %4441 = vmatprep.subr.bf16.mxu0 0
    %4442 = vmatpush1.bf16.msra.mxu0 0
    %4443 = vmatprep.mubr.bf16.mxu0 0
    %4444 = vmatmul.mubr.bf16.gmra.mrb[0].mxu0 %v2115
    %v4445 = vpop.f32.mrb[0].mxu0
    %v4446 = vadd.f32 %v2314, %v4445
    %v4447 = vpop.f32.mrb[0].mxu0
    %v4448 = vadd.f32 %v2318, %v4447
    %v4449 = vpop.f32.mrb[0].mxu0
    %v4450 = vadd.f32 %v2314, %v4449
    %v4451 = vpop.f32.mrb[0].mxu0
    %v4452 = vadd.f32 %v2318, %v4451
    %4453 = vmatprep.mubr.bf16.mxu0 0
    %4454 = vmatmul.mubr.bf16.gmra.mrb[0].mxu0 %v2116
    %v4455 = vpop.f32.mrb[0].mxu0
    %v4456 = vadd.f32 %v2314, %v4455
    %v4457 = vpop.f32.mrb[0].mxu0
    %v4458 = vadd.f32 %v2318, %v4457
    %v4459 = vpop.f32.mrb[0].mxu0
    %v4460 = vadd.f32 %v2314, %v4459
    %v4461 = vpop.f32.mrb[0].mxu0
    %v4462 = vadd.f32 %v2318, %v4461
    %4463 = vmatprep.mubr.bf16.mxu0 0
    %4464 = vmatmul.mubr.bf16.gmra.mrb[0].mxu0 %v2117
    %v4465 = vpop.f32.mrb[0].mxu0
    %v4466 = vadd.f32 %v2314, %v4465
    %v4467 = vpop.f32.mrb[0].mxu0
    %v4468 = vadd.f32 %v2318, %v4467
    %v4469 = vpop.f32.mrb[0].mxu0
    %v4470 = vadd.f32 %v2314, %v4469
    %v4471 = vpop.f32.mrb[0].mxu0
    %v4472 = vadd.f32 %v2318, %v4471
    %4473 = vmatprep.mubr.bf16.mxu0 0
    %4474 = vmatmul.mubr.bf16.gmra.mrb[0].mxu0 %v2118
    %v4475 = vpop.f32.mrb[0].mxu0
    %v4476 = vadd.f32 %v2314, %v4475
    %v4477 = vpop.f32.mrb[0].mxu0
    %v4478 = vadd.f32 %v2318, %v4477
    %v4479 = vpop.f32.mrb[0].mxu0
    %v4480 = vadd.f32 %v2314, %v4479
    %v4481 = vpop.f32.mrb[0].mxu0
    %v4482 = vadd.f32 %v2318, %v4481
    %4483 = vmatprep.mubr.bf16.mxu0 0
    %4484 = vmatmul.mubr.bf16.gmra.mrb[0].mxu0 %v2119
    %v4485 = vpop.f32.mrb[0].mxu0
    %v4486 = vadd.f32 %v2314, %v4485
    %v4487 = vpop.f32.mrb[0].mxu0
    %v4488 = vadd.f32 %v2318, %v4487
    %v4489 = vpop.f32.mrb[0].mxu0
    %v4490 = vadd.f32 %v2314, %v4489
    %v4491 = vpop.f32.mrb[0].mxu0
    %v4492 = vadd.f32 %v2318, %v4491
    %4493 = vmatprep.mubr.bf16.mxu0 0
    %4494 = vmatmul.mubr.bf16.gmra.mrb[0].mxu0 %v2120
    %v4495 = vpop.f32.mrb[0].mxu0
    %v4496 = vadd.f32 %v2314, %v4495
    %v4497 = vpop.f32.mrb[0].mxu0
    %v4498 = vadd.f32 %v2318, %v4497
    %v4499 = vpop.f32.mrb[0].mxu0
    %v4500 = vadd.f32 %v2314, %v4499
    %v4501 = vpop.f32.mrb[0].mxu0
    %v4502 = vadd.f32 %v2318, %v4501
    %4503 = vmatprep.mubr.bf16.mxu0 0
    %4504 = vmatmul.mubr.bf16.gmra.mrb[0].mxu0 %v2121
    %v4505 = vpop.f32.mrb[0].mxu0
    %v4506 = vadd.f32 %v2314, %v4505
    %v4507 = vpop.f32.mrb[0].mxu0
    %v4508 = vadd.f32 %v2318, %v4507
    %v4509 = vpop.f32.mrb[0].mxu0
    %v4510 = vadd.f32 %v2314, %v4509
    %v4511 = vpop.f32.mrb[0].mxu0
    %v4512 = vadd.f32 %v2318, %v4511
    %4513 = vmatprep.mubr.bf16.mxu0 0
    %4514 = vmatmul.mubr.bf16.gmra.mrb[0].mxu0 %v2122
    %v4515 = vpop.f32.mrb[0].mxu0
    %v4516 = vadd.f32 %v2314, %v4515
    %v4517 = vpop.f32.mrb[0].mxu0
    %v4518 = vadd.f32 %v2318, %v4517
    %v4519 = vpop.f32.mrb[0].mxu0
    %v4520 = vadd.f32 %v2314, %v4519
    %v4521 = vpop.f32.mrb[0].mxu0
    %v4522 = vadd.f32 %v2318, %v4521
    %4523 = vmatprep.mubr.bf16.mxu0 0
    %4524 = vmatmul.mubr.bf16.gmra.mrb[0].mxu0 %v2123
    %v4525 = vpop.f32.mrb[0].mxu0
    %v4526 = vadd.f32 %v2314, %v4525
    %v4527 = vpop.f32.mrb[0].mxu0
    %v4528 = vadd.f32 %v2318, %v4527
    %v4529 = vpop.f32.mrb[0].mxu0
    %v4530 = vadd.f32 %v2314, %v4529
    %v4531 = vpop.f32.mrb[0].mxu0
    %v4532 = vadd.f32 %v2318, %v4531
    %4533 = vmatprep.mubr.bf16.mxu0 0
    %4534 = vmatmul.mubr.bf16.gmra.mrb[0].mxu0 %v2124
    %v4535 = vpop.f32.mrb[0].mxu0
    %v4536 = vadd.f32 %v2314, %v4535
    %v4537 = vpop.f32.mrb[0].mxu0
    %v4538 = vadd.f32 %v2318, %v4537
    %v4539 = vpop.f32.mrb[0].mxu0
    %v4540 = vadd.f32 %v2314, %v4539
    %v4541 = vpop.f32.mrb[0].mxu0
    %v4542 = vadd.f32 %v2318, %v4541
    %4543 = vmatprep.mubr.bf16.mxu0 0
    %4544 = vmatmul.mubr.bf16.gmra.mrb[0].mxu0 %v2125
    %v4545 = vpop.f32.mrb[0].mxu0
    %v4546 = vadd.f32 %v2314, %v4545
    %v4547 = vpop.f32.mrb[0].mxu0
    %v4548 = vadd.f32 %v2318, %v4547
    %v4549 = vpop.f32.mrb[0].mxu0
    %v4550 = vadd.f32 %v2314, %v4549
    %v4551 = vpop.f32.mrb[0].mxu0
    %v4552 = vadd.f32 %v2318, %v4551
    %4553 = vmatprep.mubr.bf16.mxu0 0
    %4554 = vmatmul.mubr.bf16.gmra.mrb[0].mxu0 %v2126
    %v4555 = vpop.f32.mrb[0].mxu0
    %v4556 = vadd.f32 %v2314, %v4555
    %v4557 = vpop.f32.mrb[0].mxu0
    %v4558 = vadd.f32 %v2318, %v4557
    %v4559 = vpop.f32.mrb[0].mxu0
    %v4560 = vadd.f32 %v2314, %v4559
    %v4561 = vpop.f32.mrb[0].mxu0
    %v4562 = vadd.f32 %v2318, %v4561
    %4563 = vmatprep.mubr.bf16.mxu0 0
    %4564 = vmatmul.mubr.bf16.gmra.mrb[0].mxu0 %v2127
    %v4565 = vpop.f32.mrb[0].mxu0
    %v4566 = vadd.f32 %v2314, %v4565
    %v4567 = vpop.f32.mrb[0].mxu0
    %v4568 = vadd.f32 %v2318, %v4567
    %v4569 = vpop.f32.mrb[0].mxu0
    %v4570 = vadd.f32 %v2314, %v4569
    %v4571 = vpop.f32.mrb[0].mxu0
    %v4572 = vadd.f32 %v2318, %v4571
    %4573 = vmatprep.mubr.bf16.mxu0 0
    %4574 = vmatmul.mubr.bf16.gmra.mrb[0].mxu0 %v2128
    %v4575 = vpop.f32.mrb[0].mxu0
    %v4576 = vadd.f32 %v2314, %v4575
    %v4577 = vpop.f32.mrb[0].mxu0
    %v4578 = vadd.f32 %v2318, %v4577
    %v4579 = vpop.f32.mrb[0].mxu0
    %v4580 = vadd.f32 %v2314, %v4579
    %v4581 = vpop.f32.mrb[0].mxu0
    %v4582 = vadd.f32 %v2318, %v4581
    %4583 = vmatprep.mubr.bf16.mxu0 0
    %4584 = vmatmul.mubr.bf16.gmra.mrb[0].mxu0 %v2129
    %v4585 = vpop.f32.mrb[0].mxu0
    %v4586 = vadd.f32 %v2314, %v4585
    %v4587 = vpop.f32.mrb[0].mxu0
    %v4588 = vadd.f32 %v2318, %v4587
    %v4589 = vpop.f32.mrb[0].mxu0
    %v4590 = vadd.f32 %v2314, %v4589
    %v4591 = vpop.f32.mrb[0].mxu0
    %v4592 = vadd.f32 %v2318, %v4591
    %4593 = vmatprep.mubr.bf16.mxu0 0
    %4594 = vmatmul.mubr.bf16.gmra.mrb[0].mxu0 %v2130
    %v4595 = vpop.f32.mrb[0].mxu0
    %v4596 = vadd.f32 %v2314, %v4595
    %v4597 = vpop.f32.mrb[0].mxu0
    %v4598 = vadd.f32 %v2318, %v4597
    %v4599 = vpop.f32.mrb[0].mxu0
    %v4600 = vadd.f32 %v2314, %v4599
    %v4601 = vpop.f32.mrb[0].mxu0
    %v4602 = vadd.f32 %v2318, %v4601
    %4603 = vmatprep.mubr.bf16.mxu0 0
    %4604 = vmatmul.mubr.bf16.gmra.mrb[0].mxu0 %v2131
    %v4605 = vpop.f32.mrb[0].mxu0
    %v4606 = vadd.f32 %v2314, %v4605
    %v4607 = vpop.f32.mrb[0].mxu0
    %v4608 = vadd.f32 %v2318, %v4607
    %v4609 = vpop.f32.mrb[0].mxu0
    %v4610 = vadd.f32 %v2314, %v4609
    %v4611 = vpop.f32.mrb[0].mxu0
    %v4612 = vadd.f32 %v2318, %v4611
    %4613 = vmatprep.mubr.bf16.mxu0 0
    %4614 = vmatmul.mubr.bf16.gmra.mrb[0].mxu0 %v2132
    %v4615 = vpop.f32.mrb[0].mxu0
    %v4616 = vadd.f32 %v2314, %v4615
    %v4617 = vpop.f32.mrb[0].mxu0
    %v4618 = vadd.f32 %v2318, %v4617
    %v4619 = vpop.f32.mrb[0].mxu0
    %v4620 = vadd.f32 %v2314, %v4619
    %v4621 = vpop.f32.mrb[0].mxu0
    %v4622 = vadd.f32 %v2318, %v4621
    %4623 = vmatprep.mubr.bf16.mxu0 0
    %4624 = vmatmul.mubr.bf16.gmra.mrb[0].mxu0 %v2133
    %v4625 = vpop.f32.mrb[0].mxu0
    %v4626 = vadd.f32 %v2314, %v4625
    %v4627 = vpop.f32.mrb[0].mxu0
    %v4628 = vadd.f32 %v2318, %v4627
    %v4629 = vpop.f32.mrb[0].mxu0
    %v4630 = vadd.f32 %v2314, %v4629
    %v4631 = vpop.f32.mrb[0].mxu0
    %v4632 = vadd.f32 %v2318, %v4631
    %4633 = vmatprep.mubr.bf16.mxu0 0
    %4634 = vmatmul.mubr.bf16.gmra.mrb[0].mxu0 %v2134
    %v4635 = vpop.f32.mrb[0].mxu0
    %v4636 = vadd.f32 %v2314, %v4635
    %v4637 = vpop.f32.mrb[0].mxu0
    %v4638 = vadd.f32 %v2318, %v4637
    %v4639 = vpop.f32.mrb[0].mxu0
    %v4640 = vadd.f32 %v2314, %v4639
    %v4641 = vpop.f32.mrb[0].mxu0
    %v4642 = vadd.f32 %v2318, %v4641
    %4643 = vmatprep.mubr.bf16.mxu0 0
    %4644 = vmatmul.mubr.bf16.gmra.mrb[0].mxu0 %v2135
    %v4645 = vpop.f32.mrb[0].mxu0
    %v4646 = vadd.f32 %v2314, %v4645
    %v4647 = vpop.f32.mrb[0].mxu0
    %v4648 = vadd.f32 %v2318, %v4647
    %v4649 = vpop.f32.mrb[0].mxu0
    %v4650 = vadd.f32 %v2314, %v4649
    %v4651 = vpop.f32.mrb[0].mxu0
    %v4652 = vadd.f32 %v2318, %v4651
    %4653 = vmatprep.mubr.bf16.mxu0 0
    %4654 = vmatmul.mubr.bf16.gmra.mrb[0].mxu0 %v2136
    %v4655 = vpop.f32.mrb[0].mxu0
    %v4656 = vadd.f32 %v2314, %v4655
    %v4657 = vpop.f32.mrb[0].mxu0
    %v4658 = vadd.f32 %v2318, %v4657
    %v4659 = vpop.f32.mrb[0].mxu0
    %v4660 = vadd.f32 %v2314, %v4659
    %v4661 = vpop.f32.mrb[0].mxu0
    %v4662 = vadd.f32 %v2318, %v4661
    %4663 = vmatprep.mubr.bf16.mxu0 0
    %4664 = vmatmul.mubr.bf16.gmra.mrb[0].mxu0 %v2137
    %v4665 = vpop.f32.mrb[0].mxu0
    %v4666 = vadd.f32 %v2314, %v4665
    %v4667 = vpop.f32.mrb[0].mxu0
    %v4668 = vadd.f32 %v2318, %v4667
    %v4669 = vpop.f32.mrb[0].mxu0
    %v4670 = vadd.f32 %v2314, %v4669
    %v4671 = vpop.f32.mrb[0].mxu0
    %v4672 = vadd.f32 %v2318, %v4671
    %4673 = vmatprep.mubr.bf16.mxu0 0
    %4674 = vmatmul.mubr.bf16.gmra.mrb[0].mxu0 %v2138
    %v4675 = vpop.f32.mrb[0].mxu0
    %v4676 = vadd.f32 %v2314, %v4675
    %v4677 = vpop.f32.mrb[0].mxu0
    %v4678 = vadd.f32 %v2318, %v4677
    %v4679 = vpop.f32.mrb[0].mxu0
    %v4680 = vadd.f32 %v2314, %v4679
    %v4681 = vpop.f32.mrb[0].mxu0
    %v4682 = vadd.f32 %v2318, %v4681
    %4683 = vmatprep.mubr.bf16.mxu0 0
    %4684 = vmatmul.mubr.bf16.gmra.mrb[0].mxu0 %v2139
    %v4685 = vpop.f32.mrb[0].mxu0
    %v4686 = vadd.f32 %v2314, %v4685
    %v4687 = vpop.f32.mrb[0].mxu0
    %v4688 = vadd.f32 %v2318, %v4687
    %v4689 = vpop.f32.mrb[0].mxu0
    %v4690 = vadd.f32 %v2314, %v4689
    %v4691 = vpop.f32.mrb[0].mxu0
    %v4692 = vadd.f32 %v2318, %v4691
    %4693 = vmatprep.mubr.bf16.mxu0 0
    %4694 = vmatmul.mubr.bf16.gmra.mrb[0].mxu0 %v2140
    %v4695 = vpop.f32.mrb[0].mxu0
    %v4696 = vadd.f32 %v2314, %v4695
    %v4697 = vpop.f32.mrb[0].mxu0
    %v4698 = vadd.f32 %v2318, %v4697
    %v4699 = vpop.f32.mrb[0].mxu0
    %v4700 = vadd.f32 %v2314, %v4699
    %v4701 = vpop.f32.mrb[0].mxu0
    %v4702 = vadd.f32 %v2318, %v4701
    %4703 = vmatprep.mubr.bf16.mxu0 0
    %4704 = vmatmul.mubr.bf16.gmra.mrb[0].mxu0 %v2141
    %v4705 = vpop.f32.mrb[0].mxu0
    %v4706 = vadd.f32 %v2314, %v4705
    %v4707 = vpop.f32.mrb[0].mxu0
    %v4708 = vadd.f32 %v2318, %v4707
    %v4709 = vpop.f32.mrb[0].mxu0
    %v4710 = vadd.f32 %v2314, %v4709
    %v4711 = vpop.f32.mrb[0].mxu0
    %v4712 = vadd.f32 %v2318, %v4711
    %4713 = vmatprep.mubr.bf16.mxu0 0
    %4714 = vmatmul.mubr.bf16.gmra.mrb[0].mxu0 %v2142
    %v4715 = vpop.f32.mrb[0].mxu0
    %v4716 = vadd.f32 %v2314, %v4715
    %v4717 = vpop.f32.mrb[0].mxu0
    %v4718 = vadd.f32 %v2318, %v4717
    %v4719 = vpop.f32.mrb[0].mxu0
    %v4720 = vadd.f32 %v2314, %v4719
    %v4721 = vpop.f32.mrb[0].mxu0
    %v4722 = vadd.f32 %v2318, %v4721
    %4723 = vmatprep.mubr.bf16.mxu0 0
    %4724 = vmatmul.mubr.bf16.gmra.mrb[0].mxu0 %v2143
    %v4725 = vpop.f32.mrb[0].mxu0
    %v4726 = vadd.f32 %v2314, %v4725
    %v4727 = vpop.f32.mrb[0].mxu0
    %v4728 = vadd.f32 %v2318, %v4727
    %v4729 = vpop.f32.mrb[0].mxu0
    %v4730 = vadd.f32 %v2314, %v4729
    %v4731 = vpop.f32.mrb[0].mxu0
    %v4732 = vadd.f32 %v2318, %v4731
    %4733 = vmatprep.mubr.bf16.mxu0 0
    %4734 = vmatmul.mubr.bf16.gmra.mrb[0].mxu0 %v2144
    %v4735 = vpop.f32.mrb[0].mxu0
    %v4736 = vadd.f32 %v2314, %v4735
    %v4737 = vpop.f32.mrb[0].mxu0
    %v4738 = vadd.f32 %v2318, %v4737
    %v4739 = vpop.f32.mrb[0].mxu0
    %v4740 = vadd.f32 %v2314, %v4739
    %v4741 = vpop.f32.mrb[0].mxu0
    %v4742 = vadd.f32 %v2318, %v4741
    %4743 = vmatprep.mubr.bf16.mxu0 0
    %4744 = vmatmul.mubr.bf16.gmra.mrb[0].mxu0 %v2145
    %v4745 = vpop.f32.mrb[0].mxu0
    %v4746 = vadd.f32 %v2314, %v4745
    %v4747 = vpop.f32.mrb[0].mxu0
    %v4748 = vadd.f32 %v2318, %v4747
    %v4749 = vpop.f32.mrb[0].mxu0
    %v4750 = vadd.f32 %v2314, %v4749
    %v4751 = vpop.f32.mrb[0].mxu0
    %v4752 = vadd.f32 %v2318, %v4751
    %4753 = vmatprep.mubr.bf16.mxu0 0
    %4754 = vmatmul.mubr.bf16.gmra.mrb[0].mxu0 %v2146
    %v4755 = vpop.f32.mrb[0].mxu0
    %v4756 = vadd.f32 %v2314, %v4755
    %v4757 = vpop.f32.mrb[0].mxu0
    %v4758 = vadd.f32 %v2318, %v4757
    %v4759 = vpop.f32.mrb[0].mxu0
    %v4760 = vadd.f32 %v2314, %v4759
    %v4761 = vpop.f32.mrb[0].mxu0
    %v4762 = vadd.f32 %v2318, %v4761
    %4763 = vdwg.mxu0
    %4764 = vmatprep.subr.bf16.mxu0 %v2754
    %4765 = vmatpush1.bf16.msra.mxu0 %v2753
    %4766 = vmatprep.subr.bf16.mxu0 %v2770
    %4767 = vmatpush1.bf16.msra.mxu0 %v2769
    %4768 = vmatprep.subr.bf16.mxu0 %v2786
    %4769 = vmatpush1.bf16.msra.mxu0 %v2785
    %4770 = vmatprep.subr.bf16.mxu0 %v2802
    %4771 = vmatpush1.bf16.msra.mxu0 %v2801
    %4772 = vmatprep.subr.bf16.mxu0 %v2818
    %4773 = vmatpush1.bf16.msra.mxu0 %v2817
    %4774 = vmatprep.subr.bf16.mxu0 %v2834
    %4775 = vmatpush1.bf16.msra.mxu0 %v2833
    %4776 = vmatprep.subr.bf16.mxu0 %v2850
    %4777 = vmatpush1.bf16.msra.mxu0 %v2849
    %4778 = vmatprep.subr.bf16.mxu0 %v2866
    %4779 = vmatpush1.bf16.msra.mxu0 %v2865
    %4780 = vmatprep.subr.bf16.mxu0 0
    %4781 = vmatpush1.bf16.msra.mxu0 0
    %4782 = vmatprep.subr.bf16.mxu0 0
    %4783 = vmatpush1.bf16.msra.mxu0 0
    %4784 = vmatprep.subr.bf16.mxu0 0
    %4785 = vmatpush1.bf16.msra.mxu0 0
    %4786 = vmatprep.subr.bf16.mxu0 0
    %4787 = vmatpush1.bf16.msra.mxu0 0
    %4788 = vmatprep.subr.bf16.mxu0 0
    %4789 = vmatpush1.bf16.msra.mxu0 0
    %4790 = vmatprep.subr.bf16.mxu0 0
    %4791 = vmatpush1.bf16.msra.mxu0 0
    %4792 = vmatprep.subr.bf16.mxu0 0
    %4793 = vmatpush1.bf16.msra.mxu0 0
    %4794 = vmatprep.subr.bf16.mxu0 0
    %4795 = vmatpush1.bf16.msra.mxu0 0
    %4796 = vmatprep.mubr.bf16.mxu0 0
    %4797 = vmatmul.mubr.bf16.gmra.mrb[0].mxu0 %v2115
    %v4798 = vpop.f32.mrb[0].mxu0
    %v4799 = vadd.f32 %v2322, %v4798
    %v4800 = vpop.f32.mrb[0].mxu0
    %v4801 = vadd.f32 %v2326, %v4800
    %v4802 = vpop.f32.mrb[0].mxu0
    %v4803 = vadd.f32 %v2322, %v4802
    %v4804 = vpop.f32.mrb[0].mxu0
    %v4805 = vadd.f32 %v2326, %v4804
    %4806 = vmatprep.mubr.bf16.mxu0 0
    %4807 = vmatmul.mubr.bf16.gmra.mrb[0].mxu0 %v2116
    %v4808 = vpop.f32.mrb[0].mxu0
    %v4809 = vadd.f32 %v2322, %v4808
    %v4810 = vpop.f32.mrb[0].mxu0
    %v4811 = vadd.f32 %v2326, %v4810
    %v4812 = vpop.f32.mrb[0].mxu0
    %v4813 = vadd.f32 %v2322, %v4812
    %v4814 = vpop.f32.mrb[0].mxu0
    %v4815 = vadd.f32 %v2326, %v4814
    %4816 = vmatprep.mubr.bf16.mxu0 0
    %4817 = vmatmul.mubr.bf16.gmra.mrb[0].mxu0 %v2117
    %v4818 = vpop.f32.mrb[0].mxu0
    %v4819 = vadd.f32 %v2322, %v4818
    %v4820 = vpop.f32.mrb[0].mxu0
    %v4821 = vadd.f32 %v2326, %v4820
    %v4822 = vpop.f32.mrb[0].mxu0
    %v4823 = vadd.f32 %v2322, %v4822
    %v4824 = vpop.f32.mrb[0].mxu0
    %v4825 = vadd.f32 %v2326, %v4824
    %4826 = vmatprep.mubr.bf16.mxu0 0
    %4827 = vmatmul.mubr.bf16.gmra.mrb[0].mxu0 %v2118
    %v4828 = vpop.f32.mrb[0].mxu0
    %v4829 = vadd.f32 %v2322, %v4828
    %v4830 = vpop.f32.mrb[0].mxu0
    %v4831 = vadd.f32 %v2326, %v4830
    %v4832 = vpop.f32.mrb[0].mxu0
    %v4833 = vadd.f32 %v2322, %v4832
    %v4834 = vpop.f32.mrb[0].mxu0
    %v4835 = vadd.f32 %v2326, %v4834
    %4836 = vmatprep.mubr.bf16.mxu0 0
    %4837 = vmatmul.mubr.bf16.gmra.mrb[0].mxu0 %v2119
    %v4838 = vpop.f32.mrb[0].mxu0
    %v4839 = vadd.f32 %v2322, %v4838
    %v4840 = vpop.f32.mrb[0].mxu0
    %v4841 = vadd.f32 %v2326, %v4840
    %v4842 = vpop.f32.mrb[0].mxu0
    %v4843 = vadd.f32 %v2322, %v4842
    %v4844 = vpop.f32.mrb[0].mxu0
    %v4845 = vadd.f32 %v2326, %v4844
    %4846 = vmatprep.mubr.bf16.mxu0 0
    %4847 = vmatmul.mubr.bf16.gmra.mrb[0].mxu0 %v2120
    %v4848 = vpop.f32.mrb[0].mxu0
    %v4849 = vadd.f32 %v2322, %v4848
    %v4850 = vpop.f32.mrb[0].mxu0
    %v4851 = vadd.f32 %v2326, %v4850
    %v4852 = vpop.f32.mrb[0].mxu0
    %v4853 = vadd.f32 %v2322, %v4852
    %v4854 = vpop.f32.mrb[0].mxu0
    %v4855 = vadd.f32 %v2326, %v4854
    %4856 = vmatprep.mubr.bf16.mxu0 0
    %4857 = vmatmul.mubr.bf16.gmra.mrb[0].mxu0 %v2121
    %v4858 = vpop.f32.mrb[0].mxu0
    %v4859 = vadd.f32 %v2322, %v4858
    %v4860 = vpop.f32.mrb[0].mxu0
    %v4861 = vadd.f32 %v2326, %v4860
    %v4862 = vpop.f32.mrb[0].mxu0
    %v4863 = vadd.f32 %v2322, %v4862
    %v4864 = vpop.f32.mrb[0].mxu0
    %v4865 = vadd.f32 %v2326, %v4864
    %4866 = vmatprep.mubr.bf16.mxu0 0
    %4867 = vmatmul.mubr.bf16.gmra.mrb[0].mxu0 %v2122
    %v4868 = vpop.f32.mrb[0].mxu0
    %v4869 = vadd.f32 %v2322, %v4868
    %v4870 = vpop.f32.mrb[0].mxu0
    %v4871 = vadd.f32 %v2326, %v4870
    %v4872 = vpop.f32.mrb[0].mxu0
    %v4873 = vadd.f32 %v2322, %v4872
    %v4874 = vpop.f32.mrb[0].mxu0
    %v4875 = vadd.f32 %v2326, %v4874
    %4876 = vmatprep.mubr.bf16.mxu0 0
    %4877 = vmatmul.mubr.bf16.gmra.mrb[0].mxu0 %v2123
    %v4878 = vpop.f32.mrb[0].mxu0
    %v4879 = vadd.f32 %v2322, %v4878
    %v4880 = vpop.f32.mrb[0].mxu0
    %v4881 = vadd.f32 %v2326, %v4880
    %v4882 = vpop.f32.mrb[0].mxu0
    %v4883 = vadd.f32 %v2322, %v4882
    %v4884 = vpop.f32.mrb[0].mxu0
    %v4885 = vadd.f32 %v2326, %v4884
    %4886 = vmatprep.mubr.bf16.mxu0 0
    %4887 = vmatmul.mubr.bf16.gmra.mrb[0].mxu0 %v2124
    %v4888 = vpop.f32.mrb[0].mxu0
    %v4889 = vadd.f32 %v2322, %v4888
    %v4890 = vpop.f32.mrb[0].mxu0
    %v4891 = vadd.f32 %v2326, %v4890
    %v4892 = vpop.f32.mrb[0].mxu0
    %v4893 = vadd.f32 %v2322, %v4892
    %v4894 = vpop.f32.mrb[0].mxu0
    %v4895 = vadd.f32 %v2326, %v4894
    %4896 = vmatprep.mubr.bf16.mxu0 0
    %4897 = vmatmul.mubr.bf16.gmra.mrb[0].mxu0 %v2125
    %v4898 = vpop.f32.mrb[0].mxu0
    %v4899 = vadd.f32 %v2322, %v4898
    %v4900 = vpop.f32.mrb[0].mxu0
    %v4901 = vadd.f32 %v2326, %v4900
    %v4902 = vpop.f32.mrb[0].mxu0
    %v4903 = vadd.f32 %v2322, %v4902
    %v4904 = vpop.f32.mrb[0].mxu0
    %v4905 = vadd.f32 %v2326, %v4904
    %4906 = vmatprep.mubr.bf16.mxu0 0
    %4907 = vmatmul.mubr.bf16.gmra.mrb[0].mxu0 %v2126
    %v4908 = vpop.f32.mrb[0].mxu0
    %v4909 = vadd.f32 %v2322, %v4908
    %v4910 = vpop.f32.mrb[0].mxu0
    %v4911 = vadd.f32 %v2326, %v4910
    %v4912 = vpop.f32.mrb[0].mxu0
    %v4913 = vadd.f32 %v2322, %v4912
    %v4914 = vpop.f32.mrb[0].mxu0
    %v4915 = vadd.f32 %v2326, %v4914
    %4916 = vmatprep.mubr.bf16.mxu0 0
    %4917 = vmatmul.mubr.bf16.gmra.mrb[0].mxu0 %v2127
    %v4918 = vpop.f32.mrb[0].mxu0
    %v4919 = vadd.f32 %v2322, %v4918
    %v4920 = vpop.f32.mrb[0].mxu0
    %v4921 = vadd.f32 %v2326, %v4920
    %v4922 = vpop.f32.mrb[0].mxu0
    %v4923 = vadd.f32 %v2322, %v4922
    %v4924 = vpop.f32.mrb[0].mxu0
    %v4925 = vadd.f32 %v2326, %v4924
    %4926 = vmatprep.mubr.bf16.mxu0 0
    %4927 = vmatmul.mubr.bf16.gmra.mrb[0].mxu0 %v2128
    %v4928 = vpop.f32.mrb[0].mxu0
    %v4929 = vadd.f32 %v2322, %v4928
    %v4930 = vpop.f32.mrb[0].mxu0
    %v4931 = vadd.f32 %v2326, %v4930
    %v4932 = vpop.f32.mrb[0].mxu0
    %v4933 = vadd.f32 %v2322, %v4932
    %v4934 = vpop.f32.mrb[0].mxu0
    %v4935 = vadd.f32 %v2326, %v4934
    %4936 = vmatprep.mubr.bf16.mxu0 0
    %4937 = vmatmul.mubr.bf16.gmra.mrb[0].mxu0 %v2129
    %v4938 = vpop.f32.mrb[0].mxu0
    %v4939 = vadd.f32 %v2322, %v4938
    %v4940 = vpop.f32.mrb[0].mxu0
    %v4941 = vadd.f32 %v2326, %v4940
    %v4942 = vpop.f32.mrb[0].mxu0
    %v4943 = vadd.f32 %v2322, %v4942
    %v4944 = vpop.f32.mrb[0].mxu0
    %v4945 = vadd.f32 %v2326, %v4944
    %4946 = vmatprep.mubr.bf16.mxu0 0
    %4947 = vmatmul.mubr.bf16.gmra.mrb[0].mxu0 %v2130
    %v4948 = vpop.f32.mrb[0].mxu0
    %v4949 = vadd.f32 %v2322, %v4948
    %v4950 = vpop.f32.mrb[0].mxu0
    %v4951 = vadd.f32 %v2326, %v4950
    %v4952 = vpop.f32.mrb[0].mxu0
    %v4953 = vadd.f32 %v2322, %v4952
    %v4954 = vpop.f32.mrb[0].mxu0
    %v4955 = vadd.f32 %v2326, %v4954
    %4956 = vmatprep.mubr.bf16.mxu0 0
    %4957 = vmatmul.mubr.bf16.gmra.mrb[0].mxu0 %v2131
    %v4958 = vpop.f32.mrb[0].mxu0
    %v4959 = vadd.f32 %v2322, %v4958
    %v4960 = vpop.f32.mrb[0].mxu0
    %v4961 = vadd.f32 %v2326, %v4960
    %v4962 = vpop.f32.mrb[0].mxu0
    %v4963 = vadd.f32 %v2322, %v4962
    %v4964 = vpop.f32.mrb[0].mxu0
    %v4965 = vadd.f32 %v2326, %v4964
    %4966 = vmatprep.mubr.bf16.mxu0 0
    %4967 = vmatmul.mubr.bf16.gmra.mrb[0].mxu0 %v2132
    %v4968 = vpop.f32.mrb[0].mxu0
    %v4969 = vadd.f32 %v2322, %v4968
    %v4970 = vpop.f32.mrb[0].mxu0
    %v4971 = vadd.f32 %v2326, %v4970
    %v4972 = vpop.f32.mrb[0].mxu0
    %v4973 = vadd.f32 %v2322, %v4972
    %v4974 = vpop.f32.mrb[0].mxu0
    %v4975 = vadd.f32 %v2326, %v4974
    %4976 = vmatprep.mubr.bf16.mxu0 0
    %4977 = vmatmul.mubr.bf16.gmra.mrb[0].mxu0 %v2133
    %v4978 = vpop.f32.mrb[0].mxu0
    %v4979 = vadd.f32 %v2322, %v4978
    %v4980 = vpop.f32.mrb[0].mxu0
    %v4981 = vadd.f32 %v2326, %v4980
    %v4982 = vpop.f32.mrb[0].mxu0
    %v4983 = vadd.f32 %v2322, %v4982
    %v4984 = vpop.f32.mrb[0].mxu0
    %v4985 = vadd.f32 %v2326, %v4984
    %4986 = vmatprep.mubr.bf16.mxu0 0
    %4987 = vmatmul.mubr.bf16.gmra.mrb[0].mxu0 %v2134
    %v4988 = vpop.f32.mrb[0].mxu0
    %v4989 = vadd.f32 %v2322, %v4988
    %v4990 = vpop.f32.mrb[0].mxu0
    %v4991 = vadd.f32 %v2326, %v4990
    %v4992 = vpop.f32.mrb[0].mxu0
    %v4993 = vadd.f32 %v2322, %v4992
    %v4994 = vpop.f32.mrb[0].mxu0
    %v4995 = vadd.f32 %v2326, %v4994
    %4996 = vmatprep.mubr.bf16.mxu0 0
    %4997 = vmatmul.mubr.bf16.gmra.mrb[0].mxu0 %v2135
    %v4998 = vpop.f32.mrb[0].mxu0
    %v4999 = vadd.f32 %v2322, %v4998
    %v5000 = vpop.f32.mrb[0].mxu0
    %v5001 = vadd.f32 %v2326, %v5000
    %v5002 = vpop.f32.mrb[0].mxu0
    %v5003 = vadd.f32 %v2322, %v5002
    %v5004 = vpop.f32.mrb[0].mxu0
    %v5005 = vadd.f32 %v2326, %v5004
    %5006 = vmatprep.mubr.bf16.mxu0 0
    %5007 = vmatmul.mubr.bf16.gmra.mrb[0].mxu0 %v2136
    %v5008 = vpop.f32.mrb[0].mxu0
    %v5009 = vadd.f32 %v2322, %v5008
    %v5010 = vpop.f32.mrb[0].mxu0
    %v5011 = vadd.f32 %v2326, %v5010
    %v5012 = vpop.f32.mrb[0].mxu0
    %v5013 = vadd.f32 %v2322, %v5012
    %v5014 = vpop.f32.mrb[0].mxu0
    %v5015 = vadd.f32 %v2326, %v5014
    %5016 = vmatprep.mubr.bf16.mxu0 0
    %5017 = vmatmul.mubr.bf16.gmra.mrb[0].mxu0 %v2137
    %v5018 = vpop.f32.mrb[0].mxu0
    %v5019 = vadd.f32 %v2322, %v5018
    %v5020 = vpop.f32.mrb[0].mxu0
    %v5021 = vadd.f32 %v2326, %v5020
    %v5022 = vpop.f32.mrb[0].mxu0
    %v5023 = vadd.f32 %v2322, %v5022
    %v5024 = vpop.f32.mrb[0].mxu0
    %v5025 = vadd.f32 %v2326, %v5024
    %5026 = vmatprep.mubr.bf16.mxu0 0
    %5027 = vmatmul.mubr.bf16.gmra.mrb[0].mxu0 %v2138
    %v5028 = vpop.f32.mrb[0].mxu0
    %v5029 = vadd.f32 %v2322, %v5028
    %v5030 = vpop.f32.mrb[0].mxu0
    %v5031 = vadd.f32 %v2326, %v5030
    %v5032 = vpop.f32.mrb[0].mxu0
    %v5033 = vadd.f32 %v2322, %v5032
    %v5034 = vpop.f32.mrb[0].mxu0
    %v5035 = vadd.f32 %v2326, %v5034
    %5036 = vmatprep.mubr.bf16.mxu0 0
    %5037 = vmatmul.mubr.bf16.gmra.mrb[0].mxu0 %v2139
    %v5038 = vpop.f32.mrb[0].mxu0
    %v5039 = vadd.f32 %v2322, %v5038
    %v5040 = vpop.f32.mrb[0].mxu0
    %v5041 = vadd.f32 %v2326, %v5040
    %v5042 = vpop.f32.mrb[0].mxu0
    %v5043 = vadd.f32 %v2322, %v5042
    %v5044 = vpop.f32.mrb[0].mxu0
    %v5045 = vadd.f32 %v2326, %v5044
    %5046 = vmatprep.mubr.bf16.mxu0 0
    %5047 = vmatmul.mubr.bf16.gmra.mrb[0].mxu0 %v2140
    %v5048 = vpop.f32.mrb[0].mxu0
    %v5049 = vadd.f32 %v2322, %v5048
    %v5050 = vpop.f32.mrb[0].mxu0
    %v5051 = vadd.f32 %v2326, %v5050
    %v5052 = vpop.f32.mrb[0].mxu0
    %v5053 = vadd.f32 %v2322, %v5052
    %v5054 = vpop.f32.mrb[0].mxu0
    %v5055 = vadd.f32 %v2326, %v5054
    %5056 = vmatprep.mubr.bf16.mxu0 0
    %5057 = vmatmul.mubr.bf16.gmra.mrb[0].mxu0 %v2141
    %v5058 = vpop.f32.mrb[0].mxu0
    %v5059 = vadd.f32 %v2322, %v5058
    %v5060 = vpop.f32.mrb[0].mxu0
    %v5061 = vadd.f32 %v2326, %v5060
    %v5062 = vpop.f32.mrb[0].mxu0
    %v5063 = vadd.f32 %v2322, %v5062
    %v5064 = vpop.f32.mrb[0].mxu0
    %v5065 = vadd.f32 %v2326, %v5064
    %5066 = vmatprep.mubr.bf16.mxu0 0
    %5067 = vmatmul.mubr.bf16.gmra.mrb[0].mxu0 %v2142
    %v5068 = vpop.f32.mrb[0].mxu0
    %v5069 = vadd.f32 %v2322, %v5068
    %v5070 = vpop.f32.mrb[0].mxu0
    %v5071 = vadd.f32 %v2326, %v5070
    %v5072 = vpop.f32.mrb[0].mxu0
    %v5073 = vadd.f32 %v2322, %v5072
    %v5074 = vpop.f32.mrb[0].mxu0
    %v5075 = vadd.f32 %v2326, %v5074
    %5076 = vmatprep.mubr.bf16.mxu0 0
    %5077 = vmatmul.mubr.bf16.gmra.mrb[0].mxu0 %v2143
    %v5078 = vpop.f32.mrb[0].mxu0
    %v5079 = vadd.f32 %v2322, %v5078
    %v5080 = vpop.f32.mrb[0].mxu0
    %v5081 = vadd.f32 %v2326, %v5080
    %v5082 = vpop.f32.mrb[0].mxu0
    %v5083 = vadd.f32 %v2322, %v5082
    %v5084 = vpop.f32.mrb[0].mxu0
    %v5085 = vadd.f32 %v2326, %v5084
    %5086 = vmatprep.mubr.bf16.mxu0 0
    %5087 = vmatmul.mubr.bf16.gmra.mrb[0].mxu0 %v2144
    %v5088 = vpop.f32.mrb[0].mxu0
    %v5089 = vadd.f32 %v2322, %v5088
    %v5090 = vpop.f32.mrb[0].mxu0
    %v5091 = vadd.f32 %v2326, %v5090
    %v5092 = vpop.f32.mrb[0].mxu0
    %v5093 = vadd.f32 %v2322, %v5092
    %v5094 = vpop.f32.mrb[0].mxu0
    %v5095 = vadd.f32 %v2326, %v5094
    %5096 = vmatprep.mubr.bf16.mxu0 0
    %5097 = vmatmul.mubr.bf16.gmra.mrb[0].mxu0 %v2145
    %v5098 = vpop.f32.mrb[0].mxu0
    %v5099 = vadd.f32 %v2322, %v5098
    %v5100 = vpop.f32.mrb[0].mxu0
    %v5101 = vadd.f32 %v2326, %v5100
    %v5102 = vpop.f32.mrb[0].mxu0
    %v5103 = vadd.f32 %v2322, %v5102
    %v5104 = vpop.f32.mrb[0].mxu0
    %v5105 = vadd.f32 %v2326, %v5104
    %5106 = vmatprep.mubr.bf16.mxu0 0
    %5107 = vmatmul.mubr.bf16.gmra.mrb[0].mxu0 %v2146
    %v5108 = vpop.f32.mrb[0].mxu0
    %v5109 = vadd.f32 %v2322, %v5108
    %v5110 = vpop.f32.mrb[0].mxu0
    %v5111 = vadd.f32 %v2326, %v5110
    %v5112 = vpop.f32.mrb[0].mxu0
    %v5113 = vadd.f32 %v2322, %v5112
    %v5114 = vpop.f32.mrb[0].mxu0
    %v5115 = vadd.f32 %v2326, %v5114
    %5116 = vdwg.mxu0
    %5117 = vmatprep.subr.bf16.mxu0 %v2756
    %5118 = vmatpush1.bf16.msra.mxu0 %v2755
    %5119 = vmatprep.subr.bf16.mxu0 %v2772
    %5120 = vmatpush1.bf16.msra.mxu0 %v2771
    %5121 = vmatprep.subr.bf16.mxu0 %v2788
    %5122 = vmatpush1.bf16.msra.mxu0 %v2787
    %5123 = vmatprep.subr.bf16.mxu0 %v2804
    %5124 = vmatpush1.bf16.msra.mxu0 %v2803
    %5125 = vmatprep.subr.bf16.mxu0 %v2820
    %5126 = vmatpush1.bf16.msra.mxu0 %v2819
    %5127 = vmatprep.subr.bf16.mxu0 %v2836
    %5128 = vmatpush1.bf16.msra.mxu0 %v2835
    %5129 = vmatprep.subr.bf16.mxu0 %v2852
    %5130 = vmatpush1.bf16.msra.mxu0 %v2851
    %5131 = vmatprep.subr.bf16.mxu0 %v2868
    %5132 = vmatpush1.bf16.msra.mxu0 %v2867
    %5133 = vmatprep.subr.bf16.mxu0 0
    %5134 = vmatpush1.bf16.msra.mxu0 0
    %5135 = vmatprep.subr.bf16.mxu0 0
    %5136 = vmatpush1.bf16.msra.mxu0 0
    %5137 = vmatprep.subr.bf16.mxu0 0
    %5138 = vmatpush1.bf16.msra.mxu0 0
    %5139 = vmatprep.subr.bf16.mxu0 0
    %5140 = vmatpush1.bf16.msra.mxu0 0
    %5141 = vmatprep.subr.bf16.mxu0 0
    %5142 = vmatpush1.bf16.msra.mxu0 0
    %5143 = vmatprep.subr.bf16.mxu0 0
    %5144 = vmatpush1.bf16.msra.mxu0 0
    %5145 = vmatprep.subr.bf16.mxu0 0
    %5146 = vmatpush1.bf16.msra.mxu0 0
    %5147 = vmatprep.subr.bf16.mxu0 0
    %5148 = vmatpush1.bf16.msra.mxu0 0
    %5149 = vmatprep.mubr.bf16.mxu0 0
    %5150 = vmatmul.mubr.bf16.gmra.mrb[0].mxu0 %v2115
    %v5151 = vpop.f32.mrb[0].mxu0
    %v5152 = vadd.f32 %v2330, %v5151
    %v5153 = vpop.f32.mrb[0].mxu0
    %v5154 = vadd.f32 %v2334, %v5153
    %v5155 = vpop.f32.mrb[0].mxu0
    %v5156 = vadd.f32 %v2330, %v5155
    %v5157 = vpop.f32.mrb[0].mxu0
    %v5158 = vadd.f32 %v2334, %v5157
    %5159 = vmatprep.mubr.bf16.mxu0 0
    %5160 = vmatmul.mubr.bf16.gmra.mrb[0].mxu0 %v2116
    %v5161 = vpop.f32.mrb[0].mxu0
    %v5162 = vadd.f32 %v2330, %v5161
    %v5163 = vpop.f32.mrb[0].mxu0
    %v5164 = vadd.f32 %v2334, %v5163
    %v5165 = vpop.f32.mrb[0].mxu0
    %v5166 = vadd.f32 %v2330, %v5165
    %v5167 = vpop.f32.mrb[0].mxu0
    %v5168 = vadd.f32 %v2334, %v5167
    %5169 = vmatprep.mubr.bf16.mxu0 0
    %5170 = vmatmul.mubr.bf16.gmra.mrb[0].mxu0 %v2117
    %v5171 = vpop.f32.mrb[0].mxu0
    %v5172 = vadd.f32 %v2330, %v5171
    %v5173 = vpop.f32.mrb[0].mxu0
    %v5174 = vadd.f32 %v2334, %v5173
    %v5175 = vpop.f32.mrb[0].mxu0
    %v5176 = vadd.f32 %v2330, %v5175
    %v5177 = vpop.f32.mrb[0].mxu0
    %v5178 = vadd.f32 %v2334, %v5177
    %5179 = vmatprep.mubr.bf16.mxu0 0
    %5180 = vmatmul.mubr.bf16.gmra.mrb[0].mxu0 %v2118
    %v5181 = vpop.f32.mrb[0].mxu0
    %v5182 = vadd.f32 %v2330, %v5181
    %v5183 = vpop.f32.mrb[0].mxu0
    %v5184 = vadd.f32 %v2334, %v5183
    %v5185 = vpop.f32.mrb[0].mxu0
    %v5186 = vadd.f32 %v2330, %v5185
    %v5187 = vpop.f32.mrb[0].mxu0
    %v5188 = vadd.f32 %v2334, %v5187
    %5189 = vmatprep.mubr.bf16.mxu0 0
    %5190 = vmatmul.mubr.bf16.gmra.mrb[0].mxu0 %v2119
    %v5191 = vpop.f32.mrb[0].mxu0
    %v5192 = vadd.f32 %v2330, %v5191
    %v5193 = vpop.f32.mrb[0].mxu0
    %v5194 = vadd.f32 %v2334, %v5193
    %v5195 = vpop.f32.mrb[0].mxu0
    %v5196 = vadd.f32 %v2330, %v5195
    %v5197 = vpop.f32.mrb[0].mxu0
    %v5198 = vadd.f32 %v2334, %v5197
    %5199 = vmatprep.mubr.bf16.mxu0 0
    %5200 = vmatmul.mubr.bf16.gmra.mrb[0].mxu0 %v2120
    %v5201 = vpop.f32.mrb[0].mxu0
    %v5202 = vadd.f32 %v2330, %v5201
    %v5203 = vpop.f32.mrb[0].mxu0
    %v5204 = vadd.f32 %v2334, %v5203
    %v5205 = vpop.f32.mrb[0].mxu0
    %v5206 = vadd.f32 %v2330, %v5205
    %v5207 = vpop.f32.mrb[0].mxu0
    %v5208 = vadd.f32 %v2334, %v5207
    %5209 = vmatprep.mubr.bf16.mxu0 0
    %5210 = vmatmul.mubr.bf16.gmra.mrb[0].mxu0 %v2121
    %v5211 = vpop.f32.mrb[0].mxu0
    %v5212 = vadd.f32 %v2330, %v5211
    %v5213 = vpop.f32.mrb[0].mxu0
    %v5214 = vadd.f32 %v2334, %v5213
    %v5215 = vpop.f32.mrb[0].mxu0
    %v5216 = vadd.f32 %v2330, %v5215
    %v5217 = vpop.f32.mrb[0].mxu0
    %v5218 = vadd.f32 %v2334, %v5217
    %5219 = vmatprep.mubr.bf16.mxu0 0
    %5220 = vmatmul.mubr.bf16.gmra.mrb[0].mxu0 %v2122
    %v5221 = vpop.f32.mrb[0].mxu0
    %v5222 = vadd.f32 %v2330, %v5221
    %v5223 = vpop.f32.mrb[0].mxu0
    %v5224 = vadd.f32 %v2334, %v5223
    %v5225 = vpop.f32.mrb[0].mxu0
    %v5226 = vadd.f32 %v2330, %v5225
    %v5227 = vpop.f32.mrb[0].mxu0
    %v5228 = vadd.f32 %v2334, %v5227
    %5229 = vmatprep.mubr.bf16.mxu0 0
    %5230 = vmatmul.mubr.bf16.gmra.mrb[0].mxu0 %v2123
    %v5231 = vpop.f32.mrb[0].mxu0
    %v5232 = vadd.f32 %v2330, %v5231
    %v5233 = vpop.f32.mrb[0].mxu0
    %v5234 = vadd.f32 %v2334, %v5233
    %v5235 = vpop.f32.mrb[0].mxu0
    %v5236 = vadd.f32 %v2330, %v5235
    %v5237 = vpop.f32.mrb[0].mxu0
    %v5238 = vadd.f32 %v2334, %v5237
    %5239 = vmatprep.mubr.bf16.mxu0 0
    %5240 = vmatmul.mubr.bf16.gmra.mrb[0].mxu0 %v2124
    %v5241 = vpop.f32.mrb[0].mxu0
    %v5242 = vadd.f32 %v2330, %v5241
    %v5243 = vpop.f32.mrb[0].mxu0
    %v5244 = vadd.f32 %v2334, %v5243
    %v5245 = vpop.f32.mrb[0].mxu0
    %v5246 = vadd.f32 %v2330, %v5245
    %v5247 = vpop.f32.mrb[0].mxu0
    %v5248 = vadd.f32 %v2334, %v5247
    %5249 = vmatprep.mubr.bf16.mxu0 0
    %5250 = vmatmul.mubr.bf16.gmra.mrb[0].mxu0 %v2125
    %v5251 = vpop.f32.mrb[0].mxu0
    %v5252 = vadd.f32 %v2330, %v5251
    %v5253 = vpop.f32.mrb[0].mxu0
    %v5254 = vadd.f32 %v2334, %v5253
    %v5255 = vpop.f32.mrb[0].mxu0
    %v5256 = vadd.f32 %v2330, %v5255
    %v5257 = vpop.f32.mrb[0].mxu0
    %v5258 = vadd.f32 %v2334, %v5257
    %5259 = vmatprep.mubr.bf16.mxu0 0
    %5260 = vmatmul.mubr.bf16.gmra.mrb[0].mxu0 %v2126
    %v5261 = vpop.f32.mrb[0].mxu0
    %v5262 = vadd.f32 %v2330, %v5261
    %v5263 = vpop.f32.mrb[0].mxu0
    %v5264 = vadd.f32 %v2334, %v5263
    %v5265 = vpop.f32.mrb[0].mxu0
    %v5266 = vadd.f32 %v2330, %v5265
    %v5267 = vpop.f32.mrb[0].mxu0
    %v5268 = vadd.f32 %v2334, %v5267
    %5269 = vmatprep.mubr.bf16.mxu0 0
    %5270 = vmatmul.mubr.bf16.gmra.mrb[0].mxu0 %v2127
    %v5271 = vpop.f32.mrb[0].mxu0
    %v5272 = vadd.f32 %v2330, %v5271
    %v5273 = vpop.f32.mrb[0].mxu0
    %v5274 = vadd.f32 %v2334, %v5273
    %v5275 = vpop.f32.mrb[0].mxu0
    %v5276 = vadd.f32 %v2330, %v5275
    %v5277 = vpop.f32.mrb[0].mxu0
    %v5278 = vadd.f32 %v2334, %v5277
    %5279 = vmatprep.mubr.bf16.mxu0 0
    %5280 = vmatmul.mubr.bf16.gmra.mrb[0].mxu0 %v2128
    %v5281 = vpop.f32.mrb[0].mxu0
    %v5282 = vadd.f32 %v2330, %v5281
    %v5283 = vpop.f32.mrb[0].mxu0
    %v5284 = vadd.f32 %v2334, %v5283
    %v5285 = vpop.f32.mrb[0].mxu0
    %v5286 = vadd.f32 %v2330, %v5285
    %v5287 = vpop.f32.mrb[0].mxu0
    %v5288 = vadd.f32 %v2334, %v5287
    %5289 = vmatprep.mubr.bf16.mxu0 0
    %5290 = vmatmul.mubr.bf16.gmra.mrb[0].mxu0 %v2129
    %v5291 = vpop.f32.mrb[0].mxu0
    %v5292 = vadd.f32 %v2330, %v5291
    %v5293 = vpop.f32.mrb[0].mxu0
    %v5294 = vadd.f32 %v2334, %v5293
    %v5295 = vpop.f32.mrb[0].mxu0
    %v5296 = vadd.f32 %v2330, %v5295
    %v5297 = vpop.f32.mrb[0].mxu0
    %v5298 = vadd.f32 %v2334, %v5297
    %5299 = vmatprep.mubr.bf16.mxu0 0
    %5300 = vmatmul.mubr.bf16.gmra.mrb[0].mxu0 %v2130
    %v5301 = vpop.f32.mrb[0].mxu0
    %v5302 = vadd.f32 %v2330, %v5301
    %v5303 = vpop.f32.mrb[0].mxu0
    %v5304 = vadd.f32 %v2334, %v5303
    %v5305 = vpop.f32.mrb[0].mxu0
    %v5306 = vadd.f32 %v2330, %v5305
    %v5307 = vpop.f32.mrb[0].mxu0
    %v5308 = vadd.f32 %v2334, %v5307
    %5309 = vmatprep.mubr.bf16.mxu0 0
    %5310 = vmatmul.mubr.bf16.gmra.mrb[0].mxu0 %v2131
    %v5311 = vpop.f32.mrb[0].mxu0
    %v5312 = vadd.f32 %v2330, %v5311
    %v5313 = vpop.f32.mrb[0].mxu0
    %v5314 = vadd.f32 %v2334, %v5313
    %v5315 = vpop.f32.mrb[0].mxu0
    %v5316 = vadd.f32 %v2330, %v5315
    %v5317 = vpop.f32.mrb[0].mxu0
    %v5318 = vadd.f32 %v2334, %v5317
    %5319 = vmatprep.mubr.bf16.mxu0 0
    %5320 = vmatmul.mubr.bf16.gmra.mrb[0].mxu0 %v2132
    %v5321 = vpop.f32.mrb[0].mxu0
    %v5322 = vadd.f32 %v2330, %v5321
    %v5323 = vpop.f32.mrb[0].mxu0
    %v5324 = vadd.f32 %v2334, %v5323
    %v5325 = vpop.f32.mrb[0].mxu0
    %v5326 = vadd.f32 %v2330, %v5325
    %v5327 = vpop.f32.mrb[0].mxu0
    %v5328 = vadd.f32 %v2334, %v5327
    %5329 = vmatprep.mubr.bf16.mxu0 0
    %5330 = vmatmul.mubr.bf16.gmra.mrb[0].mxu0 %v2133
    %v5331 = vpop.f32.mrb[0].mxu0
    %v5332 = vadd.f32 %v2330, %v5331
    %v5333 = vpop.f32.mrb[0].mxu0
    %v5334 = vadd.f32 %v2334, %v5333
    %v5335 = vpop.f32.mrb[0].mxu0
    %v5336 = vadd.f32 %v2330, %v5335
    %v5337 = vpop.f32.mrb[0].mxu0
    %v5338 = vadd.f32 %v2334, %v5337
    %5339 = vmatprep.mubr.bf16.mxu0 0
    %5340 = vmatmul.mubr.bf16.gmra.mrb[0].mxu0 %v2134
    %v5341 = vpop.f32.mrb[0].mxu0
    %v5342 = vadd.f32 %v2330, %v5341
    %v5343 = vpop.f32.mrb[0].mxu0
    %v5344 = vadd.f32 %v2334, %v5343
    %v5345 = vpop.f32.mrb[0].mxu0
    %v5346 = vadd.f32 %v2330, %v5345
    %v5347 = vpop.f32.mrb[0].mxu0
    %v5348 = vadd.f32 %v2334, %v5347
    %5349 = vmatprep.mubr.bf16.mxu0 0
    %5350 = vmatmul.mubr.bf16.gmra.mrb[0].mxu0 %v2135
    %v5351 = vpop.f32.mrb[0].mxu0
    %v5352 = vadd.f32 %v2330, %v5351
    %v5353 = vpop.f32.mrb[0].mxu0
    %v5354 = vadd.f32 %v2334, %v5353
    %v5355 = vpop.f32.mrb[0].mxu0
    %v5356 = vadd.f32 %v2330, %v5355
    %v5357 = vpop.f32.mrb[0].mxu0
    %v5358 = vadd.f32 %v2334, %v5357
    %5359 = vmatprep.mubr.bf16.mxu0 0
    %5360 = vmatmul.mubr.bf16.gmra.mrb[0].mxu0 %v2136
    %v5361 = vpop.f32.mrb[0].mxu0
    %v5362 = vadd.f32 %v2330, %v5361
    %v5363 = vpop.f32.mrb[0].mxu0
    %v5364 = vadd.f32 %v2334, %v5363
    %v5365 = vpop.f32.mrb[0].mxu0
    %v5366 = vadd.f32 %v2330, %v5365
    %v5367 = vpop.f32.mrb[0].mxu0
    %v5368 = vadd.f32 %v2334, %v5367
    %5369 = vmatprep.mubr.bf16.mxu0 0
    %5370 = vmatmul.mubr.bf16.gmra.mrb[0].mxu0 %v2137
    %v5371 = vpop.f32.mrb[0].mxu0
    %v5372 = vadd.f32 %v2330, %v5371
    %v5373 = vpop.f32.mrb[0].mxu0
    %v5374 = vadd.f32 %v2334, %v5373
    %v5375 = vpop.f32.mrb[0].mxu0
    %v5376 = vadd.f32 %v2330, %v5375
    %v5377 = vpop.f32.mrb[0].mxu0
    %v5378 = vadd.f32 %v2334, %v5377
    %5379 = vmatprep.mubr.bf16.mxu0 0
    %5380 = vmatmul.mubr.bf16.gmra.mrb[0].mxu0 %v2138
    %v5381 = vpop.f32.mrb[0].mxu0
    %v5382 = vadd.f32 %v2330, %v5381
    %v5383 = vpop.f32.mrb[0].mxu0
    %v5384 = vadd.f32 %v2334, %v5383
    %v5385 = vpop.f32.mrb[0].mxu0
    %v5386 = vadd.f32 %v2330, %v5385
    %v5387 = vpop.f32.mrb[0].mxu0
    %v5388 = vadd.f32 %v2334, %v5387
    %5389 = vmatprep.mubr.bf16.mxu0 0
    %5390 = vmatmul.mubr.bf16.gmra.mrb[0].mxu0 %v2139
    %v5391 = vpop.f32.mrb[0].mxu0
    %v5392 = vadd.f32 %v2330, %v5391
    %v5393 = vpop.f32.mrb[0].mxu0
    %v5394 = vadd.f32 %v2334, %v5393
    %v5395 = vpop.f32.mrb[0].mxu0
    %v5396 = vadd.f32 %v2330, %v5395
    %v5397 = vpop.f32.mrb[0].mxu0
    %v5398 = vadd.f32 %v2334, %v5397
    %5399 = vmatprep.mubr.bf16.mxu0 0
    %5400 = vmatmul.mubr.bf16.gmra.mrb[0].mxu0 %v2140
    %v5401 = vpop.f32.mrb[0].mxu0
    %v5402 = vadd.f32 %v2330, %v5401
    %v5403 = vpop.f32.mrb[0].mxu0
    %v5404 = vadd.f32 %v2334, %v5403
    %v5405 = vpop.f32.mrb[0].mxu0
    %v5406 = vadd.f32 %v2330, %v5405
    %v5407 = vpop.f32.mrb[0].mxu0
    %v5408 = vadd.f32 %v2334, %v5407
    %5409 = vmatprep.mubr.bf16.mxu0 0
    %5410 = vmatmul.mubr.bf16.gmra.mrb[0].mxu0 %v2141
    %v5411 = vpop.f32.mrb[0].mxu0
    %v5412 = vadd.f32 %v2330, %v5411
    %v5413 = vpop.f32.mrb[0].mxu0
    %v5414 = vadd.f32 %v2334, %v5413
    %v5415 = vpop.f32.mrb[0].mxu0
    %v5416 = vadd.f32 %v2330, %v5415
    %v5417 = vpop.f32.mrb[0].mxu0
    %v5418 = vadd.f32 %v2334, %v5417
    %5419 = vmatprep.mubr.bf16.mxu0 0
    %5420 = vmatmul.mubr.bf16.gmra.mrb[0].mxu0 %v2142
    %v5421 = vpop.f32.mrb[0].mxu0
    %v5422 = vadd.f32 %v2330, %v5421
    %v5423 = vpop.f32.mrb[0].mxu0
    %v5424 = vadd.f32 %v2334, %v5423
    %v5425 = vpop.f32.mrb[0].mxu0
    %v5426 = vadd.f32 %v2330, %v5425
    %v5427 = vpop.f32.mrb[0].mxu0
    %v5428 = vadd.f32 %v2334, %v5427
    %5429 = vmatprep.mubr.bf16.mxu0 0
    %5430 = vmatmul.mubr.bf16.gmra.mrb[0].mxu0 %v2143
    %v5431 = vpop.f32.mrb[0].mxu0
    %v5432 = vadd.f32 %v2330, %v5431
    %v5433 = vpop.f32.mrb[0].mxu0
    %v5434 = vadd.f32 %v2334, %v5433
    %v5435 = vpop.f32.mrb[0].mxu0
    %v5436 = vadd.f32 %v2330, %v5435
    %v5437 = vpop.f32.mrb[0].mxu0
    %v5438 = vadd.f32 %v2334, %v5437
    %5439 = vmatprep.mubr.bf16.mxu0 0
    %5440 = vmatmul.mubr.bf16.gmra.mrb[0].mxu0 %v2144
    %v5441 = vpop.f32.mrb[0].mxu0
    %v5442 = vadd.f32 %v2330, %v5441
    %v5443 = vpop.f32.mrb[0].mxu0
    %v5444 = vadd.f32 %v2334, %v5443
    %v5445 = vpop.f32.mrb[0].mxu0
    %v5446 = vadd.f32 %v2330, %v5445
    %v5447 = vpop.f32.mrb[0].mxu0
    %v5448 = vadd.f32 %v2334, %v5447
    %5449 = vmatprep.mubr.bf16.mxu0 0
    %5450 = vmatmul.mubr.bf16.gmra.mrb[0].mxu0 %v2145
    %v5451 = vpop.f32.mrb[0].mxu0
    %v5452 = vadd.f32 %v2330, %v5451
    %v5453 = vpop.f32.mrb[0].mxu0
    %v5454 = vadd.f32 %v2334, %v5453
    %v5455 = vpop.f32.mrb[0].mxu0
    %v5456 = vadd.f32 %v2330, %v5455
    %v5457 = vpop.f32.mrb[0].mxu0
    %v5458 = vadd.f32 %v2334, %v5457
    %5459 = vmatprep.mubr.bf16.mxu0 0
    %5460 = vmatmul.mubr.bf16.gmra.mrb[0].mxu0 %v2146
    %v5461 = vpop.f32.mrb[0].mxu0
    %v5462 = vadd.f32 %v2330, %v5461
    %v5463 = vpop.f32.mrb[0].mxu0
    %v5464 = vadd.f32 %v2334, %v5463
    %v5465 = vpop.f32.mrb[0].mxu0
    %v5466 = vadd.f32 %v2330, %v5465
    %v5467 = vpop.f32.mrb[0].mxu0
    %v5468 = vadd.f32 %v2334, %v5467
    %5469 = vdwg.mxu0
    %5470 = vmatprep.subr.bf16.mxu0 %v2758
    %5471 = vmatpush1.bf16.msra.mxu0 %v2757
    %5472 = vmatprep.subr.bf16.mxu0 %v2774
    %5473 = vmatpush1.bf16.msra.mxu0 %v2773
    %5474 = vmatprep.subr.bf16.mxu0 %v2790
    %5475 = vmatpush1.bf16.msra.mxu0 %v2789
    %5476 = vmatprep.subr.bf16.mxu0 %v2806
    %5477 = vmatpush1.bf16.msra.mxu0 %v2805
    %5478 = vmatprep.subr.bf16.mxu0 %v2822
    %5479 = vmatpush1.bf16.msra.mxu0 %v2821
    %5480 = vmatprep.subr.bf16.mxu0 %v2838
    %5481 = vmatpush1.bf16.msra.mxu0 %v2837
    %5482 = vmatprep.subr.bf16.mxu0 %v2854
    %5483 = vmatpush1.bf16.msra.mxu0 %v2853
    %5484 = vmatprep.subr.bf16.mxu0 %v2870
    %5485 = vmatpush1.bf16.msra.mxu0 %v2869
    %5486 = vmatprep.subr.bf16.mxu0 0
    %5487 = vmatpush1.bf16.msra.mxu0 0
    %5488 = vmatprep.subr.bf16.mxu0 0
    %5489 = vmatpush1.bf16.msra.mxu0 0
    %5490 = vmatprep.subr.bf16.mxu0 0
    %5491 = vmatpush1.bf16.msra.mxu0 0
    %5492 = vmatprep.subr.bf16.mxu0 0
    %5493 = vmatpush1.bf16.msra.mxu0 0
    %5494 = vmatprep.subr.bf16.mxu0 0
    %5495 = vmatpush1.bf16.msra.mxu0 0
    %5496 = vmatprep.subr.bf16.mxu0 0
    %5497 = vmatpush1.bf16.msra.mxu0 0
    %5498 = vmatprep.subr.bf16.mxu0 0
    %5499 = vmatpush1.bf16.msra.mxu0 0
    %5500 = vmatprep.subr.bf16.mxu0 0
    %5501 = vmatpush1.bf16.msra.mxu0 0
    %5502 = vmatprep.mubr.bf16.mxu0 0
    %5503 = vmatmul.mubr.bf16.gmra.mrb[0].mxu0 %v2115
    %v5504 = vpop.f32.mrb[0].mxu0
    %v5505 = vadd.f32 %v2338, %v5504
    %v5506 = vpop.f32.mrb[0].mxu0
    %v5507 = vadd.f32 %v2342, %v5506
    %v5508 = vpop.f32.mrb[0].mxu0
    %v5509 = vadd.f32 %v2338, %v5508
    %v5510 = vpop.f32.mrb[0].mxu0
    %v5511 = vadd.f32 %v2342, %v5510
    %5512 = vmatprep.mubr.bf16.mxu0 0
    %5513 = vmatmul.mubr.bf16.gmra.mrb[0].mxu0 %v2116
    %v5514 = vpop.f32.mrb[0].mxu0
    %v5515 = vadd.f32 %v2338, %v5514
    %v5516 = vpop.f32.mrb[0].mxu0
    %v5517 = vadd.f32 %v2342, %v5516
    %v5518 = vpop.f32.mrb[0].mxu0
    %v5519 = vadd.f32 %v2338, %v5518
    %v5520 = vpop.f32.mrb[0].mxu0
    %v5521 = vadd.f32 %v2342, %v5520
    %5522 = vmatprep.mubr.bf16.mxu0 0
    %5523 = vmatmul.mubr.bf16.gmra.mrb[0].mxu0 %v2117
    %v5524 = vpop.f32.mrb[0].mxu0
    %v5525 = vadd.f32 %v2338, %v5524
    %v5526 = vpop.f32.mrb[0].mxu0
    %v5527 = vadd.f32 %v2342, %v5526
    %v5528 = vpop.f32.mrb[0].mxu0
    %v5529 = vadd.f32 %v2338, %v5528
    %v5530 = vpop.f32.mrb[0].mxu0
    %v5531 = vadd.f32 %v2342, %v5530
    %5532 = vmatprep.mubr.bf16.mxu0 0
    %5533 = vmatmul.mubr.bf16.gmra.mrb[0].mxu0 %v2118
    %v5534 = vpop.f32.mrb[0].mxu0
    %v5535 = vadd.f32 %v2338, %v5534
    %v5536 = vpop.f32.mrb[0].mxu0
    %v5537 = vadd.f32 %v2342, %v5536
    %v5538 = vpop.f32.mrb[0].mxu0
    %v5539 = vadd.f32 %v2338, %v5538
    %v5540 = vpop.f32.mrb[0].mxu0
    %v5541 = vadd.f32 %v2342, %v5540
    %5542 = vmatprep.mubr.bf16.mxu0 0
    %5543 = vmatmul.mubr.bf16.gmra.mrb[0].mxu0 %v2119
    %v5544 = vpop.f32.mrb[0].mxu0
    %v5545 = vadd.f32 %v2338, %v5544
    %v5546 = vpop.f32.mrb[0].mxu0
    %v5547 = vadd.f32 %v2342, %v5546
    %v5548 = vpop.f32.mrb[0].mxu0
    %v5549 = vadd.f32 %v2338, %v5548
    %v5550 = vpop.f32.mrb[0].mxu0
    %v5551 = vadd.f32 %v2342, %v5550
    %5552 = vmatprep.mubr.bf16.mxu0 0
    %5553 = vmatmul.mubr.bf16.gmra.mrb[0].mxu0 %v2120
    %v5554 = vpop.f32.mrb[0].mxu0
    %v5555 = vadd.f32 %v2338, %v5554
    %v5556 = vpop.f32.mrb[0].mxu0
    %v5557 = vadd.f32 %v2342, %v5556
    %v5558 = vpop.f32.mrb[0].mxu0
    %v5559 = vadd.f32 %v2338, %v5558
    %v5560 = vpop.f32.mrb[0].mxu0
    %v5561 = vadd.f32 %v2342, %v5560
    %5562 = vmatprep.mubr.bf16.mxu0 0
    %5563 = vmatmul.mubr.bf16.gmra.mrb[0].mxu0 %v2121
    %v5564 = vpop.f32.mrb[0].mxu0
    %v5565 = vadd.f32 %v2338, %v5564
    %v5566 = vpop.f32.mrb[0].mxu0
    %v5567 = vadd.f32 %v2342, %v5566
    %v5568 = vpop.f32.mrb[0].mxu0
    %v5569 = vadd.f32 %v2338, %v5568
    %v5570 = vpop.f32.mrb[0].mxu0
    %v5571 = vadd.f32 %v2342, %v5570
    %5572 = vmatprep.mubr.bf16.mxu0 0
    %5573 = vmatmul.mubr.bf16.gmra.mrb[0].mxu0 %v2122
    %v5574 = vpop.f32.mrb[0].mxu0
    %v5575 = vadd.f32 %v2338, %v5574
    %v5576 = vpop.f32.mrb[0].mxu0
    %v5577 = vadd.f32 %v2342, %v5576
    %v5578 = vpop.f32.mrb[0].mxu0
    %v5579 = vadd.f32 %v2338, %v5578
    %v5580 = vpop.f32.mrb[0].mxu0
    %v5581 = vadd.f32 %v2342, %v5580
    %5582 = vmatprep.mubr.bf16.mxu0 0
    %5583 = vmatmul.mubr.bf16.gmra.mrb[0].mxu0 %v2123
    %v5584 = vpop.f32.mrb[0].mxu0
    %v5585 = vadd.f32 %v2338, %v5584
    %v5586 = vpop.f32.mrb[0].mxu0
    %v5587 = vadd.f32 %v2342, %v5586
    %v5588 = vpop.f32.mrb[0].mxu0
    %v5589 = vadd.f32 %v2338, %v5588
    %v5590 = vpop.f32.mrb[0].mxu0
    %v5591 = vadd.f32 %v2342, %v5590
    %5592 = vmatprep.mubr.bf16.mxu0 0
    %5593 = vmatmul.mubr.bf16.gmra.mrb[0].mxu0 %v2124
    %v5594 = vpop.f32.mrb[0].mxu0
    %v5595 = vadd.f32 %v2338, %v5594
    %v5596 = vpop.f32.mrb[0].mxu0
    %v5597 = vadd.f32 %v2342, %v5596
    %v5598 = vpop.f32.mrb[0].mxu0
    %v5599 = vadd.f32 %v2338, %v5598
    %v5600 = vpop.f32.mrb[0].mxu0
    %v5601 = vadd.f32 %v2342, %v5600
    %5602 = vmatprep.mubr.bf16.mxu0 0
    %5603 = vmatmul.mubr.bf16.gmra.mrb[0].mxu0 %v2125
    %v5604 = vpop.f32.mrb[0].mxu0
    %v5605 = vadd.f32 %v2338, %v5604
    %v5606 = vpop.f32.mrb[0].mxu0
    %v5607 = vadd.f32 %v2342, %v5606
    %v5608 = vpop.f32.mrb[0].mxu0
    %v5609 = vadd.f32 %v2338, %v5608
    %v5610 = vpop.f32.mrb[0].mxu0
    %v5611 = vadd.f32 %v2342, %v5610
    %5612 = vmatprep.mubr.bf16.mxu0 0
    %5613 = vmatmul.mubr.bf16.gmra.mrb[0].mxu0 %v2126
    %v5614 = vpop.f32.mrb[0].mxu0
    %v5615 = vadd.f32 %v2338, %v5614
    %v5616 = vpop.f32.mrb[0].mxu0
    %v5617 = vadd.f32 %v2342, %v5616
    %v5618 = vpop.f32.mrb[0].mxu0
    %v5619 = vadd.f32 %v2338, %v5618
    %v5620 = vpop.f32.mrb[0].mxu0
    %v5621 = vadd.f32 %v2342, %v5620
    %5622 = vmatprep.mubr.bf16.mxu0 0
    %5623 = vmatmul.mubr.bf16.gmra.mrb[0].mxu0 %v2127
    %v5624 = vpop.f32.mrb[0].mxu0
    %v5625 = vadd.f32 %v2338, %v5624
    %v5626 = vpop.f32.mrb[0].mxu0
    %v5627 = vadd.f32 %v2342, %v5626
    %v5628 = vpop.f32.mrb[0].mxu0
    %v5629 = vadd.f32 %v2338, %v5628
    %v5630 = vpop.f32.mrb[0].mxu0
    %v5631 = vadd.f32 %v2342, %v5630
    %5632 = vmatprep.mubr.bf16.mxu0 0
    %5633 = vmatmul.mubr.bf16.gmra.mrb[0].mxu0 %v2128
    %v5634 = vpop.f32.mrb[0].mxu0
    %v5635 = vadd.f32 %v2338, %v5634
    %v5636 = vpop.f32.mrb[0].mxu0
    %v5637 = vadd.f32 %v2342, %v5636
    %v5638 = vpop.f32.mrb[0].mxu0
    %v5639 = vadd.f32 %v2338, %v5638
    %v5640 = vpop.f32.mrb[0].mxu0
    %v5641 = vadd.f32 %v2342, %v5640
    %5642 = vmatprep.mubr.bf16.mxu0 0
    %5643 = vmatmul.mubr.bf16.gmra.mrb[0].mxu0 %v2129
    %v5644 = vpop.f32.mrb[0].mxu0
    %v5645 = vadd.f32 %v2338, %v5644
    %v5646 = vpop.f32.mrb[0].mxu0
    %v5647 = vadd.f32 %v2342, %v5646
    %v5648 = vpop.f32.mrb[0].mxu0
    %v5649 = vadd.f32 %v2338, %v5648
    %v5650 = vpop.f32.mrb[0].mxu0
    %v5651 = vadd.f32 %v2342, %v5650
    %5652 = vmatprep.mubr.bf16.mxu0 0
    %5653 = vmatmul.mubr.bf16.gmra.mrb[0].mxu0 %v2130
    %v5654 = vpop.f32.mrb[0].mxu0
    %v5655 = vadd.f32 %v2338, %v5654
    %v5656 = vpop.f32.mrb[0].mxu0
    %v5657 = vadd.f32 %v2342, %v5656
    %v5658 = vpop.f32.mrb[0].mxu0
    %v5659 = vadd.f32 %v2338, %v5658
    %v5660 = vpop.f32.mrb[0].mxu0
    %v5661 = vadd.f32 %v2342, %v5660
    %5662 = vmatprep.mubr.bf16.mxu0 0
    %5663 = vmatmul.mubr.bf16.gmra.mrb[0].mxu0 %v2131
    %v5664 = vpop.f32.mrb[0].mxu0
    %v5665 = vadd.f32 %v2338, %v5664
    %v5666 = vpop.f32.mrb[0].mxu0
    %v5667 = vadd.f32 %v2342, %v5666
    %v5668 = vpop.f32.mrb[0].mxu0
    %v5669 = vadd.f32 %v2338, %v5668
    %v5670 = vpop.f32.mrb[0].mxu0
    %v5671 = vadd.f32 %v2342, %v5670
    %5672 = vmatprep.mubr.bf16.mxu0 0
    %5673 = vmatmul.mubr.bf16.gmra.mrb[0].mxu0 %v2132
    %v5674 = vpop.f32.mrb[0].mxu0
    %v5675 = vadd.f32 %v2338, %v5674
    %v5676 = vpop.f32.mrb[0].mxu0
    %v5677 = vadd.f32 %v2342, %v5676
    %v5678 = vpop.f32.mrb[0].mxu0
    %v5679 = vadd.f32 %v2338, %v5678
    %v5680 = vpop.f32.mrb[0].mxu0
    %v5681 = vadd.f32 %v2342, %v5680
    %5682 = vmatprep.mubr.bf16.mxu0 0
    %5683 = vmatmul.mubr.bf16.gmra.mrb[0].mxu0 %v2133
    %v5684 = vpop.f32.mrb[0].mxu0
    %v5685 = vadd.f32 %v2338, %v5684
    %v5686 = vpop.f32.mrb[0].mxu0
    %v5687 = vadd.f32 %v2342, %v5686
    %v5688 = vpop.f32.mrb[0].mxu0
    %v5689 = vadd.f32 %v2338, %v5688
    %v5690 = vpop.f32.mrb[0].mxu0
    %v5691 = vadd.f32 %v2342, %v5690
    %5692 = vmatprep.mubr.bf16.mxu0 0
    %5693 = vmatmul.mubr.bf16.gmra.mrb[0].mxu0 %v2134
    %v5694 = vpop.f32.mrb[0].mxu0
    %v5695 = vadd.f32 %v2338, %v5694
    %v5696 = vpop.f32.mrb[0].mxu0
    %v5697 = vadd.f32 %v2342, %v5696
    %v5698 = vpop.f32.mrb[0].mxu0
    %v5699 = vadd.f32 %v2338, %v5698
    %v5700 = vpop.f32.mrb[0].mxu0
    %v5701 = vadd.f32 %v2342, %v5700
    %5702 = vmatprep.mubr.bf16.mxu0 0
    %5703 = vmatmul.mubr.bf16.gmra.mrb[0].mxu0 %v2135
    %v5704 = vpop.f32.mrb[0].mxu0
    %v5705 = vadd.f32 %v2338, %v5704
    %v5706 = vpop.f32.mrb[0].mxu0
    %v5707 = vadd.f32 %v2342, %v5706
    %v5708 = vpop.f32.mrb[0].mxu0
    %v5709 = vadd.f32 %v2338, %v5708
    %v5710 = vpop.f32.mrb[0].mxu0
    %v5711 = vadd.f32 %v2342, %v5710
    %5712 = vmatprep.mubr.bf16.mxu0 0
    %5713 = vmatmul.mubr.bf16.gmra.mrb[0].mxu0 %v2136
    %v5714 = vpop.f32.mrb[0].mxu0
    %v5715 = vadd.f32 %v2338, %v5714
    %v5716 = vpop.f32.mrb[0].mxu0
    %v5717 = vadd.f32 %v2342, %v5716
    %v5718 = vpop.f32.mrb[0].mxu0
    %v5719 = vadd.f32 %v2338, %v5718
    %v5720 = vpop.f32.mrb[0].mxu0
    %v5721 = vadd.f32 %v2342, %v5720
    %5722 = vmatprep.mubr.bf16.mxu0 0
    %5723 = vmatmul.mubr.bf16.gmra.mrb[0].mxu0 %v2137
    %v5724 = vpop.f32.mrb[0].mxu0
    %v5725 = vadd.f32 %v2338, %v5724
    %v5726 = vpop.f32.mrb[0].mxu0
    %v5727 = vadd.f32 %v2342, %v5726
    %v5728 = vpop.f32.mrb[0].mxu0
    %v5729 = vadd.f32 %v2338, %v5728
    %v5730 = vpop.f32.mrb[0].mxu0
    %v5731 = vadd.f32 %v2342, %v5730
    %5732 = vmatprep.mubr.bf16.mxu0 0
    %5733 = vmatmul.mubr.bf16.gmra.mrb[0].mxu0 %v2138
    %v5734 = vpop.f32.mrb[0].mxu0
    %v5735 = vadd.f32 %v2338, %v5734
    %v5736 = vpop.f32.mrb[0].mxu0
    %v5737 = vadd.f32 %v2342, %v5736
    %v5738 = vpop.f32.mrb[0].mxu0
    %v5739 = vadd.f32 %v2338, %v5738
    %v5740 = vpop.f32.mrb[0].mxu0
    %v5741 = vadd.f32 %v2342, %v5740
    %5742 = vmatprep.mubr.bf16.mxu0 0
    %5743 = vmatmul.mubr.bf16.gmra.mrb[0].mxu0 %v2139
    %v5744 = vpop.f32.mrb[0].mxu0
    %v5745 = vadd.f32 %v2338, %v5744
    %v5746 = vpop.f32.mrb[0].mxu0
    %v5747 = vadd.f32 %v2342, %v5746
    %v5748 = vpop.f32.mrb[0].mxu0
    %v5749 = vadd.f32 %v2338, %v5748
    %v5750 = vpop.f32.mrb[0].mxu0
    %v5751 = vadd.f32 %v2342, %v5750
    %5752 = vmatprep.mubr.bf16.mxu0 0
    %5753 = vmatmul.mubr.bf16.gmra.mrb[0].mxu0 %v2140
    %v5754 = vpop.f32.mrb[0].mxu0
    %v5755 = vadd.f32 %v2338, %v5754
    %v5756 = vpop.f32.mrb[0].mxu0
    %v5757 = vadd.f32 %v2342, %v5756
    %v5758 = vpop.f32.mrb[0].mxu0
    %v5759 = vadd.f32 %v2338, %v5758
    %v5760 = vpop.f32.mrb[0].mxu0
    %v5761 = vadd.f32 %v2342, %v5760
    %5762 = vmatprep.mubr.bf16.mxu0 0
    %5763 = vmatmul.mubr.bf16.gmra.mrb[0].mxu0 %v2141
    %v5764 = vpop.f32.mrb[0].mxu0
    %v5765 = vadd.f32 %v2338, %v5764
    %v5766 = vpop.f32.mrb[0].mxu0
    %v5767 = vadd.f32 %v2342, %v5766
    %v5768 = vpop.f32.mrb[0].mxu0
    %v5769 = vadd.f32 %v2338, %v5768
    %v5770 = vpop.f32.mrb[0].mxu0
    %v5771 = vadd.f32 %v2342, %v5770
    %5772 = vmatprep.mubr.bf16.mxu0 0
    %5773 = vmatmul.mubr.bf16.gmra.mrb[0].mxu0 %v2142
    %v5774 = vpop.f32.mrb[0].mxu0
    %v5775 = vadd.f32 %v2338, %v5774
    %v5776 = vpop.f32.mrb[0].mxu0
    %v5777 = vadd.f32 %v2342, %v5776
    %v5778 = vpop.f32.mrb[0].mxu0
    %v5779 = vadd.f32 %v2338, %v5778
    %v5780 = vpop.f32.mrb[0].mxu0
    %v5781 = vadd.f32 %v2342, %v5780
    %5782 = vmatprep.mubr.bf16.mxu0 0
    %5783 = vmatmul.mubr.bf16.gmra.mrb[0].mxu0 %v2143
    %v5784 = vpop.f32.mrb[0].mxu0
    %v5785 = vadd.f32 %v2338, %v5784
    %v5786 = vpop.f32.mrb[0].mxu0
    %v5787 = vadd.f32 %v2342, %v5786
    %v5788 = vpop.f32.mrb[0].mxu0
    %v5789 = vadd.f32 %v2338, %v5788
    %v5790 = vpop.f32.mrb[0].mxu0
    %v5791 = vadd.f32 %v2342, %v5790
    %5792 = vmatprep.mubr.bf16.mxu0 0
    %5793 = vmatmul.mubr.bf16.gmra.mrb[0].mxu0 %v2144
    %v5794 = vpop.f32.mrb[0].mxu0
    %v5795 = vadd.f32 %v2338, %v5794
    %v5796 = vpop.f32.mrb[0].mxu0
    %v5797 = vadd.f32 %v2342, %v5796
    %v5798 = vpop.f32.mrb[0].mxu0
    %v5799 = vadd.f32 %v2338, %v5798
    %v5800 = vpop.f32.mrb[0].mxu0
    %v5801 = vadd.f32 %v2342, %v5800
    %5802 = vmatprep.mubr.bf16.mxu0 0
    %5803 = vmatmul.mubr.bf16.gmra.mrb[0].mxu0 %v2145
    %v5804 = vpop.f32.mrb[0].mxu0
    %v5805 = vadd.f32 %v2338, %v5804
    %v5806 = vpop.f32.mrb[0].mxu0
    %v5807 = vadd.f32 %v2342, %v5806
    %v5808 = vpop.f32.mrb[0].mxu0
    %v5809 = vadd.f32 %v2338, %v5808
    %v5810 = vpop.f32.mrb[0].mxu0
    %v5811 = vadd.f32 %v2342, %v5810
    %5812 = vmatprep.mubr.bf16.mxu0 0
    %5813 = vmatmul.mubr.bf16.gmra.mrb[0].mxu0 %v2146
    %v5814 = vpop.f32.mrb[0].mxu0
    %v5815 = vadd.f32 %v2338, %v5814
    %v5816 = vpop.f32.mrb[0].mxu0
    %v5817 = vadd.f32 %v2342, %v5816
    %v5818 = vpop.f32.mrb[0].mxu0
    %v5819 = vadd.f32 %v2338, %v5818
    %v5820 = vpop.f32.mrb[0].mxu0
    %v5821 = vadd.f32 %v2342, %v5820
    %5822 = vdwg.mxu0
    %v5823 = vmax.f32 %v3034, %v3038
    %v5824 = vmax.f32 %v5823, %v3044
    %v5825 = vmax.f32 %v5824, %v3048
    %v5826 = vmax.f32 %v5825, %v3054
    %v5827 = vmax.f32 %v5826, %v3058
    %v5828 = vmax.f32 %v5827, %v3064
    %v5829 = vmax.f32 %v5828, %v3068
    %v5830 = vmax.f32 %v5829, %v3074
    %v5831 = vmax.f32 %v5830, %v3078
    %v5832 = vmax.f32 %v5831, %v3084
    %v5833 = vmax.f32 %v5832, %v3088
    %v5834 = vmax.f32 %v5833, %v3094
    %v5835 = vmax.f32 %v5834, %v3098
    %v5836 = vmax.f32 %v5835, %v3104
    %v5837 = vmax.f32 %v5836, %v3108
    %v5838 = vmax.f32 %v5837, %v3114
    %v5839 = vmax.f32 %v5838, %v3118
    %v5840 = vmax.f32 %v5839, %v3124
    %v5841 = vmax.f32 %v5840, %v3128
    %v5842 = vmax.f32 %v5841, %v3134
    %v5843 = vmax.f32 %v5842, %v3138
    %v5844 = vmax.f32 %v5843, %v3144
    %v5845 = vmax.f32 %v5844, %v3148
    %v5846 = vmax.f32 %v5845, %v3154
    %v5847 = vmax.f32 %v5846, %v3158
    %v5848 = vmax.f32 %v5847, %v3164
    %v5849 = vmax.f32 %v5848, %v3168
    %v5850 = vmax.f32 %v5849, %v3174
    %v5851 = vmax.f32 %v5850, %v3178
    %v5852 = vmax.f32 %v5851, %v3184
    %v5853 = vmax.f32 %v5852, %v3188
    %v5854 = vrot.slane %v5853, 4
    %v5855 = vmax.f32 %v5853, %v5854
    %v5856 = vrot.slane %v5855, 2
    %v5857 = vmax.f32 %v5855, %v5856
    %v5858 = vrot.slane %v5857, 1
    %v5859 = vmax.f32 %v5857, %v5858
    %v5860 = vmax.f32 %v3036, %v3040
    %v5861 = vmax.f32 %v5860, %v3046
    %v5862 = vmax.f32 %v5861, %v3050
    %v5863 = vmax.f32 %v5862, %v3056
    %v5864 = vmax.f32 %v5863, %v3060
    %v5865 = vmax.f32 %v5864, %v3066
    %v5866 = vmax.f32 %v5865, %v3070
    %v5867 = vmax.f32 %v5866, %v3076
    %v5868 = vmax.f32 %v5867, %v3080
    %v5869 = vmax.f32 %v5868, %v3086
    %v5870 = vmax.f32 %v5869, %v3090
    %v5871 = vmax.f32 %v5870, %v3096
    %v5872 = vmax.f32 %v5871, %v3100
    %v5873 = vmax.f32 %v5872, %v3106
    %v5874 = vmax.f32 %v5873, %v3110
    %v5875 = vmax.f32 %v5874, %v3116
    %v5876 = vmax.f32 %v5875, %v3120
    %v5877 = vmax.f32 %v5876, %v3126
    %v5878 = vmax.f32 %v5877, %v3130
    %v5879 = vmax.f32 %v5878, %v3136
    %v5880 = vmax.f32 %v5879, %v3140
    %v5881 = vmax.f32 %v5880, %v3146
    %v5882 = vmax.f32 %v5881, %v3150
    %v5883 = vmax.f32 %v5882, %v3156
    %v5884 = vmax.f32 %v5883, %v3160
    %v5885 = vmax.f32 %v5884, %v3166
    %v5886 = vmax.f32 %v5885, %v3170
    %v5887 = vmax.f32 %v5886, %v3176
    %v5888 = vmax.f32 %v5887, %v3180
    %v5889 = vmax.f32 %v5888, %v3186
    %v5890 = vmax.f32 %v5889, %v3190
    %v5891 = vrot.slane %v5890, 4
    %v5892 = vmax.f32 %v5890, %v5891
    %v5893 = vrot.slane %v5892, 2
    %v5894 = vmax.f32 %v5892, %v5893
    %v5895 = vrot.slane %v5894, 1
    %v5896 = vmax.f32 %v5894, %v5895
    %v5897 = vmax.f32 %v3387, %v3391
    %v5898 = vmax.f32 %v5897, %v3397
    %v5899 = vmax.f32 %v5898, %v3401
    %v5900 = vmax.f32 %v5899, %v3407
    %v5901 = vmax.f32 %v5900, %v3411
    %v5902 = vmax.f32 %v5901, %v3417
    %v5903 = vmax.f32 %v5902, %v3421
    %v5904 = vmax.f32 %v5903, %v3427
    %v5905 = vmax.f32 %v5904, %v3431
    %v5906 = vmax.f32 %v5905, %v3437
    %v5907 = vmax.f32 %v5906, %v3441
    %v5908 = vmax.f32 %v5907, %v3447
    %v5909 = vmax.f32 %v5908, %v3451
    %v5910 = vmax.f32 %v5909, %v3457
    %v5911 = vmax.f32 %v5910, %v3461
    %v5912 = vmax.f32 %v5911, %v3467
    %v5913 = vmax.f32 %v5912, %v3471
    %v5914 = vmax.f32 %v5913, %v3477
    %v5915 = vmax.f32 %v5914, %v3481
    %v5916 = vmax.f32 %v5915, %v3487
    %v5917 = vmax.f32 %v5916, %v3491
    %v5918 = vmax.f32 %v5917, %v3497
    %v5919 = vmax.f32 %v5918, %v3501
    %v5920 = vmax.f32 %v5919, %v3507
    %v5921 = vmax.f32 %v5920, %v3511
    %v5922 = vmax.f32 %v5921, %v3517
    %v5923 = vmax.f32 %v5922, %v3521
    %v5924 = vmax.f32 %v5923, %v3527
    %v5925 = vmax.f32 %v5924, %v3531
    %v5926 = vmax.f32 %v5925, %v3537
    %v5927 = vmax.f32 %v5926, %v3541
    %v5928 = vrot.slane %v5927, 4
    %v5929 = vmax.f32 %v5927, %v5928
    %v5930 = vrot.slane %v5929, 2
    %v5931 = vmax.f32 %v5929, %v5930
    %v5932 = vrot.slane %v5931, 1
    %v5933 = vmax.f32 %v5931, %v5932
    %v5934 = vmax.f32 %v3389, %v3393
    %v5935 = vmax.f32 %v5934, %v3399
    %v5936 = vmax.f32 %v5935, %v3403
    %v5937 = vmax.f32 %v5936, %v3409
    %v5938 = vmax.f32 %v5937, %v3413
    %v5939 = vmax.f32 %v5938, %v3419
    %v5940 = vmax.f32 %v5939, %v3423
    %v5941 = vmax.f32 %v5940, %v3429
    %v5942 = vmax.f32 %v5941, %v3433
    %v5943 = vmax.f32 %v5942, %v3439
    %v5944 = vmax.f32 %v5943, %v3443
    %v5945 = vmax.f32 %v5944, %v3449
    %v5946 = vmax.f32 %v5945, %v3453
    %v5947 = vmax.f32 %v5946, %v3459
    %v5948 = vmax.f32 %v5947, %v3463
    %v5949 = vmax.f32 %v5948, %v3469
    %v5950 = vmax.f32 %v5949, %v3473
    %v5951 = vmax.f32 %v5950, %v3479
    %v5952 = vmax.f32 %v5951, %v3483
    %v5953 = vmax.f32 %v5952, %v3489
    %v5954 = vmax.f32 %v5953, %v3493
    %v5955 = vmax.f32 %v5954, %v3499
    %v5956 = vmax.f32 %v5955, %v3503
    %v5957 = vmax.f32 %v5956, %v3509
    %v5958 = vmax.f32 %v5957, %v3513
    %v5959 = vmax.f32 %v5958, %v3519
    %v5960 = vmax.f32 %v5959, %v3523
    %v5961 = vmax.f32 %v5960, %v3529
    %v5962 = vmax.f32 %v5961, %v3533
    %v5963 = vmax.f32 %v5962, %v3539
    %v5964 = vmax.f32 %v5963, %v3543
    %v5965 = vrot.slane %v5964, 4
    %v5966 = vmax.f32 %v5964, %v5965
    %v5967 = vrot.slane %v5966, 2
    %v5968 = vmax.f32 %v5966, %v5967
    %v5969 = vrot.slane %v5968, 1
    %v5970 = vmax.f32 %v5968, %v5969
    %v5971 = vmax.f32 %v3740, %v3744
    %v5972 = vmax.f32 %v5971, %v3750
    %v5973 = vmax.f32 %v5972, %v3754
    %v5974 = vmax.f32 %v5973, %v3760
    %v5975 = vmax.f32 %v5974, %v3764
    %v5976 = vmax.f32 %v5975, %v3770
    %v5977 = vmax.f32 %v5976, %v3774
    %v5978 = vmax.f32 %v5977, %v3780
    %v5979 = vmax.f32 %v5978, %v3784
    %v5980 = vmax.f32 %v5979, %v3790
    %v5981 = vmax.f32 %v5980, %v3794
    %v5982 = vmax.f32 %v5981, %v3800
    %v5983 = vmax.f32 %v5982, %v3804
    %v5984 = vmax.f32 %v5983, %v3810
    %v5985 = vmax.f32 %v5984, %v3814
    %v5986 = vmax.f32 %v5985, %v3820
    %v5987 = vmax.f32 %v5986, %v3824
    %v5988 = vmax.f32 %v5987, %v3830
    %v5989 = vmax.f32 %v5988, %v3834
    %v5990 = vmax.f32 %v5989, %v3840
    %v5991 = vmax.f32 %v5990, %v3844
    %v5992 = vmax.f32 %v5991, %v3850
    %v5993 = vmax.f32 %v5992, %v3854
    %v5994 = vmax.f32 %v5993, %v3860
    %v5995 = vmax.f32 %v5994, %v3864
    %v5996 = vmax.f32 %v5995, %v3870
    %v5997 = vmax.f32 %v5996, %v3874
    %v5998 = vmax.f32 %v5997, %v3880
    %v5999 = vmax.f32 %v5998, %v3884
    %v6000 = vmax.f32 %v5999, %v3890
    %v6001 = vmax.f32 %v6000, %v3894
    %v6002 = vrot.slane %v6001, 4
    %v6003 = vmax.f32 %v6001, %v6002
    %v6004 = vrot.slane %v6003, 2
    %v6005 = vmax.f32 %v6003, %v6004
    %v6006 = vrot.slane %v6005, 1
    %v6007 = vmax.f32 %v6005, %v6006
    %v6008 = vmax.f32 %v3742, %v3746
    %v6009 = vmax.f32 %v6008, %v3752
    %v6010 = vmax.f32 %v6009, %v3756
    %v6011 = vmax.f32 %v6010, %v3762
    %v6012 = vmax.f32 %v6011, %v3766
    %v6013 = vmax.f32 %v6012, %v3772
    %v6014 = vmax.f32 %v6013, %v3776
    %v6015 = vmax.f32 %v6014, %v3782
    %v6016 = vmax.f32 %v6015, %v3786
    %v6017 = vmax.f32 %v6016, %v3792
    %v6018 = vmax.f32 %v6017, %v3796
    %v6019 = vmax.f32 %v6018, %v3802
    %v6020 = vmax.f32 %v6019, %v3806
    %v6021 = vmax.f32 %v6020, %v3812
    %v6022 = vmax.f32 %v6021, %v3816
    %v6023 = vmax.f32 %v6022, %v3822
    %v6024 = vmax.f32 %v6023, %v3826
    %v6025 = vmax.f32 %v6024, %v3832
    %v6026 = vmax.f32 %v6025, %v3836
    %v6027 = vmax.f32 %v6026, %v3842
    %v6028 = vmax.f32 %v6027, %v3846
    %v6029 = vmax.f32 %v6028, %v3852
    %v6030 = vmax.f32 %v6029, %v3856
    %v6031 = vmax.f32 %v6030, %v3862
    %v6032 = vmax.f32 %v6031, %v3866
    %v6033 = vmax.f32 %v6032, %v3872
    %v6034 = vmax.f32 %v6033, %v3876
    %v6035 = vmax.f32 %v6034, %v3882
    %v6036 = vmax.f32 %v6035, %v3886
    %v6037 = vmax.f32 %v6036, %v3892
    %v6038 = vmax.f32 %v6037, %v3896
    %v6039 = vrot.slane %v6038, 4
    %v6040 = vmax.f32 %v6038, %v6039
    %v6041 = vrot.slane %v6040, 2
    %v6042 = vmax.f32 %v6040, %v6041
    %v6043 = vrot.slane %v6042, 1
    %v6044 = vmax.f32 %v6042, %v6043
    %v6045 = vmax.f32 %v4093, %v4097
    %v6046 = vmax.f32 %v6045, %v4103
    %v6047 = vmax.f32 %v6046, %v4107
    %v6048 = vmax.f32 %v6047, %v4113
    %v6049 = vmax.f32 %v6048, %v4117
    %v6050 = vmax.f32 %v6049, %v4123
    %v6051 = vmax.f32 %v6050, %v4127
    %v6052 = vmax.f32 %v6051, %v4133
    %v6053 = vmax.f32 %v6052, %v4137
    %v6054 = vmax.f32 %v6053, %v4143
    %v6055 = vmax.f32 %v6054, %v4147
    %v6056 = vmax.f32 %v6055, %v4153
    %v6057 = vmax.f32 %v6056, %v4157
    %v6058 = vmax.f32 %v6057, %v4163
    %v6059 = vmax.f32 %v6058, %v4167
    %v6060 = vmax.f32 %v6059, %v4173
    %v6061 = vmax.f32 %v6060, %v4177
    %v6062 = vmax.f32 %v6061, %v4183
    %v6063 = vmax.f32 %v6062, %v4187
    %v6064 = vmax.f32 %v6063, %v4193
    %v6065 = vmax.f32 %v6064, %v4197
    %v6066 = vmax.f32 %v6065, %v4203
    %v6067 = vmax.f32 %v6066, %v4207
    %v6068 = vmax.f32 %v6067, %v4213
    %v6069 = vmax.f32 %v6068, %v4217
    %v6070 = vmax.f32 %v6069, %v4223
    %v6071 = vmax.f32 %v6070, %v4227
    %v6072 = vmax.f32 %v6071, %v4233
    %v6073 = vmax.f32 %v6072, %v4237
    %v6074 = vmax.f32 %v6073, %v4243
    %v6075 = vmax.f32 %v6074, %v4247
    %v6076 = vrot.slane %v6075, 4
    %v6077 = vmax.f32 %v6075, %v6076
    %v6078 = vrot.slane %v6077, 2
    %v6079 = vmax.f32 %v6077, %v6078
    %v6080 = vrot.slane %v6079, 1
    %v6081 = vmax.f32 %v6079, %v6080
    %v6082 = vmax.f32 %v4095, %v4099
    %v6083 = vmax.f32 %v6082, %v4105
    %v6084 = vmax.f32 %v6083, %v4109
    %v6085 = vmax.f32 %v6084, %v4115
    %v6086 = vmax.f32 %v6085, %v4119
    %v6087 = vmax.f32 %v6086, %v4125
    %v6088 = vmax.f32 %v6087, %v4129
    %v6089 = vmax.f32 %v6088, %v4135
    %v6090 = vmax.f32 %v6089, %v4139
    %v6091 = vmax.f32 %v6090, %v4145
    %v6092 = vmax.f32 %v6091, %v4149
    %v6093 = vmax.f32 %v6092, %v4155
    %v6094 = vmax.f32 %v6093, %v4159
    %v6095 = vmax.f32 %v6094, %v4165
    %v6096 = vmax.f32 %v6095, %v4169
    %v6097 = vmax.f32 %v6096, %v4175
    %v6098 = vmax.f32 %v6097, %v4179
    %v6099 = vmax.f32 %v6098, %v4185
    %v6100 = vmax.f32 %v6099, %v4189
    %v6101 = vmax.f32 %v6100, %v4195
    %v6102 = vmax.f32 %v6101, %v4199
    %v6103 = vmax.f32 %v6102, %v4205
    %v6104 = vmax.f32 %v6103, %v4209
    %v6105 = vmax.f32 %v6104, %v4215
    %v6106 = vmax.f32 %v6105, %v4219
    %v6107 = vmax.f32 %v6106, %v4225
    %v6108 = vmax.f32 %v6107, %v4229
    %v6109 = vmax.f32 %v6108, %v4235
    %v6110 = vmax.f32 %v6109, %v4239
    %v6111 = vmax.f32 %v6110, %v4245
    %v6112 = vmax.f32 %v6111, %v4249
    %v6113 = vrot.slane %v6112, 4
    %v6114 = vmax.f32 %v6112, %v6113
    %v6115 = vrot.slane %v6114, 2
    %v6116 = vmax.f32 %v6114, %v6115
    %v6117 = vrot.slane %v6116, 1
    %v6118 = vmax.f32 %v6116, %v6117
    %v6119 = vmax.f32 %v4446, %v4450
    %v6120 = vmax.f32 %v6119, %v4456
    %v6121 = vmax.f32 %v6120, %v4460
    %v6122 = vmax.f32 %v6121, %v4466
    %v6123 = vmax.f32 %v6122, %v4470
    %v6124 = vmax.f32 %v6123, %v4476
    %v6125 = vmax.f32 %v6124, %v4480
    %v6126 = vmax.f32 %v6125, %v4486
    %v6127 = vmax.f32 %v6126, %v4490
    %v6128 = vmax.f32 %v6127, %v4496
    %v6129 = vmax.f32 %v6128, %v4500
    %v6130 = vmax.f32 %v6129, %v4506
    %v6131 = vmax.f32 %v6130, %v4510
    %v6132 = vmax.f32 %v6131, %v4516
    %v6133 = vmax.f32 %v6132, %v4520
    %v6134 = vmax.f32 %v6133, %v4526
    %v6135 = vmax.f32 %v6134, %v4530
    %v6136 = vmax.f32 %v6135, %v4536
    %v6137 = vmax.f32 %v6136, %v4540
    %v6138 = vmax.f32 %v6137, %v4546
    %v6139 = vmax.f32 %v6138, %v4550
    %v6140 = vmax.f32 %v6139, %v4556
    %v6141 = vmax.f32 %v6140, %v4560
    %v6142 = vmax.f32 %v6141, %v4566
    %v6143 = vmax.f32 %v6142, %v4570
    %v6144 = vmax.f32 %v6143, %v4576
    %v6145 = vmax.f32 %v6144, %v4580
    %v6146 = vmax.f32 %v6145, %v4586
    %v6147 = vmax.f32 %v6146, %v4590
    %v6148 = vmax.f32 %v6147, %v4596
    %v6149 = vmax.f32 %v6148, %v4600
    %v6150 = vrot.slane %v6149, 4
    %v6151 = vmax.f32 %v6149, %v6150
    %v6152 = vrot.slane %v6151, 2
    %v6153 = vmax.f32 %v6151, %v6152
    %v6154 = vrot.slane %v6153, 1
    %v6155 = vmax.f32 %v6153, %v6154
    %v6156 = vmax.f32 %v4448, %v4452
    %v6157 = vmax.f32 %v6156, %v4458
    %v6158 = vmax.f32 %v6157, %v4462
    %v6159 = vmax.f32 %v6158, %v4468
    %v6160 = vmax.f32 %v6159, %v4472
    %v6161 = vmax.f32 %v6160, %v4478
    %v6162 = vmax.f32 %v6161, %v4482
    %v6163 = vmax.f32 %v6162, %v4488
    %v6164 = vmax.f32 %v6163, %v4492
    %v6165 = vmax.f32 %v6164, %v4498
    %v6166 = vmax.f32 %v6165, %v4502
    %v6167 = vmax.f32 %v6166, %v4508
    %v6168 = vmax.f32 %v6167, %v4512
    %v6169 = vmax.f32 %v6168, %v4518
    %v6170 = vmax.f32 %v6169, %v4522
    %v6171 = vmax.f32 %v6170, %v4528
    %v6172 = vmax.f32 %v6171, %v4532
    %v6173 = vmax.f32 %v6172, %v4538
    %v6174 = vmax.f32 %v6173, %v4542
    %v6175 = vmax.f32 %v6174, %v4548
    %v6176 = vmax.f32 %v6175, %v4552
    %v6177 = vmax.f32 %v6176, %v4558
    %v6178 = vmax.f32 %v6177, %v4562
    %v6179 = vmax.f32 %v6178, %v4568
    %v6180 = vmax.f32 %v6179, %v4572
    %v6181 = vmax.f32 %v6180, %v4578
    %v6182 = vmax.f32 %v6181, %v4582
    %v6183 = vmax.f32 %v6182, %v4588
    %v6184 = vmax.f32 %v6183, %v4592
    %v6185 = vmax.f32 %v6184, %v4598
    %v6186 = vmax.f32 %v6185, %v4602
    %v6187 = vrot.slane %v6186, 4
    %v6188 = vmax.f32 %v6186, %v6187
    %v6189 = vrot.slane %v6188, 2
    %v6190 = vmax.f32 %v6188, %v6189
    %v6191 = vrot.slane %v6190, 1
    %v6192 = vmax.f32 %v6190, %v6191
    %v6193 = vmax.f32 %v4799, %v4803
    %v6194 = vmax.f32 %v6193, %v4809
    %v6195 = vmax.f32 %v6194, %v4813
    %v6196 = vmax.f32 %v6195, %v4819
    %v6197 = vmax.f32 %v6196, %v4823
    %v6198 = vmax.f32 %v6197, %v4829
    %v6199 = vmax.f32 %v6198, %v4833
    %v6200 = vmax.f32 %v6199, %v4839
    %v6201 = vmax.f32 %v6200, %v4843
    %v6202 = vmax.f32 %v6201, %v4849
    %v6203 = vmax.f32 %v6202, %v4853
    %v6204 = vmax.f32 %v6203, %v4859
    %v6205 = vmax.f32 %v6204, %v4863
    %v6206 = vmax.f32 %v6205, %v4869
    %v6207 = vmax.f32 %v6206, %v4873
    %v6208 = vmax.f32 %v6207, %v4879
    %v6209 = vmax.f32 %v6208, %v4883
    %v6210 = vmax.f32 %v6209, %v4889
    %v6211 = vmax.f32 %v6210, %v4893
    %v6212 = vmax.f32 %v6211, %v4899
    %v6213 = vmax.f32 %v6212, %v4903
    %v6214 = vmax.f32 %v6213, %v4909
    %v6215 = vmax.f32 %v6214, %v4913
    %v6216 = vmax.f32 %v6215, %v4919
    %v6217 = vmax.f32 %v6216, %v4923
    %v6218 = vmax.f32 %v6217, %v4929
    %v6219 = vmax.f32 %v6218, %v4933
    %v6220 = vmax.f32 %v6219, %v4939
    %v6221 = vmax.f32 %v6220, %v4943
    %v6222 = vmax.f32 %v6221, %v4949
    %v6223 = vmax.f32 %v6222, %v4953
    %v6224 = vrot.slane %v6223, 4
    %v6225 = vmax.f32 %v6223, %v6224
    %v6226 = vrot.slane %v6225, 2
    %v6227 = vmax.f32 %v6225, %v6226
    %v6228 = vrot.slane %v6227, 1
    %v6229 = vmax.f32 %v6227, %v6228
    %v6230 = vmax.f32 %v4801, %v4805
    %v6231 = vmax.f32 %v6230, %v4811
    %v6232 = vmax.f32 %v6231, %v4815
    %v6233 = vmax.f32 %v6232, %v4821
    %v6234 = vmax.f32 %v6233, %v4825
    %v6235 = vmax.f32 %v6234, %v4831
    %v6236 = vmax.f32 %v6235, %v4835
    %v6237 = vmax.f32 %v6236, %v4841
    %v6238 = vmax.f32 %v6237, %v4845
    %v6239 = vmax.f32 %v6238, %v4851
    %v6240 = vmax.f32 %v6239, %v4855
    %v6241 = vmax.f32 %v6240, %v4861
    %v6242 = vmax.f32 %v6241, %v4865
    %v6243 = vmax.f32 %v6242, %v4871
    %v6244 = vmax.f32 %v6243, %v4875
    %v6245 = vmax.f32 %v6244, %v4881
    %v6246 = vmax.f32 %v6245, %v4885
    %v6247 = vmax.f32 %v6246, %v4891
    %v6248 = vmax.f32 %v6247, %v4895
    %v6249 = vmax.f32 %v6248, %v4901
    %v6250 = vmax.f32 %v6249, %v4905
    %v6251 = vmax.f32 %v6250, %v4911
    %v6252 = vmax.f32 %v6251, %v4915
    %v6253 = vmax.f32 %v6252, %v4921
    %v6254 = vmax.f32 %v6253, %v4925
    %v6255 = vmax.f32 %v6254, %v4931
    %v6256 = vmax.f32 %v6255, %v4935
    %v6257 = vmax.f32 %v6256, %v4941
    %v6258 = vmax.f32 %v6257, %v4945
    %v6259 = vmax.f32 %v6258, %v4951
    %v6260 = vmax.f32 %v6259, %v4955
    %v6261 = vrot.slane %v6260, 4
    %v6262 = vmax.f32 %v6260, %v6261
    %v6263 = vrot.slane %v6262, 2
    %v6264 = vmax.f32 %v6262, %v6263
    %v6265 = vrot.slane %v6264, 1
    %v6266 = vmax.f32 %v6264, %v6265
    %v6267 = vmax.f32 %v5152, %v5156
    %v6268 = vmax.f32 %v6267, %v5162
    %v6269 = vmax.f32 %v6268, %v5166
    %v6270 = vmax.f32 %v6269, %v5172
    %v6271 = vmax.f32 %v6270, %v5176
    %v6272 = vmax.f32 %v6271, %v5182
    %v6273 = vmax.f32 %v6272, %v5186
    %v6274 = vmax.f32 %v6273, %v5192
    %v6275 = vmax.f32 %v6274, %v5196
    %v6276 = vmax.f32 %v6275, %v5202
    %v6277 = vmax.f32 %v6276, %v5206
    %v6278 = vmax.f32 %v6277, %v5212
    %v6279 = vmax.f32 %v6278, %v5216
    %v6280 = vmax.f32 %v6279, %v5222
    %v6281 = vmax.f32 %v6280, %v5226
    %v6282 = vmax.f32 %v6281, %v5232
    %v6283 = vmax.f32 %v6282, %v5236
    %v6284 = vmax.f32 %v6283, %v5242
    %v6285 = vmax.f32 %v6284, %v5246
    %v6286 = vmax.f32 %v6285, %v5252
    %v6287 = vmax.f32 %v6286, %v5256
    %v6288 = vmax.f32 %v6287, %v5262
    %v6289 = vmax.f32 %v6288, %v5266
    %v6290 = vmax.f32 %v6289, %v5272
    %v6291 = vmax.f32 %v6290, %v5276
    %v6292 = vmax.f32 %v6291, %v5282
    %v6293 = vmax.f32 %v6292, %v5286
    %v6294 = vmax.f32 %v6293, %v5292
    %v6295 = vmax.f32 %v6294, %v5296
    %v6296 = vmax.f32 %v6295, %v5302
    %v6297 = vmax.f32 %v6296, %v5306
    %v6298 = vrot.slane %v6297, 4
    %v6299 = vmax.f32 %v6297, %v6298
    %v6300 = vrot.slane %v6299, 2
    %v6301 = vmax.f32 %v6299, %v6300
    %v6302 = vrot.slane %v6301, 1
    %v6303 = vmax.f32 %v6301, %v6302
    %v6304 = vmax.f32 %v5154, %v5158
    %v6305 = vmax.f32 %v6304, %v5164
    %v6306 = vmax.f32 %v6305, %v5168
    %v6307 = vmax.f32 %v6306, %v5174
    %v6308 = vmax.f32 %v6307, %v5178
    %v6309 = vmax.f32 %v6308, %v5184
    %v6310 = vmax.f32 %v6309, %v5188
    %v6311 = vmax.f32 %v6310, %v5194
    %v6312 = vmax.f32 %v6311, %v5198
    %v6313 = vmax.f32 %v6312, %v5204
    %v6314 = vmax.f32 %v6313, %v5208
    %v6315 = vmax.f32 %v6314, %v5214
    %v6316 = vmax.f32 %v6315, %v5218
    %v6317 = vmax.f32 %v6316, %v5224
    %v6318 = vmax.f32 %v6317, %v5228
    %v6319 = vmax.f32 %v6318, %v5234
    %v6320 = vmax.f32 %v6319, %v5238
    %v6321 = vmax.f32 %v6320, %v5244
    %v6322 = vmax.f32 %v6321, %v5248
    %v6323 = vmax.f32 %v6322, %v5254
    %v6324 = vmax.f32 %v6323, %v5258
    %v6325 = vmax.f32 %v6324, %v5264
    %v6326 = vmax.f32 %v6325, %v5268
    %v6327 = vmax.f32 %v6326, %v5274
    %v6328 = vmax.f32 %v6327, %v5278
    %v6329 = vmax.f32 %v6328, %v5284
    %v6330 = vmax.f32 %v6329, %v5288
    %v6331 = vmax.f32 %v6330, %v5294
    %v6332 = vmax.f32 %v6331, %v5298
    %v6333 = vmax.f32 %v6332, %v5304
    %v6334 = vmax.f32 %v6333, %v5308
    %v6335 = vrot.slane %v6334, 4
    %v6336 = vmax.f32 %v6334, %v6335
    %v6337 = vrot.slane %v6336, 2
    %v6338 = vmax.f32 %v6336, %v6337
    %v6339 = vrot.slane %v6338, 1
    %v6340 = vmax.f32 %v6338, %v6339
    %v6341 = vmax.f32 %v5505, %v5509
    %v6342 = vmax.f32 %v6341, %v5515
    %v6343 = vmax.f32 %v6342, %v5519
    %v6344 = vmax.f32 %v6343, %v5525
    %v6345 = vmax.f32 %v6344, %v5529
    %v6346 = vmax.f32 %v6345, %v5535
    %v6347 = vmax.f32 %v6346, %v5539
    %v6348 = vmax.f32 %v6347, %v5545
    %v6349 = vmax.f32 %v6348, %v5549
    %v6350 = vmax.f32 %v6349, %v5555
    %v6351 = vmax.f32 %v6350, %v5559
    %v6352 = vmax.f32 %v6351, %v5565
    %v6353 = vmax.f32 %v6352, %v5569
    %v6354 = vmax.f32 %v6353, %v5575
    %v6355 = vmax.f32 %v6354, %v5579
    %v6356 = vmax.f32 %v6355, %v5585
    %v6357 = vmax.f32 %v6356, %v5589
    %v6358 = vmax.f32 %v6357, %v5595
    %v6359 = vmax.f32 %v6358, %v5599
    %v6360 = vmax.f32 %v6359, %v5605
    %v6361 = vmax.f32 %v6360, %v5609
    %v6362 = vmax.f32 %v6361, %v5615
    %v6363 = vmax.f32 %v6362, %v5619
    %v6364 = vmax.f32 %v6363, %v5625
    %v6365 = vmax.f32 %v6364, %v5629
    %v6366 = vmax.f32 %v6365, %v5635
    %v6367 = vmax.f32 %v6366, %v5639
    %v6368 = vmax.f32 %v6367, %v5645
    %v6369 = vmax.f32 %v6368, %v5649
    %v6370 = vmax.f32 %v6369, %v5655
    %v6371 = vmax.f32 %v6370, %v5659
    %v6372 = vrot.slane %v6371, 4
    %v6373 = vmax.f32 %v6371, %v6372
    %v6374 = vrot.slane %v6373, 2
    %v6375 = vmax.f32 %v6373, %v6374
    %v6376 = vrot.slane %v6375, 1
    %v6377 = vmax.f32 %v6375, %v6376
    %v6378 = vmax.f32 %v5507, %v5511
    %v6379 = vmax.f32 %v6378, %v5517
    %v6380 = vmax.f32 %v6379, %v5521
    %v6381 = vmax.f32 %v6380, %v5527
    %v6382 = vmax.f32 %v6381, %v5531
    %v6383 = vmax.f32 %v6382, %v5537
    %v6384 = vmax.f32 %v6383, %v5541
    %v6385 = vmax.f32 %v6384, %v5547
    %v6386 = vmax.f32 %v6385, %v5551
    %v6387 = vmax.f32 %v6386, %v5557
    %v6388 = vmax.f32 %v6387, %v5561
    %v6389 = vmax.f32 %v6388, %v5567
    %v6390 = vmax.f32 %v6389, %v5571
    %v6391 = vmax.f32 %v6390, %v5577
    %v6392 = vmax.f32 %v6391, %v5581
    %v6393 = vmax.f32 %v6392, %v5587
    %v6394 = vmax.f32 %v6393, %v5591
    %v6395 = vmax.f32 %v6394, %v5597
    %v6396 = vmax.f32 %v6395, %v5601
    %v6397 = vmax.f32 %v6396, %v5607
    %v6398 = vmax.f32 %v6397, %v5611
    %v6399 = vmax.f32 %v6398, %v5617
    %v6400 = vmax.f32 %v6399, %v5621
    %v6401 = vmax.f32 %v6400, %v5627
    %v6402 = vmax.f32 %v6401, %v5631
    %v6403 = vmax.f32 %v6402, %v5637
    %v6404 = vmax.f32 %v6403, %v5641
    %v6405 = vmax.f32 %v6404, %v5647
    %v6406 = vmax.f32 %v6405, %v5651
    %v6407 = vmax.f32 %v6406, %v5657
    %v6408 = vmax.f32 %v6407, %v5661
    %v6409 = vrot.slane %v6408, 4
    %v6410 = vmax.f32 %v6408, %v6409
    %v6411 = vrot.slane %v6410, 2
    %v6412 = vmax.f32 %v6410, %v6411
    %v6413 = vrot.slane %v6412, 1
    %v6414 = vmax.f32 %v6412, %v6413
    %v6415 = vmax.f32 %v3194, %v3198
    %v6416 = vmax.f32 %v6415, %v3204
    %v6417 = vmax.f32 %v6416, %v3208
    %v6418 = vmax.f32 %v6417, %v3214
    %v6419 = vmax.f32 %v6418, %v3218
    %v6420 = vmax.f32 %v6419, %v3224
    %v6421 = vmax.f32 %v6420, %v3228
    %v6422 = vmax.f32 %v6421, %v3234
    %v6423 = vmax.f32 %v6422, %v3238
    %v6424 = vmax.f32 %v6423, %v3244
    %v6425 = vmax.f32 %v6424, %v3248
    %v6426 = vmax.f32 %v6425, %v3254
    %v6427 = vmax.f32 %v6426, %v3258
    %v6428 = vmax.f32 %v6427, %v3264
    %v6429 = vmax.f32 %v6428, %v3268
    %v6430 = vmax.f32 %v6429, %v3274
    %v6431 = vmax.f32 %v6430, %v3278
    %v6432 = vmax.f32 %v6431, %v3284
    %v6433 = vmax.f32 %v6432, %v3288
    %v6434 = vmax.f32 %v6433, %v3294
    %v6435 = vmax.f32 %v6434, %v3298
    %v6436 = vmax.f32 %v6435, %v3304
    %v6437 = vmax.f32 %v6436, %v3308
    %v6438 = vmax.f32 %v6437, %v3314
    %v6439 = vmax.f32 %v6438, %v3318
    %v6440 = vmax.f32 %v6439, %v3324
    %v6441 = vmax.f32 %v6440, %v3328
    %v6442 = vmax.f32 %v6441, %v3334
    %v6443 = vmax.f32 %v6442, %v3338
    %v6444 = vmax.f32 %v6443, %v3344
    %v6445 = vmax.f32 %v6444, %v3348
    %v6446 = vrot.slane %v6445, 4
    %v6447 = vmax.f32 %v6445, %v6446
    %v6448 = vrot.slane %v6447, 2
    %v6449 = vmax.f32 %v6447, %v6448
    %v6450 = vrot.slane %v6449, 1
    %v6451 = vmax.f32 %v6449, %v6450
    %v6452 = vmax.f32 %v3196, %v3200
    %v6453 = vmax.f32 %v6452, %v3206
    %v6454 = vmax.f32 %v6453, %v3210
    %v6455 = vmax.f32 %v6454, %v3216
    %v6456 = vmax.f32 %v6455, %v3220
    %v6457 = vmax.f32 %v6456, %v3226
    %v6458 = vmax.f32 %v6457, %v3230
    %v6459 = vmax.f32 %v6458, %v3236
    %v6460 = vmax.f32 %v6459, %v3240
    %v6461 = vmax.f32 %v6460, %v3246
    %v6462 = vmax.f32 %v6461, %v3250
    %v6463 = vmax.f32 %v6462, %v3256
    %v6464 = vmax.f32 %v6463, %v3260
    %v6465 = vmax.f32 %v6464, %v3266
    %v6466 = vmax.f32 %v6465, %v3270
    %v6467 = vmax.f32 %v6466, %v3276
    %v6468 = vmax.f32 %v6467, %v3280
    %v6469 = vmax.f32 %v6468, %v3286
    %v6470 = vmax.f32 %v6469, %v3290
    %v6471 = vmax.f32 %v6470, %v3296
    %v6472 = vmax.f32 %v6471, %v3300
    %v6473 = vmax.f32 %v6472, %v3306
    %v6474 = vmax.f32 %v6473, %v3310
    %v6475 = vmax.f32 %v6474, %v3316
    %v6476 = vmax.f32 %v6475, %v3320
    %v6477 = vmax.f32 %v6476, %v3326
    %v6478 = vmax.f32 %v6477, %v3330
    %v6479 = vmax.f32 %v6478, %v3336
    %v6480 = vmax.f32 %v6479, %v3340
    %v6481 = vmax.f32 %v6480, %v3346
    %v6482 = vmax.f32 %v6481, %v3350
    %v6483 = vrot.slane %v6482, 4
    %v6484 = vmax.f32 %v6482, %v6483
    %v6485 = vrot.slane %v6484, 2
    %v6486 = vmax.f32 %v6484, %v6485
    %v6487 = vrot.slane %v6486, 1
    %v6488 = vmax.f32 %v6486, %v6487
    %v6489 = vmax.f32 %v3547, %v3551
    %v6490 = vmax.f32 %v6489, %v3557
    %v6491 = vmax.f32 %v6490, %v3561
    %v6492 = vmax.f32 %v6491, %v3567
    %v6493 = vmax.f32 %v6492, %v3571
    %v6494 = vmax.f32 %v6493, %v3577
    %v6495 = vmax.f32 %v6494, %v3581
    %v6496 = vmax.f32 %v6495, %v3587
    %v6497 = vmax.f32 %v6496, %v3591
    %v6498 = vmax.f32 %v6497, %v3597
    %v6499 = vmax.f32 %v6498, %v3601
    %v6500 = vmax.f32 %v6499, %v3607
    %v6501 = vmax.f32 %v6500, %v3611
    %v6502 = vmax.f32 %v6501, %v3617
    %v6503 = vmax.f32 %v6502, %v3621
    %v6504 = vmax.f32 %v6503, %v3627
    %v6505 = vmax.f32 %v6504, %v3631
    %v6506 = vmax.f32 %v6505, %v3637
    %v6507 = vmax.f32 %v6506, %v3641
    %v6508 = vmax.f32 %v6507, %v3647
    %v6509 = vmax.f32 %v6508, %v3651
    %v6510 = vmax.f32 %v6509, %v3657
    %v6511 = vmax.f32 %v6510, %v3661
    %v6512 = vmax.f32 %v6511, %v3667
    %v6513 = vmax.f32 %v6512, %v3671
    %v6514 = vmax.f32 %v6513, %v3677
    %v6515 = vmax.f32 %v6514, %v3681
    %v6516 = vmax.f32 %v6515, %v3687
    %v6517 = vmax.f32 %v6516, %v3691
    %v6518 = vmax.f32 %v6517, %v3697
    %v6519 = vmax.f32 %v6518, %v3701
    %v6520 = vrot.slane %v6519, 4
    %v6521 = vmax.f32 %v6519, %v6520
    %v6522 = vrot.slane %v6521, 2
    %v6523 = vmax.f32 %v6521, %v6522
    %v6524 = vrot.slane %v6523, 1
    %v6525 = vmax.f32 %v6523, %v6524
    %v6526 = vmax.f32 %v3549, %v3553
    %v6527 = vmax.f32 %v6526, %v3559
    %v6528 = vmax.f32 %v6527, %v3563
    %v6529 = vmax.f32 %v6528, %v3569
    %v6530 = vmax.f32 %v6529, %v3573
    %v6531 = vmax.f32 %v6530, %v3579
    %v6532 = vmax.f32 %v6531, %v3583
    %v6533 = vmax.f32 %v6532, %v3589
    %v6534 = vmax.f32 %v6533, %v3593
    %v6535 = vmax.f32 %v6534, %v3599
    %v6536 = vmax.f32 %v6535, %v3603
    %v6537 = vmax.f32 %v6536, %v3609
    %v6538 = vmax.f32 %v6537, %v3613
    %v6539 = vmax.f32 %v6538, %v3619
    %v6540 = vmax.f32 %v6539, %v3623
    %v6541 = vmax.f32 %v6540, %v3629
    %v6542 = vmax.f32 %v6541, %v3633
    %v6543 = vmax.f32 %v6542, %v3639
    %v6544 = vmax.f32 %v6543, %v3643
    %v6545 = vmax.f32 %v6544, %v3649
    %v6546 = vmax.f32 %v6545, %v3653
    %v6547 = vmax.f32 %v6546, %v3659
    %v6548 = vmax.f32 %v6547, %v3663
    %v6549 = vmax.f32 %v6548, %v3669
    %v6550 = vmax.f32 %v6549, %v3673
    %v6551 = vmax.f32 %v6550, %v3679
    %v6552 = vmax.f32 %v6551, %v3683
    %v6553 = vmax.f32 %v6552, %v3689
    %v6554 = vmax.f32 %v6553, %v3693
    %v6555 = vmax.f32 %v6554, %v3699
    %v6556 = vmax.f32 %v6555, %v3703
    %v6557 = vrot.slane %v6556, 4
    %v6558 = vmax.f32 %v6556, %v6557
    %v6559 = vrot.slane %v6558, 2
    %v6560 = vmax.f32 %v6558, %v6559
    %v6561 = vrot.slane %v6560, 1
    %v6562 = vmax.f32 %v6560, %v6561
    %v6563 = vmax.f32 %v3900, %v3904
    %v6564 = vmax.f32 %v6563, %v3910
    %v6565 = vmax.f32 %v6564, %v3914
    %v6566 = vmax.f32 %v6565, %v3920
    %v6567 = vmax.f32 %v6566, %v3924
    %v6568 = vmax.f32 %v6567, %v3930
    %v6569 = vmax.f32 %v6568, %v3934
    %v6570 = vmax.f32 %v6569, %v3940
    %v6571 = vmax.f32 %v6570, %v3944
    %v6572 = vmax.f32 %v6571, %v3950
    %v6573 = vmax.f32 %v6572, %v3954
    %v6574 = vmax.f32 %v6573, %v3960
    %v6575 = vmax.f32 %v6574, %v3964
    %v6576 = vmax.f32 %v6575, %v3970
    %v6577 = vmax.f32 %v6576, %v3974
    %v6578 = vmax.f32 %v6577, %v3980
    %v6579 = vmax.f32 %v6578, %v3984
    %v6580 = vmax.f32 %v6579, %v3990
    %v6581 = vmax.f32 %v6580, %v3994
    %v6582 = vmax.f32 %v6581, %v4000
    %v6583 = vmax.f32 %v6582, %v4004
    %v6584 = vmax.f32 %v6583, %v4010
    %v6585 = vmax.f32 %v6584, %v4014
    %v6586 = vmax.f32 %v6585, %v4020
    %v6587 = vmax.f32 %v6586, %v4024
    %v6588 = vmax.f32 %v6587, %v4030
    %v6589 = vmax.f32 %v6588, %v4034
    %v6590 = vmax.f32 %v6589, %v4040
    %v6591 = vmax.f32 %v6590, %v4044
    %v6592 = vmax.f32 %v6591, %v4050
    %v6593 = vmax.f32 %v6592, %v4054
    %v6594 = vrot.slane %v6593, 4
    %v6595 = vmax.f32 %v6593, %v6594
    %v6596 = vrot.slane %v6595, 2
    %v6597 = vmax.f32 %v6595, %v6596
    %v6598 = vrot.slane %v6597, 1
    %v6599 = vmax.f32 %v6597, %v6598
    %v6600 = vmax.f32 %v3902, %v3906
    %v6601 = vmax.f32 %v6600, %v3912
    %v6602 = vmax.f32 %v6601, %v3916
    %v6603 = vmax.f32 %v6602, %v3922
    %v6604 = vmax.f32 %v6603, %v3926
    %v6605 = vmax.f32 %v6604, %v3932
    %v6606 = vmax.f32 %v6605, %v3936
    %v6607 = vmax.f32 %v6606, %v3942
    %v6608 = vmax.f32 %v6607, %v3946
    %v6609 = vmax.f32 %v6608, %v3952
    %v6610 = vmax.f32 %v6609, %v3956
    %v6611 = vmax.f32 %v6610, %v3962
    %v6612 = vmax.f32 %v6611, %v3966
    %v6613 = vmax.f32 %v6612, %v3972
    %v6614 = vmax.f32 %v6613, %v3976
    %v6615 = vmax.f32 %v6614, %v3982
    %v6616 = vmax.f32 %v6615, %v3986
    %v6617 = vmax.f32 %v6616, %v3992
    %v6618 = vmax.f32 %v6617, %v3996
    %v6619 = vmax.f32 %v6618, %v4002
    %v6620 = vmax.f32 %v6619, %v4006
    %v6621 = vmax.f32 %v6620, %v4012
    %v6622 = vmax.f32 %v6621, %v4016
    %v6623 = vmax.f32 %v6622, %v4022
    %v6624 = vmax.f32 %v6623, %v4026
    %v6625 = vmax.f32 %v6624, %v4032
    %v6626 = vmax.f32 %v6625, %v4036
    %v6627 = vmax.f32 %v6626, %v4042
    %v6628 = vmax.f32 %v6627, %v4046
    %v6629 = vmax.f32 %v6628, %v4052
    %v6630 = vmax.f32 %v6629, %v4056
    %v6631 = vrot.slane %v6630, 4
    %v6632 = vmax.f32 %v6630, %v6631
    %v6633 = vrot.slane %v6632, 2
    %v6634 = vmax.f32 %v6632, %v6633
    %v6635 = vrot.slane %v6634, 1
    %v6636 = vmax.f32 %v6634, %v6635
    %v6637 = vmax.f32 %v4253, %v4257
    %v6638 = vmax.f32 %v6637, %v4263
    %v6639 = vmax.f32 %v6638, %v4267
    %v6640 = vmax.f32 %v6639, %v4273
    %v6641 = vmax.f32 %v6640, %v4277
    %v6642 = vmax.f32 %v6641, %v4283
    %v6643 = vmax.f32 %v6642, %v4287
    %v6644 = vmax.f32 %v6643, %v4293
    %v6645 = vmax.f32 %v6644, %v4297
    %v6646 = vmax.f32 %v6645, %v4303
    %v6647 = vmax.f32 %v6646, %v4307
    %v6648 = vmax.f32 %v6647, %v4313
    %v6649 = vmax.f32 %v6648, %v4317
    %v6650 = vmax.f32 %v6649, %v4323
    %v6651 = vmax.f32 %v6650, %v4327
    %v6652 = vmax.f32 %v6651, %v4333
    %v6653 = vmax.f32 %v6652, %v4337
    %v6654 = vmax.f32 %v6653, %v4343
    %v6655 = vmax.f32 %v6654, %v4347
    %v6656 = vmax.f32 %v6655, %v4353
    %v6657 = vmax.f32 %v6656, %v4357
    %v6658 = vmax.f32 %v6657, %v4363
    %v6659 = vmax.f32 %v6658, %v4367
    %v6660 = vmax.f32 %v6659, %v4373
    %v6661 = vmax.f32 %v6660, %v4377
    %v6662 = vmax.f32 %v6661, %v4383
    %v6663 = vmax.f32 %v6662, %v4387
    %v6664 = vmax.f32 %v6663, %v4393
    %v6665 = vmax.f32 %v6664, %v4397
    %v6666 = vmax.f32 %v6665, %v4403
    %v6667 = vmax.f32 %v6666, %v4407
    %v6668 = vrot.slane %v6667, 4
    %v6669 = vmax.f32 %v6667, %v6668
    %v6670 = vrot.slane %v6669, 2
    %v6671 = vmax.f32 %v6669, %v6670
    %v6672 = vrot.slane %v6671, 1
    %v6673 = vmax.f32 %v6671, %v6672
    %v6674 = vmax.f32 %v4255, %v4259
    %v6675 = vmax.f32 %v6674, %v4265
    %v6676 = vmax.f32 %v6675, %v4269
    %v6677 = vmax.f32 %v6676, %v4275
    %v6678 = vmax.f32 %v6677, %v4279
    %v6679 = vmax.f32 %v6678, %v4285
    %v6680 = vmax.f32 %v6679, %v4289
    %v6681 = vmax.f32 %v6680, %v4295
    %v6682 = vmax.f32 %v6681, %v4299
    %v6683 = vmax.f32 %v6682, %v4305
    %v6684 = vmax.f32 %v6683, %v4309
    %v6685 = vmax.f32 %v6684, %v4315
    %v6686 = vmax.f32 %v6685, %v4319
    %v6687 = vmax.f32 %v6686, %v4325
    %v6688 = vmax.f32 %v6687, %v4329
    %v6689 = vmax.f32 %v6688, %v4335
    %v6690 = vmax.f32 %v6689, %v4339
    %v6691 = vmax.f32 %v6690, %v4345
    %v6692 = vmax.f32 %v6691, %v4349
    %v6693 = vmax.f32 %v6692, %v4355
    %v6694 = vmax.f32 %v6693, %v4359
    %v6695 = vmax.f32 %v6694, %v4365
    %v6696 = vmax.f32 %v6695, %v4369
    %v6697 = vmax.f32 %v6696, %v4375
    %v6698 = vmax.f32 %v6697, %v4379
    %v6699 = vmax.f32 %v6698, %v4385
    %v6700 = vmax.f32 %v6699, %v4389
    %v6701 = vmax.f32 %v6700, %v4395
    %v6702 = vmax.f32 %v6701, %v4399
    %v6703 = vmax.f32 %v6702, %v4405
    %v6704 = vmax.f32 %v6703, %v4409
    %v6705 = vrot.slane %v6704, 4
    %v6706 = vmax.f32 %v6704, %v6705
    %v6707 = vrot.slane %v6706, 2
    %v6708 = vmax.f32 %v6706, %v6707
    %v6709 = vrot.slane %v6708, 1
    %v6710 = vmax.f32 %v6708, %v6709
    %v6711 = vmax.f32 %v4606, %v4610
    %v6712 = vmax.f32 %v6711, %v4616
    %v6713 = vmax.f32 %v6712, %v4620
    %v6714 = vmax.f32 %v6713, %v4626
    %v6715 = vmax.f32 %v6714, %v4630
    %v6716 = vmax.f32 %v6715, %v4636
    %v6717 = vmax.f32 %v6716, %v4640
    %v6718 = vmax.f32 %v6717, %v4646
    %v6719 = vmax.f32 %v6718, %v4650
    %v6720 = vmax.f32 %v6719, %v4656
    %v6721 = vmax.f32 %v6720, %v4660
    %v6722 = vmax.f32 %v6721, %v4666
    %v6723 = vmax.f32 %v6722, %v4670
    %v6724 = vmax.f32 %v6723, %v4676
    %v6725 = vmax.f32 %v6724, %v4680
    %v6726 = vmax.f32 %v6725, %v4686
    %v6727 = vmax.f32 %v6726, %v4690
    %v6728 = vmax.f32 %v6727, %v4696
    %v6729 = vmax.f32 %v6728, %v4700
    %v6730 = vmax.f32 %v6729, %v4706
    %v6731 = vmax.f32 %v6730, %v4710
    %v6732 = vmax.f32 %v6731, %v4716
    %v6733 = vmax.f32 %v6732, %v4720
    %v6734 = vmax.f32 %v6733, %v4726
    %v6735 = vmax.f32 %v6734, %v4730
    %v6736 = vmax.f32 %v6735, %v4736
    %v6737 = vmax.f32 %v6736, %v4740
    %v6738 = vmax.f32 %v6737, %v4746
    %v6739 = vmax.f32 %v6738, %v4750
    %v6740 = vmax.f32 %v6739, %v4756
    %v6741 = vmax.f32 %v6740, %v4760
    %v6742 = vrot.slane %v6741, 4
    %v6743 = vmax.f32 %v6741, %v6742
    %v6744 = vrot.slane %v6743, 2
    %v6745 = vmax.f32 %v6743, %v6744
    %v6746 = vrot.slane %v6745, 1
    %v6747 = vmax.f32 %v6745, %v6746
    %v6748 = vmax.f32 %v4608, %v4612
    %v6749 = vmax.f32 %v6748, %v4618
    %v6750 = vmax.f32 %v6749, %v4622
    %v6751 = vmax.f32 %v6750, %v4628
    %v6752 = vmax.f32 %v6751, %v4632
    %v6753 = vmax.f32 %v6752, %v4638
    %v6754 = vmax.f32 %v6753, %v4642
    %v6755 = vmax.f32 %v6754, %v4648
    %v6756 = vmax.f32 %v6755, %v4652
    %v6757 = vmax.f32 %v6756, %v4658
    %v6758 = vmax.f32 %v6757, %v4662
    %v6759 = vmax.f32 %v6758, %v4668
    %v6760 = vmax.f32 %v6759, %v4672
    %v6761 = vmax.f32 %v6760, %v4678
    %v6762 = vmax.f32 %v6761, %v4682
    %v6763 = vmax.f32 %v6762, %v4688
    %v6764 = vmax.f32 %v6763, %v4692
    %v6765 = vmax.f32 %v6764, %v4698
    %v6766 = vmax.f32 %v6765, %v4702
    %v6767 = vmax.f32 %v6766, %v4708
    %v6768 = vmax.f32 %v6767, %v4712
    %v6769 = vmax.f32 %v6768, %v4718
    %v6770 = vmax.f32 %v6769, %v4722
    %v6771 = vmax.f32 %v6770, %v4728
    %v6772 = vmax.f32 %v6771, %v4732
    %v6773 = vmax.f32 %v6772, %v4738
    %v6774 = vmax.f32 %v6773, %v4742
    %v6775 = vmax.f32 %v6774, %v4748
    %v6776 = vmax.f32 %v6775, %v4752
    %v6777 = vmax.f32 %v6776, %v4758
    %v6778 = vmax.f32 %v6777, %v4762
    %v6779 = vrot.slane %v6778, 4
    %v6780 = vmax.f32 %v6778, %v6779
    %v6781 = vrot.slane %v6780, 2
    %v6782 = vmax.f32 %v6780, %v6781
    %v6783 = vrot.slane %v6782, 1
    %v6784 = vmax.f32 %v6782, %v6783
    %v6785 = vmax.f32 %v4959, %v4963
    %v6786 = vmax.f32 %v6785, %v4969
    %v6787 = vmax.f32 %v6786, %v4973
    %v6788 = vmax.f32 %v6787, %v4979
    %v6789 = vmax.f32 %v6788, %v4983
    %v6790 = vmax.f32 %v6789, %v4989
    %v6791 = vmax.f32 %v6790, %v4993
    %v6792 = vmax.f32 %v6791, %v4999
    %v6793 = vmax.f32 %v6792, %v5003
    %v6794 = vmax.f32 %v6793, %v5009
    %v6795 = vmax.f32 %v6794, %v5013
    %v6796 = vmax.f32 %v6795, %v5019
    %v6797 = vmax.f32 %v6796, %v5023
    %v6798 = vmax.f32 %v6797, %v5029
    %v6799 = vmax.f32 %v6798, %v5033
    %v6800 = vmax.f32 %v6799, %v5039
    %v6801 = vmax.f32 %v6800, %v5043
    %v6802 = vmax.f32 %v6801, %v5049
    %v6803 = vmax.f32 %v6802, %v5053
    %v6804 = vmax.f32 %v6803, %v5059
    %v6805 = vmax.f32 %v6804, %v5063
    %v6806 = vmax.f32 %v6805, %v5069
    %v6807 = vmax.f32 %v6806, %v5073
    %v6808 = vmax.f32 %v6807, %v5079
    %v6809 = vmax.f32 %v6808, %v5083
    %v6810 = vmax.f32 %v6809, %v5089
    %v6811 = vmax.f32 %v6810, %v5093
    %v6812 = vmax.f32 %v6811, %v5099
    %v6813 = vmax.f32 %v6812, %v5103
    %v6814 = vmax.f32 %v6813, %v5109
    %v6815 = vmax.f32 %v6814, %v5113
    %v6816 = vrot.slane %v6815, 4
    %v6817 = vmax.f32 %v6815, %v6816
    %v6818 = vrot.slane %v6817, 2
    %v6819 = vmax.f32 %v6817, %v6818
    %v6820 = vrot.slane %v6819, 1
    %v6821 = vmax.f32 %v6819, %v6820
    %v6822 = vmax.f32 %v4961, %v4965
    %v6823 = vmax.f32 %v6822, %v4971
    %v6824 = vmax.f32 %v6823, %v4975
    %v6825 = vmax.f32 %v6824, %v4981
    %v6826 = vmax.f32 %v6825, %v4985
    %v6827 = vmax.f32 %v6826, %v4991
    %v6828 = vmax.f32 %v6827, %v4995
    %v6829 = vmax.f32 %v6828, %v5001
    %v6830 = vmax.f32 %v6829, %v5005
    %v6831 = vmax.f32 %v6830, %v5011
    %v6832 = vmax.f32 %v6831, %v5015
    %v6833 = vmax.f32 %v6832, %v5021
    %v6834 = vmax.f32 %v6833, %v5025
    %v6835 = vmax.f32 %v6834, %v5031
    %v6836 = vmax.f32 %v6835, %v5035
    %v6837 = vmax.f32 %v6836, %v5041
    %v6838 = vmax.f32 %v6837, %v5045
    %v6839 = vmax.f32 %v6838, %v5051
    %v6840 = vmax.f32 %v6839, %v5055
    %v6841 = vmax.f32 %v6840, %v5061
    %v6842 = vmax.f32 %v6841, %v5065
    %v6843 = vmax.f32 %v6842, %v5071
    %v6844 = vmax.f32 %v6843, %v5075
    %v6845 = vmax.f32 %v6844, %v5081
    %v6846 = vmax.f32 %v6845, %v5085
    %v6847 = vmax.f32 %v6846, %v5091
    %v6848 = vmax.f32 %v6847, %v5095
    %v6849 = vmax.f32 %v6848, %v5101
    %v6850 = vmax.f32 %v6849, %v5105
    %v6851 = vmax.f32 %v6850, %v5111
    %v6852 = vmax.f32 %v6851, %v5115
    %v6853 = vrot.slane %v6852, 4
    %v6854 = vmax.f32 %v6852, %v6853
    %v6855 = vrot.slane %v6854, 2
    %v6856 = vmax.f32 %v6854, %v6855
    %v6857 = vrot.slane %v6856, 1
    %v6858 = vmax.f32 %v6856, %v6857
    %v6859 = vmax.f32 %v5312, %v5316
    %v6860 = vmax.f32 %v6859, %v5322
    %v6861 = vmax.f32 %v6860, %v5326
    %v6862 = vmax.f32 %v6861, %v5332
    %v6863 = vmax.f32 %v6862, %v5336
    %v6864 = vmax.f32 %v6863, %v5342
    %v6865 = vmax.f32 %v6864, %v5346
    %v6866 = vmax.f32 %v6865, %v5352
    %v6867 = vmax.f32 %v6866, %v5356
    %v6868 = vmax.f32 %v6867, %v5362
    %v6869 = vmax.f32 %v6868, %v5366
    %v6870 = vmax.f32 %v6869, %v5372
    %v6871 = vmax.f32 %v6870, %v5376
    %v6872 = vmax.f32 %v6871, %v5382
    %v6873 = vmax.f32 %v6872, %v5386
    %v6874 = vmax.f32 %v6873, %v5392
    %v6875 = vmax.f32 %v6874, %v5396
    %v6876 = vmax.f32 %v6875, %v5402
    %v6877 = vmax.f32 %v6876, %v5406
    %v6878 = vmax.f32 %v6877, %v5412
    %v6879 = vmax.f32 %v6878, %v5416
    %v6880 = vmax.f32 %v6879, %v5422
    %v6881 = vmax.f32 %v6880, %v5426
    %v6882 = vmax.f32 %v6881, %v5432
    %v6883 = vmax.f32 %v6882, %v5436
    %v6884 = vmax.f32 %v6883, %v5442
    %v6885 = vmax.f32 %v6884, %v5446
    %v6886 = vmax.f32 %v6885, %v5452
    %v6887 = vmax.f32 %v6886, %v5456
    %v6888 = vmax.f32 %v6887, %v5462
    %v6889 = vmax.f32 %v6888, %v5466
    %v6890 = vrot.slane %v6889, 4
    %v6891 = vmax.f32 %v6889, %v6890
    %v6892 = vrot.slane %v6891, 2
    %v6893 = vmax.f32 %v6891, %v6892
    %v6894 = vrot.slane %v6893, 1
    %v6895 = vmax.f32 %v6893, %v6894
    %v6896 = vmax.f32 %v5314, %v5318
    %v6897 = vmax.f32 %v6896, %v5324
    %v6898 = vmax.f32 %v6897, %v5328
    %v6899 = vmax.f32 %v6898, %v5334
    %v6900 = vmax.f32 %v6899, %v5338
    %v6901 = vmax.f32 %v6900, %v5344
    %v6902 = vmax.f32 %v6901, %v5348
    %v6903 = vmax.f32 %v6902, %v5354
    %v6904 = vmax.f32 %v6903, %v5358
    %v6905 = vmax.f32 %v6904, %v5364
    %v6906 = vmax.f32 %v6905, %v5368
    %v6907 = vmax.f32 %v6906, %v5374
    %v6908 = vmax.f32 %v6907, %v5378
    %v6909 = vmax.f32 %v6908, %v5384
    %v6910 = vmax.f32 %v6909, %v5388
    %v6911 = vmax.f32 %v6910, %v5394
    %v6912 = vmax.f32 %v6911, %v5398
    %v6913 = vmax.f32 %v6912, %v5404
    %v6914 = vmax.f32 %v6913, %v5408
    %v6915 = vmax.f32 %v6914, %v5414
    %v6916 = vmax.f32 %v6915, %v5418
    %v6917 = vmax.f32 %v6916, %v5424
    %v6918 = vmax.f32 %v6917, %v5428
    %v6919 = vmax.f32 %v6918, %v5434
    %v6920 = vmax.f32 %v6919, %v5438
    %v6921 = vmax.f32 %v6920, %v5444
    %v6922 = vmax.f32 %v6921, %v5448
    %v6923 = vmax.f32 %v6922, %v5454
    %v6924 = vmax.f32 %v6923, %v5458
    %v6925 = vmax.f32 %v6924, %v5464
    %v6926 = vmax.f32 %v6925, %v5468
    %v6927 = vrot.slane %v6926, 4
    %v6928 = vmax.f32 %v6926, %v6927
    %v6929 = vrot.slane %v6928, 2
    %v6930 = vmax.f32 %v6928, %v6929
    %v6931 = vrot.slane %v6930, 1
    %v6932 = vmax.f32 %v6930, %v6931
    %v6933 = vmax.f32 %v5665, %v5669
    %v6934 = vmax.f32 %v6933, %v5675
    %v6935 = vmax.f32 %v6934, %v5679
    %v6936 = vmax.f32 %v6935, %v5685
    %v6937 = vmax.f32 %v6936, %v5689
    %v6938 = vmax.f32 %v6937, %v5695
    %v6939 = vmax.f32 %v6938, %v5699
    %v6940 = vmax.f32 %v6939, %v5705
    %v6941 = vmax.f32 %v6940, %v5709
    %v6942 = vmax.f32 %v6941, %v5715
    %v6943 = vmax.f32 %v6942, %v5719
    %v6944 = vmax.f32 %v6943, %v5725
    %v6945 = vmax.f32 %v6944, %v5729
    %v6946 = vmax.f32 %v6945, %v5735
    %v6947 = vmax.f32 %v6946, %v5739
    %v6948 = vmax.f32 %v6947, %v5745
    %v6949 = vmax.f32 %v6948, %v5749
    %v6950 = vmax.f32 %v6949, %v5755
    %v6951 = vmax.f32 %v6950, %v5759
    %v6952 = vmax.f32 %v6951, %v5765
    %v6953 = vmax.f32 %v6952, %v5769
    %v6954 = vmax.f32 %v6953, %v5775
    %v6955 = vmax.f32 %v6954, %v5779
    %v6956 = vmax.f32 %v6955, %v5785
    %v6957 = vmax.f32 %v6956, %v5789
    %v6958 = vmax.f32 %v6957, %v5795
    %v6959 = vmax.f32 %v6958, %v5799
    %v6960 = vmax.f32 %v6959, %v5805
    %v6961 = vmax.f32 %v6960, %v5809
    %v6962 = vmax.f32 %v6961, %v5815
    %v6963 = vmax.f32 %v6962, %v5819
    %v6964 = vrot.slane %v6963, 4
    %v6965 = vmax.f32 %v6963, %v6964
    %v6966 = vrot.slane %v6965, 2
    %v6967 = vmax.f32 %v6965, %v6966
    %v6968 = vrot.slane %v6967, 1
    %v6969 = vmax.f32 %v6967, %v6968
    %v6970 = vmax.f32 %v5667, %v5671
    %v6971 = vmax.f32 %v6970, %v5677
    %v6972 = vmax.f32 %v6971, %v5681
    %v6973 = vmax.f32 %v6972, %v5687
    %v6974 = vmax.f32 %v6973, %v5691
    %v6975 = vmax.f32 %v6974, %v5697
    %v6976 = vmax.f32 %v6975, %v5701
    %v6977 = vmax.f32 %v6976, %v5707
    %v6978 = vmax.f32 %v6977, %v5711
    %v6979 = vmax.f32 %v6978, %v5717
    %v6980 = vmax.f32 %v6979, %v5721
    %v6981 = vmax.f32 %v6980, %v5727
    %v6982 = vmax.f32 %v6981, %v5731
    %v6983 = vmax.f32 %v6982, %v5737
    %v6984 = vmax.f32 %v6983, %v5741
    %v6985 = vmax.f32 %v6984, %v5747
    %v6986 = vmax.f32 %v6985, %v5751
    %v6987 = vmax.f32 %v6986, %v5757
    %v6988 = vmax.f32 %v6987, %v5761
    %v6989 = vmax.f32 %v6988, %v5767
    %v6990 = vmax.f32 %v6989, %v5771
    %v6991 = vmax.f32 %v6990, %v5777
    %v6992 = vmax.f32 %v6991, %v5781
    %v6993 = vmax.f32 %v6992, %v5787
    %v6994 = vmax.f32 %v6993, %v5791
    %v6995 = vmax.f32 %v6994, %v5797
    %v6996 = vmax.f32 %v6995, %v5801
    %v6997 = vmax.f32 %v6996, %v5807
    %v6998 = vmax.f32 %v6997, %v5811
    %v6999 = vmax.f32 %v6998, %v5817
    %v7000 = vmax.f32 %v6999, %v5821
    %v7001 = vrot.slane %v7000, 4
    %v7002 = vmax.f32 %v7000, %v7001
    %v7003 = vrot.slane %v7002, 2
    %v7004 = vmax.f32 %v7002, %v7003
    %v7005 = vrot.slane %v7004, 1
    %v7006 = vmax.f32 %v7004, %v7005
    %s7007 = smul.u32 4, 256
    %s7008 = smul.u32 %s7007, 4
    %s7009 = sshll.u32 %s7008, 4
    %7010 = dma.done [#allocation5], %s7009
    %v7011 = vpack.c.bf16 %v5859, %v5859
    %v7012 = vpack.c.bf16 %v5896, %v5896
    %v7013 = vpack.c.bf16 %v5933, %v5933
    %v7014 = vpack.c.bf16 %v5970, %v5970
    %v7015 = vpack.c.bf16 %v6007, %v6007
    %v7016 = vpack.c.bf16 %v6044, %v6044
    %v7017 = vpack.c.bf16 %v6081, %v6081
    %v7018 = vpack.c.bf16 %v6118, %v6118
    %v7019 = vpack.c.bf16 %v6155, %v6155
    %v7020 = vpack.c.bf16 %v6192, %v6192
    %v7021 = vpack.c.bf16 %v6229, %v6229
    %v7022 = vpack.c.bf16 %v6266, %v6266
    %v7023 = vpack.c.bf16 %v6303, %v6303
    %v7024 = vpack.c.bf16 %v6340, %v6340
    %v7025 = vpack.c.bf16 %v6377, %v6377
    %v7026 = vpack.c.bf16 %v6414, %v6414
    %v7027 = vpack.c.bf16 %v6451, %v6451
    %v7028 = vpack.c.bf16 %v6488, %v6488
    %v7029 = vpack.c.bf16 %v6525, %v6525
    %v7030 = vpack.c.bf16 %v6562, %v6562
    %v7031 = vpack.c.bf16 %v6599, %v6599
    %v7032 = vpack.c.bf16 %v6636, %v6636
    %v7033 = vpack.c.bf16 %v6673, %v6673
    %v7034 = vpack.c.bf16 %v6710, %v6710
    %v7035 = vpack.c.bf16 %v6747, %v6747
    %v7036 = vpack.c.bf16 %v6784, %v6784
    %v7037 = vpack.c.bf16 %v6821, %v6821
    %v7038 = vpack.c.bf16 %v6858, %v6858
    %v7039 = vpack.c.bf16 %v6895, %v6895
    %v7040 = vpack.c.bf16 %v6932, %v6932
    %v7041 = vpack.c.bf16 %v6969, %v6969
    %v7042 = vpack.c.bf16 %v7006, %v7006
    %v7043 = vld [vmem:[#allocation2] sm:$0xff]
    %v7044 = vld [vmem:[#allocation2 + $0x8] sm:$0xff]
    %v7045 = vld [vmem:[#allocation2 + $0x10] sm:$0xff]
    %v7046 = vld [vmem:[#allocation2 + $0x18] sm:$0xff]
    %v7047 = vld [vmem:[#allocation2 + $0x20] sm:$0xff]
    %v7048 = vld [vmem:[#allocation2 + $0x28] sm:$0xff]
    %v7049 = vld [vmem:[#allocation2 + $0x30] sm:$0xff]
    %v7050 = vld [vmem:[#allocation2 + $0x38] sm:$0xff]
    %v7051 = vld [vmem:[#allocation2 + $0x40] sm:$0xff]
    %v7052 = vld [vmem:[#allocation2 + $0x48] sm:$0xff]
    %v7053 = vld [vmem:[#allocation2 + $0x50] sm:$0xff]
    %v7054 = vld [vmem:[#allocation2 + $0x58] sm:$0xff]
    %v7055 = vld [vmem:[#allocation2 + $0x60] sm:$0xff]
    %v7056 = vld [vmem:[#allocation2 + $0x68] sm:$0xff]
    %v7057 = vld [vmem:[#allocation2 + $0x70] sm:$0xff]
    %v7058 = vld [vmem:[#allocation2 + $0x78] sm:$0xff]
    %v7059 = vld [vmem:[#allocation2 + $0x80] sm:$0xff]
    %v7060 = vld [vmem:[#allocation2 + $0x88] sm:$0xff]
    %v7061 = vld [vmem:[#allocation2 + $0x90] sm:$0xff]
    %v7062 = vld [vmem:[#allocation2 + $0x98] sm:$0xff]
    %v7063 = vld [vmem:[#allocation2 + $0xa0] sm:$0xff]
    %v7064 = vld [vmem:[#allocation2 + $0xa8] sm:$0xff]
    %v7065 = vld [vmem:[#allocation2 + $0xb0] sm:$0xff]
    %v7066 = vld [vmem:[#allocation2 + $0xb8] sm:$0xff]
    %v7067 = vld [vmem:[#allocation2 + $0xc0] sm:$0xff]
    %v7068 = vld [vmem:[#allocation2 + $0xc8] sm:$0xff]
    %v7069 = vld [vmem:[#allocation2 + $0xd0] sm:$0xff]
    %v7070 = vld [vmem:[#allocation2 + $0xd8] sm:$0xff]
    %v7071 = vld [vmem:[#allocation2 + $0xe0] sm:$0xff]
    %v7072 = vld [vmem:[#allocation2 + $0xe8] sm:$0xff]
    %v7073 = vld [vmem:[#allocation2 + $0xf0] sm:$0xff]
    %v7074 = vld [vmem:[#allocation2 + $0xf8] sm:$0xff]
    %v7075 = vld [vmem:[#allocation2 + $0x100] sm:$0xff]
    %v7076 = vld [vmem:[#allocation2 + $0x108] sm:$0xff]
    %v7077 = vld [vmem:[#allocation2 + $0x110] sm:$0xff]
    %v7078 = vld [vmem:[#allocation2 + $0x118] sm:$0xff]
    %v7079 = vld [vmem:[#allocation2 + $0x120] sm:$0xff]
    %v7080 = vld [vmem:[#allocation2 + $0x128] sm:$0xff]
    %v7081 = vld [vmem:[#allocation2 + $0x130] sm:$0xff]
    %v7082 = vld [vmem:[#allocation2 + $0x138] sm:$0xff]
    %v7083 = vld [vmem:[#allocation2 + $0x140] sm:$0xff]
    %v7084 = vld [vmem:[#allocation2 + $0x148] sm:$0xff]
    %v7085 = vld [vmem:[#allocation2 + $0x150] sm:$0xff]
    %v7086 = vld [vmem:[#allocation2 + $0x158] sm:$0xff]
    %v7087 = vld [vmem:[#allocation2 + $0x160] sm:$0xff]
    %v7088 = vld [vmem:[#allocation2 + $0x168] sm:$0xff]
    %v7089 = vld [vmem:[#allocation2 + $0x170] sm:$0xff]
    %v7090 = vld [vmem:[#allocation2 + $0x178] sm:$0xff]
    %v7091 = vld [vmem:[#allocation2 + $0x180] sm:$0xff]
    %v7092 = vld [vmem:[#allocation2 + $0x188] sm:$0xff]
    %v7093 = vld [vmem:[#allocation2 + $0x190] sm:$0xff]
    %v7094 = vld [vmem:[#allocation2 + $0x198] sm:$0xff]
    %v7095 = vld [vmem:[#allocation2 + $0x1a0] sm:$0xff]
    %v7096 = vld [vmem:[#allocation2 + $0x1a8] sm:$0xff]
    %v7097 = vld [vmem:[#allocation2 + $0x1b0] sm:$0xff]
    %v7098 = vld [vmem:[#allocation2 + $0x1b8] sm:$0xff]
    %v7099 = vld [vmem:[#allocation2 + $0x1c0] sm:$0xff]
    %v7100 = vld [vmem:[#allocation2 + $0x1c8] sm:$0xff]
    %v7101 = vld [vmem:[#allocation2 + $0x1d0] sm:$0xff]
    %v7102 = vld [vmem:[#allocation2 + $0x1d8] sm:$0xff]
    %v7103 = vld [vmem:[#allocation2 + $0x1e0] sm:$0xff]
    %v7104 = vld [vmem:[#allocation2 + $0x1e8] sm:$0xff]
    %v7105 = vld [vmem:[#allocation2 + $0x1f0] sm:$0xff]
    %v7106 = vld [vmem:[#allocation2 + $0x1f8] sm:$0xff]
    %v7107 = vld [vmem:[#allocation2 + $0x200] sm:$0xff]
    %v7108 = vld [vmem:[#allocation2 + $0x208] sm:$0xff]
    %v7109 = vld [vmem:[#allocation2 + $0x210] sm:$0xff]
    %v7110 = vld [vmem:[#allocation2 + $0x218] sm:$0xff]
    %v7111 = vld [vmem:[#allocation2 + $0x220] sm:$0xff]
    %v7112 = vld [vmem:[#allocation2 + $0x228] sm:$0xff]
    %v7113 = vld [vmem:[#allocation2 + $0x230] sm:$0xff]
    %v7114 = vld [vmem:[#allocation2 + $0x238] sm:$0xff]
    %v7115 = vld [vmem:[#allocation2 + $0x240] sm:$0xff]
    %v7116 = vld [vmem:[#allocation2 + $0x248] sm:$0xff]
    %v7117 = vld [vmem:[#allocation2 + $0x250] sm:$0xff]
    %v7118 = vld [vmem:[#allocation2 + $0x258] sm:$0xff]
    %v7119 = vld [vmem:[#allocation2 + $0x260] sm:$0xff]
    %v7120 = vld [vmem:[#allocation2 + $0x268] sm:$0xff]
    %v7121 = vld [vmem:[#allocation2 + $0x270] sm:$0xff]
    %v7122 = vld [vmem:[#allocation2 + $0x278] sm:$0xff]
    %v7123 = vld [vmem:[#allocation2 + $0x280] sm:$0xff]
    %v7124 = vld [vmem:[#allocation2 + $0x288] sm:$0xff]
    %v7125 = vld [vmem:[#allocation2 + $0x290] sm:$0xff]
    %v7126 = vld [vmem:[#allocation2 + $0x298] sm:$0xff]
    %v7127 = vld [vmem:[#allocation2 + $0x2a0] sm:$0xff]
    %v7128 = vld [vmem:[#allocation2 + $0x2a8] sm:$0xff]
    %v7129 = vld [vmem:[#allocation2 + $0x2b0] sm:$0xff]
    %v7130 = vld [vmem:[#allocation2 + $0x2b8] sm:$0xff]
    %v7131 = vld [vmem:[#allocation2 + $0x2c0] sm:$0xff]
    %v7132 = vld [vmem:[#allocation2 + $0x2c8] sm:$0xff]
    %v7133 = vld [vmem:[#allocation2 + $0x2d0] sm:$0xff]
    %v7134 = vld [vmem:[#allocation2 + $0x2d8] sm:$0xff]
    %v7135 = vld [vmem:[#allocation2 + $0x2e0] sm:$0xff]
    %v7136 = vld [vmem:[#allocation2 + $0x2e8] sm:$0xff]
    %v7137 = vld [vmem:[#allocation2 + $0x2f0] sm:$0xff]
    %v7138 = vld [vmem:[#allocation2 + $0x2f8] sm:$0xff]
    %v7139 = vld [vmem:[#allocation2 + $0x300] sm:$0xff]
    %v7140 = vld [vmem:[#allocation2 + $0x308] sm:$0xff]
    %v7141 = vld [vmem:[#allocation2 + $0x310] sm:$0xff]
    %v7142 = vld [vmem:[#allocation2 + $0x318] sm:$0xff]
    %v7143 = vld [vmem:[#allocation2 + $0x320] sm:$0xff]
    %v7144 = vld [vmem:[#allocation2 + $0x328] sm:$0xff]
    %v7145 = vld [vmem:[#allocation2 + $0x330] sm:$0xff]
    %v7146 = vld [vmem:[#allocation2 + $0x338] sm:$0xff]
    %v7147 = vld [vmem:[#allocation2 + $0x340] sm:$0xff]
    %v7148 = vld [vmem:[#allocation2 + $0x348] sm:$0xff]
    %v7149 = vld [vmem:[#allocation2 + $0x350] sm:$0xff]
    %v7150 = vld [vmem:[#allocation2 + $0x358] sm:$0xff]
    %v7151 = vld [vmem:[#allocation2 + $0x360] sm:$0xff]
    %v7152 = vld [vmem:[#allocation2 + $0x368] sm:$0xff]
    %v7153 = vld [vmem:[#allocation2 + $0x370] sm:$0xff]
    %v7154 = vld [vmem:[#allocation2 + $0x378] sm:$0xff]
    %v7155 = vld [vmem:[#allocation2 + $0x380] sm:$0xff]
    %v7156 = vld [vmem:[#allocation2 + $0x388] sm:$0xff]
    %v7157 = vld [vmem:[#allocation2 + $0x390] sm:$0xff]
    %v7158 = vld [vmem:[#allocation2 + $0x398] sm:$0xff]
    %v7159 = vld [vmem:[#allocation2 + $0x3a0] sm:$0xff]
    %v7160 = vld [vmem:[#allocation2 + $0x3a8] sm:$0xff]
    %v7161 = vld [vmem:[#allocation2 + $0x3b0] sm:$0xff]
    %v7162 = vld [vmem:[#allocation2 + $0x3b8] sm:$0xff]
    %v7163 = vld [vmem:[#allocation2 + $0x3c0] sm:$0xff]
    %v7164 = vld [vmem:[#allocation2 + $0x3c8] sm:$0xff]
    %v7165 = vld [vmem:[#allocation2 + $0x3d0] sm:$0xff]
    %v7166 = vld [vmem:[#allocation2 + $0x3d8] sm:$0xff]
    %v7167 = vld [vmem:[#allocation2 + $0x3e0] sm:$0xff]
    %v7168 = vld [vmem:[#allocation2 + $0x3e8] sm:$0xff]
    %v7169 = vld [vmem:[#allocation2 + $0x3f0] sm:$0xff]
    %v7170 = vld [vmem:[#allocation2 + $0x3f8] sm:$0xff]
    %v7171 = vld [vmem:[#allocation2 + $0x400] sm:$0xff]
    %v7172 = vld [vmem:[#allocation2 + $0x408] sm:$0xff]
    %v7173 = vld [vmem:[#allocation2 + $0x410] sm:$0xff]
    %v7174 = vld [vmem:[#allocation2 + $0x418] sm:$0xff]
    %v7175 = vld [vmem:[#allocation2 + $0x420] sm:$0xff]
    %v7176 = vld [vmem:[#allocation2 + $0x428] sm:$0xff]
    %v7177 = vld [vmem:[#allocation2 + $0x430] sm:$0xff]
    %v7178 = vld [vmem:[#allocation2 + $0x438] sm:$0xff]
    %v7179 = vld [vmem:[#allocation2 + $0x440] sm:$0xff]
    %v7180 = vld [vmem:[#allocation2 + $0x448] sm:$0xff]
    %v7181 = vld [vmem:[#allocation2 + $0x450] sm:$0xff]
    %v7182 = vld [vmem:[#allocation2 + $0x458] sm:$0xff]
    %v7183 = vld [vmem:[#allocation2 + $0x460] sm:$0xff]
    %v7184 = vld [vmem:[#allocation2 + $0x468] sm:$0xff]
    %v7185 = vld [vmem:[#allocation2 + $0x470] sm:$0xff]
    %v7186 = vld [vmem:[#allocation2 + $0x478] sm:$0xff]
    %v7187 = vld [vmem:[#allocation2 + $0x480] sm:$0xff]
    %v7188 = vld [vmem:[#allocation2 + $0x488] sm:$0xff]
    %v7189 = vld [vmem:[#allocation2 + $0x490] sm:$0xff]
    %v7190 = vld [vmem:[#allocation2 + $0x498] sm:$0xff]
    %v7191 = vld [vmem:[#allocation2 + $0x4a0] sm:$0xff]
    %v7192 = vld [vmem:[#allocation2 + $0x4a8] sm:$0xff]
    %v7193 = vld [vmem:[#allocation2 + $0x4b0] sm:$0xff]
    %v7194 = vld [vmem:[#allocation2 + $0x4b8] sm:$0xff]
    %v7195 = vld [vmem:[#allocation2 + $0x4c0] sm:$0xff]
    %v7196 = vld [vmem:[#allocation2 + $0x4c8] sm:$0xff]
    %v7197 = vld [vmem:[#allocation2 + $0x4d0] sm:$0xff]
    %v7198 = vld [vmem:[#allocation2 + $0x4d8] sm:$0xff]
    %v7199 = vld [vmem:[#allocation2 + $0x4e0] sm:$0xff]
    %v7200 = vld [vmem:[#allocation2 + $0x4e8] sm:$0xff]
    %v7201 = vld [vmem:[#allocation2 + $0x4f0] sm:$0xff]
    %v7202 = vld [vmem:[#allocation2 + $0x4f8] sm:$0xff]
    %v7203 = vld [vmem:[#allocation2 + $0x500] sm:$0xff]
    %v7204 = vld [vmem:[#allocation2 + $0x508] sm:$0xff]
    %v7205 = vld [vmem:[#allocation2 + $0x510] sm:$0xff]
    %v7206 = vld [vmem:[#allocation2 + $0x518] sm:$0xff]
    %v7207 = vld [vmem:[#allocation2 + $0x520] sm:$0xff]
    %v7208 = vld [vmem:[#allocation2 + $0x528] sm:$0xff]
    %v7209 = vld [vmem:[#allocation2 + $0x530] sm:$0xff]
    %v7210 = vld [vmem:[#allocation2 + $0x538] sm:$0xff]
    %v7211 = vld [vmem:[#allocation2 + $0x540] sm:$0xff]
    %v7212 = vld [vmem:[#allocation2 + $0x548] sm:$0xff]
    %v7213 = vld [vmem:[#allocation2 + $0x550] sm:$0xff]
    %v7214 = vld [vmem:[#allocation2 + $0x558] sm:$0xff]
    %v7215 = vld [vmem:[#allocation2 + $0x560] sm:$0xff]
    %v7216 = vld [vmem:[#allocation2 + $0x568] sm:$0xff]
    %v7217 = vld [vmem:[#allocation2 + $0x570] sm:$0xff]
    %v7218 = vld [vmem:[#allocation2 + $0x578] sm:$0xff]
    %v7219 = vld [vmem:[#allocation2 + $0x580] sm:$0xff]
    %v7220 = vld [vmem:[#allocation2 + $0x588] sm:$0xff]
    %v7221 = vld [vmem:[#allocation2 + $0x590] sm:$0xff]
    %v7222 = vld [vmem:[#allocation2 + $0x598] sm:$0xff]
    %v7223 = vld [vmem:[#allocation2 + $0x5a0] sm:$0xff]
    %v7224 = vld [vmem:[#allocation2 + $0x5a8] sm:$0xff]
    %v7225 = vld [vmem:[#allocation2 + $0x5b0] sm:$0xff]
    %v7226 = vld [vmem:[#allocation2 + $0x5b8] sm:$0xff]
    %v7227 = vld [vmem:[#allocation2 + $0x5c0] sm:$0xff]
    %v7228 = vld [vmem:[#allocation2 + $0x5c8] sm:$0xff]
    %v7229 = vld [vmem:[#allocation2 + $0x5d0] sm:$0xff]
    %v7230 = vld [vmem:[#allocation2 + $0x5d8] sm:$0xff]
    %v7231 = vld [vmem:[#allocation2 + $0x5e0] sm:$0xff]
    %v7232 = vld [vmem:[#allocation2 + $0x5e8] sm:$0xff]
    %v7233 = vld [vmem:[#allocation2 + $0x5f0] sm:$0xff]
    %v7234 = vld [vmem:[#allocation2 + $0x5f8] sm:$0xff]
    %v7235 = vld [vmem:[#allocation2 + $0x600] sm:$0xff]
    %v7236 = vld [vmem:[#allocation2 + $0x608] sm:$0xff]
    %v7237 = vld [vmem:[#allocation2 + $0x610] sm:$0xff]
    %v7238 = vld [vmem:[#allocation2 + $0x618] sm:$0xff]
    %v7239 = vld [vmem:[#allocation2 + $0x620] sm:$0xff]
    %v7240 = vld [vmem:[#allocation2 + $0x628] sm:$0xff]
    %v7241 = vld [vmem:[#allocation2 + $0x630] sm:$0xff]
    %v7242 = vld [vmem:[#allocation2 + $0x638] sm:$0xff]
    %v7243 = vld [vmem:[#allocation2 + $0x640] sm:$0xff]
    %v7244 = vld [vmem:[#allocation2 + $0x648] sm:$0xff]
    %v7245 = vld [vmem:[#allocation2 + $0x650] sm:$0xff]
    %v7246 = vld [vmem:[#allocation2 + $0x658] sm:$0xff]
    %v7247 = vld [vmem:[#allocation2 + $0x660] sm:$0xff]
    %v7248 = vld [vmem:[#allocation2 + $0x668] sm:$0xff]
    %v7249 = vld [vmem:[#allocation2 + $0x670] sm:$0xff]
    %v7250 = vld [vmem:[#allocation2 + $0x678] sm:$0xff]
    %v7251 = vld [vmem:[#allocation2 + $0x680] sm:$0xff]
    %v7252 = vld [vmem:[#allocation2 + $0x688] sm:$0xff]
    %v7253 = vld [vmem:[#allocation2 + $0x690] sm:$0xff]
    %v7254 = vld [vmem:[#allocation2 + $0x698] sm:$0xff]
    %v7255 = vld [vmem:[#allocation2 + $0x6a0] sm:$0xff]
    %v7256 = vld [vmem:[#allocation2 + $0x6a8] sm:$0xff]
    %v7257 = vld [vmem:[#allocation2 + $0x6b0] sm:$0xff]
    %v7258 = vld [vmem:[#allocation2 + $0x6b8] sm:$0xff]
    %v7259 = vld [vmem:[#allocation2 + $0x6c0] sm:$0xff]
    %v7260 = vld [vmem:[#allocation2 + $0x6c8] sm:$0xff]
    %v7261 = vld [vmem:[#allocation2 + $0x6d0] sm:$0xff]
    %v7262 = vld [vmem:[#allocation2 + $0x6d8] sm:$0xff]
    %v7263 = vld [vmem:[#allocation2 + $0x6e0] sm:$0xff]
    %v7264 = vld [vmem:[#allocation2 + $0x6e8] sm:$0xff]
    %v7265 = vld [vmem:[#allocation2 + $0x6f0] sm:$0xff]
    %v7266 = vld [vmem:[#allocation2 + $0x6f8] sm:$0xff]
    %v7267 = vld [vmem:[#allocation2 + $0x700] sm:$0xff]
    %v7268 = vld [vmem:[#allocation2 + $0x708] sm:$0xff]
    %v7269 = vld [vmem:[#allocation2 + $0x710] sm:$0xff]
    %v7270 = vld [vmem:[#allocation2 + $0x718] sm:$0xff]
    %v7271 = vld [vmem:[#allocation2 + $0x720] sm:$0xff]
    %v7272 = vld [vmem:[#allocation2 + $0x728] sm:$0xff]
    %v7273 = vld [vmem:[#allocation2 + $0x730] sm:$0xff]
    %v7274 = vld [vmem:[#allocation2 + $0x738] sm:$0xff]
    %v7275 = vld [vmem:[#allocation2 + $0x740] sm:$0xff]
    %v7276 = vld [vmem:[#allocation2 + $0x748] sm:$0xff]
    %v7277 = vld [vmem:[#allocation2 + $0x750] sm:$0xff]
    %v7278 = vld [vmem:[#allocation2 + $0x758] sm:$0xff]
    %v7279 = vld [vmem:[#allocation2 + $0x760] sm:$0xff]
    %v7280 = vld [vmem:[#allocation2 + $0x768] sm:$0xff]
    %v7281 = vld [vmem:[#allocation2 + $0x770] sm:$0xff]
    %v7282 = vld [vmem:[#allocation2 + $0x778] sm:$0xff]
    %v7283 = vld [vmem:[#allocation2 + $0x780] sm:$0xff]
    %v7284 = vld [vmem:[#allocation2 + $0x788] sm:$0xff]
    %v7285 = vld [vmem:[#allocation2 + $0x790] sm:$0xff]
    %v7286 = vld [vmem:[#allocation2 + $0x798] sm:$0xff]
    %v7287 = vld [vmem:[#allocation2 + $0x7a0] sm:$0xff]
    %v7288 = vld [vmem:[#allocation2 + $0x7a8] sm:$0xff]
    %v7289 = vld [vmem:[#allocation2 + $0x7b0] sm:$0xff]
    %v7290 = vld [vmem:[#allocation2 + $0x7b8] sm:$0xff]
    %v7291 = vld [vmem:[#allocation2 + $0x7c0] sm:$0xff]
    %v7292 = vld [vmem:[#allocation2 + $0x7c8] sm:$0xff]
    %v7293 = vld [vmem:[#allocation2 + $0x7d0] sm:$0xff]
    %v7294 = vld [vmem:[#allocation2 + $0x7d8] sm:$0xff]
    %v7295 = vld [vmem:[#allocation2 + $0x7e0] sm:$0xff]
    %v7296 = vld [vmem:[#allocation2 + $0x7e8] sm:$0xff]
    %v7297 = vld [vmem:[#allocation2 + $0x7f0] sm:$0xff]
    %v7298 = vld [vmem:[#allocation2 + $0x7f8] sm:$0xff]
    %v7299 = vld [vmem:[#allocation2 + $0x800] sm:$0xff]
    %v7300 = vld [vmem:[#allocation2 + $0x808] sm:$0xff]
    %v7301 = vld [vmem:[#allocation2 + $0x810] sm:$0xff]
    %v7302 = vld [vmem:[#allocation2 + $0x818] sm:$0xff]
    %v7303 = vld [vmem:[#allocation2 + $0x820] sm:$0xff]
    %v7304 = vld [vmem:[#allocation2 + $0x828] sm:$0xff]
    %v7305 = vld [vmem:[#allocation2 + $0x830] sm:$0xff]
    %v7306 = vld [vmem:[#allocation2 + $0x838] sm:$0xff]
    %v7307 = vld [vmem:[#allocation2 + $0x840] sm:$0xff]
    %v7308 = vld [vmem:[#allocation2 + $0x848] sm:$0xff]
    %v7309 = vld [vmem:[#allocation2 + $0x850] sm:$0xff]
    %v7310 = vld [vmem:[#allocation2 + $0x858] sm:$0xff]
    %v7311 = vld [vmem:[#allocation2 + $0x860] sm:$0xff]
    %v7312 = vld [vmem:[#allocation2 + $0x868] sm:$0xff]
    %v7313 = vld [vmem:[#allocation2 + $0x870] sm:$0xff]
    %v7314 = vld [vmem:[#allocation2 + $0x878] sm:$0xff]
    %v7315 = vld [vmem:[#allocation2 + $0x880] sm:$0xff]
    %v7316 = vld [vmem:[#allocation2 + $0x888] sm:$0xff]
    %v7317 = vld [vmem:[#allocation2 + $0x890] sm:$0xff]
    %v7318 = vld [vmem:[#allocation2 + $0x898] sm:$0xff]
    %v7319 = vld [vmem:[#allocation2 + $0x8a0] sm:$0xff]
    %v7320 = vld [vmem:[#allocation2 + $0x8a8] sm:$0xff]
    %v7321 = vld [vmem:[#allocation2 + $0x8b0] sm:$0xff]
    %v7322 = vld [vmem:[#allocation2 + $0x8b8] sm:$0xff]
    %v7323 = vld [vmem:[#allocation2 + $0x8c0] sm:$0xff]
    %v7324 = vld [vmem:[#allocation2 + $0x8c8] sm:$0xff]
    %v7325 = vld [vmem:[#allocation2 + $0x8d0] sm:$0xff]
    %v7326 = vld [vmem:[#allocation2 + $0x8d8] sm:$0xff]
    %v7327 = vld [vmem:[#allocation2 + $0x8e0] sm:$0xff]
    %v7328 = vld [vmem:[#allocation2 + $0x8e8] sm:$0xff]
    %v7329 = vld [vmem:[#allocation2 + $0x8f0] sm:$0xff]
    %v7330 = vld [vmem:[#allocation2 + $0x8f8] sm:$0xff]
    %v7331 = vld [vmem:[#allocation2 + $0x900] sm:$0xff]
    %v7332 = vld [vmem:[#allocation2 + $0x908] sm:$0xff]
    %v7333 = vld [vmem:[#allocation2 + $0x910] sm:$0xff]
    %v7334 = vld [vmem:[#allocation2 + $0x918] sm:$0xff]
    %v7335 = vld [vmem:[#allocation2 + $0x920] sm:$0xff]
    %v7336 = vld [vmem:[#allocation2 + $0x928] sm:$0xff]
    %v7337 = vld [vmem:[#allocation2 + $0x930] sm:$0xff]
    %v7338 = vld [vmem:[#allocation2 + $0x938] sm:$0xff]
    %v7339 = vld [vmem:[#allocation2 + $0x940] sm:$0xff]
    %v7340 = vld [vmem:[#allocation2 + $0x948] sm:$0xff]
    %v7341 = vld [vmem:[#allocation2 + $0x950] sm:$0xff]
    %v7342 = vld [vmem:[#allocation2 + $0x958] sm:$0xff]
    %v7343 = vld [vmem:[#allocation2 + $0x960] sm:$0xff]
    %v7344 = vld [vmem:[#allocation2 + $0x968] sm:$0xff]
    %v7345 = vld [vmem:[#allocation2 + $0x970] sm:$0xff]
    %v7346 = vld [vmem:[#allocation2 + $0x978] sm:$0xff]
    %v7347 = vld [vmem:[#allocation2 + $0x980] sm:$0xff]
    %v7348 = vld [vmem:[#allocation2 + $0x988] sm:$0xff]
    %v7349 = vld [vmem:[#allocation2 + $0x990] sm:$0xff]
    %v7350 = vld [vmem:[#allocation2 + $0x998] sm:$0xff]
    %v7351 = vld [vmem:[#allocation2 + $0x9a0] sm:$0xff]
    %v7352 = vld [vmem:[#allocation2 + $0x9a8] sm:$0xff]
    %v7353 = vld [vmem:[#allocation2 + $0x9b0] sm:$0xff]
    %v7354 = vld [vmem:[#allocation2 + $0x9b8] sm:$0xff]
    %v7355 = vld [vmem:[#allocation2 + $0x9c0] sm:$0xff]
    %v7356 = vld [vmem:[#allocation2 + $0x9c8] sm:$0xff]
    %v7357 = vld [vmem:[#allocation2 + $0x9d0] sm:$0xff]
    %v7358 = vld [vmem:[#allocation2 + $0x9d8] sm:$0xff]
    %v7359 = vld [vmem:[#allocation2 + $0x9e0] sm:$0xff]
    %v7360 = vld [vmem:[#allocation2 + $0x9e8] sm:$0xff]
    %v7361 = vld [vmem:[#allocation2 + $0x9f0] sm:$0xff]
    %v7362 = vld [vmem:[#allocation2 + $0x9f8] sm:$0xff]
    %v7363 = vld [vmem:[#allocation2 + $0xa00] sm:$0xff]
    %v7364 = vld [vmem:[#allocation2 + $0xa08] sm:$0xff]
    %v7365 = vld [vmem:[#allocation2 + $0xa10] sm:$0xff]
    %v7366 = vld [vmem:[#allocation2 + $0xa18] sm:$0xff]
    %v7367 = vld [vmem:[#allocation2 + $0xa20] sm:$0xff]
    %v7368 = vld [vmem:[#allocation2 + $0xa28] sm:$0xff]
    %v7369 = vld [vmem:[#allocation2 + $0xa30] sm:$0xff]
    %v7370 = vld [vmem:[#allocation2 + $0xa38] sm:$0xff]
    %v7371 = vld [vmem:[#allocation2 + $0xa40] sm:$0xff]
    %v7372 = vld [vmem:[#allocation2 + $0xa48] sm:$0xff]
    %v7373 = vld [vmem:[#allocation2 + $0xa50] sm:$0xff]
    %v7374 = vld [vmem:[#allocation2 + $0xa58] sm:$0xff]
    %v7375 = vld [vmem:[#allocation2 + $0xa60] sm:$0xff]
    %v7376 = vld [vmem:[#allocation2 + $0xa68] sm:$0xff]
    %v7377 = vld [vmem:[#allocation2 + $0xa70] sm:$0xff]
    %v7378 = vld [vmem:[#allocation2 + $0xa78] sm:$0xff]
    %v7379 = vld [vmem:[#allocation2 + $0xa80] sm:$0xff]
    %v7380 = vld [vmem:[#allocation2 + $0xa88] sm:$0xff]
    %v7381 = vld [vmem:[#allocation2 + $0xa90] sm:$0xff]
    %v7382 = vld [vmem:[#allocation2 + $0xa98] sm:$0xff]
    %v7383 = vld [vmem:[#allocation2 + $0xaa0] sm:$0xff]
    %v7384 = vld [vmem:[#allocation2 + $0xaa8] sm:$0xff]
    %v7385 = vld [vmem:[#allocation2 + $0xab0] sm:$0xff]
    %v7386 = vld [vmem:[#allocation2 + $0xab8] sm:$0xff]
    %v7387 = vld [vmem:[#allocation2 + $0xac0] sm:$0xff]
    %v7388 = vld [vmem:[#allocation2 + $0xac8] sm:$0xff]
    %v7389 = vld [vmem:[#allocation2 + $0xad0] sm:$0xff]
    %v7390 = vld [vmem:[#allocation2 + $0xad8] sm:$0xff]
    %v7391 = vld [vmem:[#allocation2 + $0xae0] sm:$0xff]
    %v7392 = vld [vmem:[#allocation2 + $0xae8] sm:$0xff]
    %v7393 = vld [vmem:[#allocation2 + $0xaf0] sm:$0xff]
    %v7394 = vld [vmem:[#allocation2 + $0xaf8] sm:$0xff]
    %v7395 = vld [vmem:[#allocation2 + $0xb00] sm:$0xff]
    %v7396 = vld [vmem:[#allocation2 + $0xb08] sm:$0xff]
    %v7397 = vld [vmem:[#allocation2 + $0xb10] sm:$0xff]
    %v7398 = vld [vmem:[#allocation2 + $0xb18] sm:$0xff]
    %v7399 = vld [vmem:[#allocation2 + $0xb20] sm:$0xff]
    %v7400 = vld [vmem:[#allocation2 + $0xb28] sm:$0xff]
    %v7401 = vld [vmem:[#allocation2 + $0xb30] sm:$0xff]
    %v7402 = vld [vmem:[#allocation2 + $0xb38] sm:$0xff]
    %v7403 = vld [vmem:[#allocation2 + $0xb40] sm:$0xff]
    %v7404 = vld [vmem:[#allocation2 + $0xb48] sm:$0xff]
    %v7405 = vld [vmem:[#allocation2 + $0xb50] sm:$0xff]
    %v7406 = vld [vmem:[#allocation2 + $0xb58] sm:$0xff]
    %v7407 = vld [vmem:[#allocation2 + $0xb60] sm:$0xff]
    %v7408 = vld [vmem:[#allocation2 + $0xb68] sm:$0xff]
    %v7409 = vld [vmem:[#allocation2 + $0xb70] sm:$0xff]
    %v7410 = vld [vmem:[#allocation2 + $0xb78] sm:$0xff]
    %v7411 = vld [vmem:[#allocation2 + $0xb80] sm:$0xff]
    %v7412 = vld [vmem:[#allocation2 + $0xb88] sm:$0xff]
    %v7413 = vld [vmem:[#allocation2 + $0xb90] sm:$0xff]
    %v7414 = vld [vmem:[#allocation2 + $0xb98] sm:$0xff]
    %v7415 = vld [vmem:[#allocation2 + $0xba0] sm:$0xff]
    %v7416 = vld [vmem:[#allocation2 + $0xba8] sm:$0xff]
    %v7417 = vld [vmem:[#allocation2 + $0xbb0] sm:$0xff]
    %v7418 = vld [vmem:[#allocation2 + $0xbb8] sm:$0xff]
    %v7419 = vld [vmem:[#allocation2 + $0xbc0] sm:$0xff]
    %v7420 = vld [vmem:[#allocation2 + $0xbc8] sm:$0xff]
    %v7421 = vld [vmem:[#allocation2 + $0xbd0] sm:$0xff]
    %v7422 = vld [vmem:[#allocation2 + $0xbd8] sm:$0xff]
    %v7423 = vld [vmem:[#allocation2 + $0xbe0] sm:$0xff]
    %v7424 = vld [vmem:[#allocation2 + $0xbe8] sm:$0xff]
    %v7425 = vld [vmem:[#allocation2 + $0xbf0] sm:$0xff]
    %v7426 = vld [vmem:[#allocation2 + $0xbf8] sm:$0xff]
    %v7427 = vld [vmem:[#allocation2 + $0xc00] sm:$0xff]
    %v7428 = vld [vmem:[#allocation2 + $0xc08] sm:$0xff]
    %v7429 = vld [vmem:[#allocation2 + $0xc10] sm:$0xff]
    %v7430 = vld [vmem:[#allocation2 + $0xc18] sm:$0xff]
    %v7431 = vld [vmem:[#allocation2 + $0xc20] sm:$0xff]
    %v7432 = vld [vmem:[#allocation2 + $0xc28] sm:$0xff]
    %v7433 = vld [vmem:[#allocation2 + $0xc30] sm:$0xff]
    %v7434 = vld [vmem:[#allocation2 + $0xc38] sm:$0xff]
    %v7435 = vld [vmem:[#allocation2 + $0xc40] sm:$0xff]
    %v7436 = vld [vmem:[#allocation2 + $0xc48] sm:$0xff]
    %v7437 = vld [vmem:[#allocation2 + $0xc50] sm:$0xff]
    %v7438 = vld [vmem:[#allocation2 + $0xc58] sm:$0xff]
    %v7439 = vld [vmem:[#allocation2 + $0xc60] sm:$0xff]
    %v7440 = vld [vmem:[#allocation2 + $0xc68] sm:$0xff]
    %v7441 = vld [vmem:[#allocation2 + $0xc70] sm:$0xff]
    %v7442 = vld [vmem:[#allocation2 + $0xc78] sm:$0xff]
    %v7443 = vld [vmem:[#allocation2 + $0xc80] sm:$0xff]
    %v7444 = vld [vmem:[#allocation2 + $0xc88] sm:$0xff]
    %v7445 = vld [vmem:[#allocation2 + $0xc90] sm:$0xff]
    %v7446 = vld [vmem:[#allocation2 + $0xc98] sm:$0xff]
    %v7447 = vld [vmem:[#allocation2 + $0xca0] sm:$0xff]
    %v7448 = vld [vmem:[#allocation2 + $0xca8] sm:$0xff]
    %v7449 = vld [vmem:[#allocation2 + $0xcb0] sm:$0xff]
    %v7450 = vld [vmem:[#allocation2 + $0xcb8] sm:$0xff]
    %v7451 = vld [vmem:[#allocation2 + $0xcc0] sm:$0xff]
    %v7452 = vld [vmem:[#allocation2 + $0xcc8] sm:$0xff]
    %v7453 = vld [vmem:[#allocation2 + $0xcd0] sm:$0xff]
    %v7454 = vld [vmem:[#allocation2 + $0xcd8] sm:$0xff]
    %v7455 = vld [vmem:[#allocation2 + $0xce0] sm:$0xff]
    %v7456 = vld [vmem:[#allocation2 + $0xce8] sm:$0xff]
    %v7457 = vld [vmem:[#allocation2 + $0xcf0] sm:$0xff]
    %v7458 = vld [vmem:[#allocation2 + $0xcf8] sm:$0xff]
    %v7459 = vld [vmem:[#allocation2 + $0xd00] sm:$0xff]
    %v7460 = vld [vmem:[#allocation2 + $0xd08] sm:$0xff]
    %v7461 = vld [vmem:[#allocation2 + $0xd10] sm:$0xff]
    %v7462 = vld [vmem:[#allocation2 + $0xd18] sm:$0xff]
    %v7463 = vld [vmem:[#allocation2 + $0xd20] sm:$0xff]
    %v7464 = vld [vmem:[#allocation2 + $0xd28] sm:$0xff]
    %v7465 = vld [vmem:[#allocation2 + $0xd30] sm:$0xff]
    %v7466 = vld [vmem:[#allocation2 + $0xd38] sm:$0xff]
    %v7467 = vld [vmem:[#allocation2 + $0xd40] sm:$0xff]
    %v7468 = vld [vmem:[#allocation2 + $0xd48] sm:$0xff]
    %v7469 = vld [vmem:[#allocation2 + $0xd50] sm:$0xff]
    %v7470 = vld [vmem:[#allocation2 + $0xd58] sm:$0xff]
    %v7471 = vld [vmem:[#allocation2 + $0xd60] sm:$0xff]
    %v7472 = vld [vmem:[#allocation2 + $0xd68] sm:$0xff]
    %v7473 = vld [vmem:[#allocation2 + $0xd70] sm:$0xff]
    %v7474 = vld [vmem:[#allocation2 + $0xd78] sm:$0xff]
    %v7475 = vld [vmem:[#allocation2 + $0xd80] sm:$0xff]
    %v7476 = vld [vmem:[#allocation2 + $0xd88] sm:$0xff]
    %v7477 = vld [vmem:[#allocation2 + $0xd90] sm:$0xff]
    %v7478 = vld [vmem:[#allocation2 + $0xd98] sm:$0xff]
    %v7479 = vld [vmem:[#allocation2 + $0xda0] sm:$0xff]
    %v7480 = vld [vmem:[#allocation2 + $0xda8] sm:$0xff]
    %v7481 = vld [vmem:[#allocation2 + $0xdb0] sm:$0xff]
    %v7482 = vld [vmem:[#allocation2 + $0xdb8] sm:$0xff]
    %v7483 = vld [vmem:[#allocation2 + $0xdc0] sm:$0xff]
    %v7484 = vld [vmem:[#allocation2 + $0xdc8] sm:$0xff]
    %v7485 = vld [vmem:[#allocation2 + $0xdd0] sm:$0xff]
    %v7486 = vld [vmem:[#allocation2 + $0xdd8] sm:$0xff]
    %v7487 = vld [vmem:[#allocation2 + $0xde0] sm:$0xff]
    %v7488 = vld [vmem:[#allocation2 + $0xde8] sm:$0xff]
    %v7489 = vld [vmem:[#allocation2 + $0xdf0] sm:$0xff]
    %v7490 = vld [vmem:[#allocation2 + $0xdf8] sm:$0xff]
    %v7491 = vld [vmem:[#allocation2 + $0xe00] sm:$0xff]
    %v7492 = vld [vmem:[#allocation2 + $0xe08] sm:$0xff]
    %v7493 = vld [vmem:[#allocation2 + $0xe10] sm:$0xff]
    %v7494 = vld [vmem:[#allocation2 + $0xe18] sm:$0xff]
    %v7495 = vld [vmem:[#allocation2 + $0xe20] sm:$0xff]
    %v7496 = vld [vmem:[#allocation2 + $0xe28] sm:$0xff]
    %v7497 = vld [vmem:[#allocation2 + $0xe30] sm:$0xff]
    %v7498 = vld [vmem:[#allocation2 + $0xe38] sm:$0xff]
    %v7499 = vld [vmem:[#allocation2 + $0xe40] sm:$0xff]
    %v7500 = vld [vmem:[#allocation2 + $0xe48] sm:$0xff]
    %v7501 = vld [vmem:[#allocation2 + $0xe50] sm:$0xff]
    %v7502 = vld [vmem:[#allocation2 + $0xe58] sm:$0xff]
    %v7503 = vld [vmem:[#allocation2 + $0xe60] sm:$0xff]
    %v7504 = vld [vmem:[#allocation2 + $0xe68] sm:$0xff]
    %v7505 = vld [vmem:[#allocation2 + $0xe70] sm:$0xff]
    %v7506 = vld [vmem:[#allocation2 + $0xe78] sm:$0xff]
    %v7507 = vld [vmem:[#allocation2 + $0xe80] sm:$0xff]
    %v7508 = vld [vmem:[#allocation2 + $0xe88] sm:$0xff]
    %v7509 = vld [vmem:[#allocation2 + $0xe90] sm:$0xff]
    %v7510 = vld [vmem:[#allocation2 + $0xe98] sm:$0xff]
    %v7511 = vld [vmem:[#allocation2 + $0xea0] sm:$0xff]
    %v7512 = vld [vmem:[#allocation2 + $0xea8] sm:$0xff]
    %v7513 = vld [vmem:[#allocation2 + $0xeb0] sm:$0xff]
    %v7514 = vld [vmem:[#allocation2 + $0xeb8] sm:$0xff]
    %v7515 = vld [vmem:[#allocation2 + $0xec0] sm:$0xff]
    %v7516 = vld [vmem:[#allocation2 + $0xec8] sm:$0xff]
    %v7517 = vld [vmem:[#allocation2 + $0xed0] sm:$0xff]
    %v7518 = vld [vmem:[#allocation2 + $0xed8] sm:$0xff]
    %v7519 = vld [vmem:[#allocation2 + $0xee0] sm:$0xff]
    %v7520 = vld [vmem:[#allocation2 + $0xee8] sm:$0xff]
    %v7521 = vld [vmem:[#allocation2 + $0xef0] sm:$0xff]
    %v7522 = vld [vmem:[#allocation2 + $0xef8] sm:$0xff]
    %v7523 = vld [vmem:[#allocation2 + $0xf00] sm:$0xff]
    %v7524 = vld [vmem:[#allocation2 + $0xf08] sm:$0xff]
    %v7525 = vld [vmem:[#allocation2 + $0xf10] sm:$0xff]
    %v7526 = vld [vmem:[#allocation2 + $0xf18] sm:$0xff]
    %v7527 = vld [vmem:[#allocation2 + $0xf20] sm:$0xff]
    %v7528 = vld [vmem:[#allocation2 + $0xf28] sm:$0xff]
    %v7529 = vld [vmem:[#allocation2 + $0xf30] sm:$0xff]
    %v7530 = vld [vmem:[#allocation2 + $0xf38] sm:$0xff]
    %v7531 = vld [vmem:[#allocation2 + $0xf40] sm:$0xff]
    %v7532 = vld [vmem:[#allocation2 + $0xf48] sm:$0xff]
    %v7533 = vld [vmem:[#allocation2 + $0xf50] sm:$0xff]
    %v7534 = vld [vmem:[#allocation2 + $0xf58] sm:$0xff]
    %v7535 = vld [vmem:[#allocation2 + $0xf60] sm:$0xff]
    %v7536 = vld [vmem:[#allocation2 + $0xf68] sm:$0xff]
    %v7537 = vld [vmem:[#allocation2 + $0xf70] sm:$0xff]
    %v7538 = vld [vmem:[#allocation2 + $0xf78] sm:$0xff]
    %v7539 = vld [vmem:[#allocation2 + $0xf80] sm:$0xff]
    %v7540 = vld [vmem:[#allocation2 + $0xf88] sm:$0xff]
    %v7541 = vld [vmem:[#allocation2 + $0xf90] sm:$0xff]
    %v7542 = vld [vmem:[#allocation2 + $0xf98] sm:$0xff]
    %v7543 = vld [vmem:[#allocation2 + $0xfa0] sm:$0xff]
    %v7544 = vld [vmem:[#allocation2 + $0xfa8] sm:$0xff]
    %v7545 = vld [vmem:[#allocation2 + $0xfb0] sm:$0xff]
    %v7546 = vld [vmem:[#allocation2 + $0xfb8] sm:$0xff]
    %v7547 = vld [vmem:[#allocation2 + $0xfc0] sm:$0xff]
    %v7548 = vld [vmem:[#allocation2 + $0xfc8] sm:$0xff]
    %v7549 = vld [vmem:[#allocation2 + $0xfd0] sm:$0xff]
    %v7550 = vld [vmem:[#allocation2 + $0xfd8] sm:$0xff]
    %v7551 = vld [vmem:[#allocation2 + $0xfe0] sm:$0xff]
    %v7552 = vld [vmem:[#allocation2 + $0xfe8] sm:$0xff]
    %v7553 = vld [vmem:[#allocation2 + $0xff0] sm:$0xff]
    %v7554 = vld [vmem:[#allocation2 + $0xff8] sm:$0xff]
    %v7555 = vld [vmem:[#allocation17] sm:$0xf]
    %v7557 = vlaneseq
    %v7558 = vshrl.u32 %v7557, 7
    %v7559 = vsub.s32 0, %v7558
    %v7560 = vrot.slane %v7555, %v7559
    %v7561 = vlaneseq
    %v7562 = vshrl.u32 %v7561, 7
    %v7563 = vsub.s32 1, %v7562
    %v7564 = vrot.slane %v7555, %v7563
    %v7565 = vlaneseq
    %v7566 = vshrl.u32 %v7565, 7
    %v7567 = vsub.s32 2, %v7566
    %v7568 = vrot.slane %v7555, %v7567
    %v7569 = vlaneseq
    %v7570 = vshrl.u32 %v7569, 7
    %v7571 = vsub.s32 3, %v7570
    %v7572 = vrot.slane %v7555, %v7571
    %v7609 = vunpack.c.l.b16 %v7011
    %v7610 = vunpack.c.l.b16 %v7012
    %v7611 = vunpack.c.l.b16 %v7013
    %v7612 = vunpack.c.l.b16 %v7014
    %v7613 = vunpack.c.l.b16 %v7015
    %v7614 = vunpack.c.l.b16 %v7016
    %v7615 = vunpack.c.l.b16 %v7017
    %v7616 = vunpack.c.l.b16 %v7018
    %v7617 = vunpack.c.l.b16 %v7019
    %v7618 = vunpack.c.l.b16 %v7020
    %v7619 = vunpack.c.l.b16 %v7021
    %v7620 = vunpack.c.l.b16 %v7022
    %v7621 = vunpack.c.l.b16 %v7023
    %v7622 = vunpack.c.l.b16 %v7024
    %v7623 = vunpack.c.l.b16 %v7025
    %v7624 = vunpack.c.l.b16 %v7026
    %v7625 = vunpack.c.l.b16 %v7027
    %v7626 = vunpack.c.l.b16 %v7028
    %v7627 = vunpack.c.l.b16 %v7029
    %v7628 = vunpack.c.l.b16 %v7030
    %v7629 = vunpack.c.l.b16 %v7031
    %v7630 = vunpack.c.l.b16 %v7032
    %v7631 = vunpack.c.l.b16 %v7033
    %v7632 = vunpack.c.l.b16 %v7034
    %v7633 = vunpack.c.l.b16 %v7035
    %v7634 = vunpack.c.l.b16 %v7036
    %v7635 = vunpack.c.l.b16 %v7037
    %v7636 = vunpack.c.l.b16 %v7038
    %v7637 = vunpack.c.l.b16 %v7039
    %v7638 = vunpack.c.l.b16 %v7040
    %v7639 = vunpack.c.l.b16 %v7041
    %v7640 = vunpack.c.l.b16 %v7042
    %vm7641 = vcmask 1041409
    %v7642 = vsel %vm7641, %v7625, %v7609
    %v7643 = vsel %vm7641, %v7626, %v7610
    %v7644 = vsel %vm7641, %v7627, %v7611
    %v7645 = vsel %vm7641, %v7628, %v7612
    %v7646 = vsel %vm7641, %v7629, %v7613
    %v7647 = vsel %vm7641, %v7630, %v7614
    %v7648 = vsel %vm7641, %v7631, %v7615
    %v7649 = vsel %vm7641, %v7632, %v7616
    %v7650 = vsel %vm7641, %v7633, %v7617
    %v7651 = vsel %vm7641, %v7634, %v7618
    %v7652 = vsel %vm7641, %v7635, %v7619
    %v7653 = vsel %vm7641, %v7636, %v7620
    %v7654 = vsel %vm7641, %v7637, %v7621
    %v7655 = vsel %vm7641, %v7638, %v7622
    %v7656 = vsel %vm7641, %v7639, %v7623
    %v7657 = vsel %vm7641, %v7640, %v7624
    %v7658 = vpack.c.b16 %v7642, %v7642
    %v7659 = vpack.c.b16 %v7643, %v7643
    %v7660 = vpack.c.b16 %v7644, %v7644
    %v7661 = vpack.c.b16 %v7645, %v7645
    %v7662 = vpack.c.b16 %v7646, %v7646
    %v7663 = vpack.c.b16 %v7647, %v7647
    %v7664 = vpack.c.b16 %v7648, %v7648
    %v7665 = vpack.c.b16 %v7649, %v7649
    %v7666 = vpack.c.b16 %v7650, %v7650
    %v7667 = vpack.c.b16 %v7651, %v7651
    %v7668 = vpack.c.b16 %v7652, %v7652
    %v7669 = vpack.c.b16 %v7653, %v7653
    %v7670 = vpack.c.b16 %v7654, %v7654
    %v7671 = vpack.c.b16 %v7655, %v7655
    %v7672 = vpack.c.b16 %v7656, %v7656
    %v7673 = vpack.c.b16 %v7657, %v7657
    %7690 = vmatprep.subr.bf16.mxu0 %v7044
    %7691 = vmatpush1.bf16.msra.mxu0 %v7043
    %7692 = vmatprep.subr.bf16.mxu0 %v7048
    %7693 = vmatpush1.bf16.msra.mxu0 %v7047
    %7694 = vmatprep.subr.bf16.mxu0 %v7052
    %7695 = vmatpush1.bf16.msra.mxu0 %v7051
    %7696 = vmatprep.subr.bf16.mxu0 %v7056
    %7697 = vmatpush1.bf16.msra.mxu0 %v7055
    %7698 = vmatprep.subr.bf16.mxu0 %v7060
    %7699 = vmatpush1.bf16.msra.mxu0 %v7059
    %7700 = vmatprep.subr.bf16.mxu0 %v7064
    %7701 = vmatpush1.bf16.msra.mxu0 %v7063
    %7702 = vmatprep.subr.bf16.mxu0 %v7068
    %7703 = vmatpush1.bf16.msra.mxu0 %v7067
    %7704 = vmatprep.subr.bf16.mxu0 %v7072
    %7705 = vmatpush1.bf16.msra.mxu0 %v7071
    %7706 = vmatprep.subr.bf16.mxu0 %v7076
    %7707 = vmatpush1.bf16.msra.mxu0 %v7075
    %7708 = vmatprep.subr.bf16.mxu0 %v7080
    %7709 = vmatpush1.bf16.msra.mxu0 %v7079
    %7710 = vmatprep.subr.bf16.mxu0 %v7084
    %7711 = vmatpush1.bf16.msra.mxu0 %v7083
    %7712 = vmatprep.subr.bf16.mxu0 %v7088
    %7713 = vmatpush1.bf16.msra.mxu0 %v7087
    %7714 = vmatprep.subr.bf16.mxu0 %v7092
    %7715 = vmatpush1.bf16.msra.mxu0 %v7091
    %7716 = vmatprep.subr.bf16.mxu0 %v7096
    %7717 = vmatpush1.bf16.msra.mxu0 %v7095
    %7718 = vmatprep.subr.bf16.mxu0 %v7100
    %7719 = vmatpush1.bf16.msra.mxu0 %v7099
    %7720 = vmatprep.subr.bf16.mxu0 %v7104
    %7721 = vmatpush1.bf16.msra.mxu0 %v7103
    %7722 = vmatprep.mubr.bf16.mxu0 %v7659
    %7723 = vmatmul.mubr.bf16.gmra.mrb[0].mxu0 %v7658
    %v7724 = vpop.f32.mrb[0].mxu0
    %v7725 = vadd.f32 %v7560, %v7724
    %v7726 = vpop.f32.mrb[0].mxu0
    %v7727 = vadd.f32 %v7564, %v7726
    %v7728 = vpop.f32.mrb[0].mxu0
    %v7729 = vpop.f32.mrb[0].mxu0
    %7730 = vdwg.mxu0
    %7731 = vmatprep.subr.bf16.mxu0 %v7108
    %7732 = vmatpush1.bf16.msra.mxu0 %v7107
    %7733 = vmatprep.subr.bf16.mxu0 %v7112
    %7734 = vmatpush1.bf16.msra.mxu0 %v7111
    %7735 = vmatprep.subr.bf16.mxu0 %v7116
    %7736 = vmatpush1.bf16.msra.mxu0 %v7115
    %7737 = vmatprep.subr.bf16.mxu0 %v7120
    %7738 = vmatpush1.bf16.msra.mxu0 %v7119
    %7739 = vmatprep.subr.bf16.mxu0 %v7124
    %7740 = vmatpush1.bf16.msra.mxu0 %v7123
    %7741 = vmatprep.subr.bf16.mxu0 %v7128
    %7742 = vmatpush1.bf16.msra.mxu0 %v7127
    %7743 = vmatprep.subr.bf16.mxu0 %v7132
    %7744 = vmatpush1.bf16.msra.mxu0 %v7131
    %7745 = vmatprep.subr.bf16.mxu0 %v7136
    %7746 = vmatpush1.bf16.msra.mxu0 %v7135
    %7747 = vmatprep.subr.bf16.mxu0 %v7140
    %7748 = vmatpush1.bf16.msra.mxu0 %v7139
    %7749 = vmatprep.subr.bf16.mxu0 %v7144
    %7750 = vmatpush1.bf16.msra.mxu0 %v7143
    %7751 = vmatprep.subr.bf16.mxu0 %v7148
    %7752 = vmatpush1.bf16.msra.mxu0 %v7147
    %7753 = vmatprep.subr.bf16.mxu0 %v7152
    %7754 = vmatpush1.bf16.msra.mxu0 %v7151
    %7755 = vmatprep.subr.bf16.mxu0 %v7156
    %7756 = vmatpush1.bf16.msra.mxu0 %v7155
    %7757 = vmatprep.subr.bf16.mxu0 %v7160
    %7758 = vmatpush1.bf16.msra.mxu0 %v7159
    %7759 = vmatprep.subr.bf16.mxu0 %v7164
    %7760 = vmatpush1.bf16.msra.mxu0 %v7163
    %7761 = vmatprep.subr.bf16.mxu0 %v7168
    %7762 = vmatpush1.bf16.msra.mxu0 %v7167
    %7763 = vmatprep.mubr.bf16.mxu0 %v7661
    %7764 = vmatmul.mubr.bf16.gmra.mrb[0].mxu0 %v7660
    %v7765 = vpop.f32.mrb[0].mxu0
    %v7766 = vadd.f32 %v7725, %v7765
    %v7767 = vpop.f32.mrb[0].mxu0
    %v7768 = vadd.f32 %v7727, %v7767
    %v7769 = vpop.f32.mrb[0].mxu0
    %v7770 = vpop.f32.mrb[0].mxu0
    %7771 = vdwg.mxu0
    %7772 = vmatprep.subr.bf16.mxu0 %v7172
    %7773 = vmatpush1.bf16.msra.mxu0 %v7171
    %7774 = vmatprep.subr.bf16.mxu0 %v7176
    %7775 = vmatpush1.bf16.msra.mxu0 %v7175
    %7776 = vmatprep.subr.bf16.mxu0 %v7180
    %7777 = vmatpush1.bf16.msra.mxu0 %v7179
    %7778 = vmatprep.subr.bf16.mxu0 %v7184
    %7779 = vmatpush1.bf16.msra.mxu0 %v7183
    %7780 = vmatprep.subr.bf16.mxu0 %v7188
    %7781 = vmatpush1.bf16.msra.mxu0 %v7187
    %7782 = vmatprep.subr.bf16.mxu0 %v7192
    %7783 = vmatpush1.bf16.msra.mxu0 %v7191
    %7784 = vmatprep.subr.bf16.mxu0 %v7196
    %7785 = vmatpush1.bf16.msra.mxu0 %v7195
    %7786 = vmatprep.subr.bf16.mxu0 %v7200
    %7787 = vmatpush1.bf16.msra.mxu0 %v7199
    %7788 = vmatprep.subr.bf16.mxu0 %v7204
    %7789 = vmatpush1.bf16.msra.mxu0 %v7203
    %7790 = vmatprep.subr.bf16.mxu0 %v7208
    %7791 = vmatpush1.bf16.msra.mxu0 %v7207
    %7792 = vmatprep.subr.bf16.mxu0 %v7212
    %7793 = vmatpush1.bf16.msra.mxu0 %v7211
    %7794 = vmatprep.subr.bf16.mxu0 %v7216
    %7795 = vmatpush1.bf16.msra.mxu0 %v7215
    %7796 = vmatprep.subr.bf16.mxu0 %v7220
    %7797 = vmatpush1.bf16.msra.mxu0 %v7219
    %7798 = vmatprep.subr.bf16.mxu0 %v7224
    %7799 = vmatpush1.bf16.msra.mxu0 %v7223
    %7800 = vmatprep.subr.bf16.mxu0 %v7228
    %7801 = vmatpush1.bf16.msra.mxu0 %v7227
    %7802 = vmatprep.subr.bf16.mxu0 %v7232
    %7803 = vmatpush1.bf16.msra.mxu0 %v7231
    %7804 = vmatprep.mubr.bf16.mxu0 %v7663
    %7805 = vmatmul.mubr.bf16.gmra.mrb[0].mxu0 %v7662
    %v7806 = vpop.f32.mrb[0].mxu0
    %v7807 = vadd.f32 %v7766, %v7806
    %v7808 = vpop.f32.mrb[0].mxu0
    %v7809 = vadd.f32 %v7768, %v7808
    %v7810 = vpop.f32.mrb[0].mxu0
    %v7811 = vpop.f32.mrb[0].mxu0
    %7812 = vdwg.mxu0
    %7813 = vmatprep.subr.bf16.mxu0 %v7236
    %7814 = vmatpush1.bf16.msra.mxu0 %v7235
    %7815 = vmatprep.subr.bf16.mxu0 %v7240
    %7816 = vmatpush1.bf16.msra.mxu0 %v7239
    %7817 = vmatprep.subr.bf16.mxu0 %v7244
    %7818 = vmatpush1.bf16.msra.mxu0 %v7243
    %7819 = vmatprep.subr.bf16.mxu0 %v7248
    %7820 = vmatpush1.bf16.msra.mxu0 %v7247
    %7821 = vmatprep.subr.bf16.mxu0 %v7252
    %7822 = vmatpush1.bf16.msra.mxu0 %v7251
    %7823 = vmatprep.subr.bf16.mxu0 %v7256
    %7824 = vmatpush1.bf16.msra.mxu0 %v7255
    %7825 = vmatprep.subr.bf16.mxu0 %v7260
    %7826 = vmatpush1.bf16.msra.mxu0 %v7259
    %7827 = vmatprep.subr.bf16.mxu0 %v7264
    %7828 = vmatpush1.bf16.msra.mxu0 %v7263
    %7829 = vmatprep.subr.bf16.mxu0 %v7268
    %7830 = vmatpush1.bf16.msra.mxu0 %v7267
    %7831 = vmatprep.subr.bf16.mxu0 %v7272
    %7832 = vmatpush1.bf16.msra.mxu0 %v7271
    %7833 = vmatprep.subr.bf16.mxu0 %v7276
    %7834 = vmatpush1.bf16.msra.mxu0 %v7275
    %7835 = vmatprep.subr.bf16.mxu0 %v7280
    %7836 = vmatpush1.bf16.msra.mxu0 %v7279
    %7837 = vmatprep.subr.bf16.mxu0 %v7284
    %7838 = vmatpush1.bf16.msra.mxu0 %v7283
    %7839 = vmatprep.subr.bf16.mxu0 %v7288
    %7840 = vmatpush1.bf16.msra.mxu0 %v7287
    %7841 = vmatprep.subr.bf16.mxu0 %v7292
    %7842 = vmatpush1.bf16.msra.mxu0 %v7291
    %7843 = vmatprep.subr.bf16.mxu0 %v7296
    %7844 = vmatpush1.bf16.msra.mxu0 %v7295
    %7845 = vmatprep.mubr.bf16.mxu0 %v7665
    %7846 = vmatmul.mubr.bf16.gmra.mrb[0].mxu0 %v7664
    %v7847 = vpop.f32.mrb[0].mxu0
    %v7848 = vadd.f32 %v7807, %v7847
    %v7849 = vpop.f32.mrb[0].mxu0
    %v7850 = vadd.f32 %v7809, %v7849
    %v7851 = vpop.f32.mrb[0].mxu0
    %v7852 = vpop.f32.mrb[0].mxu0
    %7853 = vdwg.mxu0
    %7854 = vmatprep.subr.bf16.mxu0 %v7300
    %7855 = vmatpush1.bf16.msra.mxu0 %v7299
    %7856 = vmatprep.subr.bf16.mxu0 %v7304
    %7857 = vmatpush1.bf16.msra.mxu0 %v7303
    %7858 = vmatprep.subr.bf16.mxu0 %v7308
    %7859 = vmatpush1.bf16.msra.mxu0 %v7307
    %7860 = vmatprep.subr.bf16.mxu0 %v7312
    %7861 = vmatpush1.bf16.msra.mxu0 %v7311
    %7862 = vmatprep.subr.bf16.mxu0 %v7316
    %7863 = vmatpush1.bf16.msra.mxu0 %v7315
    %7864 = vmatprep.subr.bf16.mxu0 %v7320
    %7865 = vmatpush1.bf16.msra.mxu0 %v7319
    %7866 = vmatprep.subr.bf16.mxu0 %v7324
    %7867 = vmatpush1.bf16.msra.mxu0 %v7323
    %7868 = vmatprep.subr.bf16.mxu0 %v7328
    %7869 = vmatpush1.bf16.msra.mxu0 %v7327
    %7870 = vmatprep.subr.bf16.mxu0 %v7332
    %7871 = vmatpush1.bf16.msra.mxu0 %v7331
    %7872 = vmatprep.subr.bf16.mxu0 %v7336
    %7873 = vmatpush1.bf16.msra.mxu0 %v7335
    %7874 = vmatprep.subr.bf16.mxu0 %v7340
    %7875 = vmatpush1.bf16.msra.mxu0 %v7339
    %7876 = vmatprep.subr.bf16.mxu0 %v7344
    %7877 = vmatpush1.bf16.msra.mxu0 %v7343
    %7878 = vmatprep.subr.bf16.mxu0 %v7348
    %7879 = vmatpush1.bf16.msra.mxu0 %v7347
    %7880 = vmatprep.subr.bf16.mxu0 %v7352
    %7881 = vmatpush1.bf16.msra.mxu0 %v7351
    %7882 = vmatprep.subr.bf16.mxu0 %v7356
    %7883 = vmatpush1.bf16.msra.mxu0 %v7355
    %7884 = vmatprep.subr.bf16.mxu0 %v7360
    %7885 = vmatpush1.bf16.msra.mxu0 %v7359
    %7886 = vmatprep.mubr.bf16.mxu0 %v7667
    %7887 = vmatmul.mubr.bf16.gmra.mrb[0].mxu0 %v7666
    %v7888 = vpop.f32.mrb[0].mxu0
    %v7889 = vadd.f32 %v7848, %v7888
    %v7890 = vpop.f32.mrb[0].mxu0
    %v7891 = vadd.f32 %v7850, %v7890
    %v7892 = vpop.f32.mrb[0].mxu0
    %v7893 = vpop.f32.mrb[0].mxu0
    %7894 = vdwg.mxu0
    %7895 = vmatprep.subr.bf16.mxu0 %v7364
    %7896 = vmatpush1.bf16.msra.mxu0 %v7363
    %7897 = vmatprep.subr.bf16.mxu0 %v7368
    %7898 = vmatpush1.bf16.msra.mxu0 %v7367
    %7899 = vmatprep.subr.bf16.mxu0 %v7372
    %7900 = vmatpush1.bf16.msra.mxu0 %v7371
    %7901 = vmatprep.subr.bf16.mxu0 %v7376
    %7902 = vmatpush1.bf16.msra.mxu0 %v7375
    %7903 = vmatprep.subr.bf16.mxu0 %v7380
    %7904 = vmatpush1.bf16.msra.mxu0 %v7379
    %7905 = vmatprep.subr.bf16.mxu0 %v7384
    %7906 = vmatpush1.bf16.msra.mxu0 %v7383
    %7907 = vmatprep.subr.bf16.mxu0 %v7388
    %7908 = vmatpush1.bf16.msra.mxu0 %v7387
    %7909 = vmatprep.subr.bf16.mxu0 %v7392
    %7910 = vmatpush1.bf16.msra.mxu0 %v7391
    %7911 = vmatprep.subr.bf16.mxu0 %v7396
    %7912 = vmatpush1.bf16.msra.mxu0 %v7395
    %7913 = vmatprep.subr.bf16.mxu0 %v7400
    %7914 = vmatpush1.bf16.msra.mxu0 %v7399
    %7915 = vmatprep.subr.bf16.mxu0 %v7404
    %7916 = vmatpush1.bf16.msra.mxu0 %v7403
    %7917 = vmatprep.subr.bf16.mxu0 %v7408
    %7918 = vmatpush1.bf16.msra.mxu0 %v7407
    %7919 = vmatprep.subr.bf16.mxu0 %v7412
    %7920 = vmatpush1.bf16.msra.mxu0 %v7411
    %7921 = vmatprep.subr.bf16.mxu0 %v7416
    %7922 = vmatpush1.bf16.msra.mxu0 %v7415
    %7923 = vmatprep.subr.bf16.mxu0 %v7420
    %7924 = vmatpush1.bf16.msra.mxu0 %v7419
    %7925 = vmatprep.subr.bf16.mxu0 %v7424
    %7926 = vmatpush1.bf16.msra.mxu0 %v7423
    %7927 = vmatprep.mubr.bf16.mxu0 %v7669
    %7928 = vmatmul.mubr.bf16.gmra.mrb[0].mxu0 %v7668
    %v7929 = vpop.f32.mrb[0].mxu0
    %v7930 = vadd.f32 %v7889, %v7929
    %v7931 = vpop.f32.mrb[0].mxu0
    %v7932 = vadd.f32 %v7891, %v7931
    %v7933 = vpop.f32.mrb[0].mxu0
    %v7934 = vpop.f32.mrb[0].mxu0
    %7935 = vdwg.mxu0
    %7936 = vmatprep.subr.bf16.mxu0 %v7428
    %7937 = vmatpush1.bf16.msra.mxu0 %v7427
    %7938 = vmatprep.subr.bf16.mxu0 %v7432
    %7939 = vmatpush1.bf16.msra.mxu0 %v7431
    %7940 = vmatprep.subr.bf16.mxu0 %v7436
    %7941 = vmatpush1.bf16.msra.mxu0 %v7435
    %7942 = vmatprep.subr.bf16.mxu0 %v7440
    %7943 = vmatpush1.bf16.msra.mxu0 %v7439
    %7944 = vmatprep.subr.bf16.mxu0 %v7444
    %7945 = vmatpush1.bf16.msra.mxu0 %v7443
    %7946 = vmatprep.subr.bf16.mxu0 %v7448
    %7947 = vmatpush1.bf16.msra.mxu0 %v7447
    %7948 = vmatprep.subr.bf16.mxu0 %v7452
    %7949 = vmatpush1.bf16.msra.mxu0 %v7451
    %7950 = vmatprep.subr.bf16.mxu0 %v7456
    %7951 = vmatpush1.bf16.msra.mxu0 %v7455
    %7952 = vmatprep.subr.bf16.mxu0 %v7460
    %7953 = vmatpush1.bf16.msra.mxu0 %v7459
    %7954 = vmatprep.subr.bf16.mxu0 %v7464
    %7955 = vmatpush1.bf16.msra.mxu0 %v7463
    %7956 = vmatprep.subr.bf16.mxu0 %v7468
    %7957 = vmatpush1.bf16.msra.mxu0 %v7467
    %7958 = vmatprep.subr.bf16.mxu0 %v7472
    %7959 = vmatpush1.bf16.msra.mxu0 %v7471
    %7960 = vmatprep.subr.bf16.mxu0 %v7476
    %7961 = vmatpush1.bf16.msra.mxu0 %v7475
    %7962 = vmatprep.subr.bf16.mxu0 %v7480
    %7963 = vmatpush1.bf16.msra.mxu0 %v7479
    %7964 = vmatprep.subr.bf16.mxu0 %v7484
    %7965 = vmatpush1.bf16.msra.mxu0 %v7483
    %7966 = vmatprep.subr.bf16.mxu0 %v7488
    %7967 = vmatpush1.bf16.msra.mxu0 %v7487
    %7968 = vmatprep.mubr.bf16.mxu0 %v7671
    %7969 = vmatmul.mubr.bf16.gmra.mrb[0].mxu0 %v7670
    %v7970 = vpop.f32.mrb[0].mxu0
    %v7971 = vadd.f32 %v7930, %v7970
    %v7972 = vpop.f32.mrb[0].mxu0
    %v7973 = vadd.f32 %v7932, %v7972
    %v7974 = vpop.f32.mrb[0].mxu0
    %v7975 = vpop.f32.mrb[0].mxu0
    %7976 = vdwg.mxu0
    %7977 = vmatprep.subr.bf16.mxu0 %v7492
    %7978 = vmatpush1.bf16.msra.mxu0 %v7491
    %7979 = vmatprep.subr.bf16.mxu0 %v7496
    %7980 = vmatpush1.bf16.msra.mxu0 %v7495
    %7981 = vmatprep.subr.bf16.mxu0 %v7500
    %7982 = vmatpush1.bf16.msra.mxu0 %v7499
    %7983 = vmatprep.subr.bf16.mxu0 %v7504
    %7984 = vmatpush1.bf16.msra.mxu0 %v7503
    %7985 = vmatprep.subr.bf16.mxu0 %v7508
    %7986 = vmatpush1.bf16.msra.mxu0 %v7507
    %7987 = vmatprep.subr.bf16.mxu0 %v7512
    %7988 = vmatpush1.bf16.msra.mxu0 %v7511
    %7989 = vmatprep.subr.bf16.mxu0 %v7516
    %7990 = vmatpush1.bf16.msra.mxu0 %v7515
    %7991 = vmatprep.subr.bf16.mxu0 %v7520
    %7992 = vmatpush1.bf16.msra.mxu0 %v7519
    %7993 = vmatprep.subr.bf16.mxu0 %v7524
    %7994 = vmatpush1.bf16.msra.mxu0 %v7523
    %7995 = vmatprep.subr.bf16.mxu0 %v7528
    %7996 = vmatpush1.bf16.msra.mxu0 %v7527
    %7997 = vmatprep.subr.bf16.mxu0 %v7532
    %7998 = vmatpush1.bf16.msra.mxu0 %v7531
    %7999 = vmatprep.subr.bf16.mxu0 %v7536
    %8000 = vmatpush1.bf16.msra.mxu0 %v7535
    %8001 = vmatprep.subr.bf16.mxu0 %v7540
    %8002 = vmatpush1.bf16.msra.mxu0 %v7539
    %8003 = vmatprep.subr.bf16.mxu0 %v7544
    %8004 = vmatpush1.bf16.msra.mxu0 %v7543
    %8005 = vmatprep.subr.bf16.mxu0 %v7548
    %8006 = vmatpush1.bf16.msra.mxu0 %v7547
    %8007 = vmatprep.subr.bf16.mxu0 %v7552
    %8008 = vmatpush1.bf16.msra.mxu0 %v7551
    %8009 = vmatprep.mubr.bf16.mxu0 %v7673
    %8010 = vmatmul.mubr.bf16.gmra.mrb[0].mxu0 %v7672
    %v8011 = vpop.f32.mrb[0].mxu0
    %v8012 = vadd.f32 %v7971, %v8011
    %v8013 = vpop.f32.mrb[0].mxu0
    %v8014 = vadd.f32 %v7973, %v8013
    %v8015 = vpop.f32.mrb[0].mxu0
    %v8016 = vpop.f32.mrb[0].mxu0
    %8017 = vdwg.mxu0
    %8018 = vmatprep.subr.bf16.mxu0 %v7046
    %8019 = vmatpush1.bf16.msra.mxu0 %v7045
    %8020 = vmatprep.subr.bf16.mxu0 %v7050
    %8021 = vmatpush1.bf16.msra.mxu0 %v7049
    %8022 = vmatprep.subr.bf16.mxu0 %v7054
    %8023 = vmatpush1.bf16.msra.mxu0 %v7053
    %8024 = vmatprep.subr.bf16.mxu0 %v7058
    %8025 = vmatpush1.bf16.msra.mxu0 %v7057
    %8026 = vmatprep.subr.bf16.mxu0 %v7062
    %8027 = vmatpush1.bf16.msra.mxu0 %v7061
    %8028 = vmatprep.subr.bf16.mxu0 %v7066
    %8029 = vmatpush1.bf16.msra.mxu0 %v7065
    %8030 = vmatprep.subr.bf16.mxu0 %v7070
    %8031 = vmatpush1.bf16.msra.mxu0 %v7069
    %8032 = vmatprep.subr.bf16.mxu0 %v7074
    %8033 = vmatpush1.bf16.msra.mxu0 %v7073
    %8034 = vmatprep.subr.bf16.mxu0 %v7078
    %8035 = vmatpush1.bf16.msra.mxu0 %v7077
    %8036 = vmatprep.subr.bf16.mxu0 %v7082
    %8037 = vmatpush1.bf16.msra.mxu0 %v7081
    %8038 = vmatprep.subr.bf16.mxu0 %v7086
    %8039 = vmatpush1.bf16.msra.mxu0 %v7085
    %8040 = vmatprep.subr.bf16.mxu0 %v7090
    %8041 = vmatpush1.bf16.msra.mxu0 %v7089
    %8042 = vmatprep.subr.bf16.mxu0 %v7094
    %8043 = vmatpush1.bf16.msra.mxu0 %v7093
    %8044 = vmatprep.subr.bf16.mxu0 %v7098
    %8045 = vmatpush1.bf16.msra.mxu0 %v7097
    %8046 = vmatprep.subr.bf16.mxu0 %v7102
    %8047 = vmatpush1.bf16.msra.mxu0 %v7101
    %8048 = vmatprep.subr.bf16.mxu0 %v7106
    %8049 = vmatpush1.bf16.msra.mxu0 %v7105
    %8050 = vmatprep.mubr.bf16.mxu0 %v7659
    %8051 = vmatmul.mubr.bf16.gmra.mrb[0].mxu0 %v7658
    %v8052 = vpop.f32.mrb[0].mxu0
    %v8053 = vadd.f32 %v7568, %v8052
    %v8054 = vpop.f32.mrb[0].mxu0
    %v8055 = vadd.f32 %v7572, %v8054
    %v8056 = vpop.f32.mrb[0].mxu0
    %v8057 = vpop.f32.mrb[0].mxu0
    %8058 = vdwg.mxu0
    %8059 = vmatprep.subr.bf16.mxu0 %v7110
    %8060 = vmatpush1.bf16.msra.mxu0 %v7109
    %8061 = vmatprep.subr.bf16.mxu0 %v7114
    %8062 = vmatpush1.bf16.msra.mxu0 %v7113
    %8063 = vmatprep.subr.bf16.mxu0 %v7118
    %8064 = vmatpush1.bf16.msra.mxu0 %v7117
    %8065 = vmatprep.subr.bf16.mxu0 %v7122
    %8066 = vmatpush1.bf16.msra.mxu0 %v7121
    %8067 = vmatprep.subr.bf16.mxu0 %v7126
    %8068 = vmatpush1.bf16.msra.mxu0 %v7125
    %8069 = vmatprep.subr.bf16.mxu0 %v7130
    %8070 = vmatpush1.bf16.msra.mxu0 %v7129
    %8071 = vmatprep.subr.bf16.mxu0 %v7134
    %8072 = vmatpush1.bf16.msra.mxu0 %v7133
    %8073 = vmatprep.subr.bf16.mxu0 %v7138
    %8074 = vmatpush1.bf16.msra.mxu0 %v7137
    %8075 = vmatprep.subr.bf16.mxu0 %v7142
    %8076 = vmatpush1.bf16.msra.mxu0 %v7141
    %8077 = vmatprep.subr.bf16.mxu0 %v7146
    %8078 = vmatpush1.bf16.msra.mxu0 %v7145
    %8079 = vmatprep.subr.bf16.mxu0 %v7150
    %8080 = vmatpush1.bf16.msra.mxu0 %v7149
    %8081 = vmatprep.subr.bf16.mxu0 %v7154
    %8082 = vmatpush1.bf16.msra.mxu0 %v7153
    %8083 = vmatprep.subr.bf16.mxu0 %v7158
    %8084 = vmatpush1.bf16.msra.mxu0 %v7157
    %8085 = vmatprep.subr.bf16.mxu0 %v7162
    %8086 = vmatpush1.bf16.msra.mxu0 %v7161
    %8087 = vmatprep.subr.bf16.mxu0 %v7166
    %8088 = vmatpush1.bf16.msra.mxu0 %v7165
    %8089 = vmatprep.subr.bf16.mxu0 %v7170
    %8090 = vmatpush1.bf16.msra.mxu0 %v7169
    %8091 = vmatprep.mubr.bf16.mxu0 %v7661
    %8092 = vmatmul.mubr.bf16.gmra.mrb[0].mxu0 %v7660
    %v8093 = vpop.f32.mrb[0].mxu0
    %v8094 = vadd.f32 %v8053, %v8093
    %v8095 = vpop.f32.mrb[0].mxu0
    %v8096 = vadd.f32 %v8055, %v8095
    %v8097 = vpop.f32.mrb[0].mxu0
    %v8098 = vpop.f32.mrb[0].mxu0
    %8099 = vdwg.mxu0
    %8100 = vmatprep.subr.bf16.mxu0 %v7174
    %8101 = vmatpush1.bf16.msra.mxu0 %v7173
    %8102 = vmatprep.subr.bf16.mxu0 %v7178
    %8103 = vmatpush1.bf16.msra.mxu0 %v7177
    %8104 = vmatprep.subr.bf16.mxu0 %v7182
    %8105 = vmatpush1.bf16.msra.mxu0 %v7181
    %8106 = vmatprep.subr.bf16.mxu0 %v7186
    %8107 = vmatpush1.bf16.msra.mxu0 %v7185
    %8108 = vmatprep.subr.bf16.mxu0 %v7190
    %8109 = vmatpush1.bf16.msra.mxu0 %v7189
    %8110 = vmatprep.subr.bf16.mxu0 %v7194
    %8111 = vmatpush1.bf16.msra.mxu0 %v7193
    %8112 = vmatprep.subr.bf16.mxu0 %v7198
    %8113 = vmatpush1.bf16.msra.mxu0 %v7197
    %8114 = vmatprep.subr.bf16.mxu0 %v7202
    %8115 = vmatpush1.bf16.msra.mxu0 %v7201
    %8116 = vmatprep.subr.bf16.mxu0 %v7206
    %8117 = vmatpush1.bf16.msra.mxu0 %v7205
    %8118 = vmatprep.subr.bf16.mxu0 %v7210
    %8119 = vmatpush1.bf16.msra.mxu0 %v7209
    %8120 = vmatprep.subr.bf16.mxu0 %v7214
    %8121 = vmatpush1.bf16.msra.mxu0 %v7213
    %8122 = vmatprep.subr.bf16.mxu0 %v7218
    %8123 = vmatpush1.bf16.msra.mxu0 %v7217
    %8124 = vmatprep.subr.bf16.mxu0 %v7222
    %8125 = vmatpush1.bf16.msra.mxu0 %v7221
    %8126 = vmatprep.subr.bf16.mxu0 %v7226
    %8127 = vmatpush1.bf16.msra.mxu0 %v7225
    %8128 = vmatprep.subr.bf16.mxu0 %v7230
    %8129 = vmatpush1.bf16.msra.mxu0 %v7229
    %8130 = vmatprep.subr.bf16.mxu0 %v7234
    %8131 = vmatpush1.bf16.msra.mxu0 %v7233
    %8132 = vmatprep.mubr.bf16.mxu0 %v7663
    %8133 = vmatmul.mubr.bf16.gmra.mrb[0].mxu0 %v7662
    %v8134 = vpop.f32.mrb[0].mxu0
    %v8135 = vadd.f32 %v8094, %v8134
    %v8136 = vpop.f32.mrb[0].mxu0
    %v8137 = vadd.f32 %v8096, %v8136
    %v8138 = vpop.f32.mrb[0].mxu0
    %v8139 = vpop.f32.mrb[0].mxu0
    %8140 = vdwg.mxu0
    %8141 = vmatprep.subr.bf16.mxu0 %v7238
    %8142 = vmatpush1.bf16.msra.mxu0 %v7237
    %8143 = vmatprep.subr.bf16.mxu0 %v7242
    %8144 = vmatpush1.bf16.msra.mxu0 %v7241
    %8145 = vmatprep.subr.bf16.mxu0 %v7246
    %8146 = vmatpush1.bf16.msra.mxu0 %v7245
    %8147 = vmatprep.subr.bf16.mxu0 %v7250
    %8148 = vmatpush1.bf16.msra.mxu0 %v7249
    %8149 = vmatprep.subr.bf16.mxu0 %v7254
    %8150 = vmatpush1.bf16.msra.mxu0 %v7253
    %8151 = vmatprep.subr.bf16.mxu0 %v7258
    %8152 = vmatpush1.bf16.msra.mxu0 %v7257
    %8153 = vmatprep.subr.bf16.mxu0 %v7262
    %8154 = vmatpush1.bf16.msra.mxu0 %v7261
    %8155 = vmatprep.subr.bf16.mxu0 %v7266
    %8156 = vmatpush1.bf16.msra.mxu0 %v7265
    %8157 = vmatprep.subr.bf16.mxu0 %v7270
    %8158 = vmatpush1.bf16.msra.mxu0 %v7269
    %8159 = vmatprep.subr.bf16.mxu0 %v7274
    %8160 = vmatpush1.bf16.msra.mxu0 %v7273
    %8161 = vmatprep.subr.bf16.mxu0 %v7278
    %8162 = vmatpush1.bf16.msra.mxu0 %v7277
    %8163 = vmatprep.subr.bf16.mxu0 %v7282
    %8164 = vmatpush1.bf16.msra.mxu0 %v7281
    %8165 = vmatprep.subr.bf16.mxu0 %v7286
    %8166 = vmatpush1.bf16.msra.mxu0 %v7285
    %8167 = vmatprep.subr.bf16.mxu0 %v7290
    %8168 = vmatpush1.bf16.msra.mxu0 %v7289
    %8169 = vmatprep.subr.bf16.mxu0 %v7294
    %8170 = vmatpush1.bf16.msra.mxu0 %v7293
    %8171 = vmatprep.subr.bf16.mxu0 %v7298
    %8172 = vmatpush1.bf16.msra.mxu0 %v7297
    %8173 = vmatprep.mubr.bf16.mxu0 %v7665
    %8174 = vmatmul.mubr.bf16.gmra.mrb[0].mxu0 %v7664
    %v8175 = vpop.f32.mrb[0].mxu0
    %v8176 = vadd.f32 %v8135, %v8175
    %v8177 = vpop.f32.mrb[0].mxu0
    %v8178 = vadd.f32 %v8137, %v8177
    %v8179 = vpop.f32.mrb[0].mxu0
    %v8180 = vpop.f32.mrb[0].mxu0
    %8181 = vdwg.mxu0
    %8182 = vmatprep.subr.bf16.mxu0 %v7302
    %8183 = vmatpush1.bf16.msra.mxu0 %v7301
    %8184 = vmatprep.subr.bf16.mxu0 %v7306
    %8185 = vmatpush1.bf16.msra.mxu0 %v7305
    %8186 = vmatprep.subr.bf16.mxu0 %v7310
    %8187 = vmatpush1.bf16.msra.mxu0 %v7309
    %8188 = vmatprep.subr.bf16.mxu0 %v7314
    %8189 = vmatpush1.bf16.msra.mxu0 %v7313
    %8190 = vmatprep.subr.bf16.mxu0 %v7318
    %8191 = vmatpush1.bf16.msra.mxu0 %v7317
    %8192 = vmatprep.subr.bf16.mxu0 %v7322
    %8193 = vmatpush1.bf16.msra.mxu0 %v7321
    %8194 = vmatprep.subr.bf16.mxu0 %v7326
    %8195 = vmatpush1.bf16.msra.mxu0 %v7325
    %8196 = vmatprep.subr.bf16.mxu0 %v7330
    %8197 = vmatpush1.bf16.msra.mxu0 %v7329
    %8198 = vmatprep.subr.bf16.mxu0 %v7334
    %8199 = vmatpush1.bf16.msra.mxu0 %v7333
    %8200 = vmatprep.subr.bf16.mxu0 %v7338
    %8201 = vmatpush1.bf16.msra.mxu0 %v7337
    %8202 = vmatprep.subr.bf16.mxu0 %v7342
    %8203 = vmatpush1.bf16.msra.mxu0 %v7341
    %8204 = vmatprep.subr.bf16.mxu0 %v7346
    %8205 = vmatpush1.bf16.msra.mxu0 %v7345
    %8206 = vmatprep.subr.bf16.mxu0 %v7350
    %8207 = vmatpush1.bf16.msra.mxu0 %v7349
    %8208 = vmatprep.subr.bf16.mxu0 %v7354
    %8209 = vmatpush1.bf16.msra.mxu0 %v7353
    %8210 = vmatprep.subr.bf16.mxu0 %v7358
    %8211 = vmatpush1.bf16.msra.mxu0 %v7357
    %8212 = vmatprep.subr.bf16.mxu0 %v7362
    %8213 = vmatpush1.bf16.msra.mxu0 %v7361
    %8214 = vmatprep.mubr.bf16.mxu0 %v7667
    %8215 = vmatmul.mubr.bf16.gmra.mrb[0].mxu0 %v7666
    %v8216 = vpop.f32.mrb[0].mxu0
    %v8217 = vadd.f32 %v8176, %v8216
    %v8218 = vpop.f32.mrb[0].mxu0
    %v8219 = vadd.f32 %v8178, %v8218
    %v8220 = vpop.f32.mrb[0].mxu0
    %v8221 = vpop.f32.mrb[0].mxu0
    %8222 = vdwg.mxu0
    %8223 = vmatprep.subr.bf16.mxu0 %v7366
    %8224 = vmatpush1.bf16.msra.mxu0 %v7365
    %8225 = vmatprep.subr.bf16.mxu0 %v7370
    %8226 = vmatpush1.bf16.msra.mxu0 %v7369
    %8227 = vmatprep.subr.bf16.mxu0 %v7374
    %8228 = vmatpush1.bf16.msra.mxu0 %v7373
    %8229 = vmatprep.subr.bf16.mxu0 %v7378
    %8230 = vmatpush1.bf16.msra.mxu0 %v7377
    %8231 = vmatprep.subr.bf16.mxu0 %v7382
    %8232 = vmatpush1.bf16.msra.mxu0 %v7381
    %8233 = vmatprep.subr.bf16.mxu0 %v7386
    %8234 = vmatpush1.bf16.msra.mxu0 %v7385
    %8235 = vmatprep.subr.bf16.mxu0 %v7390
    %8236 = vmatpush1.bf16.msra.mxu0 %v7389
    %8237 = vmatprep.subr.bf16.mxu0 %v7394
    %8238 = vmatpush1.bf16.msra.mxu0 %v7393
    %8239 = vmatprep.subr.bf16.mxu0 %v7398
    %8240 = vmatpush1.bf16.msra.mxu0 %v7397
    %8241 = vmatprep.subr.bf16.mxu0 %v7402
    %8242 = vmatpush1.bf16.msra.mxu0 %v7401
    %8243 = vmatprep.subr.bf16.mxu0 %v7406
    %8244 = vmatpush1.bf16.msra.mxu0 %v7405
    %8245 = vmatprep.subr.bf16.mxu0 %v7410
    %8246 = vmatpush1.bf16.msra.mxu0 %v7409
    %8247 = vmatprep.subr.bf16.mxu0 %v7414
    %8248 = vmatpush1.bf16.msra.mxu0 %v7413
    %8249 = vmatprep.subr.bf16.mxu0 %v7418
    %8250 = vmatpush1.bf16.msra.mxu0 %v7417
    %8251 = vmatprep.subr.bf16.mxu0 %v7422
    %8252 = vmatpush1.bf16.msra.mxu0 %v7421
    %8253 = vmatprep.subr.bf16.mxu0 %v7426
    %8254 = vmatpush1.bf16.msra.mxu0 %v7425
    %8255 = vmatprep.mubr.bf16.mxu0 %v7669
    %8256 = vmatmul.mubr.bf16.gmra.mrb[0].mxu0 %v7668
    %v8257 = vpop.f32.mrb[0].mxu0
    %v8258 = vadd.f32 %v8217, %v8257
    %v8259 = vpop.f32.mrb[0].mxu0
    %v8260 = vadd.f32 %v8219, %v8259
    %v8261 = vpop.f32.mrb[0].mxu0
    %v8262 = vpop.f32.mrb[0].mxu0
    %8263 = vdwg.mxu0
    %8264 = vmatprep.subr.bf16.mxu0 %v7430
    %8265 = vmatpush1.bf16.msra.mxu0 %v7429
    %8266 = vmatprep.subr.bf16.mxu0 %v7434
    %8267 = vmatpush1.bf16.msra.mxu0 %v7433
    %8268 = vmatprep.subr.bf16.mxu0 %v7438
    %8269 = vmatpush1.bf16.msra.mxu0 %v7437
    %8270 = vmatprep.subr.bf16.mxu0 %v7442
    %8271 = vmatpush1.bf16.msra.mxu0 %v7441
    %8272 = vmatprep.subr.bf16.mxu0 %v7446
    %8273 = vmatpush1.bf16.msra.mxu0 %v7445
    %8274 = vmatprep.subr.bf16.mxu0 %v7450
    %8275 = vmatpush1.bf16.msra.mxu0 %v7449
    %8276 = vmatprep.subr.bf16.mxu0 %v7454
    %8277 = vmatpush1.bf16.msra.mxu0 %v7453
    %8278 = vmatprep.subr.bf16.mxu0 %v7458
    %8279 = vmatpush1.bf16.msra.mxu0 %v7457
    %8280 = vmatprep.subr.bf16.mxu0 %v7462
    %8281 = vmatpush1.bf16.msra.mxu0 %v7461
    %8282 = vmatprep.subr.bf16.mxu0 %v7466
    %8283 = vmatpush1.bf16.msra.mxu0 %v7465
    %8284 = vmatprep.subr.bf16.mxu0 %v7470
    %8285 = vmatpush1.bf16.msra.mxu0 %v7469
    %8286 = vmatprep.subr.bf16.mxu0 %v7474
    %8287 = vmatpush1.bf16.msra.mxu0 %v7473
    %8288 = vmatprep.subr.bf16.mxu0 %v7478
    %8289 = vmatpush1.bf16.msra.mxu0 %v7477
    %8290 = vmatprep.subr.bf16.mxu0 %v7482
    %8291 = vmatpush1.bf16.msra.mxu0 %v7481
    %8292 = vmatprep.subr.bf16.mxu0 %v7486
    %8293 = vmatpush1.bf16.msra.mxu0 %v7485
    %8294 = vmatprep.subr.bf16.mxu0 %v7490
    %8295 = vmatpush1.bf16.msra.mxu0 %v7489
    %8296 = vmatprep.mubr.bf16.mxu0 %v7671
    %8297 = vmatmul.mubr.bf16.gmra.mrb[0].mxu0 %v7670
    %v8298 = vpop.f32.mrb[0].mxu0
    %v8299 = vadd.f32 %v8258, %v8298
    %v8300 = vpop.f32.mrb[0].mxu0
    %v8301 = vadd.f32 %v8260, %v8300
    %v8302 = vpop.f32.mrb[0].mxu0
    %v8303 = vpop.f32.mrb[0].mxu0
    %8304 = vdwg.mxu0
    %8305 = vmatprep.subr.bf16.mxu0 %v7494
    %8306 = vmatpush1.bf16.msra.mxu0 %v7493
    %8307 = vmatprep.subr.bf16.mxu0 %v7498
    %8308 = vmatpush1.bf16.msra.mxu0 %v7497
    %8309 = vmatprep.subr.bf16.mxu0 %v7502
    %8310 = vmatpush1.bf16.msra.mxu0 %v7501
    %8311 = vmatprep.subr.bf16.mxu0 %v7506
    %8312 = vmatpush1.bf16.msra.mxu0 %v7505
    %8313 = vmatprep.subr.bf16.mxu0 %v7510
    %8314 = vmatpush1.bf16.msra.mxu0 %v7509
    %8315 = vmatprep.subr.bf16.mxu0 %v7514
    %8316 = vmatpush1.bf16.msra.mxu0 %v7513
    %8317 = vmatprep.subr.bf16.mxu0 %v7518
    %8318 = vmatpush1.bf16.msra.mxu0 %v7517
    %8319 = vmatprep.subr.bf16.mxu0 %v7522
    %8320 = vmatpush1.bf16.msra.mxu0 %v7521
    %8321 = vmatprep.subr.bf16.mxu0 %v7526
    %8322 = vmatpush1.bf16.msra.mxu0 %v7525
    %8323 = vmatprep.subr.bf16.mxu0 %v7530
    %8324 = vmatpush1.bf16.msra.mxu0 %v7529
    %8325 = vmatprep.subr.bf16.mxu0 %v7534
    %8326 = vmatpush1.bf16.msra.mxu0 %v7533
    %8327 = vmatprep.subr.bf16.mxu0 %v7538
    %8328 = vmatpush1.bf16.msra.mxu0 %v7537
    %8329 = vmatprep.subr.bf16.mxu0 %v7542
    %8330 = vmatpush1.bf16.msra.mxu0 %v7541
    %8331 = vmatprep.subr.bf16.mxu0 %v7546
    %8332 = vmatpush1.bf16.msra.mxu0 %v7545
    %8333 = vmatprep.subr.bf16.mxu0 %v7550
    %8334 = vmatpush1.bf16.msra.mxu0 %v7549
    %8335 = vmatprep.subr.bf16.mxu0 %v7554
    %8336 = vmatpush1.bf16.msra.mxu0 %v7553
    %8337 = vmatprep.mubr.bf16.mxu0 %v7673
    %8338 = vmatmul.mubr.bf16.gmra.mrb[0].mxu0 %v7672
    %v8339 = vpop.f32.mrb[0].mxu0
    %v8340 = vadd.f32 %v8299, %v8339
    %v8341 = vpop.f32.mrb[0].mxu0
    %v8342 = vadd.f32 %v8301, %v8341
    %v8343 = vpop.f32.mrb[0].mxu0
    %v8344 = vpop.f32.mrb[0].mxu0
    %8345 = vdwg.mxu0
    %v8346 = vmax.f32 %v8012, 0.0
    %v8347 = vmax.f32 %v8014, 0.0
    %v8348 = vmax.f32 %v8340, 0.0
    %v8349 = vmax.f32 %v8342, 0.0
    %s8350 = smul.u32 4, 64
    %s8351 = smul.u32 %s8350, 2
    %s8352 = sshll.u32 %s8351, 4
    %8353 = dma.done %s183, %s8352
    %v8354 = vpack.c.bf16 %v8346, %v8346
    %v8355 = vpack.c.bf16 %v8347, %v8347
    %v8356 = vpack.c.bf16 %v8348, %v8348
    %v8357 = vpack.c.bf16 %v8349, %v8349
    %v8358 = vld [vmem:[#allocation3] sm:$0xff]
    %v8359 = vld [vmem:[#allocation3 + $0x8] sm:$0xff]
    %v8360 = vld [vmem:[#allocation3 + $0x10] sm:$0xff]
    %v8361 = vld [vmem:[#allocation3 + $0x18] sm:$0xff]
    %v8362 = vld [vmem:[#allocation3 + $0x20] sm:$0xff]
    %v8363 = vld [vmem:[#allocation3 + $0x28] sm:$0xff]
    %v8364 = vld [vmem:[#allocation3 + $0x30] sm:$0xff]
    %v8365 = vld [vmem:[#allocation3 + $0x38] sm:$0xff]
    %v8366 = vld [vmem:[#allocation3 + $0x40] sm:$0xff]
    %v8367 = vld [vmem:[#allocation3 + $0x48] sm:$0xff]
    %v8368 = vld [vmem:[#allocation3 + $0x50] sm:$0xff]
    %v8369 = vld [vmem:[#allocation3 + $0x58] sm:$0xff]
    %v8370 = vld [vmem:[#allocation3 + $0x60] sm:$0xff]
    %v8371 = vld [vmem:[#allocation3 + $0x68] sm:$0xff]
    %v8372 = vld [vmem:[#allocation3 + $0x70] sm:$0xff]
    %v8373 = vld [vmem:[#allocation3 + $0x78] sm:$0xff]
    %v8374 = vld [vmem:[#allocation3 + $0x80] sm:$0xff]
    %v8375 = vld [vmem:[#allocation3 + $0x88] sm:$0xff]
    %v8376 = vld [vmem:[#allocation3 + $0x90] sm:$0xff]
    %v8377 = vld [vmem:[#allocation3 + $0x98] sm:$0xff]
    %v8378 = vld [vmem:[#allocation3 + $0xa0] sm:$0xff]
    %v8379 = vld [vmem:[#allocation3 + $0xa8] sm:$0xff]
    %v8380 = vld [vmem:[#allocation3 + $0xb0] sm:$0xff]
    %v8381 = vld [vmem:[#allocation3 + $0xb8] sm:$0xff]
    %v8382 = vld [vmem:[#allocation3 + $0xc0] sm:$0xff]
    %v8383 = vld [vmem:[#allocation3 + $0xc8] sm:$0xff]
    %v8384 = vld [vmem:[#allocation3 + $0xd0] sm:$0xff]
    %v8385 = vld [vmem:[#allocation3 + $0xd8] sm:$0xff]
    %v8386 = vld [vmem:[#allocation3 + $0xe0] sm:$0xff]
    %v8387 = vld [vmem:[#allocation3 + $0xe8] sm:$0xff]
    %v8388 = vld [vmem:[#allocation3 + $0xf0] sm:$0xff]
    %v8389 = vld [vmem:[#allocation3 + $0xf8] sm:$0xff]
    %v8390 = vld [vmem:[#allocation3 + $0x100] sm:$0xff]
    %v8391 = vld [vmem:[#allocation3 + $0x108] sm:$0xff]
    %v8392 = vld [vmem:[#allocation3 + $0x110] sm:$0xff]
    %v8393 = vld [vmem:[#allocation3 + $0x118] sm:$0xff]
    %v8394 = vld [vmem:[#allocation3 + $0x120] sm:$0xff]
    %v8395 = vld [vmem:[#allocation3 + $0x128] sm:$0xff]
    %v8396 = vld [vmem:[#allocation3 + $0x130] sm:$0xff]
    %v8397 = vld [vmem:[#allocation3 + $0x138] sm:$0xff]
    %v8398 = vld [vmem:[#allocation3 + $0x140] sm:$0xff]
    %v8399 = vld [vmem:[#allocation3 + $0x148] sm:$0xff]
    %v8400 = vld [vmem:[#allocation3 + $0x150] sm:$0xff]
    %v8401 = vld [vmem:[#allocation3 + $0x158] sm:$0xff]
    %v8402 = vld [vmem:[#allocation3 + $0x160] sm:$0xff]
    %v8403 = vld [vmem:[#allocation3 + $0x168] sm:$0xff]
    %v8404 = vld [vmem:[#allocation3 + $0x170] sm:$0xff]
    %v8405 = vld [vmem:[#allocation3 + $0x178] sm:$0xff]
    %v8406 = vld [vmem:[#allocation3 + $0x180] sm:$0xff]
    %v8407 = vld [vmem:[#allocation3 + $0x188] sm:$0xff]
    %v8408 = vld [vmem:[#allocation3 + $0x190] sm:$0xff]
    %v8409 = vld [vmem:[#allocation3 + $0x198] sm:$0xff]
    %v8410 = vld [vmem:[#allocation3 + $0x1a0] sm:$0xff]
    %v8411 = vld [vmem:[#allocation3 + $0x1a8] sm:$0xff]
    %v8412 = vld [vmem:[#allocation3 + $0x1b0] sm:$0xff]
    %v8413 = vld [vmem:[#allocation3 + $0x1b8] sm:$0xff]
    %v8414 = vld [vmem:[#allocation3 + $0x1c0] sm:$0xff]
    %v8415 = vld [vmem:[#allocation3 + $0x1c8] sm:$0xff]
    %v8416 = vld [vmem:[#allocation3 + $0x1d0] sm:$0xff]
    %v8417 = vld [vmem:[#allocation3 + $0x1d8] sm:$0xff]
    %v8418 = vld [vmem:[#allocation3 + $0x1e0] sm:$0xff]
    %v8419 = vld [vmem:[#allocation3 + $0x1e8] sm:$0xff]
    %v8420 = vld [vmem:[#allocation3 + $0x1f0] sm:$0xff]
    %v8421 = vld [vmem:[#allocation3 + $0x1f8] sm:$0xff]
    %v8422 = vld [vmem:[#allocation18] sm:$0x3]
    %v8424 = vlaneseq
    %v8425 = vshrl.u32 %v8424, 7
    %v8426 = vsub.s32 0, %v8425
    %v8427 = vrot.slane %v8422, %v8426
    %v8428 = vlaneseq
    %v8429 = vshrl.u32 %v8428, 7
    %v8430 = vsub.s32 1, %v8429
    %v8431 = vrot.slane %v8422, %v8430
    %8434 = vmatprep.subr.bf16.mxu0 %v8359
    %8435 = vmatpush1.bf16.msra.mxu0 %v8358
    %8436 = vmatprep.subr.bf16.mxu0 %v8361
    %8437 = vmatpush1.bf16.msra.mxu0 %v8360
    %8438 = vmatprep.subr.bf16.mxu0 %v8363
    %8439 = vmatpush1.bf16.msra.mxu0 %v8362
    %8440 = vmatprep.subr.bf16.mxu0 %v8365
    %8441 = vmatpush1.bf16.msra.mxu0 %v8364
    %8442 = vmatprep.subr.bf16.mxu0 %v8367
    %8443 = vmatpush1.bf16.msra.mxu0 %v8366
    %8444 = vmatprep.subr.bf16.mxu0 %v8369
    %8445 = vmatpush1.bf16.msra.mxu0 %v8368
    %8446 = vmatprep.subr.bf16.mxu0 %v8371
    %8447 = vmatpush1.bf16.msra.mxu0 %v8370
    %8448 = vmatprep.subr.bf16.mxu0 %v8373
    %8449 = vmatpush1.bf16.msra.mxu0 %v8372
    %8450 = vmatprep.subr.bf16.mxu0 %v8375
    %8451 = vmatpush1.bf16.msra.mxu0 %v8374
    %8452 = vmatprep.subr.bf16.mxu0 %v8377
    %8453 = vmatpush1.bf16.msra.mxu0 %v8376
    %8454 = vmatprep.subr.bf16.mxu0 %v8379
    %8455 = vmatpush1.bf16.msra.mxu0 %v8378
    %8456 = vmatprep.subr.bf16.mxu0 %v8381
    %8457 = vmatpush1.bf16.msra.mxu0 %v8380
    %8458 = vmatprep.subr.bf16.mxu0 %v8383
    %8459 = vmatpush1.bf16.msra.mxu0 %v8382
    %8460 = vmatprep.subr.bf16.mxu0 %v8385
    %8461 = vmatpush1.bf16.msra.mxu0 %v8384
    %8462 = vmatprep.subr.bf16.mxu0 %v8387
    %8463 = vmatpush1.bf16.msra.mxu0 %v8386
    %8464 = vmatprep.subr.bf16.mxu0 %v8389
    %8465 = vmatpush1.bf16.msra.mxu0 %v8388
    %8466 = vmatprep.mubr.bf16.mxu0 %v8355
    %8467 = vmatmul.mubr.bf16.gmra.mrb[0].mxu0 %v8354
    %v8468 = vpop.f32.mrb[0].mxu0
    %v8469 = vadd.f32 %v8427, %v8468
    %v8470 = vpop.f32.mrb[0].mxu0
    %v8471 = vadd.f32 %v8431, %v8470
    %v8472 = vpop.f32.mrb[0].mxu0
    %v8473 = vpop.f32.mrb[0].mxu0
    %8474 = vdwg.mxu0
    %8475 = vmatprep.subr.bf16.mxu0 %v8391
    %8476 = vmatpush1.bf16.msra.mxu0 %v8390
    %8477 = vmatprep.subr.bf16.mxu0 %v8393
    %8478 = vmatpush1.bf16.msra.mxu0 %v8392
    %8479 = vmatprep.subr.bf16.mxu0 %v8395
    %8480 = vmatpush1.bf16.msra.mxu0 %v8394
    %8481 = vmatprep.subr.bf16.mxu0 %v8397
    %8482 = vmatpush1.bf16.msra.mxu0 %v8396
    %8483 = vmatprep.subr.bf16.mxu0 %v8399
    %8484 = vmatpush1.bf16.msra.mxu0 %v8398
    %8485 = vmatprep.subr.bf16.mxu0 %v8401
    %8486 = vmatpush1.bf16.msra.mxu0 %v8400
    %8487 = vmatprep.subr.bf16.mxu0 %v8403
    %8488 = vmatpush1.bf16.msra.mxu0 %v8402
    %8489 = vmatprep.subr.bf16.mxu0 %v8405
    %8490 = vmatpush1.bf16.msra.mxu0 %v8404
    %8491 = vmatprep.subr.bf16.mxu0 %v8407
    %8492 = vmatpush1.bf16.msra.mxu0 %v8406
    %8493 = vmatprep.subr.bf16.mxu0 %v8409
    %8494 = vmatpush1.bf16.msra.mxu0 %v8408
    %8495 = vmatprep.subr.bf16.mxu0 %v8411
    %8496 = vmatpush1.bf16.msra.mxu0 %v8410
    %8497 = vmatprep.subr.bf16.mxu0 %v8413
    %8498 = vmatpush1.bf16.msra.mxu0 %v8412
    %8499 = vmatprep.subr.bf16.mxu0 %v8415
    %8500 = vmatpush1.bf16.msra.mxu0 %v8414
    %8501 = vmatprep.subr.bf16.mxu0 %v8417
    %8502 = vmatpush1.bf16.msra.mxu0 %v8416
    %8503 = vmatprep.subr.bf16.mxu0 %v8419
    %8504 = vmatpush1.bf16.msra.mxu0 %v8418
    %8505 = vmatprep.subr.bf16.mxu0 %v8421
    %8506 = vmatpush1.bf16.msra.mxu0 %v8420
    %8507 = vmatprep.mubr.bf16.mxu0 %v8357
    %8508 = vmatmul.mubr.bf16.gmra.mrb[0].mxu0 %v8356
    %v8509 = vpop.f32.mrb[0].mxu0
    %v8510 = vadd.f32 %v8469, %v8509
    %v8511 = vpop.f32.mrb[0].mxu0
    %v8512 = vadd.f32 %v8471, %v8511
    %v8513 = vpop.f32.mrb[0].mxu0
    %v8514 = vpop.f32.mrb[0].mxu0
    %8515 = vdwg.mxu0
    %v8516 = vmax.f32 %v8510, 0.0
    %v8517 = vmax.f32 %v8512, 0.0
    %s8518 = smul.u32 4, 32
    %s8519 = smul.u32 %s8518, 1
    %s8520 = sshll.u32 %s8519, 4
    %8521 = dma.done %s218, %s8520
    %v8522 = vpack.c.bf16 %v8516, %v8516
    %v8523 = vpack.c.bf16 %v8517, %v8517
    %v8524 = vld [vmem:[#allocation4] sm:$0xff]
    %v8525 = vld [vmem:[#allocation4 + $0x8] sm:$0xff]
    %v8526 = vld [vmem:[#allocation4 + $0x10] sm:$0xff]
    %v8527 = vld [vmem:[#allocation4 + $0x18] sm:$0xff]
    %v8528 = vld [vmem:[#allocation4 + $0x20] sm:$0xff]
    %v8529 = vld [vmem:[#allocation4 + $0x28] sm:$0xff]
    %v8530 = vld [vmem:[#allocation4 + $0x30] sm:$0xff]
    %v8531 = vld [vmem:[#allocation4 + $0x38] sm:$0xff]
    %v8532 = vld [vmem:[#allocation4 + $0x40] sm:$0xff]
    %v8533 = vld [vmem:[#allocation4 + $0x48] sm:$0xff]
    %v8534 = vld [vmem:[#allocation4 + $0x50] sm:$0xff]
    %v8535 = vld [vmem:[#allocation4 + $0x58] sm:$0xff]
    %v8536 = vld [vmem:[#allocation4 + $0x60] sm:$0xff]
    %v8537 = vld [vmem:[#allocation4 + $0x68] sm:$0xff]
    %v8538 = vld [vmem:[#allocation4 + $0x70] sm:$0xff]
    %v8539 = vld [vmem:[#allocation4 + $0x78] sm:$0xff]
    %v8540 = vld [vmem:[#allocation20] sm:$0x1]
    %v8542 = vlaneseq
    %v8543 = vshrl.u32 %v8542, 7
    %v8544 = vsub.s32 0, %v8543
    %v8545 = vrot.slane %v8540, %v8544
    %8547 = vmatprep.subr.bf16.mxu0 0
    %8548 = vmatpush1.bf16.msra.mxu0 %v8524
    %8549 = vmatprep.subr.bf16.mxu0 0
    %8550 = vmatpush1.bf16.msra.mxu0 %v8525
    %8551 = vmatprep.subr.bf16.mxu0 0
    %8552 = vmatpush1.bf16.msra.mxu0 %v8526
    %8553 = vmatprep.subr.bf16.mxu0 0
    %8554 = vmatpush1.bf16.msra.mxu0 %v8527
    %8555 = vmatprep.subr.bf16.mxu0 0
    %8556 = vmatpush1.bf16.msra.mxu0 %v8528
    %8557 = vmatprep.subr.bf16.mxu0 0
    %8558 = vmatpush1.bf16.msra.mxu0 %v8529
    %8559 = vmatprep.subr.bf16.mxu0 0
    %8560 = vmatpush1.bf16.msra.mxu0 %v8530
    %8561 = vmatprep.subr.bf16.mxu0 0
    %8562 = vmatpush1.bf16.msra.mxu0 %v8531
    %8563 = vmatprep.subr.bf16.mxu0 0
    %8564 = vmatpush1.bf16.msra.mxu0 %v8532
    %8565 = vmatprep.subr.bf16.mxu0 0
    %8566 = vmatpush1.bf16.msra.mxu0 %v8533
    %8567 = vmatprep.subr.bf16.mxu0 0
    %8568 = vmatpush1.bf16.msra.mxu0 %v8534
    %8569 = vmatprep.subr.bf16.mxu0 0
    %8570 = vmatpush1.bf16.msra.mxu0 %v8535
    %8571 = vmatprep.subr.bf16.mxu0 0
    %8572 = vmatpush1.bf16.msra.mxu0 %v8536
    %8573 = vmatprep.subr.bf16.mxu0 0
    %8574 = vmatpush1.bf16.msra.mxu0 %v8537
    %8575 = vmatprep.subr.bf16.mxu0 0
    %8576 = vmatpush1.bf16.msra.mxu0 %v8538
    %8577 = vmatprep.subr.bf16.mxu0 0
    %8578 = vmatpush1.bf16.msra.mxu0 %v8539
    %8579 = vmatprep.mubr.bf16.mxu0 %v8523
    %8580 = vmatmul.mubr.bf16.gmra.mrb[0].mxu0 %v8522
    %v8581 = vpop.f32.mrb[0].mxu0
    %v8582 = vadd.f32 %v8545, %v8581
    %v8583 = vpop.f32.mrb[0].mxu0
    %v8584 = vpop.f32.mrb[0].mxu0
    %v8585 = vpop.f32.mrb[0].mxu0
    %8586 = vdwg.mxu0
    %vm8587 = vcmask 1041408
    %v8588 = vsel %vm8587, %v8582, -inf
    %8589 = vmax.xlane.f32.xlu0 %v8588
    %v8590 = vpop.xlane.xlu0 %8589
    %v8591 = vsub.f32 %v8582, %v8590
    %v8592 = vmul.f32 %v8591, 1.442695
    %v8593 = vpow.pop %v8592
    %v8594 = vsel %vm8587, %v8593, 0.0
    %8595 = vadd.xlane.f32.xlu0 %v8594
    %v8596 = vpop.xlane.xlu0 %8595
    %v8597 = vlog2.pop %v8596
    %v8598 = vmul.f32 %v8597, 0.6931472
    %v8599 = vsub.f32 %v8591, %v8598
    %8600 = vst [vmem:[#allocation21] sm:$0x3] %v8599
    // Predicated region
    $region82: #{vnn_pointnet_cls_forward.1} parent=1 // pred_check
      _
    $region83: #{vnn_pointnet_cls_forward.1} parent=1 // pred_check_branch
      %8602 = sbr.rel (0) target = $region85
    $region84: #{vnn_pointnet_cls_forward.1} parent=1 // pred_region
      %s8604 = ssub.s32 32, 32
      %8605 = vsyncadd [#allocation8], %s8604
      %s8607 = sshll.u32 [#allocation21], 4
      %s8608 = int_to_ptr.vmem [resolvable:$true] %s8607
      %8610 = dma.vmem_to_hbm [thread:$0]  %s8608, 32, %s13, [#allocation8]
    $region85: #{vnn_pointnet_cls_forward.1} parent=1 // pred_fallthru
      _
    // Predicated region
    $region86: #{vnn_pointnet_cls_forward.1} parent=1 // pred_check
      _
    $region87: #{vnn_pointnet_cls_forward.1} parent=1 // pred_check_branch
      %8612 = sbr.rel (0) target = $region89
    $region88: #{vnn_pointnet_cls_forward.1} parent=1 // pred_region
      %8613 = dma.done [#allocation8], 32
    $region89: #{vnn_pointnet_cls_forward.1} parent=1 // pred_fallthru
      _
    %8614 = vsyncpa [#allocation7], 1
    %8615 = vsyncpa [#allocation10], 1
    %8616 = vsyncpa [#allocation13], 1
    %8617 = vsyncpa [#allocation16], 1
    %8618 = vsyncpa [#allocation19], 1
    %8619 = vsyncpa [#allocation8], 1
  %8620 = vsyncmov [#allocation5]
  %s8621 = vpop.sfrf %8620
  %p8622 = scmp.eq.s32.totalorder %s8621, 0
  %p8623 = pneg %p8622
  %8625 = shalt.err (%p8623)
  %s8626 = scalar_lea.sflag [#allocation5], 1
  %8627 = vsyncmov %s8626
  %s8628 = vpop.sfrf %8627
  %p8629 = scmp.eq.s32.totalorder %s8628, 0
  %p8630 = pneg %p8629
  %8632 = shalt.err (%p8630)
  %s8633 = scalar_lea.sflag [#allocation5], 2
  %8634 = vsyncmov %s8633
  %s8635 = vpop.sfrf %8634
  %p8636 = scmp.eq.s32.totalorder %s8635, 0
  %p8637 = pneg %p8636
  %8639 = shalt.err (%p8637)

</llo_original>
